<compile_context>
chip_gen: v5e
topology: v5e:2x2
jax: 0.10.0
libtpu: 0.0.40
codegen_flags: <defaults>
</compile_context>

<pallas_src>
import functools

import jax
import jax.numpy as jnp
from jax.experimental import pallas as pl
from jax.experimental.pallas import tpu as pltpu


def _mha_kernel(x_ref, wqkv_ref, bqkv_ref, wo_ref, bo_ref, o_ref,
                *, heads, head_dim, block_b, seq_len):
    # x_ref:    (block_b, L, D)
    # wqkv_ref: (D, 3D)   pre-transposed fused [Wq^T | Wk^T | Wv^T]
    # bqkv_ref: (1, 3D)   fused [bq | bk | bv]
    # wo_ref:   (D, D)    pre-transposed Wo^T
    # bo_ref:   (1, D)
    # o_ref:    (block_b, L, D)
    bblk, L = block_b, seq_len
    D = heads * head_dim
    x = x_ref[...]                                        # (bblk, L, D)
    in_dtype = x.dtype
    x2d = x.reshape(bblk * L, D)                          # fold batch block into M

    # --- fused QKV projection: one big MXU matmul, f32 accumulation ---
    qkv = jnp.dot(x2d, wqkv_ref[...],
                  preferred_element_type=jnp.float32) + bqkv_ref[...]   # (M, 3D)
    scale = 1.0 / (float(head_dim) ** 0.5)
    q2d = qkv[:, :D] * scale                              # fold 1/sqrt(hd) into q
    k2d = qkv[:, D:2 * D]
    v2d = qkv[:, 2 * D:]

    # --- head-major relayout: (bblk*L, D) -> (heads*bblk, L, hd) ---
    # Static lane slices + leading-axis concat: a lowering-safe einshape
    # "bl(hd) -> (hb)ld".  All matmuls below stay batched over heads*bblk.
    def split_heads(t2d):
        t = t2d.reshape(bblk, L, D)
        parts = [t[:, :, h * head_dim:(h + 1) * head_dim] for h in range(heads)]
        return jnp.concatenate(parts, axis=0)             # (heads*bblk, L, hd)

    qh = split_heads(q2d).astype(in_dtype)
    kh = split_heads(k2d).astype(in_dtype)
    vh = split_heads(v2d).astype(in_dtype)

    # --- batched scaled-dot-product attention over (heads*bblk) ---
    s = jnp.einsum("bld,bmd->blm", qh, kh,
                   preferred_element_type=jnp.float32)    # (heads*bblk, L, L)
    s = s - jnp.max(s, axis=-1, keepdims=True)
    p = jnp.exp(s)
    p = p * pl.reciprocal(jnp.sum(p, axis=-1, keepdims=True), approx=True)
    ctx = jnp.einsum("blm,bmd->bld", p.astype(in_dtype), vh,
                     preferred_element_type=jnp.float32)  # (heads*bblk, L, hd)

    # --- merge heads back to (bblk*L, D) ---
    attn = jnp.concatenate(
        [ctx[h * bblk:(h + 1) * bblk] for h in range(heads)], axis=-1)  # (bblk, L, D)
    attn2d = attn.reshape(bblk * L, D).astype(in_dtype)

    # --- output projection + residual ---
    y = jnp.dot(attn2d, wo_ref[...],
                preferred_element_type=jnp.float32) + bo_ref[...]       # (M, D)
    o_ref[...] = (y.reshape(bblk, L, D) + x).astype(o_ref.dtype)


def _pick_block_b(B, L, target_rows=256):
    """Smallest divisor of B whose batch block feeds >= target_rows rows to the MXU."""
    block_b = B
    for bb in range(1, B + 1):
        if B % bb == 0 and bb * L >= target_rows:
            block_b = bb
            break
    return block_b


def self_attention_pallas(x, params, heads, block_b=None):
    B, L, D = x.shape
    assert D % heads == 0, "embed_dim must be divisible by heads"
    head_dim = D // heads
    wqkv_t, bqkv, wo_t, bo = params

    if block_b is None:
        block_b = _pick_block_b(B, L)
    assert B % block_b == 0

    kernel = functools.partial(_mha_kernel, heads=heads, head_dim=head_dim,
                               block_b=block_b, seq_len=L)

    return pl.pallas_call(
        kernel,
        out_shape=jax.ShapeDtypeStruct((B, L, D), x.dtype),
        grid_spec=pltpu.PrefetchScalarGridSpec(
            num_scalar_prefetch=0,
            grid=(B // block_b,),
            in_specs=[
                pl.BlockSpec((block_b, L, D), lambda b: (b, 0, 0)),  # x
                pl.BlockSpec((D, 3 * D), lambda b: (0, 0)),          # fused Wqkv^T
                pl.BlockSpec((1, 3 * D), lambda b: (0, 0)),          # fused bias
                pl.BlockSpec((D, D), lambda b: (0, 0)),              # Wo^T
                pl.BlockSpec((1, D), lambda b: (0, 0)),              # bo
            ],
            out_specs=pl.BlockSpec((block_b, L, D), lambda b: (b, 0, 0)),
        ),
        compiler_params=pltpu.CompilerParams(
            dimension_semantics=("parallel",),
            vmem_limit_bytes=32 * 1024 * 1024,
        ),
    )(x, wqkv_t, bqkv, wo_t, bo)


def self_attention_ref(x, params, heads):
    """Pure-JAX reference mirroring nn.MultiheadAttention forward + residual."""
    B, L, D = x.shape
    hd = D // heads
    wqkv_t, bqkv, wo_t, bo = params
    qkv = x @ wqkv_t + bqkv                                  # (B, L, 3D)
    q, k, v = qkv[..., :D], qkv[..., D:2 * D], qkv[..., 2 * D:]

    def split(t):
        return t.reshape(B, L, heads, hd).transpose(0, 2, 1, 3)  # (B, H, L, hd)

    qh, kh, vh = split(q), split(k), split(v)
    s = jnp.einsum("bhld,bhmd->bhlm", qh, kh) / jnp.sqrt(jnp.float32(hd))
    p = jax.nn.softmax(s, axis=-1)
    o = jnp.einsum("bhlm,bhmd->bhld", p, vh)
    o = o.transpose(0, 2, 1, 3).reshape(B, L, D)
    return o @ wo_t + bo + x


def make_params(key, dim):
    """Deterministic synthetic params matching nn.MultiheadAttention shapes:
       in_proj_weight (3*dim, dim), in_proj_bias (3*dim,),
       out_proj.weight (dim, dim), out_proj.bias (dim,).
       Returned pre-transposed/fused for the kernel (PyTorch linear is x @ W^T + b)."""
    k1, k2, k3, k4 = jax.random.split(key, 4)
    in_proj_w = jax.random.normal(k1, (3 * dim, dim), jnp.float32) * 0.1
    in_proj_b = jax.random.normal(k2, (3 * dim,), jnp.float32) * 0.1
    out_w = jax.random.normal(k3, (dim, dim), jnp.float32) * 0.1
    out_b = jax.random.normal(k4, (dim,), jnp.float32) * 0.1
    return (in_proj_w.T,                       # (D, 3D) fused [Wq^T | Wk^T | Wv^T]
            in_proj_b.reshape(1, 3 * dim),     # (1, 3D)
            out_w.T,                           # (D, D)
            out_b.reshape(1, dim))             # (1, D)


if __name__ == "__main__":
    # Small but TPU-friendly shapes: D = 128 (lane-dense), head_dim = 16,
    # block_b * L = 256 rows per grid step, grid of 4 parallel steps.
    B, L, D, H = 16, 64, 128, 8
    key = jax.random.PRNGKey(0)
    kx, kp = jax.random.split(key)
    x = jax.random.normal(kx, (B, L, D), jnp.float32)
    params = make_params(kp, D)

    out = self_attention_pallas(x, params, heads=H)
    out = jax.block_until_ready(out)

    ref = self_attention_ref(x, params, heads=H)
    assert out.shape == (B, L, D)
    # Loose-ish tolerance: the softmax denominator uses the EUP approximate
    # reciprocal; everything else accumulates in f32.
    assert jnp.allclose(out, ref, atol=2e-2, rtol=2e-2), "mismatch vs reference"
    print("KERNEL_OK")
</pallas_src>

<mosaic_0001>
module attributes {stable_mosaic.version = 11 : i64} {
  func.func @_mha_kernel(%arg0: i32, %arg1: memref<4x64x128xf32, #tpu.memory_space<vmem>>, %arg2: memref<128x384xf32, #tpu.memory_space<vmem>>, %arg3: memref<1x384xf32, #tpu.memory_space<vmem>>, %arg4: memref<128x128xf32, #tpu.memory_space<vmem>>, %arg5: memref<1x128xf32, #tpu.memory_space<vmem>>, %arg6: memref<4x64x128xf32, #tpu.memory_space<vmem>>) attributes {dimension_semantics = [#tpu.dimension_semantics<parallel>], iteration_bounds = array<i64: 4>, scalar_prefetch = 0 : i64, scratch_operands = 0 : i64, tpu.core_type = #tpu.core_type<tc>, window_params = [{transform_indices = @transform_0, window_bounds = array<i64: 4, 64, 128>}, {pipeline_mode = #tpu.pipeline_mode<synchronous>, transform_indices = @transform_1, window_bounds = array<i64: 128, 384>}, {pipeline_mode = #tpu.pipeline_mode<synchronous>, transform_indices = @transform_2, window_bounds = array<i64: 1, 384>}, {pipeline_mode = #tpu.pipeline_mode<synchronous>, transform_indices = @transform_3, window_bounds = array<i64: 128, 128>}, {pipeline_mode = #tpu.pipeline_mode<synchronous>, transform_indices = @transform_4, window_bounds = array<i64: 1, 128>}, {transform_indices = @transform_5, window_bounds = array<i64: 4, 64, 128>}]} {
    %c0 = arith.constant 0 : index
    %c0_0 = arith.constant 0 : index
    %c0_1 = arith.constant 0 : index
    %0 = vector.load %arg1[%c0, %c0_0, %c0_1] : memref<4x64x128xf32, #tpu.memory_space<vmem>>, vector<4x64x128xf32>
    %1 = vector.shape_cast %0 : vector<4x64x128xf32> to vector<256x128xf32>
    %c0_2 = arith.constant 0 : index
    %c0_3 = arith.constant 0 : index
    %2 = vector.load %arg2[%c0_2, %c0_3] : memref<128x384xf32, #tpu.memory_space<vmem>>, vector<128x384xf32>
    %cst = arith.constant dense<0.000000e+00> : vector<256x384xf32>
    %3 = tpu.matmul %1, %2, %cst {dimension_numbers = #tpu.dot_dimension_numbers<[1], [0], [0], [1], [0, 0, 1, 1], [], []>} : vector<256x128xf32>, vector<128x384xf32>, vector<256x384xf32> -> vector<256x384xf32>
    %c0_4 = arith.constant 0 : index
    %c0_5 = arith.constant 0 : index
    %4 = vector.load %arg3[%c0_4, %c0_5] : memref<1x384xf32, #tpu.memory_space<vmem>>, vector<1x384xf32>
    %5 = vector.broadcast %4 : vector<1x384xf32> to vector<256x384xf32>
    %6 = arith.addf %3, %5 : vector<256x384xf32>
    %7 = vector.extract_strided_slice %6 {offsets = [0, 0], sizes = [256, 128], strides = [1, 1]} : vector<256x384xf32> to vector<256x128xf32>
    %cst_6 = arith.constant 2.500000e-01 : f32
    %8 = vector.broadcast %cst_6 : f32 to vector<256x128xf32>
    %9 = arith.mulf %7, %8 : vector<256x128xf32>
    %10 = vector.extract_strided_slice %6 {offsets = [0, 128], sizes = [256, 128], strides = [1, 1]} : vector<256x384xf32> to vector<256x128xf32>
    %11 = vector.extract_strided_slice %6 {offsets = [0, 256], sizes = [256, 128], strides = [1, 1]} : vector<256x384xf32> to vector<256x128xf32>
    %12 = vector.shape_cast %9 : vector<256x128xf32> to vector<4x64x128xf32>
    %13 = vector.extract_strided_slice %12 {offsets = [0, 0, 0], sizes = [4, 64, 16], strides = [1, 1, 1]} : vector<4x64x128xf32> to vector<4x64x16xf32>
    %14 = vector.extract_strided_slice %12 {offsets = [0, 0, 16], sizes = [4, 64, 16], strides = [1, 1, 1]} : vector<4x64x128xf32> to vector<4x64x16xf32>
    %15 = vector.extract_strided_slice %12 {offsets = [0, 0, 32], sizes = [4, 64, 16], strides = [1, 1, 1]} : vector<4x64x128xf32> to vector<4x64x16xf32>
    %16 = vector.extract_strided_slice %12 {offsets = [0, 0, 48], sizes = [4, 64, 16], strides = [1, 1, 1]} : vector<4x64x128xf32> to vector<4x64x16xf32>
    %17 = vector.extract_strided_slice %12 {offsets = [0, 0, 64], sizes = [4, 64, 16], strides = [1, 1, 1]} : vector<4x64x128xf32> to vector<4x64x16xf32>
    %18 = vector.extract_strided_slice %12 {offsets = [0, 0, 80], sizes = [4, 64, 16], strides = [1, 1, 1]} : vector<4x64x128xf32> to vector<4x64x16xf32>
    %19 = vector.extract_strided_slice %12 {offsets = [0, 0, 96], sizes = [4, 64, 16], strides = [1, 1, 1]} : vector<4x64x128xf32> to vector<4x64x16xf32>
    %20 = vector.extract_strided_slice %12 {offsets = [0, 0, 112], sizes = [4, 64, 16], strides = [1, 1, 1]} : vector<4x64x128xf32> to vector<4x64x16xf32>
    %21 = tpu.concatenate %13, %14, %15, %16, %17, %18, %19, %20 in 0 : vector<4x64x16xf32>, vector<4x64x16xf32>, vector<4x64x16xf32>, vector<4x64x16xf32>, vector<4x64x16xf32>, vector<4x64x16xf32>, vector<4x64x16xf32>, vector<4x64x16xf32> -> vector<32x64x16xf32>
    %22 = vector.shape_cast %10 : vector<256x128xf32> to vector<4x64x128xf32>
    %23 = vector.extract_strided_slice %22 {offsets = [0, 0, 0], sizes = [4, 64, 16], strides = [1, 1, 1]} : vector<4x64x128xf32> to vector<4x64x16xf32>
    %24 = vector.extract_strided_slice %22 {offsets = [0, 0, 16], sizes = [4, 64, 16], strides = [1, 1, 1]} : vector<4x64x128xf32> to vector<4x64x16xf32>
    %25 = vector.extract_strided_slice %22 {offsets = [0, 0, 32], sizes = [4, 64, 16], strides = [1, 1, 1]} : vector<4x64x128xf32> to vector<4x64x16xf32>
    %26 = vector.extract_strided_slice %22 {offsets = [0, 0, 48], sizes = [4, 64, 16], strides = [1, 1, 1]} : vector<4x64x128xf32> to vector<4x64x16xf32>
    %27 = vector.extract_strided_slice %22 {offsets = [0, 0, 64], sizes = [4, 64, 16], strides = [1, 1, 1]} : vector<4x64x128xf32> to vector<4x64x16xf32>
    %28 = vector.extract_strided_slice %22 {offsets = [0, 0, 80], sizes = [4, 64, 16], strides = [1, 1, 1]} : vector<4x64x128xf32> to vector<4x64x16xf32>
    %29 = vector.extract_strided_slice %22 {offsets = [0, 0, 96], sizes = [4, 64, 16], strides = [1, 1, 1]} : vector<4x64x128xf32> to vector<4x64x16xf32>
    %30 = vector.extract_strided_slice %22 {offsets = [0, 0, 112], sizes = [4, 64, 16], strides = [1, 1, 1]} : vector<4x64x128xf32> to vector<4x64x16xf32>
    %31 = tpu.concatenate %23, %24, %25, %26, %27, %28, %29, %30 in 0 : vector<4x64x16xf32>, vector<4x64x16xf32>, vector<4x64x16xf32>, vector<4x64x16xf32>, vector<4x64x16xf32>, vector<4x64x16xf32>, vector<4x64x16xf32>, vector<4x64x16xf32> -> vector<32x64x16xf32>
    %32 = vector.shape_cast %11 : vector<256x128xf32> to vector<4x64x128xf32>
    %33 = vector.extract_strided_slice %32 {offsets = [0, 0, 0], sizes = [4, 64, 16], strides = [1, 1, 1]} : vector<4x64x128xf32> to vector<4x64x16xf32>
    %34 = vector.extract_strided_slice %32 {offsets = [0, 0, 16], sizes = [4, 64, 16], strides = [1, 1, 1]} : vector<4x64x128xf32> to vector<4x64x16xf32>
    %35 = vector.extract_strided_slice %32 {offsets = [0, 0, 32], sizes = [4, 64, 16], strides = [1, 1, 1]} : vector<4x64x128xf32> to vector<4x64x16xf32>
    %36 = vector.extract_strided_slice %32 {offsets = [0, 0, 48], sizes = [4, 64, 16], strides = [1, 1, 1]} : vector<4x64x128xf32> to vector<4x64x16xf32>
    %37 = vector.extract_strided_slice %32 {offsets = [0, 0, 64], sizes = [4, 64, 16], strides = [1, 1, 1]} : vector<4x64x128xf32> to vector<4x64x16xf32>
    %38 = vector.extract_strided_slice %32 {offsets = [0, 0, 80], sizes = [4, 64, 16], strides = [1, 1, 1]} : vector<4x64x128xf32> to vector<4x64x16xf32>
    %39 = vector.extract_strided_slice %32 {offsets = [0, 0, 96], sizes = [4, 64, 16], strides = [1, 1, 1]} : vector<4x64x128xf32> to vector<4x64x16xf32>
    %40 = vector.extract_strided_slice %32 {offsets = [0, 0, 112], sizes = [4, 64, 16], strides = [1, 1, 1]} : vector<4x64x128xf32> to vector<4x64x16xf32>
    %41 = tpu.concatenate %33, %34, %35, %36, %37, %38, %39, %40 in 0 : vector<4x64x16xf32>, vector<4x64x16xf32>, vector<4x64x16xf32>, vector<4x64x16xf32>, vector<4x64x16xf32>, vector<4x64x16xf32>, vector<4x64x16xf32>, vector<4x64x16xf32> -> vector<32x64x16xf32>
    "tpu.trace_start"() <{level = 10 : i32, message = "bld,bmd->blm"}> : () -> ()
    %cst_7 = arith.constant dense<0.000000e+00> : vector<32x64x64xf32>
    %42 = tpu.matmul %21, %31, %cst_7 {dimension_numbers = #tpu.dot_dimension_numbers<[2], [2], [1], [1], [0, 0, 0, 1, 1, 1], [0], [0]>} : vector<32x64x16xf32>, vector<32x64x16xf32>, vector<32x64x64xf32> -> vector<32x64x64xf32>
    "tpu.trace_stop"() : () -> ()
    %cst_8 = arith.constant dense<0xFF800000> : vector<32x64xf32>
    %43 = vector.multi_reduction <maximumf>, %42, %cst_8 [2] : vector<32x64x64xf32> to vector<32x64xf32>
    %44 = vector.shape_cast %43 : vector<32x64xf32> to vector<32x64x1xf32>
    %45 = vector.broadcast %44 : vector<32x64x1xf32> to vector<32x64x64xf32>
    %46 = arith.subf %42, %45 : vector<32x64x64xf32>
    %47 = math.exp %46 : vector<32x64x64xf32>
    %cst_9 = arith.constant dense<0.000000e+00> : vector<32x64xf32>
    %48 = vector.multi_reduction <add>, %47, %cst_9 [2] : vector<32x64x64xf32> to vector<32x64xf32>
    %49 = vector.shape_cast %48 : vector<32x64xf32> to vector<32x64x1xf32>
    %50 = tpu.reciprocal %49 {approx = true} : vector<32x64x1xf32> -> vector<32x64x1xf32>
    %51 = vector.broadcast %50 : vector<32x64x1xf32> to vector<32x64x64xf32>
    %52 = arith.mulf %47, %51 : vector<32x64x64xf32>
    "tpu.trace_start"() <{level = 10 : i32, message = "blm,bmd->bld"}> : () -> ()
    %cst_10 = arith.constant dense<0.000000e+00> : vector<32x64x16xf32>
    %53 = tpu.matmul %52, %41, %cst_10 {dimension_numbers = #tpu.dot_dimension_numbers<[2], [1], [1], [2], [0, 0, 0, 1, 1, 2], [0], [0]>} : vector<32x64x64xf32>, vector<32x64x16xf32>, vector<32x64x16xf32> -> vector<32x64x16xf32>
    "tpu.trace_stop"() : () -> ()
    %54 = vector.extract_strided_slice %53 {offsets = [0, 0, 0], sizes = [4, 64, 16], strides = [1, 1, 1]} : vector<32x64x16xf32> to vector<4x64x16xf32>
    %55 = vector.extract_strided_slice %53 {offsets = [4, 0, 0], sizes = [4, 64, 16], strides = [1, 1, 1]} : vector<32x64x16xf32> to vector<4x64x16xf32>
    %56 = vector.extract_strided_slice %53 {offsets = [8, 0, 0], sizes = [4, 64, 16], strides = [1, 1, 1]} : vector<32x64x16xf32> to vector<4x64x16xf32>
    %57 = vector.extract_strided_slice %53 {offsets = [12, 0, 0], sizes = [4, 64, 16], strides = [1, 1, 1]} : vector<32x64x16xf32> to vector<4x64x16xf32>
    %58 = vector.extract_strided_slice %53 {offsets = [16, 0, 0], sizes = [4, 64, 16], strides = [1, 1, 1]} : vector<32x64x16xf32> to vector<4x64x16xf32>
    %59 = vector.extract_strided_slice %53 {offsets = [20, 0, 0], sizes = [4, 64, 16], strides = [1, 1, 1]} : vector<32x64x16xf32> to vector<4x64x16xf32>
    %60 = vector.extract_strided_slice %53 {offsets = [24, 0, 0], sizes = [4, 64, 16], strides = [1, 1, 1]} : vector<32x64x16xf32> to vector<4x64x16xf32>
    %61 = vector.extract_strided_slice %53 {offsets = [28, 0, 0], sizes = [4, 64, 16], strides = [1, 1, 1]} : vector<32x64x16xf32> to vector<4x64x16xf32>
    %62 = tpu.concatenate %54, %55, %56, %57, %58, %59, %60, %61 in 2 : vector<4x64x16xf32>, vector<4x64x16xf32>, vector<4x64x16xf32>, vector<4x64x16xf32>, vector<4x64x16xf32>, vector<4x64x16xf32>, vector<4x64x16xf32>, vector<4x64x16xf32> -> vector<4x64x128xf32>
    %63 = vector.shape_cast %62 : vector<4x64x128xf32> to vector<256x128xf32>
    %c0_11 = arith.constant 0 : index
    %c0_12 = arith.constant 0 : index
    %64 = vector.load %arg4[%c0_11, %c0_12] : memref<128x128xf32, #tpu.memory_space<vmem>>, vector<128x128xf32>
    %cst_13 = arith.constant dense<0.000000e+00> : vector<256x128xf32>
    %65 = tpu.matmul %63, %64, %cst_13 {dimension_numbers = #tpu.dot_dimension_numbers<[1], [0], [0], [1], [0, 0, 1, 1], [], []>} : vector<256x128xf32>, vector<128x128xf32>, vector<256x128xf32> -> vector<256x128xf32>
    %c0_14 = arith.constant 0 : index
    %c0_15 = arith.constant 0 : index
    %66 = vector.load %arg5[%c0_14, %c0_15] : memref<1x128xf32, #tpu.memory_space<vmem>>, vector<1x128xf32>
    %67 = vector.broadcast %66 : vector<1x128xf32> to vector<256x128xf32>
    %68 = arith.addf %65, %67 : vector<256x128xf32>
    %69 = vector.shape_cast %68 : vector<256x128xf32> to vector<4x64x128xf32>
    %70 = arith.addf %69, %0 : vector<4x64x128xf32>
    %c0_16 = arith.constant 0 : index
    %c0_17 = arith.constant 0 : index
    %c0_18 = arith.constant 0 : index
    %71 = vector.load %arg6[%c0_16, %c0_17, %c0_18] : memref<4x64x128xf32, #tpu.memory_space<vmem>>, vector<4x64x128xf32>
    tpu.vector_store %arg6[%c0_16, %c0_17, %c0_18], %70 {strides = array<i32>} : memref<4x64x128xf32, #tpu.memory_space<vmem>>, vector<4x64x128xf32>,
    return
  }
  func.func @transform_0(%arg0: i32) -> (i32, i32, i32) {
    %c0_i32 = arith.constant 0 : i32
    %c0_i32_0 = arith.constant 0 : i32
    %c0_i32_1 = arith.constant 0 : i32
    return %arg0, %c0_i32, %c0_i32_0 : i32, i32, i32
  }
  func.func @transform_1(%arg0: i32) -> (i32, i32) {
    %c0_i32 = arith.constant 0 : i32
    %c0_i32_0 = arith.constant 0 : i32
    %c0_i32_1 = arith.constant 0 : i32
    return %c0_i32, %c0_i32_0 : i32, i32
  }
  func.func @transform_2(%arg0: i32) -> (i32, i32) {
    %c0_i32 = arith.constant 0 : i32
    %c0_i32_0 = arith.constant 0 : i32
    %c0_i32_1 = arith.constant 0 : i32
    return %c0_i32, %c0_i32_0 : i32, i32
  }
  func.func @transform_3(%arg0: i32) -> (i32, i32) {
    %c0_i32 = arith.constant 0 : i32
    %c0_i32_0 = arith.constant 0 : i32
    %c0_i32_1 = arith.constant 0 : i32
    return %c0_i32, %c0_i32_0 : i32, i32
  }
  func.func @transform_4(%arg0: i32) -> (i32, i32) {
    %c0_i32 = arith.constant 0 : i32
    %c0_i32_0 = arith.constant 0 : i32
    %c0_i32_1 = arith.constant 0 : i32
    return %c0_i32, %c0_i32_0 : i32, i32
  }
  func.func @transform_5(%arg0: i32) -> (i32, i32, i32) {
    %c0_i32 = arith.constant 0 : i32
    %c0_i32_0 = arith.constant 0 : i32
    %c0_i32_1 = arith.constant 0 : i32
    return %arg0, %c0_i32, %c0_i32_0 : i32, i32, i32
  }
}

</mosaic_0001>

<llo_original>
// kernel: tpu_custom_call.1
$region0: #{tpu_custom_call.1}
  #allocation0 [shape = 'u32[]', space=smem, size = 0x4, offset = 0x4, fixed_abs, tag = 'smem constant byte address 0x4 - core index']
  #allocation1 [shape = 'u32[72,128]{1,0:T(1,128)}', space=vmem, size = 0x9000, scoped, tag = 'internal scratch']
  %s0 = inlined_call_operand.hbm [shape: f32[16,64,128], index: 0, kind: input, shape index: {}]
  %s1 = inlined_call_operand.hbm [shape: f32[128,384], index: 1, kind: input, shape index: {}]
  %s2 = inlined_call_operand.hbm [shape: f32[1,384], index: 2, kind: input, shape index: {}]
  %s3 = inlined_call_operand.hbm [shape: f32[128,128], index: 3, kind: input, shape index: {}]
  %s4 = inlined_call_operand.vmem [shape: f32[1,128], index: 4, kind: input, shape index: {}]
  %s5 = inlined_call_operand.hbm [shape: f32[16,64,128], index: 5, kind: output, shape index: {}]
  %s6 = sld [smem:[#allocation0]]
  $region69: #{tpu_custom_call.1} parent=0
    _
  %s8 = ssub.s32 1, %s6
  %s9 = scalar_select 0, %s8, %s6
  $region1: #{tpu_custom_call.1} parent=0
    #allocation2 [shape = 'u8[262144]{0}', space=vmem, size = 0x40000, scoped, tag = 'input window, operand 0']
    #allocation3 [shape = 's32[2]{0}', space=sflag, size = 0x8, scoped, tag = 'scoped memory for tpu_custom_call.1']
    #allocation4 [shape = 's32[2]{0}', space=sflag, size = 0x8, scoped, tag = 'scoped memory for tpu_custom_call.1']
    #allocation5 [shape = 'u8[196608]{0}', space=vmem, size = 0x30000, scoped, tag = 'input window, operand 1, single buffered']
    #allocation6 [shape = 's32[1]{0}', space=sflag, size = 0x4, scoped, tag = 'scoped memory for tpu_custom_call.1']
    #allocation7 [shape = 'u8[1536]{0}', space=vmem, size = 0x800, scoped, tag = 'input window, operand 2, single buffered']
    #allocation8 [shape = 'u8[65536]{0}', space=vmem, size = 0x10000, scoped, tag = 'input window, operand 3, single buffered']
    #allocation9 [shape = 's32[1]{0}', space=sflag, size = 0x4, scoped, tag = 'scoped memory for tpu_custom_call.1']
    #allocation10 [shape = 'u8[262144]{0}', space=vmem, size = 0x40000, scoped, tag = 'output window, operand 0']
    %10 = vsyncpa [#allocation3], 0
    %s11 = scalar_lea.sflag [#allocation3], 1
    %12 = vsyncpa %s11, 0
    %13 = vsyncpa [#allocation6], 0
    %14 = vsyncpa [#allocation9], 0
    %15 = vsyncpa [#allocation4], 0
    %s16 = scalar_lea.sflag [#allocation4], 1
    %17 = vsyncpa %s16, 0
    loop: start=0, step=1, limit=6
    $region2: #{tpu_custom_call.1} parent=1 // loop_pre_header
      _
    $region3: #{tpu_custom_call.1} parent=1 // loop_header
      %s19 = sphi 0, %s23
      %p20 = scmp.ge.s32.totalorder %s19, 6
      %s29 = sphi 0, %s31
      %s32 = sphi 0, %s29
      %s33 = sphi 0, %s32
      %s49 = sphi 0, %s33
      %s53 = sphi 0, %s53
      %s55 = sphi 0, %s53
      %s56 = sphi 0, %s55
      %s70 = sphi 0, %s56
      %s74 = sphi 0, %s74
      %s76 = sphi 0, %s74
      %s77 = sphi 0, %s76
      %s91 = sphi 0, %s77
      %s95 = sphi 0, %s95
      %s97 = sphi 0, %s95
      %s98 = sphi 0, %s97
      %s112 = sphi 0, %s98
      %s116 = sphi 0, %s116
      %s118 = sphi 0, %s116
      %s119 = sphi 0, %s118
      %s133 = sphi 0, %s119
      %s139 = sphi 0, %s141
      %s142 = sphi 0, %s139
      %s143 = sphi 0, %s142
      %s159 = sphi 0, %s143
    $region4: #{tpu_custom_call.1} parent=1 // loop_header_branch
      %22 = sbr.rel (%p20) target = $region8
    $region5: #{tpu_custom_call.1} parent=1 // loop_body
      %s24 = ssub.s32 %s19, 1
      %s25 = ssub.s32 %s19, 2
      %s26 = sadd.s32 %s19, 1
      %s27 = ssub.s32 %s19, %s26
      %p28 = scmp.eq.s32.totalorder %s27, 0
      %s30 = sadd.s32 %s29, 1
      %s31 = scalar_select %p28, %s29, %s30
      %p34 = pneg %p28
      %p35 = scmp.eq.s32.totalorder %s19, 3
      %p36 = por %p34, %p35
      %p37 = scmp.ne.s32.totalorder %s29, %s32
      %p38 = scmp.eq.s32.totalorder %s19, 0
      %p39 = por %p37, %p38
      %p40 = scmp.ne.s32.totalorder %s29, %s32
      %p41 = scmp.eq.s32.totalorder %s24, 3
      %p42 = por %p40, %p41
      %p43 = scmp.ne.s32.totalorder %s32, %s33
      %p44 = scmp.eq.s32.totalorder %s24, 0
      %p45 = por %p43, %p44
      %p46 = scmp.ne.s32.totalorder %s32, %s33
      %p47 = scmp.eq.s32.totalorder %s25, 3
      %p48 = por %p46, %p47
      %p50 = scmp.ne.s32.totalorder %s33, %s49
      %p51 = scmp.eq.s32.totalorder %s25, 0
      %p52 = por %p50, %p51
      %s54 = sadd.s32 %s53, 1
      %p57 = scmp.eq.s32.totalorder %s19, 3
      %p58 = scmp.ne.s32.totalorder %s53, %s55
      %p59 = scmp.eq.s32.totalorder %s19, 0
      %p60 = por %p58, %p59
      %p61 = scmp.ne.s32.totalorder %s53, %s55
      %p62 = scmp.eq.s32.totalorder %s24, 3
      %p63 = por %p61, %p62
      %p64 = scmp.ne.s32.totalorder %s55, %s56
      %p65 = scmp.eq.s32.totalorder %s24, 0
      %p66 = por %p64, %p65
      %p67 = scmp.ne.s32.totalorder %s55, %s56
      %p68 = scmp.eq.s32.totalorder %s25, 3
      %p69 = por %p67, %p68
      %p71 = scmp.ne.s32.totalorder %s56, %s70
      %p72 = scmp.eq.s32.totalorder %s25, 0
      %p73 = por %p71, %p72
      %s75 = sadd.s32 %s74, 1
      %p78 = scmp.eq.s32.totalorder %s19, 3
      %p79 = scmp.ne.s32.totalorder %s74, %s76
      %p80 = scmp.eq.s32.totalorder %s19, 0
      %p81 = por %p79, %p80
      %p82 = scmp.ne.s32.totalorder %s74, %s76
      %p83 = scmp.eq.s32.totalorder %s24, 3
      %p84 = por %p82, %p83
      %p85 = scmp.ne.s32.totalorder %s76, %s77
      %p86 = scmp.eq.s32.totalorder %s24, 0
      %p87 = por %p85, %p86
      %p88 = scmp.ne.s32.totalorder %s76, %s77
      %p89 = scmp.eq.s32.totalorder %s25, 3
      %p90 = por %p88, %p89
      %p92 = scmp.ne.s32.totalorder %s77, %s91
      %p93 = scmp.eq.s32.totalorder %s25, 0
      %p94 = por %p92, %p93
      %s96 = sadd.s32 %s95, 1
      %p99 = scmp.eq.s32.totalorder %s19, 3
      %p100 = scmp.ne.s32.totalorder %s95, %s97
      %p101 = scmp.eq.s32.totalorder %s19, 0
      %p102 = por %p100, %p101
      %p103 = scmp.ne.s32.totalorder %s95, %s97
      %p104 = scmp.eq.s32.totalorder %s24, 3
      %p105 = por %p103, %p104
      %p106 = scmp.ne.s32.totalorder %s97, %s98
      %p107 = scmp.eq.s32.totalorder %s24, 0
      %p108 = por %p106, %p107
      %p109 = scmp.ne.s32.totalorder %s97, %s98
      %p110 = scmp.eq.s32.totalorder %s25, 3
      %p111 = por %p109, %p110
      %p113 = scmp.ne.s32.totalorder %s98, %s112
      %p114 = scmp.eq.s32.totalorder %s25, 0
      %p115 = por %p113, %p114
      %s117 = sadd.s32 %s116, 1
      %p120 = scmp.eq.s32.totalorder %s19, 3
      %p121 = scmp.ne.s32.totalorder %s116, %s118
      %p122 = scmp.eq.s32.totalorder %s19, 0
      %p123 = por %p121, %p122
      %p124 = scmp.ne.s32.totalorder %s116, %s118
      %p125 = scmp.eq.s32.totalorder %s24, 3
      %p126 = por %p124, %p125
      %p127 = scmp.ne.s32.totalorder %s118, %s119
      %p128 = scmp.eq.s32.totalorder %s24, 0
      %p129 = por %p127, %p128
      %p130 = scmp.ne.s32.totalorder %s118, %s119
      %p131 = scmp.eq.s32.totalorder %s25, 3
      %p132 = por %p130, %p131
      %p134 = scmp.ne.s32.totalorder %s119, %s133
      %p135 = scmp.eq.s32.totalorder %s25, 0
      %p136 = por %p134, %p135
      %s137 = ssub.s32 %s19, %s26
      %p138 = scmp.eq.s32.totalorder %s137, 0
      %s140 = sadd.s32 %s139, 1
      %s141 = scalar_select %p138, %s139, %s140
      %p144 = pneg %p138
      %p145 = scmp.eq.s32.totalorder %s19, 3
      %p146 = por %p144, %p145
      %p147 = scmp.ne.s32.totalorder %s139, %s142
      %p148 = scmp.eq.s32.totalorder %s19, 0
      %p149 = por %p147, %p148
      %p150 = scmp.ne.s32.totalorder %s139, %s142
      %p151 = scmp.eq.s32.totalorder %s24, 3
      %p152 = por %p150, %p151
      %p153 = scmp.ne.s32.totalorder %s142, %s143
      %p154 = scmp.eq.s32.totalorder %s24, 0
      %p155 = por %p153, %p154
      %p156 = scmp.ne.s32.totalorder %s142, %s143
      %p157 = scmp.eq.s32.totalorder %s25, 3
      %p158 = por %p156, %p157
      %p160 = scmp.ne.s32.totalorder %s143, %s159
      %p161 = scmp.eq.s32.totalorder %s25, 0
      %p162 = por %p160, %p161
      %p163 = scmp.le.s32.totalorder 1, %s19
      %p164 = scmp.lt.s32.totalorder %s19, 5
      %p165 = pnand %p163, %p164
      %p166 = pneg %p165
      // Predicated region
      $region9: #{tpu_custom_call.1} parent=5 // pred_check
        _
      $region10: #{tpu_custom_call.1} parent=5 // pred_check_branch
        %168 = sbr.rel (%p165) target = $region12
      $region11: #{tpu_custom_call.1} parent=5 // pred_region
        %s169 = ssub.s32 %s19, 1
        // Predicated region
        $region13: #{tpu_custom_call.1} parent=11 // pred_check
          %p170 = pneg %p66
        $region14: #{tpu_custom_call.1} parent=11 // pred_check_branch
          %172 = sbr.rel (%p170) target = $region16
        $region15: #{tpu_custom_call.1} parent=11 // pred_region
          %174 = vsyncadd [#allocation6], 0
          %s175 = sshll.u32 %s1, 4
          %s176 = int_to_ptr.hbm [resolvable:$true] %s175
          %s177 = sshll.u32 [#allocation5], 4
          %s178 = int_to_ptr.vmem [resolvable:$true] %s177
          %183 = dma.hbm_to_vmem [thread:$0]  %s176, 6144, %s178, [#allocation6], 384, 384, 24
        $region16: #{tpu_custom_call.1} parent=11 // pred_fallthru
          _
        // Predicated region
        $region17: #{tpu_custom_call.1} parent=11 // pred_check
          %p184 = pneg %p87
        $region18: #{tpu_custom_call.1} parent=11 // pred_check_branch
          %186 = sbr.rel (%p184) target = $region20
        $region19: #{tpu_custom_call.1} parent=11 // pred_region
          %188 = vsyncadd [#allocation6], 0
          %s190 = sshll.u32 %s2, 4
          %s191 = int_to_ptr.hbm [resolvable:$true] %s190
          %s192 = sshll.u32 [#allocation7], 4
          %s193 = int_to_ptr.vmem [resolvable:$true] %s192
          %195 = dma.hbm_to_vmem [thread:$0]  %s191, 48, %s193, [#allocation6]
        $region20: #{tpu_custom_call.1} parent=11 // pred_fallthru
          _
        // Predicated region
        $region21: #{tpu_custom_call.1} parent=11 // pred_check
          %p196 = pneg %p108
        $region22: #{tpu_custom_call.1} parent=11 // pred_check_branch
          %198 = sbr.rel (%p196) target = $region24
        $region23: #{tpu_custom_call.1} parent=11 // pred_region
          %200 = vsyncadd [#allocation9], 0
          %s201 = sshll.u32 %s3, 4
          %s202 = int_to_ptr.hbm [resolvable:$true] %s201
          %s203 = sshll.u32 [#allocation8], 4
          %s204 = int_to_ptr.vmem [resolvable:$true] %s203
          %209 = dma.hbm_to_vmem [thread:$0]  %s202, 2048, %s204, [#allocation9], 128, 128, 8
        $region24: #{tpu_custom_call.1} parent=11 // pred_fallthru
          _
        // Predicated region
        $region25: #{tpu_custom_call.1} parent=11 // pred_check
          %p210 = pneg %p129
        $region26: #{tpu_custom_call.1} parent=11 // pred_check_branch
          %212 = sbr.rel (%p210) target = $region28
        $region27: #{tpu_custom_call.1} parent=11 // pred_region
          _
        $region28: #{tpu_custom_call.1} parent=11 // pred_fallthru
          _
      $region12: #{tpu_custom_call.1} parent=5 // pred_fallthru
        _
      %p213 = scmp.lt.s32.totalorder %s19, 4
      // Predicated region
      $region29: #{tpu_custom_call.1} parent=5 // pred_check
        %p214 = pneg %p213
      $region30: #{tpu_custom_call.1} parent=5 // pred_check_branch
        %216 = sbr.rel (%p214) target = $region32
      $region31: #{tpu_custom_call.1} parent=5 // pred_region
        // Predicated region
        $region33: #{tpu_custom_call.1} parent=31 // pred_check
          %p217 = pneg %p39
        $region34: #{tpu_custom_call.1} parent=31 // pred_check_branch
          %219 = sbr.rel (%p217) target = $region36
        $region35: #{tpu_custom_call.1} parent=31 // pred_region
          %s220 = sand.u32 %s29, 1
          %s221 = scalar_lea.sflag [#allocation3], %s220
          %s222 = sand.u32 %s29, 1
          %s223 = smul.addr %s222, 256
          %s224 = scalar_lea.vmem [#allocation2], %s223
          %s225 = smul.u32 4, %s19
          %227 = vsyncadd %s221, 0
          %s228 = smul.addr %s225, 8
          %s229 = smul.addr %s228, 8
          %s230 = scalar_lea.hbm %s0, %s229
          %s231 = sshll.u32 %s230, 4
          %s232 = int_to_ptr.hbm [resolvable:$true] %s231
          %s233 = sshll.u32 %s224, 4
          %s234 = int_to_ptr.vmem [resolvable:$true] %s233
          %239 = dma.hbm_to_vmem [thread:$0]  %s232, 4096, %s234, %s221, 128, 128, 8
        $region36: #{tpu_custom_call.1} parent=31 // pred_fallthru
          _
      $region32: #{tpu_custom_call.1} parent=5 // pred_fallthru
        _
      %p240 = scmp.le.s32.totalorder 1, %s19
      %p241 = scmp.lt.s32.totalorder %s19, 5
      %p242 = pnand %p240, %p241
      %p243 = pneg %p242
      // Predicated region
      $region37: #{tpu_custom_call.1} parent=5 // pred_check
        _
      $region38: #{tpu_custom_call.1} parent=5 // pred_check_branch
        %245 = sbr.rel (%p242) target = $region40
      $region39: #{tpu_custom_call.1} parent=5 // pred_region
        %s246 = ssub.s32 %s19, 1
        %s247 = sand.u32 %s32, 1
        %s248 = scalar_lea.sflag [#allocation3], %s247
        %s249 = sand.u32 %s32, 1
        %s250 = smul.addr %s249, 256
        %s251 = scalar_lea.vmem [#allocation2], %s250
        // Predicated region
        $region41: #{tpu_custom_call.1} parent=39 // pred_check
          %p252 = pneg %p45
        $region42: #{tpu_custom_call.1} parent=39 // pred_check_branch
          %254 = sbr.rel (%p252) target = $region44
        $region43: #{tpu_custom_call.1} parent=39 // pred_region
          %256 = dma.done %s248, 4096
        $region44: #{tpu_custom_call.1} parent=39 // pred_fallthru
          _
        // Predicated region
        $region45: #{tpu_custom_call.1} parent=39 // pred_check
          %p257 = pneg %p66
        $region46: #{tpu_custom_call.1} parent=39 // pred_check_branch
          %259 = sbr.rel (%p257) target = $region48
        $region47: #{tpu_custom_call.1} parent=39 // pred_region
          %261 = dma.done [#allocation6], 6144
        $region48: #{tpu_custom_call.1} parent=39 // pred_fallthru
          _
        // Predicated region
        $region49: #{tpu_custom_call.1} parent=39 // pred_check
          %p262 = pneg %p87
        $region50: #{tpu_custom_call.1} parent=39 // pred_check_branch
          %264 = sbr.rel (%p262) target = $region52
        $region51: #{tpu_custom_call.1} parent=39 // pred_region
          %266 = dma.done [#allocation6], 48
        $region52: #{tpu_custom_call.1} parent=39 // pred_fallthru
          _
        // Predicated region
        $region53: #{tpu_custom_call.1} parent=39 // pred_check
          %p267 = pneg %p108
        $region54: #{tpu_custom_call.1} parent=39 // pred_check_branch
          %269 = sbr.rel (%p267) target = $region56
        $region55: #{tpu_custom_call.1} parent=39 // pred_region
          %271 = dma.done [#allocation9], 2048
        $region56: #{tpu_custom_call.1} parent=39 // pred_fallthru
          _
        %s272 = sand.u32 %s32, 1
        %s273 = scalar_lea.sflag [#allocation3], %s272
        %s274 = sand.u32 %s32, 1
        %s275 = smul.addr %s274, 256
        %s276 = scalar_lea.vmem [#allocation2], %s275
        %p277 = pneg %p45
        %p278 = pneg %p42
        %p279 = pneg %p66
        %p280 = pneg %p63
        %p281 = pneg %p87
        %p282 = pneg %p84
        %p283 = pneg %p108
        %p284 = pneg %p105
        %p285 = pneg %p129
        %p286 = pneg %p126
        %p287 = pneg %p155
        %p288 = pneg %p152
        %s289 = sand.u32 %s142, 1
        %s290 = scalar_lea.sflag [#allocation4], %s289
        %s291 = sand.u32 %s142, 1
        %s292 = smul.addr %s291, 256
        %s293 = scalar_lea.vmem [#allocation10], %s292
        %s294 = smul.u32 4, %s24
        %s295 = smul.u32 4, %s24
        %v296 = vld [vmem:[%s251] sm:$0xff]
        %v297 = vld [vmem:[%s251 + $0x8] sm:$0xff]
        %v298 = vld [vmem:[%s251 + $0x10] sm:$0xff]
        %v299 = vld [vmem:[%s251 + $0x18] sm:$0xff]
        %v300 = vld [vmem:[%s251 + $0x20] sm:$0xff]
        %v301 = vld [vmem:[%s251 + $0x28] sm:$0xff]
        %v302 = vld [vmem:[%s251 + $0x30] sm:$0xff]
        %v303 = vld [vmem:[%s251 + $0x38] sm:$0xff]
        %v304 = vld [vmem:[%s251 + $0x40] sm:$0xff]
        %v305 = vld [vmem:[%s251 + $0x48] sm:$0xff]
        %v306 = vld [vmem:[%s251 + $0x50] sm:$0xff]
        %v307 = vld [vmem:[%s251 + $0x58] sm:$0xff]
        %v308 = vld [vmem:[%s251 + $0x60] sm:$0xff]
        %v309 = vld [vmem:[%s251 + $0x68] sm:$0xff]
        %v310 = vld [vmem:[%s251 + $0x70] sm:$0xff]
        %v311 = vld [vmem:[%s251 + $0x78] sm:$0xff]
        %v312 = vld [vmem:[%s251 + $0x80] sm:$0xff]
        %v313 = vld [vmem:[%s251 + $0x88] sm:$0xff]
        %v314 = vld [vmem:[%s251 + $0x90] sm:$0xff]
        %v315 = vld [vmem:[%s251 + $0x98] sm:$0xff]
        %v316 = vld [vmem:[%s251 + $0xa0] sm:$0xff]
        %v317 = vld [vmem:[%s251 + $0xa8] sm:$0xff]
        %v318 = vld [vmem:[%s251 + $0xb0] sm:$0xff]
        %v319 = vld [vmem:[%s251 + $0xb8] sm:$0xff]
        %v320 = vld [vmem:[%s251 + $0xc0] sm:$0xff]
        %v321 = vld [vmem:[%s251 + $0xc8] sm:$0xff]
        %v322 = vld [vmem:[%s251 + $0xd0] sm:$0xff]
        %v323 = vld [vmem:[%s251 + $0xd8] sm:$0xff]
        %v324 = vld [vmem:[%s251 + $0xe0] sm:$0xff]
        %v325 = vld [vmem:[%s251 + $0xe8] sm:$0xff]
        %v326 = vld [vmem:[%s251 + $0xf0] sm:$0xff]
        %v327 = vld [vmem:[%s251 + $0xf8] sm:$0xff]
        %v328 = vld [vmem:[#allocation5] sm:$0xff]
        %v329 = vld [vmem:[#allocation5 + $0x8] sm:$0xff]
        %v330 = vld [vmem:[#allocation5 + $0x10] sm:$0xff]
        %v331 = vld [vmem:[#allocation5 + $0x18] sm:$0xff]
        %v332 = vld [vmem:[#allocation5 + $0x20] sm:$0xff]
        %v333 = vld [vmem:[#allocation5 + $0x28] sm:$0xff]
        %v334 = vld [vmem:[#allocation5 + $0x30] sm:$0xff]
        %v335 = vld [vmem:[#allocation5 + $0x38] sm:$0xff]
        %v336 = vld [vmem:[#allocation5 + $0x40] sm:$0xff]
        %v337 = vld [vmem:[#allocation5 + $0x48] sm:$0xff]
        %v338 = vld [vmem:[#allocation5 + $0x50] sm:$0xff]
        %v339 = vld [vmem:[#allocation5 + $0x58] sm:$0xff]
        %v340 = vld [vmem:[#allocation5 + $0x60] sm:$0xff]
        %v341 = vld [vmem:[#allocation5 + $0x68] sm:$0xff]
        %v342 = vld [vmem:[#allocation5 + $0x70] sm:$0xff]
        %v343 = vld [vmem:[#allocation5 + $0x78] sm:$0xff]
        %v344 = vld [vmem:[#allocation5 + $0x80] sm:$0xff]
        %v345 = vld [vmem:[#allocation5 + $0x88] sm:$0xff]
        %v346 = vld [vmem:[#allocation5 + $0x90] sm:$0xff]
        %v347 = vld [vmem:[#allocation5 + $0x98] sm:$0xff]
        %v348 = vld [vmem:[#allocation5 + $0xa0] sm:$0xff]
        %v349 = vld [vmem:[#allocation5 + $0xa8] sm:$0xff]
        %v350 = vld [vmem:[#allocation5 + $0xb0] sm:$0xff]
        %v351 = vld [vmem:[#allocation5 + $0xb8] sm:$0xff]
        %v352 = vld [vmem:[#allocation5 + $0xc0] sm:$0xff]
        %v353 = vld [vmem:[#allocation5 + $0xc8] sm:$0xff]
        %v354 = vld [vmem:[#allocation5 + $0xd0] sm:$0xff]
        %v355 = vld [vmem:[#allocation5 + $0xd8] sm:$0xff]
        %v356 = vld [vmem:[#allocation5 + $0xe0] sm:$0xff]
        %v357 = vld [vmem:[#allocation5 + $0xe8] sm:$0xff]
        %v358 = vld [vmem:[#allocation5 + $0xf0] sm:$0xff]
        %v359 = vld [vmem:[#allocation5 + $0xf8] sm:$0xff]
        %v360 = vld [vmem:[#allocation5 + $0x100] sm:$0xff]
        %v361 = vld [vmem:[#allocation5 + $0x108] sm:$0xff]
        %v362 = vld [vmem:[#allocation5 + $0x110] sm:$0xff]
        %v363 = vld [vmem:[#allocation5 + $0x118] sm:$0xff]
        %v364 = vld [vmem:[#allocation5 + $0x120] sm:$0xff]
        %v365 = vld [vmem:[#allocation5 + $0x128] sm:$0xff]
        %v366 = vld [vmem:[#allocation5 + $0x130] sm:$0xff]
        %v367 = vld [vmem:[#allocation5 + $0x138] sm:$0xff]
        %v368 = vld [vmem:[#allocation5 + $0x140] sm:$0xff]
        %v369 = vld [vmem:[#allocation5 + $0x148] sm:$0xff]
        %v370 = vld [vmem:[#allocation5 + $0x150] sm:$0xff]
        %v371 = vld [vmem:[#allocation5 + $0x158] sm:$0xff]
        %v372 = vld [vmem:[#allocation5 + $0x160] sm:$0xff]
        %v373 = vld [vmem:[#allocation5 + $0x168] sm:$0xff]
        %v374 = vld [vmem:[#allocation5 + $0x170] sm:$0xff]
        %v375 = vld [vmem:[#allocation5 + $0x178] sm:$0xff]
        %v376 = vld [vmem:[#allocation7] sm:$0x7]
        %v378 = vperm.slane %v376, 0
        %v379 = vperm.slane %v376, 1
        %v380 = vperm.slane %v376, 2
        %384 = vmatpush.msra.mxu0 %v373
        %385 = vmatpush.msra.mxu0 %v370
        %386 = vmatpush.msra.mxu0 %v367
        %387 = vmatpush.msra.mxu0 %v364
        %388 = vmatpush.msra.mxu0 %v361
        %389 = vmatpush.msra.mxu0 %v358
        %390 = vmatpush.msra.mxu0 %v355
        %391 = vmatpush.msra.mxu0 %v352
        %392 = vmatpush.msra.mxu0 %v349
        %393 = vmatpush.msra.mxu0 %v346
        %394 = vmatpush.msra.mxu0 %v343
        %395 = vmatpush.msra.mxu0 %v340
        %396 = vmatpush.msra.mxu0 %v337
        %397 = vmatpush.msra.mxu0 %v334
        %398 = vmatpush.msra.mxu0 %v331
        %399 = vmatpush.msra.mxu0 %v328
        %400 = vmatmul.f32.gmra.mxu0 %v296
        %v401 = vpop.f32.mrf.mxu0
        %v402 = vadd.f32 %v378, %v401
        %403 = vmatmul.f32.gmra.mxu0 %v297
        %v404 = vpop.f32.mrf.mxu0
        %v405 = vadd.f32 %v378, %v404
        %406 = vmatmul.f32.gmra.mxu0 %v298
        %v407 = vpop.f32.mrf.mxu0
        %v408 = vadd.f32 %v378, %v407
        %409 = vmatmul.f32.gmra.mxu0 %v299
        %v410 = vpop.f32.mrf.mxu0
        %v411 = vadd.f32 %v378, %v410
        %412 = vmatmul.f32.gmra.mxu0 %v300
        %v413 = vpop.f32.mrf.mxu0
        %v414 = vadd.f32 %v378, %v413
        %415 = vmatmul.f32.gmra.mxu0 %v301
        %v416 = vpop.f32.mrf.mxu0
        %v417 = vadd.f32 %v378, %v416
        %418 = vmatmul.f32.gmra.mxu0 %v302
        %v419 = vpop.f32.mrf.mxu0
        %v420 = vadd.f32 %v378, %v419
        %421 = vmatmul.f32.gmra.mxu0 %v303
        %v422 = vpop.f32.mrf.mxu0
        %v423 = vadd.f32 %v378, %v422
        %424 = vmatmul.f32.gmra.mxu0 %v304
        %v425 = vpop.f32.mrf.mxu0
        %v426 = vadd.f32 %v378, %v425
        %427 = vmatmul.f32.gmra.mxu0 %v305
        %v428 = vpop.f32.mrf.mxu0
        %v429 = vadd.f32 %v378, %v428
        %430 = vmatmul.f32.gmra.mxu0 %v306
        %v431 = vpop.f32.mrf.mxu0
        %v432 = vadd.f32 %v378, %v431
        %433 = vmatmul.f32.gmra.mxu0 %v307
        %v434 = vpop.f32.mrf.mxu0
        %v435 = vadd.f32 %v378, %v434
        %436 = vmatmul.f32.gmra.mxu0 %v308
        %v437 = vpop.f32.mrf.mxu0
        %v438 = vadd.f32 %v378, %v437
        %439 = vmatmul.f32.gmra.mxu0 %v309
        %v440 = vpop.f32.mrf.mxu0
        %v441 = vadd.f32 %v378, %v440
        %442 = vmatmul.f32.gmra.mxu0 %v310
        %v443 = vpop.f32.mrf.mxu0
        %v444 = vadd.f32 %v378, %v443
        %445 = vmatmul.f32.gmra.mxu0 %v311
        %v446 = vpop.f32.mrf.mxu0
        %v447 = vadd.f32 %v378, %v446
        %448 = vmatmul.f32.gmra.mxu0 %v312
        %v449 = vpop.f32.mrf.mxu0
        %v450 = vadd.f32 %v378, %v449
        %451 = vmatmul.f32.gmra.mxu0 %v313
        %v452 = vpop.f32.mrf.mxu0
        %v453 = vadd.f32 %v378, %v452
        %454 = vmatmul.f32.gmra.mxu0 %v314
        %v455 = vpop.f32.mrf.mxu0
        %v456 = vadd.f32 %v378, %v455
        %457 = vmatmul.f32.gmra.mxu0 %v315
        %v458 = vpop.f32.mrf.mxu0
        %v459 = vadd.f32 %v378, %v458
        %460 = vmatmul.f32.gmra.mxu0 %v316
        %v461 = vpop.f32.mrf.mxu0
        %v462 = vadd.f32 %v378, %v461
        %463 = vmatmul.f32.gmra.mxu0 %v317
        %v464 = vpop.f32.mrf.mxu0
        %v465 = vadd.f32 %v378, %v464
        %466 = vmatmul.f32.gmra.mxu0 %v318
        %v467 = vpop.f32.mrf.mxu0
        %v468 = vadd.f32 %v378, %v467
        %469 = vmatmul.f32.gmra.mxu0 %v319
        %v470 = vpop.f32.mrf.mxu0
        %v471 = vadd.f32 %v378, %v470
        %472 = vmatmul.f32.gmra.mxu0 %v320
        %v473 = vpop.f32.mrf.mxu0
        %v474 = vadd.f32 %v378, %v473
        %475 = vmatmul.f32.gmra.mxu0 %v321
        %v476 = vpop.f32.mrf.mxu0
        %v477 = vadd.f32 %v378, %v476
        %478 = vmatmul.f32.gmra.mxu0 %v322
        %v479 = vpop.f32.mrf.mxu0
        %v480 = vadd.f32 %v378, %v479
        %481 = vmatmul.f32.gmra.mxu0 %v323
        %v482 = vpop.f32.mrf.mxu0
        %v483 = vadd.f32 %v378, %v482
        %484 = vmatmul.f32.gmra.mxu0 %v324
        %v485 = vpop.f32.mrf.mxu0
        %v486 = vadd.f32 %v378, %v485
        %487 = vmatmul.f32.gmra.mxu0 %v325
        %v488 = vpop.f32.mrf.mxu0
        %v489 = vadd.f32 %v378, %v488
        %490 = vmatmul.f32.gmra.mxu0 %v326
        %v491 = vpop.f32.mrf.mxu0
        %v492 = vadd.f32 %v378, %v491
        %493 = vmatmul.f32.gmra.mxu0 %v327
        %v494 = vpop.f32.mrf.mxu0
        %v495 = vadd.f32 %v378, %v494
        %496 = vdwg.mxu0
        %497 = vmatpush.msra.mxu0 %v374
        %498 = vmatpush.msra.mxu0 %v371
        %499 = vmatpush.msra.mxu0 %v368
        %500 = vmatpush.msra.mxu0 %v365
        %501 = vmatpush.msra.mxu0 %v362
        %502 = vmatpush.msra.mxu0 %v359
        %503 = vmatpush.msra.mxu0 %v356
        %504 = vmatpush.msra.mxu0 %v353
        %505 = vmatpush.msra.mxu0 %v350
        %506 = vmatpush.msra.mxu0 %v347
        %507 = vmatpush.msra.mxu0 %v344
        %508 = vmatpush.msra.mxu0 %v341
        %509 = vmatpush.msra.mxu0 %v338
        %510 = vmatpush.msra.mxu0 %v335
        %511 = vmatpush.msra.mxu0 %v332
        %512 = vmatpush.msra.mxu0 %v329
        %513 = vmatmul.f32.gmra.mxu0 %v296
        %v514 = vpop.f32.mrf.mxu0
        %v515 = vadd.f32 %v379, %v514
        %516 = vmatmul.f32.gmra.mxu0 %v297
        %v517 = vpop.f32.mrf.mxu0
        %v518 = vadd.f32 %v379, %v517
        %519 = vmatmul.f32.gmra.mxu0 %v298
        %v520 = vpop.f32.mrf.mxu0
        %v521 = vadd.f32 %v379, %v520
        %522 = vmatmul.f32.gmra.mxu0 %v299
        %v523 = vpop.f32.mrf.mxu0
        %v524 = vadd.f32 %v379, %v523
        %525 = vmatmul.f32.gmra.mxu0 %v300
        %v526 = vpop.f32.mrf.mxu0
        %v527 = vadd.f32 %v379, %v526
        %528 = vmatmul.f32.gmra.mxu0 %v301
        %v529 = vpop.f32.mrf.mxu0
        %v530 = vadd.f32 %v379, %v529
        %531 = vmatmul.f32.gmra.mxu0 %v302
        %v532 = vpop.f32.mrf.mxu0
        %v533 = vadd.f32 %v379, %v532
        %534 = vmatmul.f32.gmra.mxu0 %v303
        %v535 = vpop.f32.mrf.mxu0
        %v536 = vadd.f32 %v379, %v535
        %537 = vmatmul.f32.gmra.mxu0 %v304
        %v538 = vpop.f32.mrf.mxu0
        %v539 = vadd.f32 %v379, %v538
        %540 = vmatmul.f32.gmra.mxu0 %v305
        %v541 = vpop.f32.mrf.mxu0
        %v542 = vadd.f32 %v379, %v541
        %543 = vmatmul.f32.gmra.mxu0 %v306
        %v544 = vpop.f32.mrf.mxu0
        %v545 = vadd.f32 %v379, %v544
        %546 = vmatmul.f32.gmra.mxu0 %v307
        %v547 = vpop.f32.mrf.mxu0
        %v548 = vadd.f32 %v379, %v547
        %549 = vmatmul.f32.gmra.mxu0 %v308
        %v550 = vpop.f32.mrf.mxu0
        %v551 = vadd.f32 %v379, %v550
        %552 = vmatmul.f32.gmra.mxu0 %v309
        %v553 = vpop.f32.mrf.mxu0
        %v554 = vadd.f32 %v379, %v553
        %555 = vmatmul.f32.gmra.mxu0 %v310
        %v556 = vpop.f32.mrf.mxu0
        %v557 = vadd.f32 %v379, %v556
        %558 = vmatmul.f32.gmra.mxu0 %v311
        %v559 = vpop.f32.mrf.mxu0
        %v560 = vadd.f32 %v379, %v559
        %561 = vmatmul.f32.gmra.mxu0 %v312
        %v562 = vpop.f32.mrf.mxu0
        %v563 = vadd.f32 %v379, %v562
        %564 = vmatmul.f32.gmra.mxu0 %v313
        %v565 = vpop.f32.mrf.mxu0
        %v566 = vadd.f32 %v379, %v565
        %567 = vmatmul.f32.gmra.mxu0 %v314
        %v568 = vpop.f32.mrf.mxu0
        %v569 = vadd.f32 %v379, %v568
        %570 = vmatmul.f32.gmra.mxu0 %v315
        %v571 = vpop.f32.mrf.mxu0
        %v572 = vadd.f32 %v379, %v571
        %573 = vmatmul.f32.gmra.mxu0 %v316
        %v574 = vpop.f32.mrf.mxu0
        %v575 = vadd.f32 %v379, %v574
        %576 = vmatmul.f32.gmra.mxu0 %v317
        %v577 = vpop.f32.mrf.mxu0
        %v578 = vadd.f32 %v379, %v577
        %579 = vmatmul.f32.gmra.mxu0 %v318
        %v580 = vpop.f32.mrf.mxu0
        %v581 = vadd.f32 %v379, %v580
        %582 = vmatmul.f32.gmra.mxu0 %v319
        %v583 = vpop.f32.mrf.mxu0
        %v584 = vadd.f32 %v379, %v583
        %585 = vmatmul.f32.gmra.mxu0 %v320
        %v586 = vpop.f32.mrf.mxu0
        %v587 = vadd.f32 %v379, %v586
        %588 = vmatmul.f32.gmra.mxu0 %v321
        %v589 = vpop.f32.mrf.mxu0
        %v590 = vadd.f32 %v379, %v589
        %591 = vmatmul.f32.gmra.mxu0 %v322
        %v592 = vpop.f32.mrf.mxu0
        %v593 = vadd.f32 %v379, %v592
        %594 = vmatmul.f32.gmra.mxu0 %v323
        %v595 = vpop.f32.mrf.mxu0
        %v596 = vadd.f32 %v379, %v595
        %597 = vmatmul.f32.gmra.mxu0 %v324
        %v598 = vpop.f32.mrf.mxu0
        %v599 = vadd.f32 %v379, %v598
        %600 = vmatmul.f32.gmra.mxu0 %v325
        %v601 = vpop.f32.mrf.mxu0
        %v602 = vadd.f32 %v379, %v601
        %603 = vmatmul.f32.gmra.mxu0 %v326
        %v604 = vpop.f32.mrf.mxu0
        %v605 = vadd.f32 %v379, %v604
        %606 = vmatmul.f32.gmra.mxu0 %v327
        %v607 = vpop.f32.mrf.mxu0
        %v608 = vadd.f32 %v379, %v607
        %609 = vdwg.mxu0
        %610 = vmatpush.msra.mxu0 %v375
        %611 = vmatpush.msra.mxu0 %v372
        %612 = vmatpush.msra.mxu0 %v369
        %613 = vmatpush.msra.mxu0 %v366
        %614 = vmatpush.msra.mxu0 %v363
        %615 = vmatpush.msra.mxu0 %v360
        %616 = vmatpush.msra.mxu0 %v357
        %617 = vmatpush.msra.mxu0 %v354
        %618 = vmatpush.msra.mxu0 %v351
        %619 = vmatpush.msra.mxu0 %v348
        %620 = vmatpush.msra.mxu0 %v345
        %621 = vmatpush.msra.mxu0 %v342
        %622 = vmatpush.msra.mxu0 %v339
        %623 = vmatpush.msra.mxu0 %v336
        %624 = vmatpush.msra.mxu0 %v333
        %625 = vmatpush.msra.mxu0 %v330
        %626 = vmatmul.f32.gmra.mxu0 %v296
        %v627 = vpop.f32.mrf.mxu0
        %v628 = vadd.f32 %v380, %v627
        %629 = vmatmul.f32.gmra.mxu0 %v297
        %v630 = vpop.f32.mrf.mxu0
        %v631 = vadd.f32 %v380, %v630
        %632 = vmatmul.f32.gmra.mxu0 %v298
        %v633 = vpop.f32.mrf.mxu0
        %v634 = vadd.f32 %v380, %v633
        %635 = vmatmul.f32.gmra.mxu0 %v299
        %v636 = vpop.f32.mrf.mxu0
        %v637 = vadd.f32 %v380, %v636
        %638 = vmatmul.f32.gmra.mxu0 %v300
        %v639 = vpop.f32.mrf.mxu0
        %v640 = vadd.f32 %v380, %v639
        %641 = vmatmul.f32.gmra.mxu0 %v301
        %v642 = vpop.f32.mrf.mxu0
        %v643 = vadd.f32 %v380, %v642
        %644 = vmatmul.f32.gmra.mxu0 %v302
        %v645 = vpop.f32.mrf.mxu0
        %v646 = vadd.f32 %v380, %v645
        %647 = vmatmul.f32.gmra.mxu0 %v303
        %v648 = vpop.f32.mrf.mxu0
        %v649 = vadd.f32 %v380, %v648
        %650 = vmatmul.f32.gmra.mxu0 %v304
        %v651 = vpop.f32.mrf.mxu0
        %v652 = vadd.f32 %v380, %v651
        %653 = vmatmul.f32.gmra.mxu0 %v305
        %v654 = vpop.f32.mrf.mxu0
        %v655 = vadd.f32 %v380, %v654
        %656 = vmatmul.f32.gmra.mxu0 %v306
        %v657 = vpop.f32.mrf.mxu0
        %v658 = vadd.f32 %v380, %v657
        %659 = vmatmul.f32.gmra.mxu0 %v307
        %v660 = vpop.f32.mrf.mxu0
        %v661 = vadd.f32 %v380, %v660
        %662 = vmatmul.f32.gmra.mxu0 %v308
        %v663 = vpop.f32.mrf.mxu0
        %v664 = vadd.f32 %v380, %v663
        %665 = vmatmul.f32.gmra.mxu0 %v309
        %v666 = vpop.f32.mrf.mxu0
        %v667 = vadd.f32 %v380, %v666
        %668 = vmatmul.f32.gmra.mxu0 %v310
        %v669 = vpop.f32.mrf.mxu0
        %v670 = vadd.f32 %v380, %v669
        %671 = vmatmul.f32.gmra.mxu0 %v311
        %v672 = vpop.f32.mrf.mxu0
        %v673 = vadd.f32 %v380, %v672
        %674 = vmatmul.f32.gmra.mxu0 %v312
        %v675 = vpop.f32.mrf.mxu0
        %v676 = vadd.f32 %v380, %v675
        %677 = vmatmul.f32.gmra.mxu0 %v313
        %v678 = vpop.f32.mrf.mxu0
        %v679 = vadd.f32 %v380, %v678
        %680 = vmatmul.f32.gmra.mxu0 %v314
        %v681 = vpop.f32.mrf.mxu0
        %v682 = vadd.f32 %v380, %v681
        %683 = vmatmul.f32.gmra.mxu0 %v315
        %v684 = vpop.f32.mrf.mxu0
        %v685 = vadd.f32 %v380, %v684
        %686 = vmatmul.f32.gmra.mxu0 %v316
        %v687 = vpop.f32.mrf.mxu0
        %v688 = vadd.f32 %v380, %v687
        %689 = vmatmul.f32.gmra.mxu0 %v317
        %v690 = vpop.f32.mrf.mxu0
        %v691 = vadd.f32 %v380, %v690
        %692 = vmatmul.f32.gmra.mxu0 %v318
        %v693 = vpop.f32.mrf.mxu0
        %v694 = vadd.f32 %v380, %v693
        %695 = vmatmul.f32.gmra.mxu0 %v319
        %v696 = vpop.f32.mrf.mxu0
        %v697 = vadd.f32 %v380, %v696
        %698 = vmatmul.f32.gmra.mxu0 %v320
        %v699 = vpop.f32.mrf.mxu0
        %v700 = vadd.f32 %v380, %v699
        %701 = vmatmul.f32.gmra.mxu0 %v321
        %v702 = vpop.f32.mrf.mxu0
        %v703 = vadd.f32 %v380, %v702
        %704 = vmatmul.f32.gmra.mxu0 %v322
        %v705 = vpop.f32.mrf.mxu0
        %v706 = vadd.f32 %v380, %v705
        %707 = vmatmul.f32.gmra.mxu0 %v323
        %v708 = vpop.f32.mrf.mxu0
        %v709 = vadd.f32 %v380, %v708
        %710 = vmatmul.f32.gmra.mxu0 %v324
        %v711 = vpop.f32.mrf.mxu0
        %v712 = vadd.f32 %v380, %v711
        %713 = vmatmul.f32.gmra.mxu0 %v325
        %v714 = vpop.f32.mrf.mxu0
        %v715 = vadd.f32 %v380, %v714
        %716 = vmatmul.f32.gmra.mxu0 %v326
        %v717 = vpop.f32.mrf.mxu0
        %v718 = vadd.f32 %v380, %v717
        %719 = vmatmul.f32.gmra.mxu0 %v327
        %v720 = vpop.f32.mrf.mxu0
        %v721 = vadd.f32 %v380, %v720
        %722 = vdwg.mxu0
        %v723 = vmul.f32 %v402, 0.25
        %v724 = vmul.f32 %v405, 0.25
        %v725 = vmul.f32 %v408, 0.25
        %v726 = vmul.f32 %v411, 0.25
        %v727 = vmul.f32 %v414, 0.25
        %v728 = vmul.f32 %v417, 0.25
        %v729 = vmul.f32 %v420, 0.25
        %v730 = vmul.f32 %v423, 0.25
        %v731 = vmul.f32 %v426, 0.25
        %v732 = vmul.f32 %v429, 0.25
        %v733 = vmul.f32 %v432, 0.25
        %v734 = vmul.f32 %v435, 0.25
        %v735 = vmul.f32 %v438, 0.25
        %v736 = vmul.f32 %v441, 0.25
        %v737 = vmul.f32 %v444, 0.25
        %v738 = vmul.f32 %v447, 0.25
        %v739 = vmul.f32 %v450, 0.25
        %v740 = vmul.f32 %v453, 0.25
        %v741 = vmul.f32 %v456, 0.25
        %v742 = vmul.f32 %v459, 0.25
        %v743 = vmul.f32 %v462, 0.25
        %v744 = vmul.f32 %v465, 0.25
        %v745 = vmul.f32 %v468, 0.25
        %v746 = vmul.f32 %v471, 0.25
        %v747 = vmul.f32 %v474, 0.25
        %v748 = vmul.f32 %v477, 0.25
        %v749 = vmul.f32 %v480, 0.25
        %v750 = vmul.f32 %v483, 0.25
        %v751 = vmul.f32 %v486, 0.25
        %v752 = vmul.f32 %v489, 0.25
        %v753 = vmul.f32 %v492, 0.25
        %v754 = vmul.f32 %v495, 0.25
        %787 = vrot.lane.b32.xlu0 %v723, 112
        %v788 = vpop.permute.xlu0 %787
        %789 = vrot.lane.b32.xlu0 %v724, 112
        %v790 = vpop.permute.xlu0 %789
        %791 = vrot.lane.b32.xlu0 %v725, 112
        %v792 = vpop.permute.xlu0 %791
        %793 = vrot.lane.b32.xlu0 %v726, 112
        %v794 = vpop.permute.xlu0 %793
        %795 = vrot.lane.b32.xlu0 %v727, 112
        %v796 = vpop.permute.xlu0 %795
        %797 = vrot.lane.b32.xlu0 %v728, 112
        %v798 = vpop.permute.xlu0 %797
        %799 = vrot.lane.b32.xlu0 %v729, 112
        %v800 = vpop.permute.xlu0 %799
        %801 = vrot.lane.b32.xlu0 %v730, 112
        %v802 = vpop.permute.xlu0 %801
        %803 = vrot.lane.b32.xlu0 %v731, 112
        %v804 = vpop.permute.xlu0 %803
        %805 = vrot.lane.b32.xlu0 %v732, 112
        %v806 = vpop.permute.xlu0 %805
        %807 = vrot.lane.b32.xlu0 %v733, 112
        %v808 = vpop.permute.xlu0 %807
        %809 = vrot.lane.b32.xlu0 %v734, 112
        %v810 = vpop.permute.xlu0 %809
        %811 = vrot.lane.b32.xlu0 %v735, 112
        %v812 = vpop.permute.xlu0 %811
        %813 = vrot.lane.b32.xlu0 %v736, 112
        %v814 = vpop.permute.xlu0 %813
        %815 = vrot.lane.b32.xlu0 %v737, 112
        %v816 = vpop.permute.xlu0 %815
        %817 = vrot.lane.b32.xlu0 %v738, 112
        %v818 = vpop.permute.xlu0 %817
        %819 = vrot.lane.b32.xlu0 %v739, 112
        %v820 = vpop.permute.xlu0 %819
        %821 = vrot.lane.b32.xlu0 %v740, 112
        %v822 = vpop.permute.xlu0 %821
        %823 = vrot.lane.b32.xlu0 %v741, 112
        %v824 = vpop.permute.xlu0 %823
        %825 = vrot.lane.b32.xlu0 %v742, 112
        %v826 = vpop.permute.xlu0 %825
        %827 = vrot.lane.b32.xlu0 %v743, 112
        %v828 = vpop.permute.xlu0 %827
        %829 = vrot.lane.b32.xlu0 %v744, 112
        %v830 = vpop.permute.xlu0 %829
        %831 = vrot.lane.b32.xlu0 %v745, 112
        %v832 = vpop.permute.xlu0 %831
        %833 = vrot.lane.b32.xlu0 %v746, 112
        %v834 = vpop.permute.xlu0 %833
        %835 = vrot.lane.b32.xlu0 %v747, 112
        %v836 = vpop.permute.xlu0 %835
        %837 = vrot.lane.b32.xlu0 %v748, 112
        %v838 = vpop.permute.xlu0 %837
        %839 = vrot.lane.b32.xlu0 %v749, 112
        %v840 = vpop.permute.xlu0 %839
        %841 = vrot.lane.b32.xlu0 %v750, 112
        %v842 = vpop.permute.xlu0 %841
        %843 = vrot.lane.b32.xlu0 %v751, 112
        %v844 = vpop.permute.xlu0 %843
        %845 = vrot.lane.b32.xlu0 %v752, 112
        %v846 = vpop.permute.xlu0 %845
        %847 = vrot.lane.b32.xlu0 %v753, 112
        %v848 = vpop.permute.xlu0 %847
        %849 = vrot.lane.b32.xlu0 %v754, 112
        %v850 = vpop.permute.xlu0 %849
        %851 = vrot.lane.b32.xlu0 %v723, 96
        %v852 = vpop.permute.xlu0 %851
        %853 = vrot.lane.b32.xlu0 %v724, 96
        %v854 = vpop.permute.xlu0 %853
        %855 = vrot.lane.b32.xlu0 %v725, 96
        %v856 = vpop.permute.xlu0 %855
        %857 = vrot.lane.b32.xlu0 %v726, 96
        %v858 = vpop.permute.xlu0 %857
        %859 = vrot.lane.b32.xlu0 %v727, 96
        %v860 = vpop.permute.xlu0 %859
        %861 = vrot.lane.b32.xlu0 %v728, 96
        %v862 = vpop.permute.xlu0 %861
        %863 = vrot.lane.b32.xlu0 %v729, 96
        %v864 = vpop.permute.xlu0 %863
        %865 = vrot.lane.b32.xlu0 %v730, 96
        %v866 = vpop.permute.xlu0 %865
        %867 = vrot.lane.b32.xlu0 %v731, 96
        %v868 = vpop.permute.xlu0 %867
        %869 = vrot.lane.b32.xlu0 %v732, 96
        %v870 = vpop.permute.xlu0 %869
        %871 = vrot.lane.b32.xlu0 %v733, 96
        %v872 = vpop.permute.xlu0 %871
        %873 = vrot.lane.b32.xlu0 %v734, 96
        %v874 = vpop.permute.xlu0 %873
        %875 = vrot.lane.b32.xlu0 %v735, 96
        %v876 = vpop.permute.xlu0 %875
        %877 = vrot.lane.b32.xlu0 %v736, 96
        %v878 = vpop.permute.xlu0 %877
        %879 = vrot.lane.b32.xlu0 %v737, 96
        %v880 = vpop.permute.xlu0 %879
        %881 = vrot.lane.b32.xlu0 %v738, 96
        %v882 = vpop.permute.xlu0 %881
        %883 = vrot.lane.b32.xlu0 %v739, 96
        %v884 = vpop.permute.xlu0 %883
        %885 = vrot.lane.b32.xlu0 %v740, 96
        %v886 = vpop.permute.xlu0 %885
        %887 = vrot.lane.b32.xlu0 %v741, 96
        %v888 = vpop.permute.xlu0 %887
        %889 = vrot.lane.b32.xlu0 %v742, 96
        %v890 = vpop.permute.xlu0 %889
        %891 = vrot.lane.b32.xlu0 %v743, 96
        %v892 = vpop.permute.xlu0 %891
        %893 = vrot.lane.b32.xlu0 %v744, 96
        %v894 = vpop.permute.xlu0 %893
        %895 = vrot.lane.b32.xlu0 %v745, 96
        %v896 = vpop.permute.xlu0 %895
        %897 = vrot.lane.b32.xlu0 %v746, 96
        %v898 = vpop.permute.xlu0 %897
        %899 = vrot.lane.b32.xlu0 %v747, 96
        %v900 = vpop.permute.xlu0 %899
        %901 = vrot.lane.b32.xlu0 %v748, 96
        %v902 = vpop.permute.xlu0 %901
        %903 = vrot.lane.b32.xlu0 %v749, 96
        %v904 = vpop.permute.xlu0 %903
        %905 = vrot.lane.b32.xlu0 %v750, 96
        %v906 = vpop.permute.xlu0 %905
        %907 = vrot.lane.b32.xlu0 %v751, 96
        %v908 = vpop.permute.xlu0 %907
        %909 = vrot.lane.b32.xlu0 %v752, 96
        %v910 = vpop.permute.xlu0 %909
        %911 = vrot.lane.b32.xlu0 %v753, 96
        %v912 = vpop.permute.xlu0 %911
        %913 = vrot.lane.b32.xlu0 %v754, 96
        %v914 = vpop.permute.xlu0 %913
        %915 = vrot.lane.b32.xlu0 %v723, 80
        %v916 = vpop.permute.xlu0 %915
        %917 = vrot.lane.b32.xlu0 %v724, 80
        %v918 = vpop.permute.xlu0 %917
        %919 = vrot.lane.b32.xlu0 %v725, 80
        %v920 = vpop.permute.xlu0 %919
        %921 = vrot.lane.b32.xlu0 %v726, 80
        %v922 = vpop.permute.xlu0 %921
        %923 = vrot.lane.b32.xlu0 %v727, 80
        %v924 = vpop.permute.xlu0 %923
        %925 = vrot.lane.b32.xlu0 %v728, 80
        %v926 = vpop.permute.xlu0 %925
        %927 = vrot.lane.b32.xlu0 %v729, 80
        %v928 = vpop.permute.xlu0 %927
        %929 = vrot.lane.b32.xlu0 %v730, 80
        %v930 = vpop.permute.xlu0 %929
        %931 = vrot.lane.b32.xlu0 %v731, 80
        %v932 = vpop.permute.xlu0 %931
        %933 = vrot.lane.b32.xlu0 %v732, 80
        %v934 = vpop.permute.xlu0 %933
        %935 = vrot.lane.b32.xlu0 %v733, 80
        %v936 = vpop.permute.xlu0 %935
        %937 = vrot.lane.b32.xlu0 %v734, 80
        %v938 = vpop.permute.xlu0 %937
        %939 = vrot.lane.b32.xlu0 %v735, 80
        %v940 = vpop.permute.xlu0 %939
        %941 = vrot.lane.b32.xlu0 %v736, 80
        %v942 = vpop.permute.xlu0 %941
        %943 = vrot.lane.b32.xlu0 %v737, 80
        %v944 = vpop.permute.xlu0 %943
        %945 = vrot.lane.b32.xlu0 %v738, 80
        %v946 = vpop.permute.xlu0 %945
        %947 = vrot.lane.b32.xlu0 %v739, 80
        %v948 = vpop.permute.xlu0 %947
        %949 = vrot.lane.b32.xlu0 %v740, 80
        %v950 = vpop.permute.xlu0 %949
        %951 = vrot.lane.b32.xlu0 %v741, 80
        %v952 = vpop.permute.xlu0 %951
        %953 = vrot.lane.b32.xlu0 %v742, 80
        %v954 = vpop.permute.xlu0 %953
        %955 = vrot.lane.b32.xlu0 %v743, 80
        %v956 = vpop.permute.xlu0 %955
        %957 = vrot.lane.b32.xlu0 %v744, 80
        %v958 = vpop.permute.xlu0 %957
        %959 = vrot.lane.b32.xlu0 %v745, 80
        %v960 = vpop.permute.xlu0 %959
        %961 = vrot.lane.b32.xlu0 %v746, 80
        %v962 = vpop.permute.xlu0 %961
        %963 = vrot.lane.b32.xlu0 %v747, 80
        %v964 = vpop.permute.xlu0 %963
        %965 = vrot.lane.b32.xlu0 %v748, 80
        %v966 = vpop.permute.xlu0 %965
        %967 = vrot.lane.b32.xlu0 %v749, 80
        %v968 = vpop.permute.xlu0 %967
        %969 = vrot.lane.b32.xlu0 %v750, 80
        %v970 = vpop.permute.xlu0 %969
        %971 = vrot.lane.b32.xlu0 %v751, 80
        %v972 = vpop.permute.xlu0 %971
        %973 = vrot.lane.b32.xlu0 %v752, 80
        %v974 = vpop.permute.xlu0 %973
        %975 = vrot.lane.b32.xlu0 %v753, 80
        %v976 = vpop.permute.xlu0 %975
        %977 = vrot.lane.b32.xlu0 %v754, 80
        %v978 = vpop.permute.xlu0 %977
        %979 = vrot.lane.b32.xlu0 %v723, 64
        %v980 = vpop.permute.xlu0 %979
        %981 = vrot.lane.b32.xlu0 %v724, 64
        %v982 = vpop.permute.xlu0 %981
        %983 = vrot.lane.b32.xlu0 %v725, 64
        %v984 = vpop.permute.xlu0 %983
        %985 = vrot.lane.b32.xlu0 %v726, 64
        %v986 = vpop.permute.xlu0 %985
        %987 = vrot.lane.b32.xlu0 %v727, 64
        %v988 = vpop.permute.xlu0 %987
        %989 = vrot.lane.b32.xlu0 %v728, 64
        %v990 = vpop.permute.xlu0 %989
        %991 = vrot.lane.b32.xlu0 %v729, 64
        %v992 = vpop.permute.xlu0 %991
        %993 = vrot.lane.b32.xlu0 %v730, 64
        %v994 = vpop.permute.xlu0 %993
        %995 = vrot.lane.b32.xlu0 %v731, 64
        %v996 = vpop.permute.xlu0 %995
        %997 = vrot.lane.b32.xlu0 %v732, 64
        %v998 = vpop.permute.xlu0 %997
        %999 = vrot.lane.b32.xlu0 %v733, 64
        %v1000 = vpop.permute.xlu0 %999
        %1001 = vrot.lane.b32.xlu0 %v734, 64
        %v1002 = vpop.permute.xlu0 %1001
        %1003 = vrot.lane.b32.xlu0 %v735, 64
        %v1004 = vpop.permute.xlu0 %1003
        %1005 = vrot.lane.b32.xlu0 %v736, 64
        %v1006 = vpop.permute.xlu0 %1005
        %1007 = vrot.lane.b32.xlu0 %v737, 64
        %v1008 = vpop.permute.xlu0 %1007
        %1009 = vrot.lane.b32.xlu0 %v738, 64
        %v1010 = vpop.permute.xlu0 %1009
        %1011 = vrot.lane.b32.xlu0 %v739, 64
        %v1012 = vpop.permute.xlu0 %1011
        %1013 = vrot.lane.b32.xlu0 %v740, 64
        %v1014 = vpop.permute.xlu0 %1013
        %1015 = vrot.lane.b32.xlu0 %v741, 64
        %v1016 = vpop.permute.xlu0 %1015
        %1017 = vrot.lane.b32.xlu0 %v742, 64
        %v1018 = vpop.permute.xlu0 %1017
        %1019 = vrot.lane.b32.xlu0 %v743, 64
        %v1020 = vpop.permute.xlu0 %1019
        %1021 = vrot.lane.b32.xlu0 %v744, 64
        %v1022 = vpop.permute.xlu0 %1021
        %1023 = vrot.lane.b32.xlu0 %v745, 64
        %v1024 = vpop.permute.xlu0 %1023
        %1025 = vrot.lane.b32.xlu0 %v746, 64
        %v1026 = vpop.permute.xlu0 %1025
        %1027 = vrot.lane.b32.xlu0 %v747, 64
        %v1028 = vpop.permute.xlu0 %1027
        %1029 = vrot.lane.b32.xlu0 %v748, 64
        %v1030 = vpop.permute.xlu0 %1029
        %1031 = vrot.lane.b32.xlu0 %v749, 64
        %v1032 = vpop.permute.xlu0 %1031
        %1033 = vrot.lane.b32.xlu0 %v750, 64
        %v1034 = vpop.permute.xlu0 %1033
        %1035 = vrot.lane.b32.xlu0 %v751, 64
        %v1036 = vpop.permute.xlu0 %1035
        %1037 = vrot.lane.b32.xlu0 %v752, 64
        %v1038 = vpop.permute.xlu0 %1037
        %1039 = vrot.lane.b32.xlu0 %v753, 64
        %v1040 = vpop.permute.xlu0 %1039
        %1041 = vrot.lane.b32.xlu0 %v754, 64
        %v1042 = vpop.permute.xlu0 %1041
        %1043 = vrot.lane.b32.xlu0 %v723, 48
        %v1044 = vpop.permute.xlu0 %1043
        %1045 = vrot.lane.b32.xlu0 %v724, 48
        %v1046 = vpop.permute.xlu0 %1045
        %1047 = vrot.lane.b32.xlu0 %v725, 48
        %v1048 = vpop.permute.xlu0 %1047
        %1049 = vrot.lane.b32.xlu0 %v726, 48
        %v1050 = vpop.permute.xlu0 %1049
        %1051 = vrot.lane.b32.xlu0 %v727, 48
        %v1052 = vpop.permute.xlu0 %1051
        %1053 = vrot.lane.b32.xlu0 %v728, 48
        %v1054 = vpop.permute.xlu0 %1053
        %1055 = vrot.lane.b32.xlu0 %v729, 48
        %v1056 = vpop.permute.xlu0 %1055
        %1057 = vrot.lane.b32.xlu0 %v730, 48
        %v1058 = vpop.permute.xlu0 %1057
        %1059 = vrot.lane.b32.xlu0 %v731, 48
        %v1060 = vpop.permute.xlu0 %1059
        %1061 = vrot.lane.b32.xlu0 %v732, 48
        %v1062 = vpop.permute.xlu0 %1061
        %1063 = vrot.lane.b32.xlu0 %v733, 48
        %v1064 = vpop.permute.xlu0 %1063
        %1065 = vrot.lane.b32.xlu0 %v734, 48
        %v1066 = vpop.permute.xlu0 %1065
        %1067 = vrot.lane.b32.xlu0 %v735, 48
        %v1068 = vpop.permute.xlu0 %1067
        %1069 = vrot.lane.b32.xlu0 %v736, 48
        %v1070 = vpop.permute.xlu0 %1069
        %1071 = vrot.lane.b32.xlu0 %v737, 48
        %v1072 = vpop.permute.xlu0 %1071
        %1073 = vrot.lane.b32.xlu0 %v738, 48
        %v1074 = vpop.permute.xlu0 %1073
        %1075 = vrot.lane.b32.xlu0 %v739, 48
        %v1076 = vpop.permute.xlu0 %1075
        %1077 = vrot.lane.b32.xlu0 %v740, 48
        %v1078 = vpop.permute.xlu0 %1077
        %1079 = vrot.lane.b32.xlu0 %v741, 48
        %v1080 = vpop.permute.xlu0 %1079
        %1081 = vrot.lane.b32.xlu0 %v742, 48
        %v1082 = vpop.permute.xlu0 %1081
        %1083 = vrot.lane.b32.xlu0 %v743, 48
        %v1084 = vpop.permute.xlu0 %1083
        %1085 = vrot.lane.b32.xlu0 %v744, 48
        %v1086 = vpop.permute.xlu0 %1085
        %1087 = vrot.lane.b32.xlu0 %v745, 48
        %v1088 = vpop.permute.xlu0 %1087
        %1089 = vrot.lane.b32.xlu0 %v746, 48
        %v1090 = vpop.permute.xlu0 %1089
        %1091 = vrot.lane.b32.xlu0 %v747, 48
        %v1092 = vpop.permute.xlu0 %1091
        %1093 = vrot.lane.b32.xlu0 %v748, 48
        %v1094 = vpop.permute.xlu0 %1093
        %1095 = vrot.lane.b32.xlu0 %v749, 48
        %v1096 = vpop.permute.xlu0 %1095
        %1097 = vrot.lane.b32.xlu0 %v750, 48
        %v1098 = vpop.permute.xlu0 %1097
        %1099 = vrot.lane.b32.xlu0 %v751, 48
        %v1100 = vpop.permute.xlu0 %1099
        %1101 = vrot.lane.b32.xlu0 %v752, 48
        %v1102 = vpop.permute.xlu0 %1101
        %1103 = vrot.lane.b32.xlu0 %v753, 48
        %v1104 = vpop.permute.xlu0 %1103
        %1105 = vrot.lane.b32.xlu0 %v754, 48
        %v1106 = vpop.permute.xlu0 %1105
        %1107 = vrot.lane.b32.xlu0 %v723, 32
        %v1108 = vpop.permute.xlu0 %1107
        %1109 = vrot.lane.b32.xlu0 %v724, 32
        %v1110 = vpop.permute.xlu0 %1109
        %1111 = vrot.lane.b32.xlu0 %v725, 32
        %v1112 = vpop.permute.xlu0 %1111
        %1113 = vrot.lane.b32.xlu0 %v726, 32
        %v1114 = vpop.permute.xlu0 %1113
        %1115 = vrot.lane.b32.xlu0 %v727, 32
        %v1116 = vpop.permute.xlu0 %1115
        %1117 = vrot.lane.b32.xlu0 %v728, 32
        %v1118 = vpop.permute.xlu0 %1117
        %1119 = vrot.lane.b32.xlu0 %v729, 32
        %v1120 = vpop.permute.xlu0 %1119
        %1121 = vrot.lane.b32.xlu0 %v730, 32
        %v1122 = vpop.permute.xlu0 %1121
        %1123 = vrot.lane.b32.xlu0 %v731, 32
        %v1124 = vpop.permute.xlu0 %1123
        %1125 = vrot.lane.b32.xlu0 %v732, 32
        %v1126 = vpop.permute.xlu0 %1125
        %1127 = vrot.lane.b32.xlu0 %v733, 32
        %v1128 = vpop.permute.xlu0 %1127
        %1129 = vrot.lane.b32.xlu0 %v734, 32
        %v1130 = vpop.permute.xlu0 %1129
        %1131 = vrot.lane.b32.xlu0 %v735, 32
        %v1132 = vpop.permute.xlu0 %1131
        %1133 = vrot.lane.b32.xlu0 %v736, 32
        %v1134 = vpop.permute.xlu0 %1133
        %1135 = vrot.lane.b32.xlu0 %v737, 32
        %v1136 = vpop.permute.xlu0 %1135
        %1137 = vrot.lane.b32.xlu0 %v738, 32
        %v1138 = vpop.permute.xlu0 %1137
        %1139 = vrot.lane.b32.xlu0 %v739, 32
        %v1140 = vpop.permute.xlu0 %1139
        %1141 = vrot.lane.b32.xlu0 %v740, 32
        %v1142 = vpop.permute.xlu0 %1141
        %1143 = vrot.lane.b32.xlu0 %v741, 32
        %v1144 = vpop.permute.xlu0 %1143
        %1145 = vrot.lane.b32.xlu0 %v742, 32
        %v1146 = vpop.permute.xlu0 %1145
        %1147 = vrot.lane.b32.xlu0 %v743, 32
        %v1148 = vpop.permute.xlu0 %1147
        %1149 = vrot.lane.b32.xlu0 %v744, 32
        %v1150 = vpop.permute.xlu0 %1149
        %1151 = vrot.lane.b32.xlu0 %v745, 32
        %v1152 = vpop.permute.xlu0 %1151
        %1153 = vrot.lane.b32.xlu0 %v746, 32
        %v1154 = vpop.permute.xlu0 %1153
        %1155 = vrot.lane.b32.xlu0 %v747, 32
        %v1156 = vpop.permute.xlu0 %1155
        %1157 = vrot.lane.b32.xlu0 %v748, 32
        %v1158 = vpop.permute.xlu0 %1157
        %1159 = vrot.lane.b32.xlu0 %v749, 32
        %v1160 = vpop.permute.xlu0 %1159
        %1161 = vrot.lane.b32.xlu0 %v750, 32
        %v1162 = vpop.permute.xlu0 %1161
        %1163 = vrot.lane.b32.xlu0 %v751, 32
        %v1164 = vpop.permute.xlu0 %1163
        %1165 = vrot.lane.b32.xlu0 %v752, 32
        %v1166 = vpop.permute.xlu0 %1165
        %1167 = vrot.lane.b32.xlu0 %v753, 32
        %v1168 = vpop.permute.xlu0 %1167
        %1169 = vrot.lane.b32.xlu0 %v754, 32
        %v1170 = vpop.permute.xlu0 %1169
        %1171 = vrot.lane.b32.xlu0 %v723, 16
        %v1172 = vpop.permute.xlu0 %1171
        %1173 = vrot.lane.b32.xlu0 %v724, 16
        %v1174 = vpop.permute.xlu0 %1173
        %1175 = vrot.lane.b32.xlu0 %v725, 16
        %v1176 = vpop.permute.xlu0 %1175
        %1177 = vrot.lane.b32.xlu0 %v726, 16
        %v1178 = vpop.permute.xlu0 %1177
        %1179 = vrot.lane.b32.xlu0 %v727, 16
        %v1180 = vpop.permute.xlu0 %1179
        %1181 = vrot.lane.b32.xlu0 %v728, 16
        %v1182 = vpop.permute.xlu0 %1181
        %1183 = vrot.lane.b32.xlu0 %v729, 16
        %v1184 = vpop.permute.xlu0 %1183
        %1185 = vrot.lane.b32.xlu0 %v730, 16
        %v1186 = vpop.permute.xlu0 %1185
        %1187 = vrot.lane.b32.xlu0 %v731, 16
        %v1188 = vpop.permute.xlu0 %1187
        %1189 = vrot.lane.b32.xlu0 %v732, 16
        %v1190 = vpop.permute.xlu0 %1189
        %1191 = vrot.lane.b32.xlu0 %v733, 16
        %v1192 = vpop.permute.xlu0 %1191
        %1193 = vrot.lane.b32.xlu0 %v734, 16
        %v1194 = vpop.permute.xlu0 %1193
        %1195 = vrot.lane.b32.xlu0 %v735, 16
        %v1196 = vpop.permute.xlu0 %1195
        %1197 = vrot.lane.b32.xlu0 %v736, 16
        %v1198 = vpop.permute.xlu0 %1197
        %1199 = vrot.lane.b32.xlu0 %v737, 16
        %v1200 = vpop.permute.xlu0 %1199
        %1201 = vrot.lane.b32.xlu0 %v738, 16
        %v1202 = vpop.permute.xlu0 %1201
        %1203 = vrot.lane.b32.xlu0 %v739, 16
        %v1204 = vpop.permute.xlu0 %1203
        %1205 = vrot.lane.b32.xlu0 %v740, 16
        %v1206 = vpop.permute.xlu0 %1205
        %1207 = vrot.lane.b32.xlu0 %v741, 16
        %v1208 = vpop.permute.xlu0 %1207
        %1209 = vrot.lane.b32.xlu0 %v742, 16
        %v1210 = vpop.permute.xlu0 %1209
        %1211 = vrot.lane.b32.xlu0 %v743, 16
        %v1212 = vpop.permute.xlu0 %1211
        %1213 = vrot.lane.b32.xlu0 %v744, 16
        %v1214 = vpop.permute.xlu0 %1213
        %1215 = vrot.lane.b32.xlu0 %v745, 16
        %v1216 = vpop.permute.xlu0 %1215
        %1217 = vrot.lane.b32.xlu0 %v746, 16
        %v1218 = vpop.permute.xlu0 %1217
        %1219 = vrot.lane.b32.xlu0 %v747, 16
        %v1220 = vpop.permute.xlu0 %1219
        %1221 = vrot.lane.b32.xlu0 %v748, 16
        %v1222 = vpop.permute.xlu0 %1221
        %1223 = vrot.lane.b32.xlu0 %v749, 16
        %v1224 = vpop.permute.xlu0 %1223
        %1225 = vrot.lane.b32.xlu0 %v750, 16
        %v1226 = vpop.permute.xlu0 %1225
        %1227 = vrot.lane.b32.xlu0 %v751, 16
        %v1228 = vpop.permute.xlu0 %1227
        %1229 = vrot.lane.b32.xlu0 %v752, 16
        %v1230 = vpop.permute.xlu0 %1229
        %1231 = vrot.lane.b32.xlu0 %v753, 16
        %v1232 = vpop.permute.xlu0 %1231
        %1233 = vrot.lane.b32.xlu0 %v754, 16
        %v1234 = vpop.permute.xlu0 %1233
        %1267 = vrot.lane.b32.xlu0 %v515, 112
        %v1268 = vpop.permute.xlu0 %1267
        %1269 = vrot.lane.b32.xlu0 %v518, 112
        %v1270 = vpop.permute.xlu0 %1269
        %1271 = vrot.lane.b32.xlu0 %v521, 112
        %v1272 = vpop.permute.xlu0 %1271
        %1273 = vrot.lane.b32.xlu0 %v524, 112
        %v1274 = vpop.permute.xlu0 %1273
        %1275 = vrot.lane.b32.xlu0 %v527, 112
        %v1276 = vpop.permute.xlu0 %1275
        %1277 = vrot.lane.b32.xlu0 %v530, 112
        %v1278 = vpop.permute.xlu0 %1277
        %1279 = vrot.lane.b32.xlu0 %v533, 112
        %v1280 = vpop.permute.xlu0 %1279
        %1281 = vrot.lane.b32.xlu0 %v536, 112
        %v1282 = vpop.permute.xlu0 %1281
        %1283 = vrot.lane.b32.xlu0 %v539, 112
        %v1284 = vpop.permute.xlu0 %1283
        %1285 = vrot.lane.b32.xlu0 %v542, 112
        %v1286 = vpop.permute.xlu0 %1285
        %1287 = vrot.lane.b32.xlu0 %v545, 112
        %v1288 = vpop.permute.xlu0 %1287
        %1289 = vrot.lane.b32.xlu0 %v548, 112
        %v1290 = vpop.permute.xlu0 %1289
        %1291 = vrot.lane.b32.xlu0 %v551, 112
        %v1292 = vpop.permute.xlu0 %1291
        %1293 = vrot.lane.b32.xlu0 %v554, 112
        %v1294 = vpop.permute.xlu0 %1293
        %1295 = vrot.lane.b32.xlu0 %v557, 112
        %v1296 = vpop.permute.xlu0 %1295
        %1297 = vrot.lane.b32.xlu0 %v560, 112
        %v1298 = vpop.permute.xlu0 %1297
        %1299 = vrot.lane.b32.xlu0 %v563, 112
        %v1300 = vpop.permute.xlu0 %1299
        %1301 = vrot.lane.b32.xlu0 %v566, 112
        %v1302 = vpop.permute.xlu0 %1301
        %1303 = vrot.lane.b32.xlu0 %v569, 112
        %v1304 = vpop.permute.xlu0 %1303
        %1305 = vrot.lane.b32.xlu0 %v572, 112
        %v1306 = vpop.permute.xlu0 %1305
        %1307 = vrot.lane.b32.xlu0 %v575, 112
        %v1308 = vpop.permute.xlu0 %1307
        %1309 = vrot.lane.b32.xlu0 %v578, 112
        %v1310 = vpop.permute.xlu0 %1309
        %1311 = vrot.lane.b32.xlu0 %v581, 112
        %v1312 = vpop.permute.xlu0 %1311
        %1313 = vrot.lane.b32.xlu0 %v584, 112
        %v1314 = vpop.permute.xlu0 %1313
        %1315 = vrot.lane.b32.xlu0 %v587, 112
        %v1316 = vpop.permute.xlu0 %1315
        %1317 = vrot.lane.b32.xlu0 %v590, 112
        %v1318 = vpop.permute.xlu0 %1317
        %1319 = vrot.lane.b32.xlu0 %v593, 112
        %v1320 = vpop.permute.xlu0 %1319
        %1321 = vrot.lane.b32.xlu0 %v596, 112
        %v1322 = vpop.permute.xlu0 %1321
        %1323 = vrot.lane.b32.xlu0 %v599, 112
        %v1324 = vpop.permute.xlu0 %1323
        %1325 = vrot.lane.b32.xlu0 %v602, 112
        %v1326 = vpop.permute.xlu0 %1325
        %1327 = vrot.lane.b32.xlu0 %v605, 112
        %v1328 = vpop.permute.xlu0 %1327
        %1329 = vrot.lane.b32.xlu0 %v608, 112
        %v1330 = vpop.permute.xlu0 %1329
        %1331 = vrot.lane.b32.xlu0 %v515, 96
        %v1332 = vpop.permute.xlu0 %1331
        %1333 = vrot.lane.b32.xlu0 %v518, 96
        %v1334 = vpop.permute.xlu0 %1333
        %1335 = vrot.lane.b32.xlu0 %v521, 96
        %v1336 = vpop.permute.xlu0 %1335
        %1337 = vrot.lane.b32.xlu0 %v524, 96
        %v1338 = vpop.permute.xlu0 %1337
        %1339 = vrot.lane.b32.xlu0 %v527, 96
        %v1340 = vpop.permute.xlu0 %1339
        %1341 = vrot.lane.b32.xlu0 %v530, 96
        %v1342 = vpop.permute.xlu0 %1341
        %1343 = vrot.lane.b32.xlu0 %v533, 96
        %v1344 = vpop.permute.xlu0 %1343
        %1345 = vrot.lane.b32.xlu0 %v536, 96
        %v1346 = vpop.permute.xlu0 %1345
        %1347 = vrot.lane.b32.xlu0 %v539, 96
        %v1348 = vpop.permute.xlu0 %1347
        %1349 = vrot.lane.b32.xlu0 %v542, 96
        %v1350 = vpop.permute.xlu0 %1349
        %1351 = vrot.lane.b32.xlu0 %v545, 96
        %v1352 = vpop.permute.xlu0 %1351
        %1353 = vrot.lane.b32.xlu0 %v548, 96
        %v1354 = vpop.permute.xlu0 %1353
        %1355 = vrot.lane.b32.xlu0 %v551, 96
        %v1356 = vpop.permute.xlu0 %1355
        %1357 = vrot.lane.b32.xlu0 %v554, 96
        %v1358 = vpop.permute.xlu0 %1357
        %1359 = vrot.lane.b32.xlu0 %v557, 96
        %v1360 = vpop.permute.xlu0 %1359
        %1361 = vrot.lane.b32.xlu0 %v560, 96
        %v1362 = vpop.permute.xlu0 %1361
        %1363 = vrot.lane.b32.xlu0 %v563, 96
        %v1364 = vpop.permute.xlu0 %1363
        %1365 = vrot.lane.b32.xlu0 %v566, 96
        %v1366 = vpop.permute.xlu0 %1365
        %1367 = vrot.lane.b32.xlu0 %v569, 96
        %v1368 = vpop.permute.xlu0 %1367
        %1369 = vrot.lane.b32.xlu0 %v572, 96
        %v1370 = vpop.permute.xlu0 %1369
        %1371 = vrot.lane.b32.xlu0 %v575, 96
        %v1372 = vpop.permute.xlu0 %1371
        %1373 = vrot.lane.b32.xlu0 %v578, 96
        %v1374 = vpop.permute.xlu0 %1373
        %1375 = vrot.lane.b32.xlu0 %v581, 96
        %v1376 = vpop.permute.xlu0 %1375
        %1377 = vrot.lane.b32.xlu0 %v584, 96
        %v1378 = vpop.permute.xlu0 %1377
        %1379 = vrot.lane.b32.xlu0 %v587, 96
        %v1380 = vpop.permute.xlu0 %1379
        %1381 = vrot.lane.b32.xlu0 %v590, 96
        %v1382 = vpop.permute.xlu0 %1381
        %1383 = vrot.lane.b32.xlu0 %v593, 96
        %v1384 = vpop.permute.xlu0 %1383
        %1385 = vrot.lane.b32.xlu0 %v596, 96
        %v1386 = vpop.permute.xlu0 %1385
        %1387 = vrot.lane.b32.xlu0 %v599, 96
        %v1388 = vpop.permute.xlu0 %1387
        %1389 = vrot.lane.b32.xlu0 %v602, 96
        %v1390 = vpop.permute.xlu0 %1389
        %1391 = vrot.lane.b32.xlu0 %v605, 96
        %v1392 = vpop.permute.xlu0 %1391
        %1393 = vrot.lane.b32.xlu0 %v608, 96
        %v1394 = vpop.permute.xlu0 %1393
        %1395 = vrot.lane.b32.xlu0 %v515, 80
        %v1396 = vpop.permute.xlu0 %1395
        %1397 = vrot.lane.b32.xlu0 %v518, 80
        %v1398 = vpop.permute.xlu0 %1397
        %1399 = vrot.lane.b32.xlu0 %v521, 80
        %v1400 = vpop.permute.xlu0 %1399
        %1401 = vrot.lane.b32.xlu0 %v524, 80
        %v1402 = vpop.permute.xlu0 %1401
        %1403 = vrot.lane.b32.xlu0 %v527, 80
        %v1404 = vpop.permute.xlu0 %1403
        %1405 = vrot.lane.b32.xlu0 %v530, 80
        %v1406 = vpop.permute.xlu0 %1405
        %1407 = vrot.lane.b32.xlu0 %v533, 80
        %v1408 = vpop.permute.xlu0 %1407
        %1409 = vrot.lane.b32.xlu0 %v536, 80
        %v1410 = vpop.permute.xlu0 %1409
        %1411 = vrot.lane.b32.xlu0 %v539, 80
        %v1412 = vpop.permute.xlu0 %1411
        %1413 = vrot.lane.b32.xlu0 %v542, 80
        %v1414 = vpop.permute.xlu0 %1413
        %1415 = vrot.lane.b32.xlu0 %v545, 80
        %v1416 = vpop.permute.xlu0 %1415
        %1417 = vrot.lane.b32.xlu0 %v548, 80
        %v1418 = vpop.permute.xlu0 %1417
        %1419 = vrot.lane.b32.xlu0 %v551, 80
        %v1420 = vpop.permute.xlu0 %1419
        %1421 = vrot.lane.b32.xlu0 %v554, 80
        %v1422 = vpop.permute.xlu0 %1421
        %1423 = vrot.lane.b32.xlu0 %v557, 80
        %v1424 = vpop.permute.xlu0 %1423
        %1425 = vrot.lane.b32.xlu0 %v560, 80
        %v1426 = vpop.permute.xlu0 %1425
        %1427 = vrot.lane.b32.xlu0 %v563, 80
        %v1428 = vpop.permute.xlu0 %1427
        %1429 = vrot.lane.b32.xlu0 %v566, 80
        %v1430 = vpop.permute.xlu0 %1429
        %1431 = vrot.lane.b32.xlu0 %v569, 80
        %v1432 = vpop.permute.xlu0 %1431
        %1433 = vrot.lane.b32.xlu0 %v572, 80
        %v1434 = vpop.permute.xlu0 %1433
        %1435 = vrot.lane.b32.xlu0 %v575, 80
        %v1436 = vpop.permute.xlu0 %1435
        %1437 = vrot.lane.b32.xlu0 %v578, 80
        %v1438 = vpop.permute.xlu0 %1437
        %1439 = vrot.lane.b32.xlu0 %v581, 80
        %v1440 = vpop.permute.xlu0 %1439
        %1441 = vrot.lane.b32.xlu0 %v584, 80
        %v1442 = vpop.permute.xlu0 %1441
        %1443 = vrot.lane.b32.xlu0 %v587, 80
        %v1444 = vpop.permute.xlu0 %1443
        %1445 = vrot.lane.b32.xlu0 %v590, 80
        %v1446 = vpop.permute.xlu0 %1445
        %1447 = vrot.lane.b32.xlu0 %v593, 80
        %v1448 = vpop.permute.xlu0 %1447
        %1449 = vrot.lane.b32.xlu0 %v596, 80
        %v1450 = vpop.permute.xlu0 %1449
        %1451 = vrot.lane.b32.xlu0 %v599, 80
        %v1452 = vpop.permute.xlu0 %1451
        %1453 = vrot.lane.b32.xlu0 %v602, 80
        %v1454 = vpop.permute.xlu0 %1453
        %1455 = vrot.lane.b32.xlu0 %v605, 80
        %v1456 = vpop.permute.xlu0 %1455
        %1457 = vrot.lane.b32.xlu0 %v608, 80
        %v1458 = vpop.permute.xlu0 %1457
        %1459 = vrot.lane.b32.xlu0 %v515, 64
        %v1460 = vpop.permute.xlu0 %1459
        %1461 = vrot.lane.b32.xlu0 %v518, 64
        %v1462 = vpop.permute.xlu0 %1461
        %1463 = vrot.lane.b32.xlu0 %v521, 64
        %v1464 = vpop.permute.xlu0 %1463
        %1465 = vrot.lane.b32.xlu0 %v524, 64
        %v1466 = vpop.permute.xlu0 %1465
        %1467 = vrot.lane.b32.xlu0 %v527, 64
        %v1468 = vpop.permute.xlu0 %1467
        %1469 = vrot.lane.b32.xlu0 %v530, 64
        %v1470 = vpop.permute.xlu0 %1469
        %1471 = vrot.lane.b32.xlu0 %v533, 64
        %v1472 = vpop.permute.xlu0 %1471
        %1473 = vrot.lane.b32.xlu0 %v536, 64
        %v1474 = vpop.permute.xlu0 %1473
        %1475 = vrot.lane.b32.xlu0 %v539, 64
        %v1476 = vpop.permute.xlu0 %1475
        %1477 = vrot.lane.b32.xlu0 %v542, 64
        %v1478 = vpop.permute.xlu0 %1477
        %1479 = vrot.lane.b32.xlu0 %v545, 64
        %v1480 = vpop.permute.xlu0 %1479
        %1481 = vrot.lane.b32.xlu0 %v548, 64
        %v1482 = vpop.permute.xlu0 %1481
        %1483 = vrot.lane.b32.xlu0 %v551, 64
        %v1484 = vpop.permute.xlu0 %1483
        %1485 = vrot.lane.b32.xlu0 %v554, 64
        %v1486 = vpop.permute.xlu0 %1485
        %1487 = vrot.lane.b32.xlu0 %v557, 64
        %v1488 = vpop.permute.xlu0 %1487
        %1489 = vrot.lane.b32.xlu0 %v560, 64
        %v1490 = vpop.permute.xlu0 %1489
        %1491 = vrot.lane.b32.xlu0 %v563, 64
        %v1492 = vpop.permute.xlu0 %1491
        %1493 = vrot.lane.b32.xlu0 %v566, 64
        %v1494 = vpop.permute.xlu0 %1493
        %1495 = vrot.lane.b32.xlu0 %v569, 64
        %v1496 = vpop.permute.xlu0 %1495
        %1497 = vrot.lane.b32.xlu0 %v572, 64
        %v1498 = vpop.permute.xlu0 %1497
        %1499 = vrot.lane.b32.xlu0 %v575, 64
        %v1500 = vpop.permute.xlu0 %1499
        %1501 = vrot.lane.b32.xlu0 %v578, 64
        %v1502 = vpop.permute.xlu0 %1501
        %1503 = vrot.lane.b32.xlu0 %v581, 64
        %v1504 = vpop.permute.xlu0 %1503
        %1505 = vrot.lane.b32.xlu0 %v584, 64
        %v1506 = vpop.permute.xlu0 %1505
        %1507 = vrot.lane.b32.xlu0 %v587, 64
        %v1508 = vpop.permute.xlu0 %1507
        %1509 = vrot.lane.b32.xlu0 %v590, 64
        %v1510 = vpop.permute.xlu0 %1509
        %1511 = vrot.lane.b32.xlu0 %v593, 64
        %v1512 = vpop.permute.xlu0 %1511
        %1513 = vrot.lane.b32.xlu0 %v596, 64
        %v1514 = vpop.permute.xlu0 %1513
        %1515 = vrot.lane.b32.xlu0 %v599, 64
        %v1516 = vpop.permute.xlu0 %1515
        %1517 = vrot.lane.b32.xlu0 %v602, 64
        %v1518 = vpop.permute.xlu0 %1517
        %1519 = vrot.lane.b32.xlu0 %v605, 64
        %v1520 = vpop.permute.xlu0 %1519
        %1521 = vrot.lane.b32.xlu0 %v608, 64
        %v1522 = vpop.permute.xlu0 %1521
        %1523 = vrot.lane.b32.xlu0 %v515, 48
        %v1524 = vpop.permute.xlu0 %1523
        %1525 = vrot.lane.b32.xlu0 %v518, 48
        %v1526 = vpop.permute.xlu0 %1525
        %1527 = vrot.lane.b32.xlu0 %v521, 48
        %v1528 = vpop.permute.xlu0 %1527
        %1529 = vrot.lane.b32.xlu0 %v524, 48
        %v1530 = vpop.permute.xlu0 %1529
        %1531 = vrot.lane.b32.xlu0 %v527, 48
        %v1532 = vpop.permute.xlu0 %1531
        %1533 = vrot.lane.b32.xlu0 %v530, 48
        %v1534 = vpop.permute.xlu0 %1533
        %1535 = vrot.lane.b32.xlu0 %v533, 48
        %v1536 = vpop.permute.xlu0 %1535
        %1537 = vrot.lane.b32.xlu0 %v536, 48
        %v1538 = vpop.permute.xlu0 %1537
        %1539 = vrot.lane.b32.xlu0 %v539, 48
        %v1540 = vpop.permute.xlu0 %1539
        %1541 = vrot.lane.b32.xlu0 %v542, 48
        %v1542 = vpop.permute.xlu0 %1541
        %1543 = vrot.lane.b32.xlu0 %v545, 48
        %v1544 = vpop.permute.xlu0 %1543
        %1545 = vrot.lane.b32.xlu0 %v548, 48
        %v1546 = vpop.permute.xlu0 %1545
        %1547 = vrot.lane.b32.xlu0 %v551, 48
        %v1548 = vpop.permute.xlu0 %1547
        %1549 = vrot.lane.b32.xlu0 %v554, 48
        %v1550 = vpop.permute.xlu0 %1549
        %1551 = vrot.lane.b32.xlu0 %v557, 48
        %v1552 = vpop.permute.xlu0 %1551
        %1553 = vrot.lane.b32.xlu0 %v560, 48
        %v1554 = vpop.permute.xlu0 %1553
        %1555 = vrot.lane.b32.xlu0 %v563, 48
        %v1556 = vpop.permute.xlu0 %1555
        %1557 = vrot.lane.b32.xlu0 %v566, 48
        %v1558 = vpop.permute.xlu0 %1557
        %1559 = vrot.lane.b32.xlu0 %v569, 48
        %v1560 = vpop.permute.xlu0 %1559
        %1561 = vrot.lane.b32.xlu0 %v572, 48
        %v1562 = vpop.permute.xlu0 %1561
        %1563 = vrot.lane.b32.xlu0 %v575, 48
        %v1564 = vpop.permute.xlu0 %1563
        %1565 = vrot.lane.b32.xlu0 %v578, 48
        %v1566 = vpop.permute.xlu0 %1565
        %1567 = vrot.lane.b32.xlu0 %v581, 48
        %v1568 = vpop.permute.xlu0 %1567
        %1569 = vrot.lane.b32.xlu0 %v584, 48
        %v1570 = vpop.permute.xlu0 %1569
        %1571 = vrot.lane.b32.xlu0 %v587, 48
        %v1572 = vpop.permute.xlu0 %1571
        %1573 = vrot.lane.b32.xlu0 %v590, 48
        %v1574 = vpop.permute.xlu0 %1573
        %1575 = vrot.lane.b32.xlu0 %v593, 48
        %v1576 = vpop.permute.xlu0 %1575
        %1577 = vrot.lane.b32.xlu0 %v596, 48
        %v1578 = vpop.permute.xlu0 %1577
        %1579 = vrot.lane.b32.xlu0 %v599, 48
        %v1580 = vpop.permute.xlu0 %1579
        %1581 = vrot.lane.b32.xlu0 %v602, 48
        %v1582 = vpop.permute.xlu0 %1581
        %1583 = vrot.lane.b32.xlu0 %v605, 48
        %v1584 = vpop.permute.xlu0 %1583
        %1585 = vrot.lane.b32.xlu0 %v608, 48
        %v1586 = vpop.permute.xlu0 %1585
        %1587 = vrot.lane.b32.xlu0 %v515, 32
        %v1588 = vpop.permute.xlu0 %1587
        %1589 = vrot.lane.b32.xlu0 %v518, 32
        %v1590 = vpop.permute.xlu0 %1589
        %1591 = vrot.lane.b32.xlu0 %v521, 32
        %v1592 = vpop.permute.xlu0 %1591
        %1593 = vrot.lane.b32.xlu0 %v524, 32
        %v1594 = vpop.permute.xlu0 %1593
        %1595 = vrot.lane.b32.xlu0 %v527, 32
        %v1596 = vpop.permute.xlu0 %1595
        %1597 = vrot.lane.b32.xlu0 %v530, 32
        %v1598 = vpop.permute.xlu0 %1597
        %1599 = vrot.lane.b32.xlu0 %v533, 32
        %v1600 = vpop.permute.xlu0 %1599
        %1601 = vrot.lane.b32.xlu0 %v536, 32
        %v1602 = vpop.permute.xlu0 %1601
        %1603 = vrot.lane.b32.xlu0 %v539, 32
        %v1604 = vpop.permute.xlu0 %1603
        %1605 = vrot.lane.b32.xlu0 %v542, 32
        %v1606 = vpop.permute.xlu0 %1605
        %1607 = vrot.lane.b32.xlu0 %v545, 32
        %v1608 = vpop.permute.xlu0 %1607
        %1609 = vrot.lane.b32.xlu0 %v548, 32
        %v1610 = vpop.permute.xlu0 %1609
        %1611 = vrot.lane.b32.xlu0 %v551, 32
        %v1612 = vpop.permute.xlu0 %1611
        %1613 = vrot.lane.b32.xlu0 %v554, 32
        %v1614 = vpop.permute.xlu0 %1613
        %1615 = vrot.lane.b32.xlu0 %v557, 32
        %v1616 = vpop.permute.xlu0 %1615
        %1617 = vrot.lane.b32.xlu0 %v560, 32
        %v1618 = vpop.permute.xlu0 %1617
        %1619 = vrot.lane.b32.xlu0 %v563, 32
        %v1620 = vpop.permute.xlu0 %1619
        %1621 = vrot.lane.b32.xlu0 %v566, 32
        %v1622 = vpop.permute.xlu0 %1621
        %1623 = vrot.lane.b32.xlu0 %v569, 32
        %v1624 = vpop.permute.xlu0 %1623
        %1625 = vrot.lane.b32.xlu0 %v572, 32
        %v1626 = vpop.permute.xlu0 %1625
        %1627 = vrot.lane.b32.xlu0 %v575, 32
        %v1628 = vpop.permute.xlu0 %1627
        %1629 = vrot.lane.b32.xlu0 %v578, 32
        %v1630 = vpop.permute.xlu0 %1629
        %1631 = vrot.lane.b32.xlu0 %v581, 32
        %v1632 = vpop.permute.xlu0 %1631
        %1633 = vrot.lane.b32.xlu0 %v584, 32
        %v1634 = vpop.permute.xlu0 %1633
        %1635 = vrot.lane.b32.xlu0 %v587, 32
        %v1636 = vpop.permute.xlu0 %1635
        %1637 = vrot.lane.b32.xlu0 %v590, 32
        %v1638 = vpop.permute.xlu0 %1637
        %1639 = vrot.lane.b32.xlu0 %v593, 32
        %v1640 = vpop.permute.xlu0 %1639
        %1641 = vrot.lane.b32.xlu0 %v596, 32
        %v1642 = vpop.permute.xlu0 %1641
        %1643 = vrot.lane.b32.xlu0 %v599, 32
        %v1644 = vpop.permute.xlu0 %1643
        %1645 = vrot.lane.b32.xlu0 %v602, 32
        %v1646 = vpop.permute.xlu0 %1645
        %1647 = vrot.lane.b32.xlu0 %v605, 32
        %v1648 = vpop.permute.xlu0 %1647
        %1649 = vrot.lane.b32.xlu0 %v608, 32
        %v1650 = vpop.permute.xlu0 %1649
        %1651 = vrot.lane.b32.xlu0 %v515, 16
        %v1652 = vpop.permute.xlu0 %1651
        %1653 = vrot.lane.b32.xlu0 %v518, 16
        %v1654 = vpop.permute.xlu0 %1653
        %1655 = vrot.lane.b32.xlu0 %v521, 16
        %v1656 = vpop.permute.xlu0 %1655
        %1657 = vrot.lane.b32.xlu0 %v524, 16
        %v1658 = vpop.permute.xlu0 %1657
        %1659 = vrot.lane.b32.xlu0 %v527, 16
        %v1660 = vpop.permute.xlu0 %1659
        %1661 = vrot.lane.b32.xlu0 %v530, 16
        %v1662 = vpop.permute.xlu0 %1661
        %1663 = vrot.lane.b32.xlu0 %v533, 16
        %v1664 = vpop.permute.xlu0 %1663
        %1665 = vrot.lane.b32.xlu0 %v536, 16
        %v1666 = vpop.permute.xlu0 %1665
        %1667 = vrot.lane.b32.xlu0 %v539, 16
        %v1668 = vpop.permute.xlu0 %1667
        %1669 = vrot.lane.b32.xlu0 %v542, 16
        %v1670 = vpop.permute.xlu0 %1669
        %1671 = vrot.lane.b32.xlu0 %v545, 16
        %v1672 = vpop.permute.xlu0 %1671
        %1673 = vrot.lane.b32.xlu0 %v548, 16
        %v1674 = vpop.permute.xlu0 %1673
        %1675 = vrot.lane.b32.xlu0 %v551, 16
        %v1676 = vpop.permute.xlu0 %1675
        %1677 = vrot.lane.b32.xlu0 %v554, 16
        %v1678 = vpop.permute.xlu0 %1677
        %1679 = vrot.lane.b32.xlu0 %v557, 16
        %v1680 = vpop.permute.xlu0 %1679
        %1681 = vrot.lane.b32.xlu0 %v560, 16
        %v1682 = vpop.permute.xlu0 %1681
        %1683 = vrot.lane.b32.xlu0 %v563, 16
        %v1684 = vpop.permute.xlu0 %1683
        %1685 = vrot.lane.b32.xlu0 %v566, 16
        %v1686 = vpop.permute.xlu0 %1685
        %1687 = vrot.lane.b32.xlu0 %v569, 16
        %v1688 = vpop.permute.xlu0 %1687
        %1689 = vrot.lane.b32.xlu0 %v572, 16
        %v1690 = vpop.permute.xlu0 %1689
        %1691 = vrot.lane.b32.xlu0 %v575, 16
        %v1692 = vpop.permute.xlu0 %1691
        %1693 = vrot.lane.b32.xlu0 %v578, 16
        %v1694 = vpop.permute.xlu0 %1693
        %1695 = vrot.lane.b32.xlu0 %v581, 16
        %v1696 = vpop.permute.xlu0 %1695
        %1697 = vrot.lane.b32.xlu0 %v584, 16
        %v1698 = vpop.permute.xlu0 %1697
        %1699 = vrot.lane.b32.xlu0 %v587, 16
        %v1700 = vpop.permute.xlu0 %1699
        %1701 = vrot.lane.b32.xlu0 %v590, 16
        %v1702 = vpop.permute.xlu0 %1701
        %1703 = vrot.lane.b32.xlu0 %v593, 16
        %v1704 = vpop.permute.xlu0 %1703
        %1705 = vrot.lane.b32.xlu0 %v596, 16
        %v1706 = vpop.permute.xlu0 %1705
        %1707 = vrot.lane.b32.xlu0 %v599, 16
        %v1708 = vpop.permute.xlu0 %1707
        %1709 = vrot.lane.b32.xlu0 %v602, 16
        %v1710 = vpop.permute.xlu0 %1709
        %1711 = vrot.lane.b32.xlu0 %v605, 16
        %v1712 = vpop.permute.xlu0 %1711
        %1713 = vrot.lane.b32.xlu0 %v608, 16
        %v1714 = vpop.permute.xlu0 %1713
        %1747 = vrot.lane.b32.xlu0 %v628, 112
        %v1748 = vpop.permute.xlu0 %1747
        %1749 = vrot.lane.b32.xlu0 %v631, 112
        %v1750 = vpop.permute.xlu0 %1749
        %1751 = vrot.lane.b32.xlu0 %v634, 112
        %v1752 = vpop.permute.xlu0 %1751
        %1753 = vrot.lane.b32.xlu0 %v637, 112
        %v1754 = vpop.permute.xlu0 %1753
        %1755 = vrot.lane.b32.xlu0 %v640, 112
        %v1756 = vpop.permute.xlu0 %1755
        %1757 = vrot.lane.b32.xlu0 %v643, 112
        %v1758 = vpop.permute.xlu0 %1757
        %1759 = vrot.lane.b32.xlu0 %v646, 112
        %v1760 = vpop.permute.xlu0 %1759
        %1761 = vrot.lane.b32.xlu0 %v649, 112
        %v1762 = vpop.permute.xlu0 %1761
        %1763 = vrot.lane.b32.xlu0 %v652, 112
        %v1764 = vpop.permute.xlu0 %1763
        %1765 = vrot.lane.b32.xlu0 %v655, 112
        %v1766 = vpop.permute.xlu0 %1765
        %1767 = vrot.lane.b32.xlu0 %v658, 112
        %v1768 = vpop.permute.xlu0 %1767
        %1769 = vrot.lane.b32.xlu0 %v661, 112
        %v1770 = vpop.permute.xlu0 %1769
        %1771 = vrot.lane.b32.xlu0 %v664, 112
        %v1772 = vpop.permute.xlu0 %1771
        %1773 = vrot.lane.b32.xlu0 %v667, 112
        %v1774 = vpop.permute.xlu0 %1773
        %1775 = vrot.lane.b32.xlu0 %v670, 112
        %v1776 = vpop.permute.xlu0 %1775
        %1777 = vrot.lane.b32.xlu0 %v673, 112
        %v1778 = vpop.permute.xlu0 %1777
        %1779 = vrot.lane.b32.xlu0 %v676, 112
        %v1780 = vpop.permute.xlu0 %1779
        %1781 = vrot.lane.b32.xlu0 %v679, 112
        %v1782 = vpop.permute.xlu0 %1781
        %1783 = vrot.lane.b32.xlu0 %v682, 112
        %v1784 = vpop.permute.xlu0 %1783
        %1785 = vrot.lane.b32.xlu0 %v685, 112
        %v1786 = vpop.permute.xlu0 %1785
        %1787 = vrot.lane.b32.xlu0 %v688, 112
        %v1788 = vpop.permute.xlu0 %1787
        %1789 = vrot.lane.b32.xlu0 %v691, 112
        %v1790 = vpop.permute.xlu0 %1789
        %1791 = vrot.lane.b32.xlu0 %v694, 112
        %v1792 = vpop.permute.xlu0 %1791
        %1793 = vrot.lane.b32.xlu0 %v697, 112
        %v1794 = vpop.permute.xlu0 %1793
        %1795 = vrot.lane.b32.xlu0 %v700, 112
        %v1796 = vpop.permute.xlu0 %1795
        %1797 = vrot.lane.b32.xlu0 %v703, 112
        %v1798 = vpop.permute.xlu0 %1797
        %1799 = vrot.lane.b32.xlu0 %v706, 112
        %v1800 = vpop.permute.xlu0 %1799
        %1801 = vrot.lane.b32.xlu0 %v709, 112
        %v1802 = vpop.permute.xlu0 %1801
        %1803 = vrot.lane.b32.xlu0 %v712, 112
        %v1804 = vpop.permute.xlu0 %1803
        %1805 = vrot.lane.b32.xlu0 %v715, 112
        %v1806 = vpop.permute.xlu0 %1805
        %1807 = vrot.lane.b32.xlu0 %v718, 112
        %v1808 = vpop.permute.xlu0 %1807
        %1809 = vrot.lane.b32.xlu0 %v721, 112
        %v1810 = vpop.permute.xlu0 %1809
        %1843 = vrot.lane.b32.xlu0 %v628, 96
        %v1844 = vpop.permute.xlu0 %1843
        %1845 = vrot.lane.b32.xlu0 %v631, 96
        %v1846 = vpop.permute.xlu0 %1845
        %1847 = vrot.lane.b32.xlu0 %v634, 96
        %v1848 = vpop.permute.xlu0 %1847
        %1849 = vrot.lane.b32.xlu0 %v637, 96
        %v1850 = vpop.permute.xlu0 %1849
        %1851 = vrot.lane.b32.xlu0 %v640, 96
        %v1852 = vpop.permute.xlu0 %1851
        %1853 = vrot.lane.b32.xlu0 %v643, 96
        %v1854 = vpop.permute.xlu0 %1853
        %1855 = vrot.lane.b32.xlu0 %v646, 96
        %v1856 = vpop.permute.xlu0 %1855
        %1857 = vrot.lane.b32.xlu0 %v649, 96
        %v1858 = vpop.permute.xlu0 %1857
        %1859 = vrot.lane.b32.xlu0 %v652, 96
        %v1860 = vpop.permute.xlu0 %1859
        %1861 = vrot.lane.b32.xlu0 %v655, 96
        %v1862 = vpop.permute.xlu0 %1861
        %1863 = vrot.lane.b32.xlu0 %v658, 96
        %v1864 = vpop.permute.xlu0 %1863
        %1865 = vrot.lane.b32.xlu0 %v661, 96
        %v1866 = vpop.permute.xlu0 %1865
        %1867 = vrot.lane.b32.xlu0 %v664, 96
        %v1868 = vpop.permute.xlu0 %1867
        %1869 = vrot.lane.b32.xlu0 %v667, 96
        %v1870 = vpop.permute.xlu0 %1869
        %1871 = vrot.lane.b32.xlu0 %v670, 96
        %v1872 = vpop.permute.xlu0 %1871
        %1873 = vrot.lane.b32.xlu0 %v673, 96
        %v1874 = vpop.permute.xlu0 %1873
        %1875 = vrot.lane.b32.xlu0 %v676, 96
        %v1876 = vpop.permute.xlu0 %1875
        %1877 = vrot.lane.b32.xlu0 %v679, 96
        %v1878 = vpop.permute.xlu0 %1877
        %1879 = vrot.lane.b32.xlu0 %v682, 96
        %v1880 = vpop.permute.xlu0 %1879
        %1881 = vrot.lane.b32.xlu0 %v685, 96
        %v1882 = vpop.permute.xlu0 %1881
        %1883 = vrot.lane.b32.xlu0 %v688, 96
        %v1884 = vpop.permute.xlu0 %1883
        %1885 = vrot.lane.b32.xlu0 %v691, 96
        %v1886 = vpop.permute.xlu0 %1885
        %1887 = vrot.lane.b32.xlu0 %v694, 96
        %v1888 = vpop.permute.xlu0 %1887
        %1889 = vrot.lane.b32.xlu0 %v697, 96
        %v1890 = vpop.permute.xlu0 %1889
        %1891 = vrot.lane.b32.xlu0 %v700, 96
        %v1892 = vpop.permute.xlu0 %1891
        %1893 = vrot.lane.b32.xlu0 %v703, 96
        %v1894 = vpop.permute.xlu0 %1893
        %1895 = vrot.lane.b32.xlu0 %v706, 96
        %v1896 = vpop.permute.xlu0 %1895
        %1897 = vrot.lane.b32.xlu0 %v709, 96
        %v1898 = vpop.permute.xlu0 %1897
        %1899 = vrot.lane.b32.xlu0 %v712, 96
        %v1900 = vpop.permute.xlu0 %1899
        %1901 = vrot.lane.b32.xlu0 %v715, 96
        %v1902 = vpop.permute.xlu0 %1901
        %1903 = vrot.lane.b32.xlu0 %v718, 96
        %v1904 = vpop.permute.xlu0 %1903
        %1905 = vrot.lane.b32.xlu0 %v721, 96
        %v1906 = vpop.permute.xlu0 %1905
        %1939 = vrot.lane.b32.xlu0 %v628, 80
        %v1940 = vpop.permute.xlu0 %1939
        %1941 = vrot.lane.b32.xlu0 %v631, 80
        %v1942 = vpop.permute.xlu0 %1941
        %1943 = vrot.lane.b32.xlu0 %v634, 80
        %v1944 = vpop.permute.xlu0 %1943
        %1945 = vrot.lane.b32.xlu0 %v637, 80
        %v1946 = vpop.permute.xlu0 %1945
        %1947 = vrot.lane.b32.xlu0 %v640, 80
        %v1948 = vpop.permute.xlu0 %1947
        %1949 = vrot.lane.b32.xlu0 %v643, 80
        %v1950 = vpop.permute.xlu0 %1949
        %1951 = vrot.lane.b32.xlu0 %v646, 80
        %v1952 = vpop.permute.xlu0 %1951
        %1953 = vrot.lane.b32.xlu0 %v649, 80
        %v1954 = vpop.permute.xlu0 %1953
        %1955 = vrot.lane.b32.xlu0 %v652, 80
        %v1956 = vpop.permute.xlu0 %1955
        %1957 = vrot.lane.b32.xlu0 %v655, 80
        %v1958 = vpop.permute.xlu0 %1957
        %1959 = vrot.lane.b32.xlu0 %v658, 80
        %v1960 = vpop.permute.xlu0 %1959
        %1961 = vrot.lane.b32.xlu0 %v661, 80
        %v1962 = vpop.permute.xlu0 %1961
        %1963 = vrot.lane.b32.xlu0 %v664, 80
        %v1964 = vpop.permute.xlu0 %1963
        %1965 = vrot.lane.b32.xlu0 %v667, 80
        %v1966 = vpop.permute.xlu0 %1965
        %1967 = vrot.lane.b32.xlu0 %v670, 80
        %v1968 = vpop.permute.xlu0 %1967
        %1969 = vrot.lane.b32.xlu0 %v673, 80
        %v1970 = vpop.permute.xlu0 %1969
        %1971 = vrot.lane.b32.xlu0 %v676, 80
        %v1972 = vpop.permute.xlu0 %1971
        %1973 = vrot.lane.b32.xlu0 %v679, 80
        %v1974 = vpop.permute.xlu0 %1973
        %1975 = vrot.lane.b32.xlu0 %v682, 80
        %v1976 = vpop.permute.xlu0 %1975
        %1977 = vrot.lane.b32.xlu0 %v685, 80
        %v1978 = vpop.permute.xlu0 %1977
        %1979 = vrot.lane.b32.xlu0 %v688, 80
        %v1980 = vpop.permute.xlu0 %1979
        %1981 = vrot.lane.b32.xlu0 %v691, 80
        %v1982 = vpop.permute.xlu0 %1981
        %1983 = vrot.lane.b32.xlu0 %v694, 80
        %v1984 = vpop.permute.xlu0 %1983
        %1985 = vrot.lane.b32.xlu0 %v697, 80
        %v1986 = vpop.permute.xlu0 %1985
        %1987 = vrot.lane.b32.xlu0 %v700, 80
        %v1988 = vpop.permute.xlu0 %1987
        %1989 = vrot.lane.b32.xlu0 %v703, 80
        %v1990 = vpop.permute.xlu0 %1989
        %1991 = vrot.lane.b32.xlu0 %v706, 80
        %v1992 = vpop.permute.xlu0 %1991
        %1993 = vrot.lane.b32.xlu0 %v709, 80
        %v1994 = vpop.permute.xlu0 %1993
        %1995 = vrot.lane.b32.xlu0 %v712, 80
        %v1996 = vpop.permute.xlu0 %1995
        %1997 = vrot.lane.b32.xlu0 %v715, 80
        %v1998 = vpop.permute.xlu0 %1997
        %1999 = vrot.lane.b32.xlu0 %v718, 80
        %v2000 = vpop.permute.xlu0 %1999
        %2001 = vrot.lane.b32.xlu0 %v721, 80
        %v2002 = vpop.permute.xlu0 %2001
        %2035 = vrot.lane.b32.xlu0 %v628, 64
        %v2036 = vpop.permute.xlu0 %2035
        %2037 = vrot.lane.b32.xlu0 %v631, 64
        %v2038 = vpop.permute.xlu0 %2037
        %2039 = vrot.lane.b32.xlu0 %v634, 64
        %v2040 = vpop.permute.xlu0 %2039
        %2041 = vrot.lane.b32.xlu0 %v637, 64
        %v2042 = vpop.permute.xlu0 %2041
        %2043 = vrot.lane.b32.xlu0 %v640, 64
        %v2044 = vpop.permute.xlu0 %2043
        %2045 = vrot.lane.b32.xlu0 %v643, 64
        %v2046 = vpop.permute.xlu0 %2045
        %2047 = vrot.lane.b32.xlu0 %v646, 64
        %v2048 = vpop.permute.xlu0 %2047
        %2049 = vrot.lane.b32.xlu0 %v649, 64
        %v2050 = vpop.permute.xlu0 %2049
        %2051 = vrot.lane.b32.xlu0 %v652, 64
        %v2052 = vpop.permute.xlu0 %2051
        %2053 = vrot.lane.b32.xlu0 %v655, 64
        %v2054 = vpop.permute.xlu0 %2053
        %2055 = vrot.lane.b32.xlu0 %v658, 64
        %v2056 = vpop.permute.xlu0 %2055
        %2057 = vrot.lane.b32.xlu0 %v661, 64
        %v2058 = vpop.permute.xlu0 %2057
        %2059 = vrot.lane.b32.xlu0 %v664, 64
        %v2060 = vpop.permute.xlu0 %2059
        %2061 = vrot.lane.b32.xlu0 %v667, 64
        %v2062 = vpop.permute.xlu0 %2061
        %2063 = vrot.lane.b32.xlu0 %v670, 64
        %v2064 = vpop.permute.xlu0 %2063
        %2065 = vrot.lane.b32.xlu0 %v673, 64
        %v2066 = vpop.permute.xlu0 %2065
        %2067 = vrot.lane.b32.xlu0 %v676, 64
        %v2068 = vpop.permute.xlu0 %2067
        %2069 = vrot.lane.b32.xlu0 %v679, 64
        %v2070 = vpop.permute.xlu0 %2069
        %2071 = vrot.lane.b32.xlu0 %v682, 64
        %v2072 = vpop.permute.xlu0 %2071
        %2073 = vrot.lane.b32.xlu0 %v685, 64
        %v2074 = vpop.permute.xlu0 %2073
        %2075 = vrot.lane.b32.xlu0 %v688, 64
        %v2076 = vpop.permute.xlu0 %2075
        %2077 = vrot.lane.b32.xlu0 %v691, 64
        %v2078 = vpop.permute.xlu0 %2077
        %2079 = vrot.lane.b32.xlu0 %v694, 64
        %v2080 = vpop.permute.xlu0 %2079
        %2081 = vrot.lane.b32.xlu0 %v697, 64
        %v2082 = vpop.permute.xlu0 %2081
        %2083 = vrot.lane.b32.xlu0 %v700, 64
        %v2084 = vpop.permute.xlu0 %2083
        %2085 = vrot.lane.b32.xlu0 %v703, 64
        %v2086 = vpop.permute.xlu0 %2085
        %2087 = vrot.lane.b32.xlu0 %v706, 64
        %v2088 = vpop.permute.xlu0 %2087
        %2089 = vrot.lane.b32.xlu0 %v709, 64
        %v2090 = vpop.permute.xlu0 %2089
        %2091 = vrot.lane.b32.xlu0 %v712, 64
        %v2092 = vpop.permute.xlu0 %2091
        %2093 = vrot.lane.b32.xlu0 %v715, 64
        %v2094 = vpop.permute.xlu0 %2093
        %2095 = vrot.lane.b32.xlu0 %v718, 64
        %v2096 = vpop.permute.xlu0 %2095
        %2097 = vrot.lane.b32.xlu0 %v721, 64
        %v2098 = vpop.permute.xlu0 %2097
        %2131 = vrot.lane.b32.xlu0 %v628, 48
        %v2132 = vpop.permute.xlu0 %2131
        %2133 = vrot.lane.b32.xlu0 %v631, 48
        %v2134 = vpop.permute.xlu0 %2133
        %2135 = vrot.lane.b32.xlu0 %v634, 48
        %v2136 = vpop.permute.xlu0 %2135
        %2137 = vrot.lane.b32.xlu0 %v637, 48
        %v2138 = vpop.permute.xlu0 %2137
        %2139 = vrot.lane.b32.xlu0 %v640, 48
        %v2140 = vpop.permute.xlu0 %2139
        %2141 = vrot.lane.b32.xlu0 %v643, 48
        %v2142 = vpop.permute.xlu0 %2141
        %2143 = vrot.lane.b32.xlu0 %v646, 48
        %v2144 = vpop.permute.xlu0 %2143
        %2145 = vrot.lane.b32.xlu0 %v649, 48
        %v2146 = vpop.permute.xlu0 %2145
        %2147 = vrot.lane.b32.xlu0 %v652, 48
        %v2148 = vpop.permute.xlu0 %2147
        %2149 = vrot.lane.b32.xlu0 %v655, 48
        %v2150 = vpop.permute.xlu0 %2149
        %2151 = vrot.lane.b32.xlu0 %v658, 48
        %v2152 = vpop.permute.xlu0 %2151
        %2153 = vrot.lane.b32.xlu0 %v661, 48
        %v2154 = vpop.permute.xlu0 %2153
        %2155 = vrot.lane.b32.xlu0 %v664, 48
        %v2156 = vpop.permute.xlu0 %2155
        %2157 = vrot.lane.b32.xlu0 %v667, 48
        %v2158 = vpop.permute.xlu0 %2157
        %2159 = vrot.lane.b32.xlu0 %v670, 48
        %v2160 = vpop.permute.xlu0 %2159
        %2161 = vrot.lane.b32.xlu0 %v673, 48
        %v2162 = vpop.permute.xlu0 %2161
        %2163 = vrot.lane.b32.xlu0 %v676, 48
        %v2164 = vpop.permute.xlu0 %2163
        %2165 = vrot.lane.b32.xlu0 %v679, 48
        %v2166 = vpop.permute.xlu0 %2165
        %2167 = vrot.lane.b32.xlu0 %v682, 48
        %v2168 = vpop.permute.xlu0 %2167
        %2169 = vrot.lane.b32.xlu0 %v685, 48
        %v2170 = vpop.permute.xlu0 %2169
        %2171 = vrot.lane.b32.xlu0 %v688, 48
        %v2172 = vpop.permute.xlu0 %2171
        %2173 = vrot.lane.b32.xlu0 %v691, 48
        %v2174 = vpop.permute.xlu0 %2173
        %2175 = vrot.lane.b32.xlu0 %v694, 48
        %v2176 = vpop.permute.xlu0 %2175
        %2177 = vrot.lane.b32.xlu0 %v697, 48
        %v2178 = vpop.permute.xlu0 %2177
        %2179 = vrot.lane.b32.xlu0 %v700, 48
        %v2180 = vpop.permute.xlu0 %2179
        %2181 = vrot.lane.b32.xlu0 %v703, 48
        %v2182 = vpop.permute.xlu0 %2181
        %2183 = vrot.lane.b32.xlu0 %v706, 48
        %v2184 = vpop.permute.xlu0 %2183
        %2185 = vrot.lane.b32.xlu0 %v709, 48
        %v2186 = vpop.permute.xlu0 %2185
        %2187 = vrot.lane.b32.xlu0 %v712, 48
        %v2188 = vpop.permute.xlu0 %2187
        %2189 = vrot.lane.b32.xlu0 %v715, 48
        %v2190 = vpop.permute.xlu0 %2189
        %2191 = vrot.lane.b32.xlu0 %v718, 48
        %v2192 = vpop.permute.xlu0 %2191
        %2193 = vrot.lane.b32.xlu0 %v721, 48
        %v2194 = vpop.permute.xlu0 %2193
        %2227 = vrot.lane.b32.xlu0 %v628, 32
        %v2228 = vpop.permute.xlu0 %2227
        %2229 = vrot.lane.b32.xlu0 %v631, 32
        %v2230 = vpop.permute.xlu0 %2229
        %2231 = vrot.lane.b32.xlu0 %v634, 32
        %v2232 = vpop.permute.xlu0 %2231
        %2233 = vrot.lane.b32.xlu0 %v637, 32
        %v2234 = vpop.permute.xlu0 %2233
        %2235 = vrot.lane.b32.xlu0 %v640, 32
        %v2236 = vpop.permute.xlu0 %2235
        %2237 = vrot.lane.b32.xlu0 %v643, 32
        %v2238 = vpop.permute.xlu0 %2237
        %2239 = vrot.lane.b32.xlu0 %v646, 32
        %v2240 = vpop.permute.xlu0 %2239
        %2241 = vrot.lane.b32.xlu0 %v649, 32
        %v2242 = vpop.permute.xlu0 %2241
        %2243 = vrot.lane.b32.xlu0 %v652, 32
        %v2244 = vpop.permute.xlu0 %2243
        %2245 = vrot.lane.b32.xlu0 %v655, 32
        %v2246 = vpop.permute.xlu0 %2245
        %2247 = vrot.lane.b32.xlu0 %v658, 32
        %v2248 = vpop.permute.xlu0 %2247
        %2249 = vrot.lane.b32.xlu0 %v661, 32
        %v2250 = vpop.permute.xlu0 %2249
        %2251 = vrot.lane.b32.xlu0 %v664, 32
        %v2252 = vpop.permute.xlu0 %2251
        %2253 = vrot.lane.b32.xlu0 %v667, 32
        %v2254 = vpop.permute.xlu0 %2253
        %2255 = vrot.lane.b32.xlu0 %v670, 32
        %v2256 = vpop.permute.xlu0 %2255
        %2257 = vrot.lane.b32.xlu0 %v673, 32
        %v2258 = vpop.permute.xlu0 %2257
        %2259 = vrot.lane.b32.xlu0 %v676, 32
        %v2260 = vpop.permute.xlu0 %2259
        %2261 = vrot.lane.b32.xlu0 %v679, 32
        %v2262 = vpop.permute.xlu0 %2261
        %2263 = vrot.lane.b32.xlu0 %v682, 32
        %v2264 = vpop.permute.xlu0 %2263
        %2265 = vrot.lane.b32.xlu0 %v685, 32
        %v2266 = vpop.permute.xlu0 %2265
        %2267 = vrot.lane.b32.xlu0 %v688, 32
        %v2268 = vpop.permute.xlu0 %2267
        %2269 = vrot.lane.b32.xlu0 %v691, 32
        %v2270 = vpop.permute.xlu0 %2269
        %2271 = vrot.lane.b32.xlu0 %v694, 32
        %v2272 = vpop.permute.xlu0 %2271
        %2273 = vrot.lane.b32.xlu0 %v697, 32
        %v2274 = vpop.permute.xlu0 %2273
        %2275 = vrot.lane.b32.xlu0 %v700, 32
        %v2276 = vpop.permute.xlu0 %2275
        %2277 = vrot.lane.b32.xlu0 %v703, 32
        %v2278 = vpop.permute.xlu0 %2277
        %2279 = vrot.lane.b32.xlu0 %v706, 32
        %v2280 = vpop.permute.xlu0 %2279
        %2281 = vrot.lane.b32.xlu0 %v709, 32
        %v2282 = vpop.permute.xlu0 %2281
        %2283 = vrot.lane.b32.xlu0 %v712, 32
        %v2284 = vpop.permute.xlu0 %2283
        %2285 = vrot.lane.b32.xlu0 %v715, 32
        %v2286 = vpop.permute.xlu0 %2285
        %2287 = vrot.lane.b32.xlu0 %v718, 32
        %v2288 = vpop.permute.xlu0 %2287
        %2289 = vrot.lane.b32.xlu0 %v721, 32
        %v2290 = vpop.permute.xlu0 %2289
        %2323 = vrot.lane.b32.xlu0 %v628, 16
        %v2324 = vpop.permute.xlu0 %2323
        %2325 = vrot.lane.b32.xlu0 %v631, 16
        %v2326 = vpop.permute.xlu0 %2325
        %2327 = vrot.lane.b32.xlu0 %v634, 16
        %v2328 = vpop.permute.xlu0 %2327
        %2329 = vrot.lane.b32.xlu0 %v637, 16
        %v2330 = vpop.permute.xlu0 %2329
        %2331 = vrot.lane.b32.xlu0 %v640, 16
        %v2332 = vpop.permute.xlu0 %2331
        %2333 = vrot.lane.b32.xlu0 %v643, 16
        %v2334 = vpop.permute.xlu0 %2333
        %2335 = vrot.lane.b32.xlu0 %v646, 16
        %v2336 = vpop.permute.xlu0 %2335
        %2337 = vrot.lane.b32.xlu0 %v649, 16
        %v2338 = vpop.permute.xlu0 %2337
        %2339 = vrot.lane.b32.xlu0 %v652, 16
        %v2340 = vpop.permute.xlu0 %2339
        %2341 = vrot.lane.b32.xlu0 %v655, 16
        %v2342 = vpop.permute.xlu0 %2341
        %2343 = vrot.lane.b32.xlu0 %v658, 16
        %v2344 = vpop.permute.xlu0 %2343
        %2345 = vrot.lane.b32.xlu0 %v661, 16
        %v2346 = vpop.permute.xlu0 %2345
        %2347 = vrot.lane.b32.xlu0 %v664, 16
        %v2348 = vpop.permute.xlu0 %2347
        %2349 = vrot.lane.b32.xlu0 %v667, 16
        %v2350 = vpop.permute.xlu0 %2349
        %2351 = vrot.lane.b32.xlu0 %v670, 16
        %v2352 = vpop.permute.xlu0 %2351
        %2353 = vrot.lane.b32.xlu0 %v673, 16
        %v2354 = vpop.permute.xlu0 %2353
        %2355 = vrot.lane.b32.xlu0 %v676, 16
        %v2356 = vpop.permute.xlu0 %2355
        %2357 = vrot.lane.b32.xlu0 %v679, 16
        %v2358 = vpop.permute.xlu0 %2357
        %2359 = vrot.lane.b32.xlu0 %v682, 16
        %v2360 = vpop.permute.xlu0 %2359
        %2361 = vrot.lane.b32.xlu0 %v685, 16
        %v2362 = vpop.permute.xlu0 %2361
        %2363 = vrot.lane.b32.xlu0 %v688, 16
        %v2364 = vpop.permute.xlu0 %2363
        %2365 = vrot.lane.b32.xlu0 %v691, 16
        %v2366 = vpop.permute.xlu0 %2365
        %2367 = vrot.lane.b32.xlu0 %v694, 16
        %v2368 = vpop.permute.xlu0 %2367
        %2369 = vrot.lane.b32.xlu0 %v697, 16
        %v2370 = vpop.permute.xlu0 %2369
        %2371 = vrot.lane.b32.xlu0 %v700, 16
        %v2372 = vpop.permute.xlu0 %2371
        %2373 = vrot.lane.b32.xlu0 %v703, 16
        %v2374 = vpop.permute.xlu0 %2373
        %2375 = vrot.lane.b32.xlu0 %v706, 16
        %v2376 = vpop.permute.xlu0 %2375
        %2377 = vrot.lane.b32.xlu0 %v709, 16
        %v2378 = vpop.permute.xlu0 %2377
        %2379 = vrot.lane.b32.xlu0 %v712, 16
        %v2380 = vpop.permute.xlu0 %2379
        %2381 = vrot.lane.b32.xlu0 %v715, 16
        %v2382 = vpop.permute.xlu0 %2381
        %2383 = vrot.lane.b32.xlu0 %v718, 16
        %v2384 = vpop.permute.xlu0 %2383
        %2385 = vrot.lane.b32.xlu0 %v721, 16
        %v2386 = vpop.permute.xlu0 %2385
        %vm2419 = vcmask 130048
        %v2420 = vsel %vm2419, %v723, 0
        %v2422 = vsel %vm2419, %v724, 0
        %v2424 = vsel %vm2419, %v725, 0
        %v2426 = vsel %vm2419, %v726, 0
        %v2428 = vsel %vm2419, %v727, 0
        %v2430 = vsel %vm2419, %v728, 0
        %v2432 = vsel %vm2419, %v729, 0
        %v2434 = vsel %vm2419, %v730, 0
        %v2436 = vsel %vm2419, %v515, 0
        %v2438 = vsel %vm2419, %v518, 0
        %v2440 = vsel %vm2419, %v521, 0
        %v2442 = vsel %vm2419, %v524, 0
        %v2444 = vsel %vm2419, %v527, 0
        %v2446 = vsel %vm2419, %v530, 0
        %v2448 = vsel %vm2419, %v533, 0
        %v2450 = vsel %vm2419, %v536, 0
        %2452 = vmatpush.xpose.msra.mxu0 0.0
        %2453 = vmatpush.xpose.msra.mxu0 0.0
        %2454 = vmatpush.xpose.msra.mxu0 0.0
        %2455 = vmatpush.xpose.msra.mxu0 0.0
        %2456 = vmatpush.xpose.msra.mxu0 0.0
        %2457 = vmatpush.xpose.msra.mxu0 0.0
        %2458 = vmatpush.xpose.msra.mxu0 0.0
        %2459 = vmatpush.xpose.msra.mxu0 0.0
        %2460 = vmatpush.xpose.msra.mxu0 %v2450
        %2461 = vmatpush.xpose.msra.mxu0 %v2448
        %2462 = vmatpush.xpose.msra.mxu0 %v2446
        %2463 = vmatpush.xpose.msra.mxu0 %v2444
        %2464 = vmatpush.xpose.msra.mxu0 %v2442
        %2465 = vmatpush.xpose.msra.mxu0 %v2440
        %2466 = vmatpush.xpose.msra.mxu0 %v2438
        %2467 = vmatpush.xpose.msra.mxu0 %v2436
        %2468 = vmatmul.f32.gmra.mxu0 %v2420
        %v2469 = vpop.f32.mrf.mxu0
        %v2470 = vadd.f32 0.0, %v2469
        %2471 = vmatmul.f32.gmra.mxu0 %v2422
        %v2472 = vpop.f32.mrf.mxu0
        %v2473 = vadd.f32 0.0, %v2472
        %2474 = vmatmul.f32.gmra.mxu0 %v2424
        %v2475 = vpop.f32.mrf.mxu0
        %v2476 = vadd.f32 0.0, %v2475
        %2477 = vmatmul.f32.gmra.mxu0 %v2426
        %v2478 = vpop.f32.mrf.mxu0
        %v2479 = vadd.f32 0.0, %v2478
        %2480 = vmatmul.f32.gmra.mxu0 %v2428
        %v2481 = vpop.f32.mrf.mxu0
        %v2482 = vadd.f32 0.0, %v2481
        %2483 = vmatmul.f32.gmra.mxu0 %v2430
        %v2484 = vpop.f32.mrf.mxu0
        %v2485 = vadd.f32 0.0, %v2484
        %2486 = vmatmul.f32.gmra.mxu0 %v2432
        %v2487 = vpop.f32.mrf.mxu0
        %v2488 = vadd.f32 0.0, %v2487
        %2489 = vmatmul.f32.gmra.mxu0 %v2434
        %v2490 = vpop.f32.mrf.mxu0
        %v2491 = vadd.f32 0.0, %v2490
        %2492 = vdwg.mxu0
        %v2493 = vsel %vm2419, %v731, 0
        %v2495 = vsel %vm2419, %v732, 0
        %v2497 = vsel %vm2419, %v733, 0
        %v2499 = vsel %vm2419, %v734, 0
        %v2501 = vsel %vm2419, %v735, 0
        %v2503 = vsel %vm2419, %v736, 0
        %v2505 = vsel %vm2419, %v737, 0
        %v2507 = vsel %vm2419, %v738, 0
        %v2509 = vsel %vm2419, %v539, 0
        %v2511 = vsel %vm2419, %v542, 0
        %v2513 = vsel %vm2419, %v545, 0
        %v2515 = vsel %vm2419, %v548, 0
        %v2517 = vsel %vm2419, %v551, 0
        %v2519 = vsel %vm2419, %v554, 0
        %v2521 = vsel %vm2419, %v557, 0
        %v2523 = vsel %vm2419, %v560, 0
        %2525 = vmatpush.xpose.msra.mxu0 0.0
        %2526 = vmatpush.xpose.msra.mxu0 0.0
        %2527 = vmatpush.xpose.msra.mxu0 0.0
        %2528 = vmatpush.xpose.msra.mxu0 0.0
        %2529 = vmatpush.xpose.msra.mxu0 0.0
        %2530 = vmatpush.xpose.msra.mxu0 0.0
        %2531 = vmatpush.xpose.msra.mxu0 0.0
        %2532 = vmatpush.xpose.msra.mxu0 0.0
        %2533 = vmatpush.xpose.msra.mxu0 %v2523
        %2534 = vmatpush.xpose.msra.mxu0 %v2521
        %2535 = vmatpush.xpose.msra.mxu0 %v2519
        %2536 = vmatpush.xpose.msra.mxu0 %v2517
        %2537 = vmatpush.xpose.msra.mxu0 %v2515
        %2538 = vmatpush.xpose.msra.mxu0 %v2513
        %2539 = vmatpush.xpose.msra.mxu0 %v2511
        %2540 = vmatpush.xpose.msra.mxu0 %v2509
        %2541 = vmatmul.f32.gmra.mxu0 %v2493
        %v2542 = vpop.f32.mrf.mxu0
        %v2543 = vadd.f32 0.0, %v2542
        %2544 = vmatmul.f32.gmra.mxu0 %v2495
        %v2545 = vpop.f32.mrf.mxu0
        %v2546 = vadd.f32 0.0, %v2545
        %2547 = vmatmul.f32.gmra.mxu0 %v2497
        %v2548 = vpop.f32.mrf.mxu0
        %v2549 = vadd.f32 0.0, %v2548
        %2550 = vmatmul.f32.gmra.mxu0 %v2499
        %v2551 = vpop.f32.mrf.mxu0
        %v2552 = vadd.f32 0.0, %v2551
        %2553 = vmatmul.f32.gmra.mxu0 %v2501
        %v2554 = vpop.f32.mrf.mxu0
        %v2555 = vadd.f32 0.0, %v2554
        %2556 = vmatmul.f32.gmra.mxu0 %v2503
        %v2557 = vpop.f32.mrf.mxu0
        %v2558 = vadd.f32 0.0, %v2557
        %2559 = vmatmul.f32.gmra.mxu0 %v2505
        %v2560 = vpop.f32.mrf.mxu0
        %v2561 = vadd.f32 0.0, %v2560
        %2562 = vmatmul.f32.gmra.mxu0 %v2507
        %v2563 = vpop.f32.mrf.mxu0
        %v2564 = vadd.f32 0.0, %v2563
        %2565 = vdwg.mxu0
        %v2566 = vsel %vm2419, %v739, 0
        %v2568 = vsel %vm2419, %v740, 0
        %v2570 = vsel %vm2419, %v741, 0
        %v2572 = vsel %vm2419, %v742, 0
        %v2574 = vsel %vm2419, %v743, 0
        %v2576 = vsel %vm2419, %v744, 0
        %v2578 = vsel %vm2419, %v745, 0
        %v2580 = vsel %vm2419, %v746, 0
        %v2582 = vsel %vm2419, %v563, 0
        %v2584 = vsel %vm2419, %v566, 0
        %v2586 = vsel %vm2419, %v569, 0
        %v2588 = vsel %vm2419, %v572, 0
        %v2590 = vsel %vm2419, %v575, 0
        %v2592 = vsel %vm2419, %v578, 0
        %v2594 = vsel %vm2419, %v581, 0
        %v2596 = vsel %vm2419, %v584, 0
        %2598 = vmatpush.xpose.msra.mxu0 0.0
        %2599 = vmatpush.xpose.msra.mxu0 0.0
        %2600 = vmatpush.xpose.msra.mxu0 0.0
        %2601 = vmatpush.xpose.msra.mxu0 0.0
        %2602 = vmatpush.xpose.msra.mxu0 0.0
        %2603 = vmatpush.xpose.msra.mxu0 0.0
        %2604 = vmatpush.xpose.msra.mxu0 0.0
        %2605 = vmatpush.xpose.msra.mxu0 0.0
        %2606 = vmatpush.xpose.msra.mxu0 %v2596
        %2607 = vmatpush.xpose.msra.mxu0 %v2594
        %2608 = vmatpush.xpose.msra.mxu0 %v2592
        %2609 = vmatpush.xpose.msra.mxu0 %v2590
        %2610 = vmatpush.xpose.msra.mxu0 %v2588
        %2611 = vmatpush.xpose.msra.mxu0 %v2586
        %2612 = vmatpush.xpose.msra.mxu0 %v2584
        %2613 = vmatpush.xpose.msra.mxu0 %v2582
        %2614 = vmatmul.f32.gmra.mxu0 %v2566
        %v2615 = vpop.f32.mrf.mxu0
        %v2616 = vadd.f32 0.0, %v2615
        %2617 = vmatmul.f32.gmra.mxu0 %v2568
        %v2618 = vpop.f32.mrf.mxu0
        %v2619 = vadd.f32 0.0, %v2618
        %2620 = vmatmul.f32.gmra.mxu0 %v2570
        %v2621 = vpop.f32.mrf.mxu0
        %v2622 = vadd.f32 0.0, %v2621
        %2623 = vmatmul.f32.gmra.mxu0 %v2572
        %v2624 = vpop.f32.mrf.mxu0
        %v2625 = vadd.f32 0.0, %v2624
        %2626 = vmatmul.f32.gmra.mxu0 %v2574
        %v2627 = vpop.f32.mrf.mxu0
        %v2628 = vadd.f32 0.0, %v2627
        %2629 = vmatmul.f32.gmra.mxu0 %v2576
        %v2630 = vpop.f32.mrf.mxu0
        %v2631 = vadd.f32 0.0, %v2630
        %2632 = vmatmul.f32.gmra.mxu0 %v2578
        %v2633 = vpop.f32.mrf.mxu0
        %v2634 = vadd.f32 0.0, %v2633
        %2635 = vmatmul.f32.gmra.mxu0 %v2580
        %v2636 = vpop.f32.mrf.mxu0
        %v2637 = vadd.f32 0.0, %v2636
        %2638 = vdwg.mxu0
        %v2639 = vsel %vm2419, %v747, 0
        %v2641 = vsel %vm2419, %v748, 0
        %v2643 = vsel %vm2419, %v749, 0
        %v2645 = vsel %vm2419, %v750, 0
        %v2647 = vsel %vm2419, %v751, 0
        %v2649 = vsel %vm2419, %v752, 0
        %v2651 = vsel %vm2419, %v753, 0
        %v2653 = vsel %vm2419, %v754, 0
        %v2655 = vsel %vm2419, %v587, 0
        %v2657 = vsel %vm2419, %v590, 0
        %v2659 = vsel %vm2419, %v593, 0
        %v2661 = vsel %vm2419, %v596, 0
        %v2663 = vsel %vm2419, %v599, 0
        %v2665 = vsel %vm2419, %v602, 0
        %v2667 = vsel %vm2419, %v605, 0
        %v2669 = vsel %vm2419, %v608, 0
        %2671 = vmatpush.xpose.msra.mxu0 0.0
        %2672 = vmatpush.xpose.msra.mxu0 0.0
        %2673 = vmatpush.xpose.msra.mxu0 0.0
        %2674 = vmatpush.xpose.msra.mxu0 0.0
        %2675 = vmatpush.xpose.msra.mxu0 0.0
        %2676 = vmatpush.xpose.msra.mxu0 0.0
        %2677 = vmatpush.xpose.msra.mxu0 0.0
        %2678 = vmatpush.xpose.msra.mxu0 0.0
        %2679 = vmatpush.xpose.msra.mxu0 %v2669
        %2680 = vmatpush.xpose.msra.mxu0 %v2667
        %2681 = vmatpush.xpose.msra.mxu0 %v2665
        %2682 = vmatpush.xpose.msra.mxu0 %v2663
        %2683 = vmatpush.xpose.msra.mxu0 %v2661
        %2684 = vmatpush.xpose.msra.mxu0 %v2659
        %2685 = vmatpush.xpose.msra.mxu0 %v2657
        %2686 = vmatpush.xpose.msra.mxu0 %v2655
        %2687 = vmatmul.f32.gmra.mxu0 %v2639
        %v2688 = vpop.f32.mrf.mxu0
        %v2689 = vadd.f32 0.0, %v2688
        %2690 = vmatmul.f32.gmra.mxu0 %v2641
        %v2691 = vpop.f32.mrf.mxu0
        %v2692 = vadd.f32 0.0, %v2691
        %2693 = vmatmul.f32.gmra.mxu0 %v2643
        %v2694 = vpop.f32.mrf.mxu0
        %v2695 = vadd.f32 0.0, %v2694
        %2696 = vmatmul.f32.gmra.mxu0 %v2645
        %v2697 = vpop.f32.mrf.mxu0
        %v2698 = vadd.f32 0.0, %v2697
        %2699 = vmatmul.f32.gmra.mxu0 %v2647
        %v2700 = vpop.f32.mrf.mxu0
        %v2701 = vadd.f32 0.0, %v2700
        %2702 = vmatmul.f32.gmra.mxu0 %v2649
        %v2703 = vpop.f32.mrf.mxu0
        %v2704 = vadd.f32 0.0, %v2703
        %2705 = vmatmul.f32.gmra.mxu0 %v2651
        %v2706 = vpop.f32.mrf.mxu0
        %v2707 = vadd.f32 0.0, %v2706
        %2708 = vmatmul.f32.gmra.mxu0 %v2653
        %v2709 = vpop.f32.mrf.mxu0
        %v2710 = vadd.f32 0.0, %v2709
        %2711 = vdwg.mxu0
        %v2712 = vsel %vm2419, %v788, 0
        %v2714 = vsel %vm2419, %v790, 0
        %v2716 = vsel %vm2419, %v792, 0
        %v2718 = vsel %vm2419, %v794, 0
        %v2720 = vsel %vm2419, %v796, 0
        %v2722 = vsel %vm2419, %v798, 0
        %v2724 = vsel %vm2419, %v800, 0
        %v2726 = vsel %vm2419, %v802, 0
        %v2728 = vsel %vm2419, %v1268, 0
        %v2730 = vsel %vm2419, %v1270, 0
        %v2732 = vsel %vm2419, %v1272, 0
        %v2734 = vsel %vm2419, %v1274, 0
        %v2736 = vsel %vm2419, %v1276, 0
        %v2738 = vsel %vm2419, %v1278, 0
        %v2740 = vsel %vm2419, %v1280, 0
        %v2742 = vsel %vm2419, %v1282, 0
        %2744 = vmatpush.xpose.msra.mxu0 0.0
        %2745 = vmatpush.xpose.msra.mxu0 0.0
        %2746 = vmatpush.xpose.msra.mxu0 0.0
        %2747 = vmatpush.xpose.msra.mxu0 0.0
        %2748 = vmatpush.xpose.msra.mxu0 0.0
        %2749 = vmatpush.xpose.msra.mxu0 0.0
        %2750 = vmatpush.xpose.msra.mxu0 0.0
        %2751 = vmatpush.xpose.msra.mxu0 0.0
        %2752 = vmatpush.xpose.msra.mxu0 %v2742
        %2753 = vmatpush.xpose.msra.mxu0 %v2740
        %2754 = vmatpush.xpose.msra.mxu0 %v2738
        %2755 = vmatpush.xpose.msra.mxu0 %v2736
        %2756 = vmatpush.xpose.msra.mxu0 %v2734
        %2757 = vmatpush.xpose.msra.mxu0 %v2732
        %2758 = vmatpush.xpose.msra.mxu0 %v2730
        %2759 = vmatpush.xpose.msra.mxu0 %v2728
        %2760 = vmatmul.f32.gmra.mxu0 %v2712
        %v2761 = vpop.f32.mrf.mxu0
        %v2762 = vadd.f32 0.0, %v2761
        %2763 = vmatmul.f32.gmra.mxu0 %v2714
        %v2764 = vpop.f32.mrf.mxu0
        %v2765 = vadd.f32 0.0, %v2764
        %2766 = vmatmul.f32.gmra.mxu0 %v2716
        %v2767 = vpop.f32.mrf.mxu0
        %v2768 = vadd.f32 0.0, %v2767
        %2769 = vmatmul.f32.gmra.mxu0 %v2718
        %v2770 = vpop.f32.mrf.mxu0
        %v2771 = vadd.f32 0.0, %v2770
        %2772 = vmatmul.f32.gmra.mxu0 %v2720
        %v2773 = vpop.f32.mrf.mxu0
        %v2774 = vadd.f32 0.0, %v2773
        %2775 = vmatmul.f32.gmra.mxu0 %v2722
        %v2776 = vpop.f32.mrf.mxu0
        %v2777 = vadd.f32 0.0, %v2776
        %2778 = vmatmul.f32.gmra.mxu0 %v2724
        %v2779 = vpop.f32.mrf.mxu0
        %v2780 = vadd.f32 0.0, %v2779
        %2781 = vmatmul.f32.gmra.mxu0 %v2726
        %v2782 = vpop.f32.mrf.mxu0
        %v2783 = vadd.f32 0.0, %v2782
        %2784 = vdwg.mxu0
        %v2785 = vsel %vm2419, %v804, 0
        %v2787 = vsel %vm2419, %v806, 0
        %v2789 = vsel %vm2419, %v808, 0
        %v2791 = vsel %vm2419, %v810, 0
        %v2793 = vsel %vm2419, %v812, 0
        %v2795 = vsel %vm2419, %v814, 0
        %v2797 = vsel %vm2419, %v816, 0
        %v2799 = vsel %vm2419, %v818, 0
        %v2801 = vsel %vm2419, %v1284, 0
        %v2803 = vsel %vm2419, %v1286, 0
        %v2805 = vsel %vm2419, %v1288, 0
        %v2807 = vsel %vm2419, %v1290, 0
        %v2809 = vsel %vm2419, %v1292, 0
        %v2811 = vsel %vm2419, %v1294, 0
        %v2813 = vsel %vm2419, %v1296, 0
        %v2815 = vsel %vm2419, %v1298, 0
        %2817 = vmatpush.xpose.msra.mxu0 0.0
        %2818 = vmatpush.xpose.msra.mxu0 0.0
        %2819 = vmatpush.xpose.msra.mxu0 0.0
        %2820 = vmatpush.xpose.msra.mxu0 0.0
        %2821 = vmatpush.xpose.msra.mxu0 0.0
        %2822 = vmatpush.xpose.msra.mxu0 0.0
        %2823 = vmatpush.xpose.msra.mxu0 0.0
        %2824 = vmatpush.xpose.msra.mxu0 0.0
        %2825 = vmatpush.xpose.msra.mxu0 %v2815
        %2826 = vmatpush.xpose.msra.mxu0 %v2813
        %2827 = vmatpush.xpose.msra.mxu0 %v2811
        %2828 = vmatpush.xpose.msra.mxu0 %v2809
        %2829 = vmatpush.xpose.msra.mxu0 %v2807
        %2830 = vmatpush.xpose.msra.mxu0 %v2805
        %2831 = vmatpush.xpose.msra.mxu0 %v2803
        %2832 = vmatpush.xpose.msra.mxu0 %v2801
        %2833 = vmatmul.f32.gmra.mxu0 %v2785
        %v2834 = vpop.f32.mrf.mxu0
        %v2835 = vadd.f32 0.0, %v2834
        %2836 = vmatmul.f32.gmra.mxu0 %v2787
        %v2837 = vpop.f32.mrf.mxu0
        %v2838 = vadd.f32 0.0, %v2837
        %2839 = vmatmul.f32.gmra.mxu0 %v2789
        %v2840 = vpop.f32.mrf.mxu0
        %v2841 = vadd.f32 0.0, %v2840
        %2842 = vmatmul.f32.gmra.mxu0 %v2791
        %v2843 = vpop.f32.mrf.mxu0
        %v2844 = vadd.f32 0.0, %v2843
        %2845 = vmatmul.f32.gmra.mxu0 %v2793
        %v2846 = vpop.f32.mrf.mxu0
        %v2847 = vadd.f32 0.0, %v2846
        %2848 = vmatmul.f32.gmra.mxu0 %v2795
        %v2849 = vpop.f32.mrf.mxu0
        %v2850 = vadd.f32 0.0, %v2849
        %2851 = vmatmul.f32.gmra.mxu0 %v2797
        %v2852 = vpop.f32.mrf.mxu0
        %v2853 = vadd.f32 0.0, %v2852
        %2854 = vmatmul.f32.gmra.mxu0 %v2799
        %v2855 = vpop.f32.mrf.mxu0
        %v2856 = vadd.f32 0.0, %v2855
        %2857 = vdwg.mxu0
        %v2858 = vsel %vm2419, %v820, 0
        %v2860 = vsel %vm2419, %v822, 0
        %v2862 = vsel %vm2419, %v824, 0
        %v2864 = vsel %vm2419, %v826, 0
        %v2866 = vsel %vm2419, %v828, 0
        %v2868 = vsel %vm2419, %v830, 0
        %v2870 = vsel %vm2419, %v832, 0
        %v2872 = vsel %vm2419, %v834, 0
        %v2874 = vsel %vm2419, %v1300, 0
        %v2876 = vsel %vm2419, %v1302, 0
        %v2878 = vsel %vm2419, %v1304, 0
        %v2880 = vsel %vm2419, %v1306, 0
        %v2882 = vsel %vm2419, %v1308, 0
        %v2884 = vsel %vm2419, %v1310, 0
        %v2886 = vsel %vm2419, %v1312, 0
        %v2888 = vsel %vm2419, %v1314, 0
        %2890 = vmatpush.xpose.msra.mxu0 0.0
        %2891 = vmatpush.xpose.msra.mxu0 0.0
        %2892 = vmatpush.xpose.msra.mxu0 0.0
        %2893 = vmatpush.xpose.msra.mxu0 0.0
        %2894 = vmatpush.xpose.msra.mxu0 0.0
        %2895 = vmatpush.xpose.msra.mxu0 0.0
        %2896 = vmatpush.xpose.msra.mxu0 0.0
        %2897 = vmatpush.xpose.msra.mxu0 0.0
        %2898 = vmatpush.xpose.msra.mxu0 %v2888
        %2899 = vmatpush.xpose.msra.mxu0 %v2886
        %2900 = vmatpush.xpose.msra.mxu0 %v2884
        %2901 = vmatpush.xpose.msra.mxu0 %v2882
        %2902 = vmatpush.xpose.msra.mxu0 %v2880
        %2903 = vmatpush.xpose.msra.mxu0 %v2878
        %2904 = vmatpush.xpose.msra.mxu0 %v2876
        %2905 = vmatpush.xpose.msra.mxu0 %v2874
        %2906 = vmatmul.f32.gmra.mxu0 %v2858
        %v2907 = vpop.f32.mrf.mxu0
        %v2908 = vadd.f32 0.0, %v2907
        %2909 = vmatmul.f32.gmra.mxu0 %v2860
        %v2910 = vpop.f32.mrf.mxu0
        %v2911 = vadd.f32 0.0, %v2910
        %2912 = vmatmul.f32.gmra.mxu0 %v2862
        %v2913 = vpop.f32.mrf.mxu0
        %v2914 = vadd.f32 0.0, %v2913
        %2915 = vmatmul.f32.gmra.mxu0 %v2864
        %v2916 = vpop.f32.mrf.mxu0
        %v2917 = vadd.f32 0.0, %v2916
        %2918 = vmatmul.f32.gmra.mxu0 %v2866
        %v2919 = vpop.f32.mrf.mxu0
        %v2920 = vadd.f32 0.0, %v2919
        %2921 = vmatmul.f32.gmra.mxu0 %v2868
        %v2922 = vpop.f32.mrf.mxu0
        %v2923 = vadd.f32 0.0, %v2922
        %2924 = vmatmul.f32.gmra.mxu0 %v2870
        %v2925 = vpop.f32.mrf.mxu0
        %v2926 = vadd.f32 0.0, %v2925
        %2927 = vmatmul.f32.gmra.mxu0 %v2872
        %v2928 = vpop.f32.mrf.mxu0
        %v2929 = vadd.f32 0.0, %v2928
        %2930 = vdwg.mxu0
        %v2931 = vsel %vm2419, %v836, 0
        %v2933 = vsel %vm2419, %v838, 0
        %v2935 = vsel %vm2419, %v840, 0
        %v2937 = vsel %vm2419, %v842, 0
        %v2939 = vsel %vm2419, %v844, 0
        %v2941 = vsel %vm2419, %v846, 0
        %v2943 = vsel %vm2419, %v848, 0
        %v2945 = vsel %vm2419, %v850, 0
        %v2947 = vsel %vm2419, %v1316, 0
        %v2949 = vsel %vm2419, %v1318, 0
        %v2951 = vsel %vm2419, %v1320, 0
        %v2953 = vsel %vm2419, %v1322, 0
        %v2955 = vsel %vm2419, %v1324, 0
        %v2957 = vsel %vm2419, %v1326, 0
        %v2959 = vsel %vm2419, %v1328, 0
        %v2961 = vsel %vm2419, %v1330, 0
        %2963 = vmatpush.xpose.msra.mxu0 0.0
        %2964 = vmatpush.xpose.msra.mxu0 0.0
        %2965 = vmatpush.xpose.msra.mxu0 0.0
        %2966 = vmatpush.xpose.msra.mxu0 0.0
        %2967 = vmatpush.xpose.msra.mxu0 0.0
        %2968 = vmatpush.xpose.msra.mxu0 0.0
        %2969 = vmatpush.xpose.msra.mxu0 0.0
        %2970 = vmatpush.xpose.msra.mxu0 0.0
        %2971 = vmatpush.xpose.msra.mxu0 %v2961
        %2972 = vmatpush.xpose.msra.mxu0 %v2959
        %2973 = vmatpush.xpose.msra.mxu0 %v2957
        %2974 = vmatpush.xpose.msra.mxu0 %v2955
        %2975 = vmatpush.xpose.msra.mxu0 %v2953
        %2976 = vmatpush.xpose.msra.mxu0 %v2951
        %2977 = vmatpush.xpose.msra.mxu0 %v2949
        %2978 = vmatpush.xpose.msra.mxu0 %v2947
        %2979 = vmatmul.f32.gmra.mxu0 %v2931
        %v2980 = vpop.f32.mrf.mxu0
        %v2981 = vadd.f32 0.0, %v2980
        %2982 = vmatmul.f32.gmra.mxu0 %v2933
        %v2983 = vpop.f32.mrf.mxu0
        %v2984 = vadd.f32 0.0, %v2983
        %2985 = vmatmul.f32.gmra.mxu0 %v2935
        %v2986 = vpop.f32.mrf.mxu0
        %v2987 = vadd.f32 0.0, %v2986
        %2988 = vmatmul.f32.gmra.mxu0 %v2937
        %v2989 = vpop.f32.mrf.mxu0
        %v2990 = vadd.f32 0.0, %v2989
        %2991 = vmatmul.f32.gmra.mxu0 %v2939
        %v2992 = vpop.f32.mrf.mxu0
        %v2993 = vadd.f32 0.0, %v2992
        %2994 = vmatmul.f32.gmra.mxu0 %v2941
        %v2995 = vpop.f32.mrf.mxu0
        %v2996 = vadd.f32 0.0, %v2995
        %2997 = vmatmul.f32.gmra.mxu0 %v2943
        %v2998 = vpop.f32.mrf.mxu0
        %v2999 = vadd.f32 0.0, %v2998
        %3000 = vmatmul.f32.gmra.mxu0 %v2945
        %v3001 = vpop.f32.mrf.mxu0
        %v3002 = vadd.f32 0.0, %v3001
        %3003 = vdwg.mxu0
        %v3004 = vsel %vm2419, %v852, 0
        %v3006 = vsel %vm2419, %v854, 0
        %v3008 = vsel %vm2419, %v856, 0
        %v3010 = vsel %vm2419, %v858, 0
        %v3012 = vsel %vm2419, %v860, 0
        %v3014 = vsel %vm2419, %v862, 0
        %v3016 = vsel %vm2419, %v864, 0
        %v3018 = vsel %vm2419, %v866, 0
        %v3020 = vsel %vm2419, %v1332, 0
        %v3022 = vsel %vm2419, %v1334, 0
        %v3024 = vsel %vm2419, %v1336, 0
        %v3026 = vsel %vm2419, %v1338, 0
        %v3028 = vsel %vm2419, %v1340, 0
        %v3030 = vsel %vm2419, %v1342, 0
        %v3032 = vsel %vm2419, %v1344, 0
        %v3034 = vsel %vm2419, %v1346, 0
        %3036 = vmatpush.xpose.msra.mxu0 0.0
        %3037 = vmatpush.xpose.msra.mxu0 0.0
        %3038 = vmatpush.xpose.msra.mxu0 0.0
        %3039 = vmatpush.xpose.msra.mxu0 0.0
        %3040 = vmatpush.xpose.msra.mxu0 0.0
        %3041 = vmatpush.xpose.msra.mxu0 0.0
        %3042 = vmatpush.xpose.msra.mxu0 0.0
        %3043 = vmatpush.xpose.msra.mxu0 0.0
        %3044 = vmatpush.xpose.msra.mxu0 %v3034
        %3045 = vmatpush.xpose.msra.mxu0 %v3032
        %3046 = vmatpush.xpose.msra.mxu0 %v3030
        %3047 = vmatpush.xpose.msra.mxu0 %v3028
        %3048 = vmatpush.xpose.msra.mxu0 %v3026
        %3049 = vmatpush.xpose.msra.mxu0 %v3024
        %3050 = vmatpush.xpose.msra.mxu0 %v3022
        %3051 = vmatpush.xpose.msra.mxu0 %v3020
        %3052 = vmatmul.f32.gmra.mxu0 %v3004
        %v3053 = vpop.f32.mrf.mxu0
        %v3054 = vadd.f32 0.0, %v3053
        %3055 = vmatmul.f32.gmra.mxu0 %v3006
        %v3056 = vpop.f32.mrf.mxu0
        %v3057 = vadd.f32 0.0, %v3056
        %3058 = vmatmul.f32.gmra.mxu0 %v3008
        %v3059 = vpop.f32.mrf.mxu0
        %v3060 = vadd.f32 0.0, %v3059
        %3061 = vmatmul.f32.gmra.mxu0 %v3010
        %v3062 = vpop.f32.mrf.mxu0
        %v3063 = vadd.f32 0.0, %v3062
        %3064 = vmatmul.f32.gmra.mxu0 %v3012
        %v3065 = vpop.f32.mrf.mxu0
        %v3066 = vadd.f32 0.0, %v3065
        %3067 = vmatmul.f32.gmra.mxu0 %v3014
        %v3068 = vpop.f32.mrf.mxu0
        %v3069 = vadd.f32 0.0, %v3068
        %3070 = vmatmul.f32.gmra.mxu0 %v3016
        %v3071 = vpop.f32.mrf.mxu0
        %v3072 = vadd.f32 0.0, %v3071
        %3073 = vmatmul.f32.gmra.mxu0 %v3018
        %v3074 = vpop.f32.mrf.mxu0
        %v3075 = vadd.f32 0.0, %v3074
        %3076 = vdwg.mxu0
        %v3077 = vsel %vm2419, %v868, 0
        %v3079 = vsel %vm2419, %v870, 0
        %v3081 = vsel %vm2419, %v872, 0
        %v3083 = vsel %vm2419, %v874, 0
        %v3085 = vsel %vm2419, %v876, 0
        %v3087 = vsel %vm2419, %v878, 0
        %v3089 = vsel %vm2419, %v880, 0
        %v3091 = vsel %vm2419, %v882, 0
        %v3093 = vsel %vm2419, %v1348, 0
        %v3095 = vsel %vm2419, %v1350, 0
        %v3097 = vsel %vm2419, %v1352, 0
        %v3099 = vsel %vm2419, %v1354, 0
        %v3101 = vsel %vm2419, %v1356, 0
        %v3103 = vsel %vm2419, %v1358, 0
        %v3105 = vsel %vm2419, %v1360, 0
        %v3107 = vsel %vm2419, %v1362, 0
        %3109 = vmatpush.xpose.msra.mxu0 0.0
        %3110 = vmatpush.xpose.msra.mxu0 0.0
        %3111 = vmatpush.xpose.msra.mxu0 0.0
        %3112 = vmatpush.xpose.msra.mxu0 0.0
        %3113 = vmatpush.xpose.msra.mxu0 0.0
        %3114 = vmatpush.xpose.msra.mxu0 0.0
        %3115 = vmatpush.xpose.msra.mxu0 0.0
        %3116 = vmatpush.xpose.msra.mxu0 0.0
        %3117 = vmatpush.xpose.msra.mxu0 %v3107
        %3118 = vmatpush.xpose.msra.mxu0 %v3105
        %3119 = vmatpush.xpose.msra.mxu0 %v3103
        %3120 = vmatpush.xpose.msra.mxu0 %v3101
        %3121 = vmatpush.xpose.msra.mxu0 %v3099
        %3122 = vmatpush.xpose.msra.mxu0 %v3097
        %3123 = vmatpush.xpose.msra.mxu0 %v3095
        %3124 = vmatpush.xpose.msra.mxu0 %v3093
        %3125 = vmatmul.f32.gmra.mxu0 %v3077
        %v3126 = vpop.f32.mrf.mxu0
        %v3127 = vadd.f32 0.0, %v3126
        %3128 = vmatmul.f32.gmra.mxu0 %v3079
        %v3129 = vpop.f32.mrf.mxu0
        %v3130 = vadd.f32 0.0, %v3129
        %3131 = vmatmul.f32.gmra.mxu0 %v3081
        %v3132 = vpop.f32.mrf.mxu0
        %v3133 = vadd.f32 0.0, %v3132
        %3134 = vmatmul.f32.gmra.mxu0 %v3083
        %v3135 = vpop.f32.mrf.mxu0
        %v3136 = vadd.f32 0.0, %v3135
        %3137 = vmatmul.f32.gmra.mxu0 %v3085
        %v3138 = vpop.f32.mrf.mxu0
        %v3139 = vadd.f32 0.0, %v3138
        %3140 = vmatmul.f32.gmra.mxu0 %v3087
        %v3141 = vpop.f32.mrf.mxu0
        %v3142 = vadd.f32 0.0, %v3141
        %3143 = vmatmul.f32.gmra.mxu0 %v3089
        %v3144 = vpop.f32.mrf.mxu0
        %v3145 = vadd.f32 0.0, %v3144
        %3146 = vmatmul.f32.gmra.mxu0 %v3091
        %v3147 = vpop.f32.mrf.mxu0
        %v3148 = vadd.f32 0.0, %v3147
        %3149 = vdwg.mxu0
        %v3150 = vsel %vm2419, %v884, 0
        %v3152 = vsel %vm2419, %v886, 0
        %v3154 = vsel %vm2419, %v888, 0
        %v3156 = vsel %vm2419, %v890, 0
        %v3158 = vsel %vm2419, %v892, 0
        %v3160 = vsel %vm2419, %v894, 0
        %v3162 = vsel %vm2419, %v896, 0
        %v3164 = vsel %vm2419, %v898, 0
        %v3166 = vsel %vm2419, %v1364, 0
        %v3168 = vsel %vm2419, %v1366, 0
        %v3170 = vsel %vm2419, %v1368, 0
        %v3172 = vsel %vm2419, %v1370, 0
        %v3174 = vsel %vm2419, %v1372, 0
        %v3176 = vsel %vm2419, %v1374, 0
        %v3178 = vsel %vm2419, %v1376, 0
        %v3180 = vsel %vm2419, %v1378, 0
        %3182 = vmatpush.xpose.msra.mxu0 0.0
        %3183 = vmatpush.xpose.msra.mxu0 0.0
        %3184 = vmatpush.xpose.msra.mxu0 0.0
        %3185 = vmatpush.xpose.msra.mxu0 0.0
        %3186 = vmatpush.xpose.msra.mxu0 0.0
        %3187 = vmatpush.xpose.msra.mxu0 0.0
        %3188 = vmatpush.xpose.msra.mxu0 0.0
        %3189 = vmatpush.xpose.msra.mxu0 0.0
        %3190 = vmatpush.xpose.msra.mxu0 %v3180
        %3191 = vmatpush.xpose.msra.mxu0 %v3178
        %3192 = vmatpush.xpose.msra.mxu0 %v3176
        %3193 = vmatpush.xpose.msra.mxu0 %v3174
        %3194 = vmatpush.xpose.msra.mxu0 %v3172
        %3195 = vmatpush.xpose.msra.mxu0 %v3170
        %3196 = vmatpush.xpose.msra.mxu0 %v3168
        %3197 = vmatpush.xpose.msra.mxu0 %v3166
        %3198 = vmatmul.f32.gmra.mxu0 %v3150
        %v3199 = vpop.f32.mrf.mxu0
        %v3200 = vadd.f32 0.0, %v3199
        %3201 = vmatmul.f32.gmra.mxu0 %v3152
        %v3202 = vpop.f32.mrf.mxu0
        %v3203 = vadd.f32 0.0, %v3202
        %3204 = vmatmul.f32.gmra.mxu0 %v3154
        %v3205 = vpop.f32.mrf.mxu0
        %v3206 = vadd.f32 0.0, %v3205
        %3207 = vmatmul.f32.gmra.mxu0 %v3156
        %v3208 = vpop.f32.mrf.mxu0
        %v3209 = vadd.f32 0.0, %v3208
        %3210 = vmatmul.f32.gmra.mxu0 %v3158
        %v3211 = vpop.f32.mrf.mxu0
        %v3212 = vadd.f32 0.0, %v3211
        %3213 = vmatmul.f32.gmra.mxu0 %v3160
        %v3214 = vpop.f32.mrf.mxu0
        %v3215 = vadd.f32 0.0, %v3214
        %3216 = vmatmul.f32.gmra.mxu0 %v3162
        %v3217 = vpop.f32.mrf.mxu0
        %v3218 = vadd.f32 0.0, %v3217
        %3219 = vmatmul.f32.gmra.mxu0 %v3164
        %v3220 = vpop.f32.mrf.mxu0
        %v3221 = vadd.f32 0.0, %v3220
        %3222 = vdwg.mxu0
        %v3223 = vsel %vm2419, %v900, 0
        %v3225 = vsel %vm2419, %v902, 0
        %v3227 = vsel %vm2419, %v904, 0
        %v3229 = vsel %vm2419, %v906, 0
        %v3231 = vsel %vm2419, %v908, 0
        %v3233 = vsel %vm2419, %v910, 0
        %v3235 = vsel %vm2419, %v912, 0
        %v3237 = vsel %vm2419, %v914, 0
        %v3239 = vsel %vm2419, %v1380, 0
        %v3241 = vsel %vm2419, %v1382, 0
        %v3243 = vsel %vm2419, %v1384, 0
        %v3245 = vsel %vm2419, %v1386, 0
        %v3247 = vsel %vm2419, %v1388, 0
        %v3249 = vsel %vm2419, %v1390, 0
        %v3251 = vsel %vm2419, %v1392, 0
        %v3253 = vsel %vm2419, %v1394, 0
        %3255 = vmatpush.xpose.msra.mxu0 0.0
        %3256 = vmatpush.xpose.msra.mxu0 0.0
        %3257 = vmatpush.xpose.msra.mxu0 0.0
        %3258 = vmatpush.xpose.msra.mxu0 0.0
        %3259 = vmatpush.xpose.msra.mxu0 0.0
        %3260 = vmatpush.xpose.msra.mxu0 0.0
        %3261 = vmatpush.xpose.msra.mxu0 0.0
        %3262 = vmatpush.xpose.msra.mxu0 0.0
        %3263 = vmatpush.xpose.msra.mxu0 %v3253
        %3264 = vmatpush.xpose.msra.mxu0 %v3251
        %3265 = vmatpush.xpose.msra.mxu0 %v3249
        %3266 = vmatpush.xpose.msra.mxu0 %v3247
        %3267 = vmatpush.xpose.msra.mxu0 %v3245
        %3268 = vmatpush.xpose.msra.mxu0 %v3243
        %3269 = vmatpush.xpose.msra.mxu0 %v3241
        %3270 = vmatpush.xpose.msra.mxu0 %v3239
        %3271 = vmatmul.f32.gmra.mxu0 %v3223
        %v3272 = vpop.f32.mrf.mxu0
        %v3273 = vadd.f32 0.0, %v3272
        %3274 = vmatmul.f32.gmra.mxu0 %v3225
        %v3275 = vpop.f32.mrf.mxu0
        %v3276 = vadd.f32 0.0, %v3275
        %3277 = vmatmul.f32.gmra.mxu0 %v3227
        %v3278 = vpop.f32.mrf.mxu0
        %v3279 = vadd.f32 0.0, %v3278
        %3280 = vmatmul.f32.gmra.mxu0 %v3229
        %v3281 = vpop.f32.mrf.mxu0
        %v3282 = vadd.f32 0.0, %v3281
        %3283 = vmatmul.f32.gmra.mxu0 %v3231
        %v3284 = vpop.f32.mrf.mxu0
        %v3285 = vadd.f32 0.0, %v3284
        %3286 = vmatmul.f32.gmra.mxu0 %v3233
        %v3287 = vpop.f32.mrf.mxu0
        %v3288 = vadd.f32 0.0, %v3287
        %3289 = vmatmul.f32.gmra.mxu0 %v3235
        %v3290 = vpop.f32.mrf.mxu0
        %v3291 = vadd.f32 0.0, %v3290
        %3292 = vmatmul.f32.gmra.mxu0 %v3237
        %v3293 = vpop.f32.mrf.mxu0
        %v3294 = vadd.f32 0.0, %v3293
        %3295 = vdwg.mxu0
        %v3296 = vsel %vm2419, %v916, 0
        %v3298 = vsel %vm2419, %v918, 0
        %v3300 = vsel %vm2419, %v920, 0
        %v3302 = vsel %vm2419, %v922, 0
        %v3304 = vsel %vm2419, %v924, 0
        %v3306 = vsel %vm2419, %v926, 0
        %v3308 = vsel %vm2419, %v928, 0
        %v3310 = vsel %vm2419, %v930, 0
        %v3312 = vsel %vm2419, %v1396, 0
        %v3314 = vsel %vm2419, %v1398, 0
        %v3316 = vsel %vm2419, %v1400, 0
        %v3318 = vsel %vm2419, %v1402, 0
        %v3320 = vsel %vm2419, %v1404, 0
        %v3322 = vsel %vm2419, %v1406, 0
        %v3324 = vsel %vm2419, %v1408, 0
        %v3326 = vsel %vm2419, %v1410, 0
        %3328 = vmatpush.xpose.msra.mxu0 0.0
        %3329 = vmatpush.xpose.msra.mxu0 0.0
        %3330 = vmatpush.xpose.msra.mxu0 0.0
        %3331 = vmatpush.xpose.msra.mxu0 0.0
        %3332 = vmatpush.xpose.msra.mxu0 0.0
        %3333 = vmatpush.xpose.msra.mxu0 0.0
        %3334 = vmatpush.xpose.msra.mxu0 0.0
        %3335 = vmatpush.xpose.msra.mxu0 0.0
        %3336 = vmatpush.xpose.msra.mxu0 %v3326
        %3337 = vmatpush.xpose.msra.mxu0 %v3324
        %3338 = vmatpush.xpose.msra.mxu0 %v3322
        %3339 = vmatpush.xpose.msra.mxu0 %v3320
        %3340 = vmatpush.xpose.msra.mxu0 %v3318
        %3341 = vmatpush.xpose.msra.mxu0 %v3316
        %3342 = vmatpush.xpose.msra.mxu0 %v3314
        %3343 = vmatpush.xpose.msra.mxu0 %v3312
        %3344 = vmatmul.f32.gmra.mxu0 %v3296
        %v3345 = vpop.f32.mrf.mxu0
        %v3346 = vadd.f32 0.0, %v3345
        %3347 = vmatmul.f32.gmra.mxu0 %v3298
        %v3348 = vpop.f32.mrf.mxu0
        %v3349 = vadd.f32 0.0, %v3348
        %3350 = vmatmul.f32.gmra.mxu0 %v3300
        %v3351 = vpop.f32.mrf.mxu0
        %v3352 = vadd.f32 0.0, %v3351
        %3353 = vmatmul.f32.gmra.mxu0 %v3302
        %v3354 = vpop.f32.mrf.mxu0
        %v3355 = vadd.f32 0.0, %v3354
        %3356 = vmatmul.f32.gmra.mxu0 %v3304
        %v3357 = vpop.f32.mrf.mxu0
        %v3358 = vadd.f32 0.0, %v3357
        %3359 = vmatmul.f32.gmra.mxu0 %v3306
        %v3360 = vpop.f32.mrf.mxu0
        %v3361 = vadd.f32 0.0, %v3360
        %3362 = vmatmul.f32.gmra.mxu0 %v3308
        %v3363 = vpop.f32.mrf.mxu0
        %v3364 = vadd.f32 0.0, %v3363
        %3365 = vmatmul.f32.gmra.mxu0 %v3310
        %v3366 = vpop.f32.mrf.mxu0
        %v3367 = vadd.f32 0.0, %v3366
        %3368 = vdwg.mxu0
        %v3369 = vsel %vm2419, %v932, 0
        %v3371 = vsel %vm2419, %v934, 0
        %v3373 = vsel %vm2419, %v936, 0
        %v3375 = vsel %vm2419, %v938, 0
        %v3377 = vsel %vm2419, %v940, 0
        %v3379 = vsel %vm2419, %v942, 0
        %v3381 = vsel %vm2419, %v944, 0
        %v3383 = vsel %vm2419, %v946, 0
        %v3385 = vsel %vm2419, %v1412, 0
        %v3387 = vsel %vm2419, %v1414, 0
        %v3389 = vsel %vm2419, %v1416, 0
        %v3391 = vsel %vm2419, %v1418, 0
        %v3393 = vsel %vm2419, %v1420, 0
        %v3395 = vsel %vm2419, %v1422, 0
        %v3397 = vsel %vm2419, %v1424, 0
        %v3399 = vsel %vm2419, %v1426, 0
        %3401 = vmatpush.xpose.msra.mxu0 0.0
        %3402 = vmatpush.xpose.msra.mxu0 0.0
        %3403 = vmatpush.xpose.msra.mxu0 0.0
        %3404 = vmatpush.xpose.msra.mxu0 0.0
        %3405 = vmatpush.xpose.msra.mxu0 0.0
        %3406 = vmatpush.xpose.msra.mxu0 0.0
        %3407 = vmatpush.xpose.msra.mxu0 0.0
        %3408 = vmatpush.xpose.msra.mxu0 0.0
        %3409 = vmatpush.xpose.msra.mxu0 %v3399
        %3410 = vmatpush.xpose.msra.mxu0 %v3397
        %3411 = vmatpush.xpose.msra.mxu0 %v3395
        %3412 = vmatpush.xpose.msra.mxu0 %v3393
        %3413 = vmatpush.xpose.msra.mxu0 %v3391
        %3414 = vmatpush.xpose.msra.mxu0 %v3389
        %3415 = vmatpush.xpose.msra.mxu0 %v3387
        %3416 = vmatpush.xpose.msra.mxu0 %v3385
        %3417 = vmatmul.f32.gmra.mxu0 %v3369
        %v3418 = vpop.f32.mrf.mxu0
        %v3419 = vadd.f32 0.0, %v3418
        %3420 = vmatmul.f32.gmra.mxu0 %v3371
        %v3421 = vpop.f32.mrf.mxu0
        %v3422 = vadd.f32 0.0, %v3421
        %3423 = vmatmul.f32.gmra.mxu0 %v3373
        %v3424 = vpop.f32.mrf.mxu0
        %v3425 = vadd.f32 0.0, %v3424
        %3426 = vmatmul.f32.gmra.mxu0 %v3375
        %v3427 = vpop.f32.mrf.mxu0
        %v3428 = vadd.f32 0.0, %v3427
        %3429 = vmatmul.f32.gmra.mxu0 %v3377
        %v3430 = vpop.f32.mrf.mxu0
        %v3431 = vadd.f32 0.0, %v3430
        %3432 = vmatmul.f32.gmra.mxu0 %v3379
        %v3433 = vpop.f32.mrf.mxu0
        %v3434 = vadd.f32 0.0, %v3433
        %3435 = vmatmul.f32.gmra.mxu0 %v3381
        %v3436 = vpop.f32.mrf.mxu0
        %v3437 = vadd.f32 0.0, %v3436
        %3438 = vmatmul.f32.gmra.mxu0 %v3383
        %v3439 = vpop.f32.mrf.mxu0
        %v3440 = vadd.f32 0.0, %v3439
        %3441 = vdwg.mxu0
        %v3442 = vsel %vm2419, %v948, 0
        %v3444 = vsel %vm2419, %v950, 0
        %v3446 = vsel %vm2419, %v952, 0
        %v3448 = vsel %vm2419, %v954, 0
        %v3450 = vsel %vm2419, %v956, 0
        %v3452 = vsel %vm2419, %v958, 0
        %v3454 = vsel %vm2419, %v960, 0
        %v3456 = vsel %vm2419, %v962, 0
        %v3458 = vsel %vm2419, %v1428, 0
        %v3460 = vsel %vm2419, %v1430, 0
        %v3462 = vsel %vm2419, %v1432, 0
        %v3464 = vsel %vm2419, %v1434, 0
        %v3466 = vsel %vm2419, %v1436, 0
        %v3468 = vsel %vm2419, %v1438, 0
        %v3470 = vsel %vm2419, %v1440, 0
        %v3472 = vsel %vm2419, %v1442, 0
        %3474 = vmatpush.xpose.msra.mxu0 0.0
        %3475 = vmatpush.xpose.msra.mxu0 0.0
        %3476 = vmatpush.xpose.msra.mxu0 0.0
        %3477 = vmatpush.xpose.msra.mxu0 0.0
        %3478 = vmatpush.xpose.msra.mxu0 0.0
        %3479 = vmatpush.xpose.msra.mxu0 0.0
        %3480 = vmatpush.xpose.msra.mxu0 0.0
        %3481 = vmatpush.xpose.msra.mxu0 0.0
        %3482 = vmatpush.xpose.msra.mxu0 %v3472
        %3483 = vmatpush.xpose.msra.mxu0 %v3470
        %3484 = vmatpush.xpose.msra.mxu0 %v3468
        %3485 = vmatpush.xpose.msra.mxu0 %v3466
        %3486 = vmatpush.xpose.msra.mxu0 %v3464
        %3487 = vmatpush.xpose.msra.mxu0 %v3462
        %3488 = vmatpush.xpose.msra.mxu0 %v3460
        %3489 = vmatpush.xpose.msra.mxu0 %v3458
        %3490 = vmatmul.f32.gmra.mxu0 %v3442
        %v3491 = vpop.f32.mrf.mxu0
        %v3492 = vadd.f32 0.0, %v3491
        %3493 = vmatmul.f32.gmra.mxu0 %v3444
        %v3494 = vpop.f32.mrf.mxu0
        %v3495 = vadd.f32 0.0, %v3494
        %3496 = vmatmul.f32.gmra.mxu0 %v3446
        %v3497 = vpop.f32.mrf.mxu0
        %v3498 = vadd.f32 0.0, %v3497
        %3499 = vmatmul.f32.gmra.mxu0 %v3448
        %v3500 = vpop.f32.mrf.mxu0
        %v3501 = vadd.f32 0.0, %v3500
        %3502 = vmatmul.f32.gmra.mxu0 %v3450
        %v3503 = vpop.f32.mrf.mxu0
        %v3504 = vadd.f32 0.0, %v3503
        %3505 = vmatmul.f32.gmra.mxu0 %v3452
        %v3506 = vpop.f32.mrf.mxu0
        %v3507 = vadd.f32 0.0, %v3506
        %3508 = vmatmul.f32.gmra.mxu0 %v3454
        %v3509 = vpop.f32.mrf.mxu0
        %v3510 = vadd.f32 0.0, %v3509
        %3511 = vmatmul.f32.gmra.mxu0 %v3456
        %v3512 = vpop.f32.mrf.mxu0
        %v3513 = vadd.f32 0.0, %v3512
        %3514 = vdwg.mxu0
        %v3515 = vsel %vm2419, %v964, 0
        %v3517 = vsel %vm2419, %v966, 0
        %v3519 = vsel %vm2419, %v968, 0
        %v3521 = vsel %vm2419, %v970, 0
        %v3523 = vsel %vm2419, %v972, 0
        %v3525 = vsel %vm2419, %v974, 0
        %v3527 = vsel %vm2419, %v976, 0
        %v3529 = vsel %vm2419, %v978, 0
        %v3531 = vsel %vm2419, %v1444, 0
        %v3533 = vsel %vm2419, %v1446, 0
        %v3535 = vsel %vm2419, %v1448, 0
        %v3537 = vsel %vm2419, %v1450, 0
        %v3539 = vsel %vm2419, %v1452, 0
        %v3541 = vsel %vm2419, %v1454, 0
        %v3543 = vsel %vm2419, %v1456, 0
        %v3545 = vsel %vm2419, %v1458, 0
        %3547 = vmatpush.xpose.msra.mxu0 0.0
        %3548 = vmatpush.xpose.msra.mxu0 0.0
        %3549 = vmatpush.xpose.msra.mxu0 0.0
        %3550 = vmatpush.xpose.msra.mxu0 0.0
        %3551 = vmatpush.xpose.msra.mxu0 0.0
        %3552 = vmatpush.xpose.msra.mxu0 0.0
        %3553 = vmatpush.xpose.msra.mxu0 0.0
        %3554 = vmatpush.xpose.msra.mxu0 0.0
        %3555 = vmatpush.xpose.msra.mxu0 %v3545
        %3556 = vmatpush.xpose.msra.mxu0 %v3543
        %3557 = vmatpush.xpose.msra.mxu0 %v3541
        %3558 = vmatpush.xpose.msra.mxu0 %v3539
        %3559 = vmatpush.xpose.msra.mxu0 %v3537
        %3560 = vmatpush.xpose.msra.mxu0 %v3535
        %3561 = vmatpush.xpose.msra.mxu0 %v3533
        %3562 = vmatpush.xpose.msra.mxu0 %v3531
        %3563 = vmatmul.f32.gmra.mxu0 %v3515
        %v3564 = vpop.f32.mrf.mxu0
        %v3565 = vadd.f32 0.0, %v3564
        %3566 = vmatmul.f32.gmra.mxu0 %v3517
        %v3567 = vpop.f32.mrf.mxu0
        %v3568 = vadd.f32 0.0, %v3567
        %3569 = vmatmul.f32.gmra.mxu0 %v3519
        %v3570 = vpop.f32.mrf.mxu0
        %v3571 = vadd.f32 0.0, %v3570
        %3572 = vmatmul.f32.gmra.mxu0 %v3521
        %v3573 = vpop.f32.mrf.mxu0
        %v3574 = vadd.f32 0.0, %v3573
        %3575 = vmatmul.f32.gmra.mxu0 %v3523
        %v3576 = vpop.f32.mrf.mxu0
        %v3577 = vadd.f32 0.0, %v3576
        %3578 = vmatmul.f32.gmra.mxu0 %v3525
        %v3579 = vpop.f32.mrf.mxu0
        %v3580 = vadd.f32 0.0, %v3579
        %3581 = vmatmul.f32.gmra.mxu0 %v3527
        %v3582 = vpop.f32.mrf.mxu0
        %v3583 = vadd.f32 0.0, %v3582
        %3584 = vmatmul.f32.gmra.mxu0 %v3529
        %v3585 = vpop.f32.mrf.mxu0
        %v3586 = vadd.f32 0.0, %v3585
        %3587 = vdwg.mxu0
        %v3588 = vsel %vm2419, %v980, 0
        %v3590 = vsel %vm2419, %v982, 0
        %v3592 = vsel %vm2419, %v984, 0
        %v3594 = vsel %vm2419, %v986, 0
        %v3596 = vsel %vm2419, %v988, 0
        %v3598 = vsel %vm2419, %v990, 0
        %v3600 = vsel %vm2419, %v992, 0
        %v3602 = vsel %vm2419, %v994, 0
        %v3604 = vsel %vm2419, %v1460, 0
        %v3606 = vsel %vm2419, %v1462, 0
        %v3608 = vsel %vm2419, %v1464, 0
        %v3610 = vsel %vm2419, %v1466, 0
        %v3612 = vsel %vm2419, %v1468, 0
        %v3614 = vsel %vm2419, %v1470, 0
        %v3616 = vsel %vm2419, %v1472, 0
        %v3618 = vsel %vm2419, %v1474, 0
        %3620 = vmatpush.xpose.msra.mxu0 0.0
        %3621 = vmatpush.xpose.msra.mxu0 0.0
        %3622 = vmatpush.xpose.msra.mxu0 0.0
        %3623 = vmatpush.xpose.msra.mxu0 0.0
        %3624 = vmatpush.xpose.msra.mxu0 0.0
        %3625 = vmatpush.xpose.msra.mxu0 0.0
        %3626 = vmatpush.xpose.msra.mxu0 0.0
        %3627 = vmatpush.xpose.msra.mxu0 0.0
        %3628 = vmatpush.xpose.msra.mxu0 %v3618
        %3629 = vmatpush.xpose.msra.mxu0 %v3616
        %3630 = vmatpush.xpose.msra.mxu0 %v3614
        %3631 = vmatpush.xpose.msra.mxu0 %v3612
        %3632 = vmatpush.xpose.msra.mxu0 %v3610
        %3633 = vmatpush.xpose.msra.mxu0 %v3608
        %3634 = vmatpush.xpose.msra.mxu0 %v3606
        %3635 = vmatpush.xpose.msra.mxu0 %v3604
        %3636 = vmatmul.f32.gmra.mxu0 %v3588
        %v3637 = vpop.f32.mrf.mxu0
        %v3638 = vadd.f32 0.0, %v3637
        %3639 = vmatmul.f32.gmra.mxu0 %v3590
        %v3640 = vpop.f32.mrf.mxu0
        %v3641 = vadd.f32 0.0, %v3640
        %3642 = vmatmul.f32.gmra.mxu0 %v3592
        %v3643 = vpop.f32.mrf.mxu0
        %v3644 = vadd.f32 0.0, %v3643
        %3645 = vmatmul.f32.gmra.mxu0 %v3594
        %v3646 = vpop.f32.mrf.mxu0
        %v3647 = vadd.f32 0.0, %v3646
        %3648 = vmatmul.f32.gmra.mxu0 %v3596
        %v3649 = vpop.f32.mrf.mxu0
        %v3650 = vadd.f32 0.0, %v3649
        %3651 = vmatmul.f32.gmra.mxu0 %v3598
        %v3652 = vpop.f32.mrf.mxu0
        %v3653 = vadd.f32 0.0, %v3652
        %3654 = vmatmul.f32.gmra.mxu0 %v3600
        %v3655 = vpop.f32.mrf.mxu0
        %v3656 = vadd.f32 0.0, %v3655
        %3657 = vmatmul.f32.gmra.mxu0 %v3602
        %v3658 = vpop.f32.mrf.mxu0
        %v3659 = vadd.f32 0.0, %v3658
        %3660 = vdwg.mxu0
        %v3661 = vsel %vm2419, %v996, 0
        %v3663 = vsel %vm2419, %v998, 0
        %v3665 = vsel %vm2419, %v1000, 0
        %v3667 = vsel %vm2419, %v1002, 0
        %v3669 = vsel %vm2419, %v1004, 0
        %v3671 = vsel %vm2419, %v1006, 0
        %v3673 = vsel %vm2419, %v1008, 0
        %v3675 = vsel %vm2419, %v1010, 0
        %v3677 = vsel %vm2419, %v1476, 0
        %v3679 = vsel %vm2419, %v1478, 0
        %v3681 = vsel %vm2419, %v1480, 0
        %v3683 = vsel %vm2419, %v1482, 0
        %v3685 = vsel %vm2419, %v1484, 0
        %v3687 = vsel %vm2419, %v1486, 0
        %v3689 = vsel %vm2419, %v1488, 0
        %v3691 = vsel %vm2419, %v1490, 0
        %3693 = vmatpush.xpose.msra.mxu0 0.0
        %3694 = vmatpush.xpose.msra.mxu0 0.0
        %3695 = vmatpush.xpose.msra.mxu0 0.0
        %3696 = vmatpush.xpose.msra.mxu0 0.0
        %3697 = vmatpush.xpose.msra.mxu0 0.0
        %3698 = vmatpush.xpose.msra.mxu0 0.0
        %3699 = vmatpush.xpose.msra.mxu0 0.0
        %3700 = vmatpush.xpose.msra.mxu0 0.0
        %3701 = vmatpush.xpose.msra.mxu0 %v3691
        %3702 = vmatpush.xpose.msra.mxu0 %v3689
        %3703 = vmatpush.xpose.msra.mxu0 %v3687
        %3704 = vmatpush.xpose.msra.mxu0 %v3685
        %3705 = vmatpush.xpose.msra.mxu0 %v3683
        %3706 = vmatpush.xpose.msra.mxu0 %v3681
        %3707 = vmatpush.xpose.msra.mxu0 %v3679
        %3708 = vmatpush.xpose.msra.mxu0 %v3677
        %3709 = vmatmul.f32.gmra.mxu0 %v3661
        %v3710 = vpop.f32.mrf.mxu0
        %v3711 = vadd.f32 0.0, %v3710
        %3712 = vmatmul.f32.gmra.mxu0 %v3663
        %v3713 = vpop.f32.mrf.mxu0
        %v3714 = vadd.f32 0.0, %v3713
        %3715 = vmatmul.f32.gmra.mxu0 %v3665
        %v3716 = vpop.f32.mrf.mxu0
        %v3717 = vadd.f32 0.0, %v3716
        %3718 = vmatmul.f32.gmra.mxu0 %v3667
        %v3719 = vpop.f32.mrf.mxu0
        %v3720 = vadd.f32 0.0, %v3719
        %3721 = vmatmul.f32.gmra.mxu0 %v3669
        %v3722 = vpop.f32.mrf.mxu0
        %v3723 = vadd.f32 0.0, %v3722
        %3724 = vmatmul.f32.gmra.mxu0 %v3671
        %v3725 = vpop.f32.mrf.mxu0
        %v3726 = vadd.f32 0.0, %v3725
        %3727 = vmatmul.f32.gmra.mxu0 %v3673
        %v3728 = vpop.f32.mrf.mxu0
        %v3729 = vadd.f32 0.0, %v3728
        %3730 = vmatmul.f32.gmra.mxu0 %v3675
        %v3731 = vpop.f32.mrf.mxu0
        %v3732 = vadd.f32 0.0, %v3731
        %3733 = vdwg.mxu0
        %v3734 = vsel %vm2419, %v1012, 0
        %v3736 = vsel %vm2419, %v1014, 0
        %v3738 = vsel %vm2419, %v1016, 0
        %v3740 = vsel %vm2419, %v1018, 0
        %v3742 = vsel %vm2419, %v1020, 0
        %v3744 = vsel %vm2419, %v1022, 0
        %v3746 = vsel %vm2419, %v1024, 0
        %v3748 = vsel %vm2419, %v1026, 0
        %v3750 = vsel %vm2419, %v1492, 0
        %v3752 = vsel %vm2419, %v1494, 0
        %v3754 = vsel %vm2419, %v1496, 0
        %v3756 = vsel %vm2419, %v1498, 0
        %v3758 = vsel %vm2419, %v1500, 0
        %v3760 = vsel %vm2419, %v1502, 0
        %v3762 = vsel %vm2419, %v1504, 0
        %v3764 = vsel %vm2419, %v1506, 0
        %3766 = vmatpush.xpose.msra.mxu0 0.0
        %3767 = vmatpush.xpose.msra.mxu0 0.0
        %3768 = vmatpush.xpose.msra.mxu0 0.0
        %3769 = vmatpush.xpose.msra.mxu0 0.0
        %3770 = vmatpush.xpose.msra.mxu0 0.0
        %3771 = vmatpush.xpose.msra.mxu0 0.0
        %3772 = vmatpush.xpose.msra.mxu0 0.0
        %3773 = vmatpush.xpose.msra.mxu0 0.0
        %3774 = vmatpush.xpose.msra.mxu0 %v3764
        %3775 = vmatpush.xpose.msra.mxu0 %v3762
        %3776 = vmatpush.xpose.msra.mxu0 %v3760
        %3777 = vmatpush.xpose.msra.mxu0 %v3758
        %3778 = vmatpush.xpose.msra.mxu0 %v3756
        %3779 = vmatpush.xpose.msra.mxu0 %v3754
        %3780 = vmatpush.xpose.msra.mxu0 %v3752
        %3781 = vmatpush.xpose.msra.mxu0 %v3750
        %3782 = vmatmul.f32.gmra.mxu0 %v3734
        %v3783 = vpop.f32.mrf.mxu0
        %v3784 = vadd.f32 0.0, %v3783
        %3785 = vmatmul.f32.gmra.mxu0 %v3736
        %v3786 = vpop.f32.mrf.mxu0
        %v3787 = vadd.f32 0.0, %v3786
        %3788 = vmatmul.f32.gmra.mxu0 %v3738
        %v3789 = vpop.f32.mrf.mxu0
        %v3790 = vadd.f32 0.0, %v3789
        %3791 = vmatmul.f32.gmra.mxu0 %v3740
        %v3792 = vpop.f32.mrf.mxu0
        %v3793 = vadd.f32 0.0, %v3792
        %3794 = vmatmul.f32.gmra.mxu0 %v3742
        %v3795 = vpop.f32.mrf.mxu0
        %v3796 = vadd.f32 0.0, %v3795
        %3797 = vmatmul.f32.gmra.mxu0 %v3744
        %v3798 = vpop.f32.mrf.mxu0
        %v3799 = vadd.f32 0.0, %v3798
        %3800 = vmatmul.f32.gmra.mxu0 %v3746
        %v3801 = vpop.f32.mrf.mxu0
        %v3802 = vadd.f32 0.0, %v3801
        %3803 = vmatmul.f32.gmra.mxu0 %v3748
        %v3804 = vpop.f32.mrf.mxu0
        %v3805 = vadd.f32 0.0, %v3804
        %3806 = vdwg.mxu0
        %v3807 = vsel %vm2419, %v1028, 0
        %v3809 = vsel %vm2419, %v1030, 0
        %v3811 = vsel %vm2419, %v1032, 0
        %v3813 = vsel %vm2419, %v1034, 0
        %v3815 = vsel %vm2419, %v1036, 0
        %v3817 = vsel %vm2419, %v1038, 0
        %v3819 = vsel %vm2419, %v1040, 0
        %v3821 = vsel %vm2419, %v1042, 0
        %v3823 = vsel %vm2419, %v1508, 0
        %v3825 = vsel %vm2419, %v1510, 0
        %v3827 = vsel %vm2419, %v1512, 0
        %v3829 = vsel %vm2419, %v1514, 0
        %v3831 = vsel %vm2419, %v1516, 0
        %v3833 = vsel %vm2419, %v1518, 0
        %v3835 = vsel %vm2419, %v1520, 0
        %v3837 = vsel %vm2419, %v1522, 0
        %3839 = vmatpush.xpose.msra.mxu0 0.0
        %3840 = vmatpush.xpose.msra.mxu0 0.0
        %3841 = vmatpush.xpose.msra.mxu0 0.0
        %3842 = vmatpush.xpose.msra.mxu0 0.0
        %3843 = vmatpush.xpose.msra.mxu0 0.0
        %3844 = vmatpush.xpose.msra.mxu0 0.0
        %3845 = vmatpush.xpose.msra.mxu0 0.0
        %3846 = vmatpush.xpose.msra.mxu0 0.0
        %3847 = vmatpush.xpose.msra.mxu0 %v3837
        %3848 = vmatpush.xpose.msra.mxu0 %v3835
        %3849 = vmatpush.xpose.msra.mxu0 %v3833
        %3850 = vmatpush.xpose.msra.mxu0 %v3831
        %3851 = vmatpush.xpose.msra.mxu0 %v3829
        %3852 = vmatpush.xpose.msra.mxu0 %v3827
        %3853 = vmatpush.xpose.msra.mxu0 %v3825
        %3854 = vmatpush.xpose.msra.mxu0 %v3823
        %3855 = vmatmul.f32.gmra.mxu0 %v3807
        %v3856 = vpop.f32.mrf.mxu0
        %v3857 = vadd.f32 0.0, %v3856
        %3858 = vmatmul.f32.gmra.mxu0 %v3809
        %v3859 = vpop.f32.mrf.mxu0
        %v3860 = vadd.f32 0.0, %v3859
        %3861 = vmatmul.f32.gmra.mxu0 %v3811
        %v3862 = vpop.f32.mrf.mxu0
        %v3863 = vadd.f32 0.0, %v3862
        %3864 = vmatmul.f32.gmra.mxu0 %v3813
        %v3865 = vpop.f32.mrf.mxu0
        %v3866 = vadd.f32 0.0, %v3865
        %3867 = vmatmul.f32.gmra.mxu0 %v3815
        %v3868 = vpop.f32.mrf.mxu0
        %v3869 = vadd.f32 0.0, %v3868
        %3870 = vmatmul.f32.gmra.mxu0 %v3817
        %v3871 = vpop.f32.mrf.mxu0
        %v3872 = vadd.f32 0.0, %v3871
        %3873 = vmatmul.f32.gmra.mxu0 %v3819
        %v3874 = vpop.f32.mrf.mxu0
        %v3875 = vadd.f32 0.0, %v3874
        %3876 = vmatmul.f32.gmra.mxu0 %v3821
        %v3877 = vpop.f32.mrf.mxu0
        %v3878 = vadd.f32 0.0, %v3877
        %3879 = vdwg.mxu0
        %v3880 = vsel %vm2419, %v1044, 0
        %v3882 = vsel %vm2419, %v1046, 0
        %v3884 = vsel %vm2419, %v1048, 0
        %v3886 = vsel %vm2419, %v1050, 0
        %v3888 = vsel %vm2419, %v1052, 0
        %v3890 = vsel %vm2419, %v1054, 0
        %v3892 = vsel %vm2419, %v1056, 0
        %v3894 = vsel %vm2419, %v1058, 0
        %v3896 = vsel %vm2419, %v1524, 0
        %v3898 = vsel %vm2419, %v1526, 0
        %v3900 = vsel %vm2419, %v1528, 0
        %v3902 = vsel %vm2419, %v1530, 0
        %v3904 = vsel %vm2419, %v1532, 0
        %v3906 = vsel %vm2419, %v1534, 0
        %v3908 = vsel %vm2419, %v1536, 0
        %v3910 = vsel %vm2419, %v1538, 0
        %3912 = vmatpush.xpose.msra.mxu0 0.0
        %3913 = vmatpush.xpose.msra.mxu0 0.0
        %3914 = vmatpush.xpose.msra.mxu0 0.0
        %3915 = vmatpush.xpose.msra.mxu0 0.0
        %3916 = vmatpush.xpose.msra.mxu0 0.0
        %3917 = vmatpush.xpose.msra.mxu0 0.0
        %3918 = vmatpush.xpose.msra.mxu0 0.0
        %3919 = vmatpush.xpose.msra.mxu0 0.0
        %3920 = vmatpush.xpose.msra.mxu0 %v3910
        %3921 = vmatpush.xpose.msra.mxu0 %v3908
        %3922 = vmatpush.xpose.msra.mxu0 %v3906
        %3923 = vmatpush.xpose.msra.mxu0 %v3904
        %3924 = vmatpush.xpose.msra.mxu0 %v3902
        %3925 = vmatpush.xpose.msra.mxu0 %v3900
        %3926 = vmatpush.xpose.msra.mxu0 %v3898
        %3927 = vmatpush.xpose.msra.mxu0 %v3896
        %3928 = vmatmul.f32.gmra.mxu0 %v3880
        %v3929 = vpop.f32.mrf.mxu0
        %v3930 = vadd.f32 0.0, %v3929
        %3931 = vmatmul.f32.gmra.mxu0 %v3882
        %v3932 = vpop.f32.mrf.mxu0
        %v3933 = vadd.f32 0.0, %v3932
        %3934 = vmatmul.f32.gmra.mxu0 %v3884
        %v3935 = vpop.f32.mrf.mxu0
        %v3936 = vadd.f32 0.0, %v3935
        %3937 = vmatmul.f32.gmra.mxu0 %v3886
        %v3938 = vpop.f32.mrf.mxu0
        %v3939 = vadd.f32 0.0, %v3938
        %3940 = vmatmul.f32.gmra.mxu0 %v3888
        %v3941 = vpop.f32.mrf.mxu0
        %v3942 = vadd.f32 0.0, %v3941
        %3943 = vmatmul.f32.gmra.mxu0 %v3890
        %v3944 = vpop.f32.mrf.mxu0
        %v3945 = vadd.f32 0.0, %v3944
        %3946 = vmatmul.f32.gmra.mxu0 %v3892
        %v3947 = vpop.f32.mrf.mxu0
        %v3948 = vadd.f32 0.0, %v3947
        %3949 = vmatmul.f32.gmra.mxu0 %v3894
        %v3950 = vpop.f32.mrf.mxu0
        %v3951 = vadd.f32 0.0, %v3950
        %3952 = vdwg.mxu0
        %v3953 = vsel %vm2419, %v1060, 0
        %v3955 = vsel %vm2419, %v1062, 0
        %v3957 = vsel %vm2419, %v1064, 0
        %v3959 = vsel %vm2419, %v1066, 0
        %v3961 = vsel %vm2419, %v1068, 0
        %v3963 = vsel %vm2419, %v1070, 0
        %v3965 = vsel %vm2419, %v1072, 0
        %v3967 = vsel %vm2419, %v1074, 0
        %v3969 = vsel %vm2419, %v1540, 0
        %v3971 = vsel %vm2419, %v1542, 0
        %v3973 = vsel %vm2419, %v1544, 0
        %v3975 = vsel %vm2419, %v1546, 0
        %v3977 = vsel %vm2419, %v1548, 0
        %v3979 = vsel %vm2419, %v1550, 0
        %v3981 = vsel %vm2419, %v1552, 0
        %v3983 = vsel %vm2419, %v1554, 0
        %3985 = vmatpush.xpose.msra.mxu0 0.0
        %3986 = vmatpush.xpose.msra.mxu0 0.0
        %3987 = vmatpush.xpose.msra.mxu0 0.0
        %3988 = vmatpush.xpose.msra.mxu0 0.0
        %3989 = vmatpush.xpose.msra.mxu0 0.0
        %3990 = vmatpush.xpose.msra.mxu0 0.0
        %3991 = vmatpush.xpose.msra.mxu0 0.0
        %3992 = vmatpush.xpose.msra.mxu0 0.0
        %3993 = vmatpush.xpose.msra.mxu0 %v3983
        %3994 = vmatpush.xpose.msra.mxu0 %v3981
        %3995 = vmatpush.xpose.msra.mxu0 %v3979
        %3996 = vmatpush.xpose.msra.mxu0 %v3977
        %3997 = vmatpush.xpose.msra.mxu0 %v3975
        %3998 = vmatpush.xpose.msra.mxu0 %v3973
        %3999 = vmatpush.xpose.msra.mxu0 %v3971
        %4000 = vmatpush.xpose.msra.mxu0 %v3969
        %4001 = vmatmul.f32.gmra.mxu0 %v3953
        %v4002 = vpop.f32.mrf.mxu0
        %v4003 = vadd.f32 0.0, %v4002
        %4004 = vmatmul.f32.gmra.mxu0 %v3955
        %v4005 = vpop.f32.mrf.mxu0
        %v4006 = vadd.f32 0.0, %v4005
        %4007 = vmatmul.f32.gmra.mxu0 %v3957
        %v4008 = vpop.f32.mrf.mxu0
        %v4009 = vadd.f32 0.0, %v4008
        %4010 = vmatmul.f32.gmra.mxu0 %v3959
        %v4011 = vpop.f32.mrf.mxu0
        %v4012 = vadd.f32 0.0, %v4011
        %4013 = vmatmul.f32.gmra.mxu0 %v3961
        %v4014 = vpop.f32.mrf.mxu0
        %v4015 = vadd.f32 0.0, %v4014
        %4016 = vmatmul.f32.gmra.mxu0 %v3963
        %v4017 = vpop.f32.mrf.mxu0
        %v4018 = vadd.f32 0.0, %v4017
        %4019 = vmatmul.f32.gmra.mxu0 %v3965
        %v4020 = vpop.f32.mrf.mxu0
        %v4021 = vadd.f32 0.0, %v4020
        %4022 = vmatmul.f32.gmra.mxu0 %v3967
        %v4023 = vpop.f32.mrf.mxu0
        %v4024 = vadd.f32 0.0, %v4023
        %4025 = vdwg.mxu0
        %v4026 = vsel %vm2419, %v1076, 0
        %v4028 = vsel %vm2419, %v1078, 0
        %v4030 = vsel %vm2419, %v1080, 0
        %v4032 = vsel %vm2419, %v1082, 0
        %v4034 = vsel %vm2419, %v1084, 0
        %v4036 = vsel %vm2419, %v1086, 0
        %v4038 = vsel %vm2419, %v1088, 0
        %v4040 = vsel %vm2419, %v1090, 0
        %v4042 = vsel %vm2419, %v1556, 0
        %v4044 = vsel %vm2419, %v1558, 0
        %v4046 = vsel %vm2419, %v1560, 0
        %v4048 = vsel %vm2419, %v1562, 0
        %v4050 = vsel %vm2419, %v1564, 0
        %v4052 = vsel %vm2419, %v1566, 0
        %v4054 = vsel %vm2419, %v1568, 0
        %v4056 = vsel %vm2419, %v1570, 0
        %4058 = vmatpush.xpose.msra.mxu0 0.0
        %4059 = vmatpush.xpose.msra.mxu0 0.0
        %4060 = vmatpush.xpose.msra.mxu0 0.0
        %4061 = vmatpush.xpose.msra.mxu0 0.0
        %4062 = vmatpush.xpose.msra.mxu0 0.0
        %4063 = vmatpush.xpose.msra.mxu0 0.0
        %4064 = vmatpush.xpose.msra.mxu0 0.0
        %4065 = vmatpush.xpose.msra.mxu0 0.0
        %4066 = vmatpush.xpose.msra.mxu0 %v4056
        %4067 = vmatpush.xpose.msra.mxu0 %v4054
        %4068 = vmatpush.xpose.msra.mxu0 %v4052
        %4069 = vmatpush.xpose.msra.mxu0 %v4050
        %4070 = vmatpush.xpose.msra.mxu0 %v4048
        %4071 = vmatpush.xpose.msra.mxu0 %v4046
        %4072 = vmatpush.xpose.msra.mxu0 %v4044
        %4073 = vmatpush.xpose.msra.mxu0 %v4042
        %4074 = vmatmul.f32.gmra.mxu0 %v4026
        %v4075 = vpop.f32.mrf.mxu0
        %v4076 = vadd.f32 0.0, %v4075
        %4077 = vmatmul.f32.gmra.mxu0 %v4028
        %v4078 = vpop.f32.mrf.mxu0
        %v4079 = vadd.f32 0.0, %v4078
        %4080 = vmatmul.f32.gmra.mxu0 %v4030
        %v4081 = vpop.f32.mrf.mxu0
        %v4082 = vadd.f32 0.0, %v4081
        %4083 = vmatmul.f32.gmra.mxu0 %v4032
        %v4084 = vpop.f32.mrf.mxu0
        %v4085 = vadd.f32 0.0, %v4084
        %4086 = vmatmul.f32.gmra.mxu0 %v4034
        %v4087 = vpop.f32.mrf.mxu0
        %v4088 = vadd.f32 0.0, %v4087
        %4089 = vmatmul.f32.gmra.mxu0 %v4036
        %v4090 = vpop.f32.mrf.mxu0
        %v4091 = vadd.f32 0.0, %v4090
        %4092 = vmatmul.f32.gmra.mxu0 %v4038
        %v4093 = vpop.f32.mrf.mxu0
        %v4094 = vadd.f32 0.0, %v4093
        %4095 = vmatmul.f32.gmra.mxu0 %v4040
        %v4096 = vpop.f32.mrf.mxu0
        %v4097 = vadd.f32 0.0, %v4096
        %4098 = vdwg.mxu0
        %v4099 = vsel %vm2419, %v1092, 0
        %v4101 = vsel %vm2419, %v1094, 0
        %v4103 = vsel %vm2419, %v1096, 0
        %v4105 = vsel %vm2419, %v1098, 0
        %v4107 = vsel %vm2419, %v1100, 0
        %v4109 = vsel %vm2419, %v1102, 0
        %v4111 = vsel %vm2419, %v1104, 0
        %v4113 = vsel %vm2419, %v1106, 0
        %v4115 = vsel %vm2419, %v1572, 0
        %v4117 = vsel %vm2419, %v1574, 0
        %v4119 = vsel %vm2419, %v1576, 0
        %v4121 = vsel %vm2419, %v1578, 0
        %v4123 = vsel %vm2419, %v1580, 0
        %v4125 = vsel %vm2419, %v1582, 0
        %v4127 = vsel %vm2419, %v1584, 0
        %v4129 = vsel %vm2419, %v1586, 0
        %4131 = vmatpush.xpose.msra.mxu0 0.0
        %4132 = vmatpush.xpose.msra.mxu0 0.0
        %4133 = vmatpush.xpose.msra.mxu0 0.0
        %4134 = vmatpush.xpose.msra.mxu0 0.0
        %4135 = vmatpush.xpose.msra.mxu0 0.0
        %4136 = vmatpush.xpose.msra.mxu0 0.0
        %4137 = vmatpush.xpose.msra.mxu0 0.0
        %4138 = vmatpush.xpose.msra.mxu0 0.0
        %4139 = vmatpush.xpose.msra.mxu0 %v4129
        %4140 = vmatpush.xpose.msra.mxu0 %v4127
        %4141 = vmatpush.xpose.msra.mxu0 %v4125
        %4142 = vmatpush.xpose.msra.mxu0 %v4123
        %4143 = vmatpush.xpose.msra.mxu0 %v4121
        %4144 = vmatpush.xpose.msra.mxu0 %v4119
        %4145 = vmatpush.xpose.msra.mxu0 %v4117
        %4146 = vmatpush.xpose.msra.mxu0 %v4115
        %4147 = vmatmul.f32.gmra.mxu0 %v4099
        %v4148 = vpop.f32.mrf.mxu0
        %v4149 = vadd.f32 0.0, %v4148
        %4150 = vmatmul.f32.gmra.mxu0 %v4101
        %v4151 = vpop.f32.mrf.mxu0
        %v4152 = vadd.f32 0.0, %v4151
        %4153 = vmatmul.f32.gmra.mxu0 %v4103
        %v4154 = vpop.f32.mrf.mxu0
        %v4155 = vadd.f32 0.0, %v4154
        %4156 = vmatmul.f32.gmra.mxu0 %v4105
        %v4157 = vpop.f32.mrf.mxu0
        %v4158 = vadd.f32 0.0, %v4157
        %4159 = vmatmul.f32.gmra.mxu0 %v4107
        %v4160 = vpop.f32.mrf.mxu0
        %v4161 = vadd.f32 0.0, %v4160
        %4162 = vmatmul.f32.gmra.mxu0 %v4109
        %v4163 = vpop.f32.mrf.mxu0
        %v4164 = vadd.f32 0.0, %v4163
        %4165 = vmatmul.f32.gmra.mxu0 %v4111
        %v4166 = vpop.f32.mrf.mxu0
        %v4167 = vadd.f32 0.0, %v4166
        %4168 = vmatmul.f32.gmra.mxu0 %v4113
        %v4169 = vpop.f32.mrf.mxu0
        %v4170 = vadd.f32 0.0, %v4169
        %4171 = vdwg.mxu0
        %v4172 = vsel %vm2419, %v1108, 0
        %v4174 = vsel %vm2419, %v1110, 0
        %v4176 = vsel %vm2419, %v1112, 0
        %v4178 = vsel %vm2419, %v1114, 0
        %v4180 = vsel %vm2419, %v1116, 0
        %v4182 = vsel %vm2419, %v1118, 0
        %v4184 = vsel %vm2419, %v1120, 0
        %v4186 = vsel %vm2419, %v1122, 0
        %v4188 = vsel %vm2419, %v1588, 0
        %v4190 = vsel %vm2419, %v1590, 0
        %v4192 = vsel %vm2419, %v1592, 0
        %v4194 = vsel %vm2419, %v1594, 0
        %v4196 = vsel %vm2419, %v1596, 0
        %v4198 = vsel %vm2419, %v1598, 0
        %v4200 = vsel %vm2419, %v1600, 0
        %v4202 = vsel %vm2419, %v1602, 0
        %4204 = vmatpush.xpose.msra.mxu0 0.0
        %4205 = vmatpush.xpose.msra.mxu0 0.0
        %4206 = vmatpush.xpose.msra.mxu0 0.0
        %4207 = vmatpush.xpose.msra.mxu0 0.0
        %4208 = vmatpush.xpose.msra.mxu0 0.0
        %4209 = vmatpush.xpose.msra.mxu0 0.0
        %4210 = vmatpush.xpose.msra.mxu0 0.0
        %4211 = vmatpush.xpose.msra.mxu0 0.0
        %4212 = vmatpush.xpose.msra.mxu0 %v4202
        %4213 = vmatpush.xpose.msra.mxu0 %v4200
        %4214 = vmatpush.xpose.msra.mxu0 %v4198
        %4215 = vmatpush.xpose.msra.mxu0 %v4196
        %4216 = vmatpush.xpose.msra.mxu0 %v4194
        %4217 = vmatpush.xpose.msra.mxu0 %v4192
        %4218 = vmatpush.xpose.msra.mxu0 %v4190
        %4219 = vmatpush.xpose.msra.mxu0 %v4188
        %4220 = vmatmul.f32.gmra.mxu0 %v4172
        %v4221 = vpop.f32.mrf.mxu0
        %v4222 = vadd.f32 0.0, %v4221
        %4223 = vmatmul.f32.gmra.mxu0 %v4174
        %v4224 = vpop.f32.mrf.mxu0
        %v4225 = vadd.f32 0.0, %v4224
        %4226 = vmatmul.f32.gmra.mxu0 %v4176
        %v4227 = vpop.f32.mrf.mxu0
        %v4228 = vadd.f32 0.0, %v4227
        %4229 = vmatmul.f32.gmra.mxu0 %v4178
        %v4230 = vpop.f32.mrf.mxu0
        %v4231 = vadd.f32 0.0, %v4230
        %4232 = vmatmul.f32.gmra.mxu0 %v4180
        %v4233 = vpop.f32.mrf.mxu0
        %v4234 = vadd.f32 0.0, %v4233
        %4235 = vmatmul.f32.gmra.mxu0 %v4182
        %v4236 = vpop.f32.mrf.mxu0
        %v4237 = vadd.f32 0.0, %v4236
        %4238 = vmatmul.f32.gmra.mxu0 %v4184
        %v4239 = vpop.f32.mrf.mxu0
        %v4240 = vadd.f32 0.0, %v4239
        %4241 = vmatmul.f32.gmra.mxu0 %v4186
        %v4242 = vpop.f32.mrf.mxu0
        %v4243 = vadd.f32 0.0, %v4242
        %4244 = vdwg.mxu0
        %v4245 = vsel %vm2419, %v1124, 0
        %v4247 = vsel %vm2419, %v1126, 0
        %v4249 = vsel %vm2419, %v1128, 0
        %v4251 = vsel %vm2419, %v1130, 0
        %v4253 = vsel %vm2419, %v1132, 0
        %v4255 = vsel %vm2419, %v1134, 0
        %v4257 = vsel %vm2419, %v1136, 0
        %v4259 = vsel %vm2419, %v1138, 0
        %v4261 = vsel %vm2419, %v1604, 0
        %v4263 = vsel %vm2419, %v1606, 0
        %v4265 = vsel %vm2419, %v1608, 0
        %v4267 = vsel %vm2419, %v1610, 0
        %v4269 = vsel %vm2419, %v1612, 0
        %v4271 = vsel %vm2419, %v1614, 0
        %v4273 = vsel %vm2419, %v1616, 0
        %v4275 = vsel %vm2419, %v1618, 0
        %4277 = vmatpush.xpose.msra.mxu0 0.0
        %4278 = vmatpush.xpose.msra.mxu0 0.0
        %4279 = vmatpush.xpose.msra.mxu0 0.0
        %4280 = vmatpush.xpose.msra.mxu0 0.0
        %4281 = vmatpush.xpose.msra.mxu0 0.0
        %4282 = vmatpush.xpose.msra.mxu0 0.0
        %4283 = vmatpush.xpose.msra.mxu0 0.0
        %4284 = vmatpush.xpose.msra.mxu0 0.0
        %4285 = vmatpush.xpose.msra.mxu0 %v4275
        %4286 = vmatpush.xpose.msra.mxu0 %v4273
        %4287 = vmatpush.xpose.msra.mxu0 %v4271
        %4288 = vmatpush.xpose.msra.mxu0 %v4269
        %4289 = vmatpush.xpose.msra.mxu0 %v4267
        %4290 = vmatpush.xpose.msra.mxu0 %v4265
        %4291 = vmatpush.xpose.msra.mxu0 %v4263
        %4292 = vmatpush.xpose.msra.mxu0 %v4261
        %4293 = vmatmul.f32.gmra.mxu0 %v4245
        %v4294 = vpop.f32.mrf.mxu0
        %v4295 = vadd.f32 0.0, %v4294
        %4296 = vmatmul.f32.gmra.mxu0 %v4247
        %v4297 = vpop.f32.mrf.mxu0
        %v4298 = vadd.f32 0.0, %v4297
        %4299 = vmatmul.f32.gmra.mxu0 %v4249
        %v4300 = vpop.f32.mrf.mxu0
        %v4301 = vadd.f32 0.0, %v4300
        %4302 = vmatmul.f32.gmra.mxu0 %v4251
        %v4303 = vpop.f32.mrf.mxu0
        %v4304 = vadd.f32 0.0, %v4303
        %4305 = vmatmul.f32.gmra.mxu0 %v4253
        %v4306 = vpop.f32.mrf.mxu0
        %v4307 = vadd.f32 0.0, %v4306
        %4308 = vmatmul.f32.gmra.mxu0 %v4255
        %v4309 = vpop.f32.mrf.mxu0
        %v4310 = vadd.f32 0.0, %v4309
        %4311 = vmatmul.f32.gmra.mxu0 %v4257
        %v4312 = vpop.f32.mrf.mxu0
        %v4313 = vadd.f32 0.0, %v4312
        %4314 = vmatmul.f32.gmra.mxu0 %v4259
        %v4315 = vpop.f32.mrf.mxu0
        %v4316 = vadd.f32 0.0, %v4315
        %4317 = vdwg.mxu0
        %v4318 = vsel %vm2419, %v1140, 0
        %v4320 = vsel %vm2419, %v1142, 0
        %v4322 = vsel %vm2419, %v1144, 0
        %v4324 = vsel %vm2419, %v1146, 0
        %v4326 = vsel %vm2419, %v1148, 0
        %v4328 = vsel %vm2419, %v1150, 0
        %v4330 = vsel %vm2419, %v1152, 0
        %v4332 = vsel %vm2419, %v1154, 0
        %v4334 = vsel %vm2419, %v1620, 0
        %v4336 = vsel %vm2419, %v1622, 0
        %v4338 = vsel %vm2419, %v1624, 0
        %v4340 = vsel %vm2419, %v1626, 0
        %v4342 = vsel %vm2419, %v1628, 0
        %v4344 = vsel %vm2419, %v1630, 0
        %v4346 = vsel %vm2419, %v1632, 0
        %v4348 = vsel %vm2419, %v1634, 0
        %4350 = vmatpush.xpose.msra.mxu0 0.0
        %4351 = vmatpush.xpose.msra.mxu0 0.0
        %4352 = vmatpush.xpose.msra.mxu0 0.0
        %4353 = vmatpush.xpose.msra.mxu0 0.0
        %4354 = vmatpush.xpose.msra.mxu0 0.0
        %4355 = vmatpush.xpose.msra.mxu0 0.0
        %4356 = vmatpush.xpose.msra.mxu0 0.0
        %4357 = vmatpush.xpose.msra.mxu0 0.0
        %4358 = vmatpush.xpose.msra.mxu0 %v4348
        %4359 = vmatpush.xpose.msra.mxu0 %v4346
        %4360 = vmatpush.xpose.msra.mxu0 %v4344
        %4361 = vmatpush.xpose.msra.mxu0 %v4342
        %4362 = vmatpush.xpose.msra.mxu0 %v4340
        %4363 = vmatpush.xpose.msra.mxu0 %v4338
        %4364 = vmatpush.xpose.msra.mxu0 %v4336
        %4365 = vmatpush.xpose.msra.mxu0 %v4334
        %4366 = vmatmul.f32.gmra.mxu0 %v4318
        %v4367 = vpop.f32.mrf.mxu0
        %v4368 = vadd.f32 0.0, %v4367
        %4369 = vmatmul.f32.gmra.mxu0 %v4320
        %v4370 = vpop.f32.mrf.mxu0
        %v4371 = vadd.f32 0.0, %v4370
        %4372 = vmatmul.f32.gmra.mxu0 %v4322
        %v4373 = vpop.f32.mrf.mxu0
        %v4374 = vadd.f32 0.0, %v4373
        %4375 = vmatmul.f32.gmra.mxu0 %v4324
        %v4376 = vpop.f32.mrf.mxu0
        %v4377 = vadd.f32 0.0, %v4376
        %4378 = vmatmul.f32.gmra.mxu0 %v4326
        %v4379 = vpop.f32.mrf.mxu0
        %v4380 = vadd.f32 0.0, %v4379
        %4381 = vmatmul.f32.gmra.mxu0 %v4328
        %v4382 = vpop.f32.mrf.mxu0
        %v4383 = vadd.f32 0.0, %v4382
        %4384 = vmatmul.f32.gmra.mxu0 %v4330
        %v4385 = vpop.f32.mrf.mxu0
        %v4386 = vadd.f32 0.0, %v4385
        %4387 = vmatmul.f32.gmra.mxu0 %v4332
        %v4388 = vpop.f32.mrf.mxu0
        %v4389 = vadd.f32 0.0, %v4388
        %4390 = vdwg.mxu0
        %v4391 = vsel %vm2419, %v1156, 0
        %v4393 = vsel %vm2419, %v1158, 0
        %v4395 = vsel %vm2419, %v1160, 0
        %v4397 = vsel %vm2419, %v1162, 0
        %v4399 = vsel %vm2419, %v1164, 0
        %v4401 = vsel %vm2419, %v1166, 0
        %v4403 = vsel %vm2419, %v1168, 0
        %v4405 = vsel %vm2419, %v1170, 0
        %v4407 = vsel %vm2419, %v1636, 0
        %v4409 = vsel %vm2419, %v1638, 0
        %v4411 = vsel %vm2419, %v1640, 0
        %v4413 = vsel %vm2419, %v1642, 0
        %v4415 = vsel %vm2419, %v1644, 0
        %v4417 = vsel %vm2419, %v1646, 0
        %v4419 = vsel %vm2419, %v1648, 0
        %v4421 = vsel %vm2419, %v1650, 0
        %4423 = vmatpush.xpose.msra.mxu0 0.0
        %4424 = vmatpush.xpose.msra.mxu0 0.0
        %4425 = vmatpush.xpose.msra.mxu0 0.0
        %4426 = vmatpush.xpose.msra.mxu0 0.0
        %4427 = vmatpush.xpose.msra.mxu0 0.0
        %4428 = vmatpush.xpose.msra.mxu0 0.0
        %4429 = vmatpush.xpose.msra.mxu0 0.0
        %4430 = vmatpush.xpose.msra.mxu0 0.0
        %4431 = vmatpush.xpose.msra.mxu0 %v4421
        %4432 = vmatpush.xpose.msra.mxu0 %v4419
        %4433 = vmatpush.xpose.msra.mxu0 %v4417
        %4434 = vmatpush.xpose.msra.mxu0 %v4415
        %4435 = vmatpush.xpose.msra.mxu0 %v4413
        %4436 = vmatpush.xpose.msra.mxu0 %v4411
        %4437 = vmatpush.xpose.msra.mxu0 %v4409
        %4438 = vmatpush.xpose.msra.mxu0 %v4407
        %4439 = vmatmul.f32.gmra.mxu0 %v4391
        %v4440 = vpop.f32.mrf.mxu0
        %v4441 = vadd.f32 0.0, %v4440
        %4442 = vmatmul.f32.gmra.mxu0 %v4393
        %v4443 = vpop.f32.mrf.mxu0
        %v4444 = vadd.f32 0.0, %v4443
        %4445 = vmatmul.f32.gmra.mxu0 %v4395
        %v4446 = vpop.f32.mrf.mxu0
        %v4447 = vadd.f32 0.0, %v4446
        %4448 = vmatmul.f32.gmra.mxu0 %v4397
        %v4449 = vpop.f32.mrf.mxu0
        %v4450 = vadd.f32 0.0, %v4449
        %4451 = vmatmul.f32.gmra.mxu0 %v4399
        %v4452 = vpop.f32.mrf.mxu0
        %v4453 = vadd.f32 0.0, %v4452
        %4454 = vmatmul.f32.gmra.mxu0 %v4401
        %v4455 = vpop.f32.mrf.mxu0
        %v4456 = vadd.f32 0.0, %v4455
        %4457 = vmatmul.f32.gmra.mxu0 %v4403
        %v4458 = vpop.f32.mrf.mxu0
        %v4459 = vadd.f32 0.0, %v4458
        %4460 = vmatmul.f32.gmra.mxu0 %v4405
        %v4461 = vpop.f32.mrf.mxu0
        %v4462 = vadd.f32 0.0, %v4461
        %4463 = vdwg.mxu0
        %v4464 = vsel %vm2419, %v1172, 0
        %v4466 = vsel %vm2419, %v1174, 0
        %v4468 = vsel %vm2419, %v1176, 0
        %v4470 = vsel %vm2419, %v1178, 0
        %v4472 = vsel %vm2419, %v1180, 0
        %v4474 = vsel %vm2419, %v1182, 0
        %v4476 = vsel %vm2419, %v1184, 0
        %v4478 = vsel %vm2419, %v1186, 0
        %v4480 = vsel %vm2419, %v1652, 0
        %v4482 = vsel %vm2419, %v1654, 0
        %v4484 = vsel %vm2419, %v1656, 0
        %v4486 = vsel %vm2419, %v1658, 0
        %v4488 = vsel %vm2419, %v1660, 0
        %v4490 = vsel %vm2419, %v1662, 0
        %v4492 = vsel %vm2419, %v1664, 0
        %v4494 = vsel %vm2419, %v1666, 0
        %4496 = vmatpush.xpose.msra.mxu0 0.0
        %4497 = vmatpush.xpose.msra.mxu0 0.0
        %4498 = vmatpush.xpose.msra.mxu0 0.0
        %4499 = vmatpush.xpose.msra.mxu0 0.0
        %4500 = vmatpush.xpose.msra.mxu0 0.0
        %4501 = vmatpush.xpose.msra.mxu0 0.0
        %4502 = vmatpush.xpose.msra.mxu0 0.0
        %4503 = vmatpush.xpose.msra.mxu0 0.0
        %4504 = vmatpush.xpose.msra.mxu0 %v4494
        %4505 = vmatpush.xpose.msra.mxu0 %v4492
        %4506 = vmatpush.xpose.msra.mxu0 %v4490
        %4507 = vmatpush.xpose.msra.mxu0 %v4488
        %4508 = vmatpush.xpose.msra.mxu0 %v4486
        %4509 = vmatpush.xpose.msra.mxu0 %v4484
        %4510 = vmatpush.xpose.msra.mxu0 %v4482
        %4511 = vmatpush.xpose.msra.mxu0 %v4480
        %4512 = vmatmul.f32.gmra.mxu0 %v4464
        %v4513 = vpop.f32.mrf.mxu0
        %v4514 = vadd.f32 0.0, %v4513
        %4515 = vmatmul.f32.gmra.mxu0 %v4466
        %v4516 = vpop.f32.mrf.mxu0
        %v4517 = vadd.f32 0.0, %v4516
        %4518 = vmatmul.f32.gmra.mxu0 %v4468
        %v4519 = vpop.f32.mrf.mxu0
        %v4520 = vadd.f32 0.0, %v4519
        %4521 = vmatmul.f32.gmra.mxu0 %v4470
        %v4522 = vpop.f32.mrf.mxu0
        %v4523 = vadd.f32 0.0, %v4522
        %4524 = vmatmul.f32.gmra.mxu0 %v4472
        %v4525 = vpop.f32.mrf.mxu0
        %v4526 = vadd.f32 0.0, %v4525
        %4527 = vmatmul.f32.gmra.mxu0 %v4474
        %v4528 = vpop.f32.mrf.mxu0
        %v4529 = vadd.f32 0.0, %v4528
        %4530 = vmatmul.f32.gmra.mxu0 %v4476
        %v4531 = vpop.f32.mrf.mxu0
        %v4532 = vadd.f32 0.0, %v4531
        %4533 = vmatmul.f32.gmra.mxu0 %v4478
        %v4534 = vpop.f32.mrf.mxu0
        %v4535 = vadd.f32 0.0, %v4534
        %4536 = vdwg.mxu0
        %v4537 = vsel %vm2419, %v1188, 0
        %v4539 = vsel %vm2419, %v1190, 0
        %v4541 = vsel %vm2419, %v1192, 0
        %v4543 = vsel %vm2419, %v1194, 0
        %v4545 = vsel %vm2419, %v1196, 0
        %v4547 = vsel %vm2419, %v1198, 0
        %v4549 = vsel %vm2419, %v1200, 0
        %v4551 = vsel %vm2419, %v1202, 0
        %v4553 = vsel %vm2419, %v1668, 0
        %v4555 = vsel %vm2419, %v1670, 0
        %v4557 = vsel %vm2419, %v1672, 0
        %v4559 = vsel %vm2419, %v1674, 0
        %v4561 = vsel %vm2419, %v1676, 0
        %v4563 = vsel %vm2419, %v1678, 0
        %v4565 = vsel %vm2419, %v1680, 0
        %v4567 = vsel %vm2419, %v1682, 0
        %4569 = vmatpush.xpose.msra.mxu0 0.0
        %4570 = vmatpush.xpose.msra.mxu0 0.0
        %4571 = vmatpush.xpose.msra.mxu0 0.0
        %4572 = vmatpush.xpose.msra.mxu0 0.0
        %4573 = vmatpush.xpose.msra.mxu0 0.0
        %4574 = vmatpush.xpose.msra.mxu0 0.0
        %4575 = vmatpush.xpose.msra.mxu0 0.0
        %4576 = vmatpush.xpose.msra.mxu0 0.0
        %4577 = vmatpush.xpose.msra.mxu0 %v4567
        %4578 = vmatpush.xpose.msra.mxu0 %v4565
        %4579 = vmatpush.xpose.msra.mxu0 %v4563
        %4580 = vmatpush.xpose.msra.mxu0 %v4561
        %4581 = vmatpush.xpose.msra.mxu0 %v4559
        %4582 = vmatpush.xpose.msra.mxu0 %v4557
        %4583 = vmatpush.xpose.msra.mxu0 %v4555
        %4584 = vmatpush.xpose.msra.mxu0 %v4553
        %4585 = vmatmul.f32.gmra.mxu0 %v4537
        %v4586 = vpop.f32.mrf.mxu0
        %v4587 = vadd.f32 0.0, %v4586
        %4588 = vmatmul.f32.gmra.mxu0 %v4539
        %v4589 = vpop.f32.mrf.mxu0
        %v4590 = vadd.f32 0.0, %v4589
        %4591 = vmatmul.f32.gmra.mxu0 %v4541
        %v4592 = vpop.f32.mrf.mxu0
        %v4593 = vadd.f32 0.0, %v4592
        %4594 = vmatmul.f32.gmra.mxu0 %v4543
        %v4595 = vpop.f32.mrf.mxu0
        %v4596 = vadd.f32 0.0, %v4595
        %4597 = vmatmul.f32.gmra.mxu0 %v4545
        %v4598 = vpop.f32.mrf.mxu0
        %v4599 = vadd.f32 0.0, %v4598
        %4600 = vmatmul.f32.gmra.mxu0 %v4547
        %v4601 = vpop.f32.mrf.mxu0
        %v4602 = vadd.f32 0.0, %v4601
        %4603 = vmatmul.f32.gmra.mxu0 %v4549
        %v4604 = vpop.f32.mrf.mxu0
        %v4605 = vadd.f32 0.0, %v4604
        %4606 = vmatmul.f32.gmra.mxu0 %v4551
        %v4607 = vpop.f32.mrf.mxu0
        %v4608 = vadd.f32 0.0, %v4607
        %4609 = vdwg.mxu0
        %v4610 = vsel %vm2419, %v1204, 0
        %v4612 = vsel %vm2419, %v1206, 0
        %v4614 = vsel %vm2419, %v1208, 0
        %v4616 = vsel %vm2419, %v1210, 0
        %v4618 = vsel %vm2419, %v1212, 0
        %v4620 = vsel %vm2419, %v1214, 0
        %v4622 = vsel %vm2419, %v1216, 0
        %v4624 = vsel %vm2419, %v1218, 0
        %v4626 = vsel %vm2419, %v1684, 0
        %v4628 = vsel %vm2419, %v1686, 0
        %v4630 = vsel %vm2419, %v1688, 0
        %v4632 = vsel %vm2419, %v1690, 0
        %v4634 = vsel %vm2419, %v1692, 0
        %v4636 = vsel %vm2419, %v1694, 0
        %v4638 = vsel %vm2419, %v1696, 0
        %v4640 = vsel %vm2419, %v1698, 0
        %4642 = vmatpush.xpose.msra.mxu0 0.0
        %4643 = vmatpush.xpose.msra.mxu0 0.0
        %4644 = vmatpush.xpose.msra.mxu0 0.0
        %4645 = vmatpush.xpose.msra.mxu0 0.0
        %4646 = vmatpush.xpose.msra.mxu0 0.0
        %4647 = vmatpush.xpose.msra.mxu0 0.0
        %4648 = vmatpush.xpose.msra.mxu0 0.0
        %4649 = vmatpush.xpose.msra.mxu0 0.0
        %4650 = vmatpush.xpose.msra.mxu0 %v4640
        %4651 = vmatpush.xpose.msra.mxu0 %v4638
        %4652 = vmatpush.xpose.msra.mxu0 %v4636
        %4653 = vmatpush.xpose.msra.mxu0 %v4634
        %4654 = vmatpush.xpose.msra.mxu0 %v4632
        %4655 = vmatpush.xpose.msra.mxu0 %v4630
        %4656 = vmatpush.xpose.msra.mxu0 %v4628
        %4657 = vmatpush.xpose.msra.mxu0 %v4626
        %4658 = vmatmul.f32.gmra.mxu0 %v4610
        %v4659 = vpop.f32.mrf.mxu0
        %v4660 = vadd.f32 0.0, %v4659
        %4661 = vmatmul.f32.gmra.mxu0 %v4612
        %v4662 = vpop.f32.mrf.mxu0
        %v4663 = vadd.f32 0.0, %v4662
        %4664 = vmatmul.f32.gmra.mxu0 %v4614
        %v4665 = vpop.f32.mrf.mxu0
        %v4666 = vadd.f32 0.0, %v4665
        %4667 = vmatmul.f32.gmra.mxu0 %v4616
        %v4668 = vpop.f32.mrf.mxu0
        %v4669 = vadd.f32 0.0, %v4668
        %4670 = vmatmul.f32.gmra.mxu0 %v4618
        %v4671 = vpop.f32.mrf.mxu0
        %v4672 = vadd.f32 0.0, %v4671
        %4673 = vmatmul.f32.gmra.mxu0 %v4620
        %v4674 = vpop.f32.mrf.mxu0
        %v4675 = vadd.f32 0.0, %v4674
        %4676 = vmatmul.f32.gmra.mxu0 %v4622
        %v4677 = vpop.f32.mrf.mxu0
        %v4678 = vadd.f32 0.0, %v4677
        %4679 = vmatmul.f32.gmra.mxu0 %v4624
        %v4680 = vpop.f32.mrf.mxu0
        %v4681 = vadd.f32 0.0, %v4680
        %4682 = vdwg.mxu0
        %v4683 = vsel %vm2419, %v1220, 0
        %v4685 = vsel %vm2419, %v1222, 0
        %v4687 = vsel %vm2419, %v1224, 0
        %v4689 = vsel %vm2419, %v1226, 0
        %v4691 = vsel %vm2419, %v1228, 0
        %v4693 = vsel %vm2419, %v1230, 0
        %v4695 = vsel %vm2419, %v1232, 0
        %v4697 = vsel %vm2419, %v1234, 0
        %v4699 = vsel %vm2419, %v1700, 0
        %v4701 = vsel %vm2419, %v1702, 0
        %v4703 = vsel %vm2419, %v1704, 0
        %v4705 = vsel %vm2419, %v1706, 0
        %v4707 = vsel %vm2419, %v1708, 0
        %v4709 = vsel %vm2419, %v1710, 0
        %v4711 = vsel %vm2419, %v1712, 0
        %v4713 = vsel %vm2419, %v1714, 0
        %4715 = vmatpush.xpose.msra.mxu0 0.0
        %4716 = vmatpush.xpose.msra.mxu0 0.0
        %4717 = vmatpush.xpose.msra.mxu0 0.0
        %4718 = vmatpush.xpose.msra.mxu0 0.0
        %4719 = vmatpush.xpose.msra.mxu0 0.0
        %4720 = vmatpush.xpose.msra.mxu0 0.0
        %4721 = vmatpush.xpose.msra.mxu0 0.0
        %4722 = vmatpush.xpose.msra.mxu0 0.0
        %4723 = vmatpush.xpose.msra.mxu0 %v4713
        %4724 = vmatpush.xpose.msra.mxu0 %v4711
        %4725 = vmatpush.xpose.msra.mxu0 %v4709
        %4726 = vmatpush.xpose.msra.mxu0 %v4707
        %4727 = vmatpush.xpose.msra.mxu0 %v4705
        %4728 = vmatpush.xpose.msra.mxu0 %v4703
        %4729 = vmatpush.xpose.msra.mxu0 %v4701
        %4730 = vmatpush.xpose.msra.mxu0 %v4699
        %4731 = vmatmul.f32.gmra.mxu0 %v4683
        %v4732 = vpop.f32.mrf.mxu0
        %v4733 = vadd.f32 0.0, %v4732
        %4734 = vmatmul.f32.gmra.mxu0 %v4685
        %v4735 = vpop.f32.mrf.mxu0
        %v4736 = vadd.f32 0.0, %v4735
        %4737 = vmatmul.f32.gmra.mxu0 %v4687
        %v4738 = vpop.f32.mrf.mxu0
        %v4739 = vadd.f32 0.0, %v4738
        %4740 = vmatmul.f32.gmra.mxu0 %v4689
        %v4741 = vpop.f32.mrf.mxu0
        %v4742 = vadd.f32 0.0, %v4741
        %4743 = vmatmul.f32.gmra.mxu0 %v4691
        %v4744 = vpop.f32.mrf.mxu0
        %v4745 = vadd.f32 0.0, %v4744
        %4746 = vmatmul.f32.gmra.mxu0 %v4693
        %v4747 = vpop.f32.mrf.mxu0
        %v4748 = vadd.f32 0.0, %v4747
        %4749 = vmatmul.f32.gmra.mxu0 %v4695
        %v4750 = vpop.f32.mrf.mxu0
        %v4751 = vadd.f32 0.0, %v4750
        %4752 = vmatmul.f32.gmra.mxu0 %v4697
        %v4753 = vpop.f32.mrf.mxu0
        %v4754 = vadd.f32 0.0, %v4753
        %4755 = vdwg.mxu0
        %vm4756 = vcmask 523264
        %v4757 = vsel %vm4756, %v2470, -inf
        %4758 = vmax.xlane.f32.xlu0 %v4757
        %v4759 = vpop.xlane.xlu0 %4758
        %v4760 = vsel %vm4756, %v2473, -inf
        %4761 = vmax.xlane.f32.xlu0 %v4760
        %v4762 = vpop.xlane.xlu0 %4761
        %v4763 = vsel %vm4756, %v2476, -inf
        %4764 = vmax.xlane.f32.xlu0 %v4763
        %v4765 = vpop.xlane.xlu0 %4764
        %v4766 = vsel %vm4756, %v2479, -inf
        %4767 = vmax.xlane.f32.xlu0 %v4766
        %v4768 = vpop.xlane.xlu0 %4767
        %v4769 = vsel %vm4756, %v2482, -inf
        %4770 = vmax.xlane.f32.xlu0 %v4769
        %v4771 = vpop.xlane.xlu0 %4770
        %v4772 = vsel %vm4756, %v2485, -inf
        %4773 = vmax.xlane.f32.xlu0 %v4772
        %v4774 = vpop.xlane.xlu0 %4773
        %v4775 = vsel %vm4756, %v2488, -inf
        %4776 = vmax.xlane.f32.xlu0 %v4775
        %v4777 = vpop.xlane.xlu0 %4776
        %v4778 = vsel %vm4756, %v2491, -inf
        %4779 = vmax.xlane.f32.xlu0 %v4778
        %v4780 = vpop.xlane.xlu0 %4779
        %v4781 = vsel %vm4756, %v2543, -inf
        %4782 = vmax.xlane.f32.xlu0 %v4781
        %v4783 = vpop.xlane.xlu0 %4782
        %v4784 = vsel %vm4756, %v2546, -inf
        %4785 = vmax.xlane.f32.xlu0 %v4784
        %v4786 = vpop.xlane.xlu0 %4785
        %v4787 = vsel %vm4756, %v2549, -inf
        %4788 = vmax.xlane.f32.xlu0 %v4787
        %v4789 = vpop.xlane.xlu0 %4788
        %v4790 = vsel %vm4756, %v2552, -inf
        %4791 = vmax.xlane.f32.xlu0 %v4790
        %v4792 = vpop.xlane.xlu0 %4791
        %v4793 = vsel %vm4756, %v2555, -inf
        %4794 = vmax.xlane.f32.xlu0 %v4793
        %v4795 = vpop.xlane.xlu0 %4794
        %v4796 = vsel %vm4756, %v2558, -inf
        %4797 = vmax.xlane.f32.xlu0 %v4796
        %v4798 = vpop.xlane.xlu0 %4797
        %v4799 = vsel %vm4756, %v2561, -inf
        %4800 = vmax.xlane.f32.xlu0 %v4799
        %v4801 = vpop.xlane.xlu0 %4800
        %v4802 = vsel %vm4756, %v2564, -inf
        %4803 = vmax.xlane.f32.xlu0 %v4802
        %v4804 = vpop.xlane.xlu0 %4803
        %v4805 = vsel %vm4756, %v2616, -inf
        %4806 = vmax.xlane.f32.xlu0 %v4805
        %v4807 = vpop.xlane.xlu0 %4806
        %v4808 = vsel %vm4756, %v2619, -inf
        %4809 = vmax.xlane.f32.xlu0 %v4808
        %v4810 = vpop.xlane.xlu0 %4809
        %v4811 = vsel %vm4756, %v2622, -inf
        %4812 = vmax.xlane.f32.xlu0 %v4811
        %v4813 = vpop.xlane.xlu0 %4812
        %v4814 = vsel %vm4756, %v2625, -inf
        %4815 = vmax.xlane.f32.xlu0 %v4814
        %v4816 = vpop.xlane.xlu0 %4815
        %v4817 = vsel %vm4756, %v2628, -inf
        %4818 = vmax.xlane.f32.xlu0 %v4817
        %v4819 = vpop.xlane.xlu0 %4818
        %v4820 = vsel %vm4756, %v2631, -inf
        %4821 = vmax.xlane.f32.xlu0 %v4820
        %v4822 = vpop.xlane.xlu0 %4821
        %v4823 = vsel %vm4756, %v2634, -inf
        %4824 = vmax.xlane.f32.xlu0 %v4823
        %v4825 = vpop.xlane.xlu0 %4824
        %v4826 = vsel %vm4756, %v2637, -inf
        %4827 = vmax.xlane.f32.xlu0 %v4826
        %v4828 = vpop.xlane.xlu0 %4827
        %v4829 = vsel %vm4756, %v2689, -inf
        %4830 = vmax.xlane.f32.xlu0 %v4829
        %v4831 = vpop.xlane.xlu0 %4830
        %v4832 = vsel %vm4756, %v2692, -inf
        %4833 = vmax.xlane.f32.xlu0 %v4832
        %v4834 = vpop.xlane.xlu0 %4833
        %v4835 = vsel %vm4756, %v2695, -inf
        %4836 = vmax.xlane.f32.xlu0 %v4835
        %v4837 = vpop.xlane.xlu0 %4836
        %v4838 = vsel %vm4756, %v2698, -inf
        %4839 = vmax.xlane.f32.xlu0 %v4838
        %v4840 = vpop.xlane.xlu0 %4839
        %v4841 = vsel %vm4756, %v2701, -inf
        %4842 = vmax.xlane.f32.xlu0 %v4841
        %v4843 = vpop.xlane.xlu0 %4842
        %v4844 = vsel %vm4756, %v2704, -inf
        %4845 = vmax.xlane.f32.xlu0 %v4844
        %v4846 = vpop.xlane.xlu0 %4845
        %v4847 = vsel %vm4756, %v2707, -inf
        %4848 = vmax.xlane.f32.xlu0 %v4847
        %v4849 = vpop.xlane.xlu0 %4848
        %v4850 = vsel %vm4756, %v2710, -inf
        %4851 = vmax.xlane.f32.xlu0 %v4850
        %v4852 = vpop.xlane.xlu0 %4851
        %v4853 = vsel %vm4756, %v2762, -inf
        %4854 = vmax.xlane.f32.xlu0 %v4853
        %v4855 = vpop.xlane.xlu0 %4854
        %v4856 = vsel %vm4756, %v2765, -inf
        %4857 = vmax.xlane.f32.xlu0 %v4856
        %v4858 = vpop.xlane.xlu0 %4857
        %v4859 = vsel %vm4756, %v2768, -inf
        %4860 = vmax.xlane.f32.xlu0 %v4859
        %v4861 = vpop.xlane.xlu0 %4860
        %v4862 = vsel %vm4756, %v2771, -inf
        %4863 = vmax.xlane.f32.xlu0 %v4862
        %v4864 = vpop.xlane.xlu0 %4863
        %v4865 = vsel %vm4756, %v2774, -inf
        %4866 = vmax.xlane.f32.xlu0 %v4865
        %v4867 = vpop.xlane.xlu0 %4866
        %v4868 = vsel %vm4756, %v2777, -inf
        %4869 = vmax.xlane.f32.xlu0 %v4868
        %v4870 = vpop.xlane.xlu0 %4869
        %v4871 = vsel %vm4756, %v2780, -inf
        %4872 = vmax.xlane.f32.xlu0 %v4871
        %v4873 = vpop.xlane.xlu0 %4872
        %v4874 = vsel %vm4756, %v2783, -inf
        %4875 = vmax.xlane.f32.xlu0 %v4874
        %v4876 = vpop.xlane.xlu0 %4875
        %v4877 = vsel %vm4756, %v2835, -inf
        %4878 = vmax.xlane.f32.xlu0 %v4877
        %v4879 = vpop.xlane.xlu0 %4878
        %v4880 = vsel %vm4756, %v2838, -inf
        %4881 = vmax.xlane.f32.xlu0 %v4880
        %v4882 = vpop.xlane.xlu0 %4881
        %v4883 = vsel %vm4756, %v2841, -inf
        %4884 = vmax.xlane.f32.xlu0 %v4883
        %v4885 = vpop.xlane.xlu0 %4884
        %v4886 = vsel %vm4756, %v2844, -inf
        %4887 = vmax.xlane.f32.xlu0 %v4886
        %v4888 = vpop.xlane.xlu0 %4887
        %v4889 = vsel %vm4756, %v2847, -inf
        %4890 = vmax.xlane.f32.xlu0 %v4889
        %v4891 = vpop.xlane.xlu0 %4890
        %v4892 = vsel %vm4756, %v2850, -inf
        %4893 = vmax.xlane.f32.xlu0 %v4892
        %v4894 = vpop.xlane.xlu0 %4893
        %v4895 = vsel %vm4756, %v2853, -inf
        %4896 = vmax.xlane.f32.xlu0 %v4895
        %v4897 = vpop.xlane.xlu0 %4896
        %v4898 = vsel %vm4756, %v2856, -inf
        %4899 = vmax.xlane.f32.xlu0 %v4898
        %v4900 = vpop.xlane.xlu0 %4899
        %v4901 = vsel %vm4756, %v2908, -inf
        %4902 = vmax.xlane.f32.xlu0 %v4901
        %v4903 = vpop.xlane.xlu0 %4902
        %v4904 = vsel %vm4756, %v2911, -inf
        %4905 = vmax.xlane.f32.xlu0 %v4904
        %v4906 = vpop.xlane.xlu0 %4905
        %v4907 = vsel %vm4756, %v2914, -inf
        %4908 = vmax.xlane.f32.xlu0 %v4907
        %v4909 = vpop.xlane.xlu0 %4908
        %v4910 = vsel %vm4756, %v2917, -inf
        %4911 = vmax.xlane.f32.xlu0 %v4910
        %v4912 = vpop.xlane.xlu0 %4911
        %v4913 = vsel %vm4756, %v2920, -inf
        %4914 = vmax.xlane.f32.xlu0 %v4913
        %v4915 = vpop.xlane.xlu0 %4914
        %v4916 = vsel %vm4756, %v2923, -inf
        %4917 = vmax.xlane.f32.xlu0 %v4916
        %v4918 = vpop.xlane.xlu0 %4917
        %v4919 = vsel %vm4756, %v2926, -inf
        %4920 = vmax.xlane.f32.xlu0 %v4919
        %v4921 = vpop.xlane.xlu0 %4920
        %v4922 = vsel %vm4756, %v2929, -inf
        %4923 = vmax.xlane.f32.xlu0 %v4922
        %v4924 = vpop.xlane.xlu0 %4923
        %v4925 = vsel %vm4756, %v2981, -inf
        %4926 = vmax.xlane.f32.xlu0 %v4925
        %v4927 = vpop.xlane.xlu0 %4926
        %v4928 = vsel %vm4756, %v2984, -inf
        %4929 = vmax.xlane.f32.xlu0 %v4928
        %v4930 = vpop.xlane.xlu0 %4929
        %v4931 = vsel %vm4756, %v2987, -inf
        %4932 = vmax.xlane.f32.xlu0 %v4931
        %v4933 = vpop.xlane.xlu0 %4932
        %v4934 = vsel %vm4756, %v2990, -inf
        %4935 = vmax.xlane.f32.xlu0 %v4934
        %v4936 = vpop.xlane.xlu0 %4935
        %v4937 = vsel %vm4756, %v2993, -inf
        %4938 = vmax.xlane.f32.xlu0 %v4937
        %v4939 = vpop.xlane.xlu0 %4938
        %v4940 = vsel %vm4756, %v2996, -inf
        %4941 = vmax.xlane.f32.xlu0 %v4940
        %v4942 = vpop.xlane.xlu0 %4941
        %v4943 = vsel %vm4756, %v2999, -inf
        %4944 = vmax.xlane.f32.xlu0 %v4943
        %v4945 = vpop.xlane.xlu0 %4944
        %v4946 = vsel %vm4756, %v3002, -inf
        %4947 = vmax.xlane.f32.xlu0 %v4946
        %v4948 = vpop.xlane.xlu0 %4947
        %v4949 = vsel %vm4756, %v3054, -inf
        %4950 = vmax.xlane.f32.xlu0 %v4949
        %v4951 = vpop.xlane.xlu0 %4950
        %v4952 = vsel %vm4756, %v3057, -inf
        %4953 = vmax.xlane.f32.xlu0 %v4952
        %v4954 = vpop.xlane.xlu0 %4953
        %v4955 = vsel %vm4756, %v3060, -inf
        %4956 = vmax.xlane.f32.xlu0 %v4955
        %v4957 = vpop.xlane.xlu0 %4956
        %v4958 = vsel %vm4756, %v3063, -inf
        %4959 = vmax.xlane.f32.xlu0 %v4958
        %v4960 = vpop.xlane.xlu0 %4959
        %v4961 = vsel %vm4756, %v3066, -inf
        %4962 = vmax.xlane.f32.xlu0 %v4961
        %v4963 = vpop.xlane.xlu0 %4962
        %v4964 = vsel %vm4756, %v3069, -inf
        %4965 = vmax.xlane.f32.xlu0 %v4964
        %v4966 = vpop.xlane.xlu0 %4965
        %v4967 = vsel %vm4756, %v3072, -inf
        %4968 = vmax.xlane.f32.xlu0 %v4967
        %v4969 = vpop.xlane.xlu0 %4968
        %v4970 = vsel %vm4756, %v3075, -inf
        %4971 = vmax.xlane.f32.xlu0 %v4970
        %v4972 = vpop.xlane.xlu0 %4971
        %v4973 = vsel %vm4756, %v3127, -inf
        %4974 = vmax.xlane.f32.xlu0 %v4973
        %v4975 = vpop.xlane.xlu0 %4974
        %v4976 = vsel %vm4756, %v3130, -inf
        %4977 = vmax.xlane.f32.xlu0 %v4976
        %v4978 = vpop.xlane.xlu0 %4977
        %v4979 = vsel %vm4756, %v3133, -inf
        %4980 = vmax.xlane.f32.xlu0 %v4979
        %v4981 = vpop.xlane.xlu0 %4980
        %v4982 = vsel %vm4756, %v3136, -inf
        %4983 = vmax.xlane.f32.xlu0 %v4982
        %v4984 = vpop.xlane.xlu0 %4983
        %v4985 = vsel %vm4756, %v3139, -inf
        %4986 = vmax.xlane.f32.xlu0 %v4985
        %v4987 = vpop.xlane.xlu0 %4986
        %v4988 = vsel %vm4756, %v3142, -inf
        %4989 = vmax.xlane.f32.xlu0 %v4988
        %v4990 = vpop.xlane.xlu0 %4989
        %v4991 = vsel %vm4756, %v3145, -inf
        %4992 = vmax.xlane.f32.xlu0 %v4991
        %v4993 = vpop.xlane.xlu0 %4992
        %v4994 = vsel %vm4756, %v3148, -inf
        %4995 = vmax.xlane.f32.xlu0 %v4994
        %v4996 = vpop.xlane.xlu0 %4995
        %v4997 = vsel %vm4756, %v3200, -inf
        %4998 = vmax.xlane.f32.xlu0 %v4997
        %v4999 = vpop.xlane.xlu0 %4998
        %v5000 = vsel %vm4756, %v3203, -inf
        %5001 = vmax.xlane.f32.xlu0 %v5000
        %v5002 = vpop.xlane.xlu0 %5001
        %v5003 = vsel %vm4756, %v3206, -inf
        %5004 = vmax.xlane.f32.xlu0 %v5003
        %v5005 = vpop.xlane.xlu0 %5004
        %v5006 = vsel %vm4756, %v3209, -inf
        %5007 = vmax.xlane.f32.xlu0 %v5006
        %v5008 = vpop.xlane.xlu0 %5007
        %v5009 = vsel %vm4756, %v3212, -inf
        %5010 = vmax.xlane.f32.xlu0 %v5009
        %v5011 = vpop.xlane.xlu0 %5010
        %v5012 = vsel %vm4756, %v3215, -inf
        %5013 = vmax.xlane.f32.xlu0 %v5012
        %v5014 = vpop.xlane.xlu0 %5013
        %v5015 = vsel %vm4756, %v3218, -inf
        %5016 = vmax.xlane.f32.xlu0 %v5015
        %v5017 = vpop.xlane.xlu0 %5016
        %v5018 = vsel %vm4756, %v3221, -inf
        %5019 = vmax.xlane.f32.xlu0 %v5018
        %v5020 = vpop.xlane.xlu0 %5019
        %v5021 = vsel %vm4756, %v3273, -inf
        %5022 = vmax.xlane.f32.xlu0 %v5021
        %v5023 = vpop.xlane.xlu0 %5022
        %v5024 = vsel %vm4756, %v3276, -inf
        %5025 = vmax.xlane.f32.xlu0 %v5024
        %v5026 = vpop.xlane.xlu0 %5025
        %v5027 = vsel %vm4756, %v3279, -inf
        %5028 = vmax.xlane.f32.xlu0 %v5027
        %v5029 = vpop.xlane.xlu0 %5028
        %v5030 = vsel %vm4756, %v3282, -inf
        %5031 = vmax.xlane.f32.xlu0 %v5030
        %v5032 = vpop.xlane.xlu0 %5031
        %v5033 = vsel %vm4756, %v3285, -inf
        %5034 = vmax.xlane.f32.xlu0 %v5033
        %v5035 = vpop.xlane.xlu0 %5034
        %v5036 = vsel %vm4756, %v3288, -inf
        %5037 = vmax.xlane.f32.xlu0 %v5036
        %v5038 = vpop.xlane.xlu0 %5037
        %v5039 = vsel %vm4756, %v3291, -inf
        %5040 = vmax.xlane.f32.xlu0 %v5039
        %v5041 = vpop.xlane.xlu0 %5040
        %v5042 = vsel %vm4756, %v3294, -inf
        %5043 = vmax.xlane.f32.xlu0 %v5042
        %v5044 = vpop.xlane.xlu0 %5043
        %v5045 = vsel %vm4756, %v3346, -inf
        %5046 = vmax.xlane.f32.xlu0 %v5045
        %v5047 = vpop.xlane.xlu0 %5046
        %v5048 = vsel %vm4756, %v3349, -inf
        %5049 = vmax.xlane.f32.xlu0 %v5048
        %v5050 = vpop.xlane.xlu0 %5049
        %v5051 = vsel %vm4756, %v3352, -inf
        %5052 = vmax.xlane.f32.xlu0 %v5051
        %v5053 = vpop.xlane.xlu0 %5052
        %v5054 = vsel %vm4756, %v3355, -inf
        %5055 = vmax.xlane.f32.xlu0 %v5054
        %v5056 = vpop.xlane.xlu0 %5055
        %v5057 = vsel %vm4756, %v3358, -inf
        %5058 = vmax.xlane.f32.xlu0 %v5057
        %v5059 = vpop.xlane.xlu0 %5058
        %v5060 = vsel %vm4756, %v3361, -inf
        %5061 = vmax.xlane.f32.xlu0 %v5060
        %v5062 = vpop.xlane.xlu0 %5061
        %v5063 = vsel %vm4756, %v3364, -inf
        %5064 = vmax.xlane.f32.xlu0 %v5063
        %v5065 = vpop.xlane.xlu0 %5064
        %v5066 = vsel %vm4756, %v3367, -inf
        %5067 = vmax.xlane.f32.xlu0 %v5066
        %v5068 = vpop.xlane.xlu0 %5067
        %v5069 = vsel %vm4756, %v3419, -inf
        %5070 = vmax.xlane.f32.xlu0 %v5069
        %v5071 = vpop.xlane.xlu0 %5070
        %v5072 = vsel %vm4756, %v3422, -inf
        %5073 = vmax.xlane.f32.xlu0 %v5072
        %v5074 = vpop.xlane.xlu0 %5073
        %v5075 = vsel %vm4756, %v3425, -inf
        %5076 = vmax.xlane.f32.xlu0 %v5075
        %v5077 = vpop.xlane.xlu0 %5076
        %v5078 = vsel %vm4756, %v3428, -inf
        %5079 = vmax.xlane.f32.xlu0 %v5078
        %v5080 = vpop.xlane.xlu0 %5079
        %v5081 = vsel %vm4756, %v3431, -inf
        %5082 = vmax.xlane.f32.xlu0 %v5081
        %v5083 = vpop.xlane.xlu0 %5082
        %v5084 = vsel %vm4756, %v3434, -inf
        %5085 = vmax.xlane.f32.xlu0 %v5084
        %v5086 = vpop.xlane.xlu0 %5085
        %v5087 = vsel %vm4756, %v3437, -inf
        %5088 = vmax.xlane.f32.xlu0 %v5087
        %v5089 = vpop.xlane.xlu0 %5088
        %v5090 = vsel %vm4756, %v3440, -inf
        %5091 = vmax.xlane.f32.xlu0 %v5090
        %v5092 = vpop.xlane.xlu0 %5091
        %v5093 = vsel %vm4756, %v3492, -inf
        %5094 = vmax.xlane.f32.xlu0 %v5093
        %v5095 = vpop.xlane.xlu0 %5094
        %v5096 = vsel %vm4756, %v3495, -inf
        %5097 = vmax.xlane.f32.xlu0 %v5096
        %v5098 = vpop.xlane.xlu0 %5097
        %v5099 = vsel %vm4756, %v3498, -inf
        %5100 = vmax.xlane.f32.xlu0 %v5099
        %v5101 = vpop.xlane.xlu0 %5100
        %v5102 = vsel %vm4756, %v3501, -inf
        %5103 = vmax.xlane.f32.xlu0 %v5102
        %v5104 = vpop.xlane.xlu0 %5103
        %v5105 = vsel %vm4756, %v3504, -inf
        %5106 = vmax.xlane.f32.xlu0 %v5105
        %v5107 = vpop.xlane.xlu0 %5106
        %v5108 = vsel %vm4756, %v3507, -inf
        %5109 = vmax.xlane.f32.xlu0 %v5108
        %v5110 = vpop.xlane.xlu0 %5109
        %v5111 = vsel %vm4756, %v3510, -inf
        %5112 = vmax.xlane.f32.xlu0 %v5111
        %v5113 = vpop.xlane.xlu0 %5112
        %v5114 = vsel %vm4756, %v3513, -inf
        %5115 = vmax.xlane.f32.xlu0 %v5114
        %v5116 = vpop.xlane.xlu0 %5115
        %v5117 = vsel %vm4756, %v3565, -inf
        %5118 = vmax.xlane.f32.xlu0 %v5117
        %v5119 = vpop.xlane.xlu0 %5118
        %v5120 = vsel %vm4756, %v3568, -inf
        %5121 = vmax.xlane.f32.xlu0 %v5120
        %v5122 = vpop.xlane.xlu0 %5121
        %v5123 = vsel %vm4756, %v3571, -inf
        %5124 = vmax.xlane.f32.xlu0 %v5123
        %v5125 = vpop.xlane.xlu0 %5124
        %v5126 = vsel %vm4756, %v3574, -inf
        %5127 = vmax.xlane.f32.xlu0 %v5126
        %v5128 = vpop.xlane.xlu0 %5127
        %v5129 = vsel %vm4756, %v3577, -inf
        %5130 = vmax.xlane.f32.xlu0 %v5129
        %v5131 = vpop.xlane.xlu0 %5130
        %v5132 = vsel %vm4756, %v3580, -inf
        %5133 = vmax.xlane.f32.xlu0 %v5132
        %v5134 = vpop.xlane.xlu0 %5133
        %v5135 = vsel %vm4756, %v3583, -inf
        %5136 = vmax.xlane.f32.xlu0 %v5135
        %v5137 = vpop.xlane.xlu0 %5136
        %v5138 = vsel %vm4756, %v3586, -inf
        %5139 = vmax.xlane.f32.xlu0 %v5138
        %v5140 = vpop.xlane.xlu0 %5139
        %v5141 = vsel %vm4756, %v3638, -inf
        %5142 = vmax.xlane.f32.xlu0 %v5141
        %v5143 = vpop.xlane.xlu0 %5142
        %v5144 = vsel %vm4756, %v3641, -inf
        %5145 = vmax.xlane.f32.xlu0 %v5144
        %v5146 = vpop.xlane.xlu0 %5145
        %v5147 = vsel %vm4756, %v3644, -inf
        %5148 = vmax.xlane.f32.xlu0 %v5147
        %v5149 = vpop.xlane.xlu0 %5148
        %v5150 = vsel %vm4756, %v3647, -inf
        %5151 = vmax.xlane.f32.xlu0 %v5150
        %v5152 = vpop.xlane.xlu0 %5151
        %v5153 = vsel %vm4756, %v3650, -inf
        %5154 = vmax.xlane.f32.xlu0 %v5153
        %v5155 = vpop.xlane.xlu0 %5154
        %v5156 = vsel %vm4756, %v3653, -inf
        %5157 = vmax.xlane.f32.xlu0 %v5156
        %v5158 = vpop.xlane.xlu0 %5157
        %v5159 = vsel %vm4756, %v3656, -inf
        %5160 = vmax.xlane.f32.xlu0 %v5159
        %v5161 = vpop.xlane.xlu0 %5160
        %v5162 = vsel %vm4756, %v3659, -inf
        %5163 = vmax.xlane.f32.xlu0 %v5162
        %v5164 = vpop.xlane.xlu0 %5163
        %v5165 = vsel %vm4756, %v3711, -inf
        %5166 = vmax.xlane.f32.xlu0 %v5165
        %v5167 = vpop.xlane.xlu0 %5166
        %v5168 = vsel %vm4756, %v3714, -inf
        %5169 = vmax.xlane.f32.xlu0 %v5168
        %v5170 = vpop.xlane.xlu0 %5169
        %v5171 = vsel %vm4756, %v3717, -inf
        %5172 = vmax.xlane.f32.xlu0 %v5171
        %v5173 = vpop.xlane.xlu0 %5172
        %v5174 = vsel %vm4756, %v3720, -inf
        %5175 = vmax.xlane.f32.xlu0 %v5174
        %v5176 = vpop.xlane.xlu0 %5175
        %v5177 = vsel %vm4756, %v3723, -inf
        %5178 = vmax.xlane.f32.xlu0 %v5177
        %v5179 = vpop.xlane.xlu0 %5178
        %v5180 = vsel %vm4756, %v3726, -inf
        %5181 = vmax.xlane.f32.xlu0 %v5180
        %v5182 = vpop.xlane.xlu0 %5181
        %v5183 = vsel %vm4756, %v3729, -inf
        %5184 = vmax.xlane.f32.xlu0 %v5183
        %v5185 = vpop.xlane.xlu0 %5184
        %v5186 = vsel %vm4756, %v3732, -inf
        %5187 = vmax.xlane.f32.xlu0 %v5186
        %v5188 = vpop.xlane.xlu0 %5187
        %v5189 = vsel %vm4756, %v3784, -inf
        %5190 = vmax.xlane.f32.xlu0 %v5189
        %v5191 = vpop.xlane.xlu0 %5190
        %v5192 = vsel %vm4756, %v3787, -inf
        %5193 = vmax.xlane.f32.xlu0 %v5192
        %v5194 = vpop.xlane.xlu0 %5193
        %v5195 = vsel %vm4756, %v3790, -inf
        %5196 = vmax.xlane.f32.xlu0 %v5195
        %v5197 = vpop.xlane.xlu0 %5196
        %v5198 = vsel %vm4756, %v3793, -inf
        %5199 = vmax.xlane.f32.xlu0 %v5198
        %v5200 = vpop.xlane.xlu0 %5199
        %v5201 = vsel %vm4756, %v3796, -inf
        %5202 = vmax.xlane.f32.xlu0 %v5201
        %v5203 = vpop.xlane.xlu0 %5202
        %v5204 = vsel %vm4756, %v3799, -inf
        %5205 = vmax.xlane.f32.xlu0 %v5204
        %v5206 = vpop.xlane.xlu0 %5205
        %v5207 = vsel %vm4756, %v3802, -inf
        %5208 = vmax.xlane.f32.xlu0 %v5207
        %v5209 = vpop.xlane.xlu0 %5208
        %v5210 = vsel %vm4756, %v3805, -inf
        %5211 = vmax.xlane.f32.xlu0 %v5210
        %v5212 = vpop.xlane.xlu0 %5211
        %v5213 = vsel %vm4756, %v3857, -inf
        %5214 = vmax.xlane.f32.xlu0 %v5213
        %v5215 = vpop.xlane.xlu0 %5214
        %v5216 = vsel %vm4756, %v3860, -inf
        %5217 = vmax.xlane.f32.xlu0 %v5216
        %v5218 = vpop.xlane.xlu0 %5217
        %v5219 = vsel %vm4756, %v3863, -inf
        %5220 = vmax.xlane.f32.xlu0 %v5219
        %v5221 = vpop.xlane.xlu0 %5220
        %v5222 = vsel %vm4756, %v3866, -inf
        %5223 = vmax.xlane.f32.xlu0 %v5222
        %v5224 = vpop.xlane.xlu0 %5223
        %v5225 = vsel %vm4756, %v3869, -inf
        %5226 = vmax.xlane.f32.xlu0 %v5225
        %v5227 = vpop.xlane.xlu0 %5226
        %v5228 = vsel %vm4756, %v3872, -inf
        %5229 = vmax.xlane.f32.xlu0 %v5228
        %v5230 = vpop.xlane.xlu0 %5229
        %v5231 = vsel %vm4756, %v3875, -inf
        %5232 = vmax.xlane.f32.xlu0 %v5231
        %v5233 = vpop.xlane.xlu0 %5232
        %v5234 = vsel %vm4756, %v3878, -inf
        %5235 = vmax.xlane.f32.xlu0 %v5234
        %v5236 = vpop.xlane.xlu0 %5235
        %v5237 = vsel %vm4756, %v3930, -inf
        %5238 = vmax.xlane.f32.xlu0 %v5237
        %v5239 = vpop.xlane.xlu0 %5238
        %v5240 = vsel %vm4756, %v3933, -inf
        %5241 = vmax.xlane.f32.xlu0 %v5240
        %v5242 = vpop.xlane.xlu0 %5241
        %v5243 = vsel %vm4756, %v3936, -inf
        %5244 = vmax.xlane.f32.xlu0 %v5243
        %v5245 = vpop.xlane.xlu0 %5244
        %v5246 = vsel %vm4756, %v3939, -inf
        %5247 = vmax.xlane.f32.xlu0 %v5246
        %v5248 = vpop.xlane.xlu0 %5247
        %v5249 = vsel %vm4756, %v3942, -inf
        %5250 = vmax.xlane.f32.xlu0 %v5249
        %v5251 = vpop.xlane.xlu0 %5250
        %v5252 = vsel %vm4756, %v3945, -inf
        %5253 = vmax.xlane.f32.xlu0 %v5252
        %v5254 = vpop.xlane.xlu0 %5253
        %v5255 = vsel %vm4756, %v3948, -inf
        %5256 = vmax.xlane.f32.xlu0 %v5255
        %v5257 = vpop.xlane.xlu0 %5256
        %v5258 = vsel %vm4756, %v3951, -inf
        %5259 = vmax.xlane.f32.xlu0 %v5258
        %v5260 = vpop.xlane.xlu0 %5259
        %v5261 = vsel %vm4756, %v4003, -inf
        %5262 = vmax.xlane.f32.xlu0 %v5261
        %v5263 = vpop.xlane.xlu0 %5262
        %v5264 = vsel %vm4756, %v4006, -inf
        %5265 = vmax.xlane.f32.xlu0 %v5264
        %v5266 = vpop.xlane.xlu0 %5265
        %v5267 = vsel %vm4756, %v4009, -inf
        %5268 = vmax.xlane.f32.xlu0 %v5267
        %v5269 = vpop.xlane.xlu0 %5268
        %v5270 = vsel %vm4756, %v4012, -inf
        %5271 = vmax.xlane.f32.xlu0 %v5270
        %v5272 = vpop.xlane.xlu0 %5271
        %v5273 = vsel %vm4756, %v4015, -inf
        %5274 = vmax.xlane.f32.xlu0 %v5273
        %v5275 = vpop.xlane.xlu0 %5274
        %v5276 = vsel %vm4756, %v4018, -inf
        %5277 = vmax.xlane.f32.xlu0 %v5276
        %v5278 = vpop.xlane.xlu0 %5277
        %v5279 = vsel %vm4756, %v4021, -inf
        %5280 = vmax.xlane.f32.xlu0 %v5279
        %v5281 = vpop.xlane.xlu0 %5280
        %v5282 = vsel %vm4756, %v4024, -inf
        %5283 = vmax.xlane.f32.xlu0 %v5282
        %v5284 = vpop.xlane.xlu0 %5283
        %v5285 = vsel %vm4756, %v4076, -inf
        %5286 = vmax.xlane.f32.xlu0 %v5285
        %v5287 = vpop.xlane.xlu0 %5286
        %v5288 = vsel %vm4756, %v4079, -inf
        %5289 = vmax.xlane.f32.xlu0 %v5288
        %v5290 = vpop.xlane.xlu0 %5289
        %v5291 = vsel %vm4756, %v4082, -inf
        %5292 = vmax.xlane.f32.xlu0 %v5291
        %v5293 = vpop.xlane.xlu0 %5292
        %v5294 = vsel %vm4756, %v4085, -inf
        %5295 = vmax.xlane.f32.xlu0 %v5294
        %v5296 = vpop.xlane.xlu0 %5295
        %v5297 = vsel %vm4756, %v4088, -inf
        %5298 = vmax.xlane.f32.xlu0 %v5297
        %v5299 = vpop.xlane.xlu0 %5298
        %v5300 = vsel %vm4756, %v4091, -inf
        %5301 = vmax.xlane.f32.xlu0 %v5300
        %v5302 = vpop.xlane.xlu0 %5301
        %v5303 = vsel %vm4756, %v4094, -inf
        %5304 = vmax.xlane.f32.xlu0 %v5303
        %v5305 = vpop.xlane.xlu0 %5304
        %v5306 = vsel %vm4756, %v4097, -inf
        %5307 = vmax.xlane.f32.xlu0 %v5306
        %v5308 = vpop.xlane.xlu0 %5307
        %v5309 = vsel %vm4756, %v4149, -inf
        %5310 = vmax.xlane.f32.xlu0 %v5309
        %v5311 = vpop.xlane.xlu0 %5310
        %v5312 = vsel %vm4756, %v4152, -inf
        %5313 = vmax.xlane.f32.xlu0 %v5312
        %v5314 = vpop.xlane.xlu0 %5313
        %v5315 = vsel %vm4756, %v4155, -inf
        %5316 = vmax.xlane.f32.xlu0 %v5315
        %v5317 = vpop.xlane.xlu0 %5316
        %v5318 = vsel %vm4756, %v4158, -inf
        %5319 = vmax.xlane.f32.xlu0 %v5318
        %v5320 = vpop.xlane.xlu0 %5319
        %v5321 = vsel %vm4756, %v4161, -inf
        %5322 = vmax.xlane.f32.xlu0 %v5321
        %v5323 = vpop.xlane.xlu0 %5322
        %v5324 = vsel %vm4756, %v4164, -inf
        %5325 = vmax.xlane.f32.xlu0 %v5324
        %v5326 = vpop.xlane.xlu0 %5325
        %v5327 = vsel %vm4756, %v4167, -inf
        %5328 = vmax.xlane.f32.xlu0 %v5327
        %v5329 = vpop.xlane.xlu0 %5328
        %v5330 = vsel %vm4756, %v4170, -inf
        %5331 = vmax.xlane.f32.xlu0 %v5330
        %v5332 = vpop.xlane.xlu0 %5331
        %v5333 = vsel %vm4756, %v4222, -inf
        %5334 = vmax.xlane.f32.xlu0 %v5333
        %v5335 = vpop.xlane.xlu0 %5334
        %v5336 = vsel %vm4756, %v4225, -inf
        %5337 = vmax.xlane.f32.xlu0 %v5336
        %v5338 = vpop.xlane.xlu0 %5337
        %v5339 = vsel %vm4756, %v4228, -inf
        %5340 = vmax.xlane.f32.xlu0 %v5339
        %v5341 = vpop.xlane.xlu0 %5340
        %v5342 = vsel %vm4756, %v4231, -inf
        %5343 = vmax.xlane.f32.xlu0 %v5342
        %v5344 = vpop.xlane.xlu0 %5343
        %v5345 = vsel %vm4756, %v4234, -inf
        %5346 = vmax.xlane.f32.xlu0 %v5345
        %v5347 = vpop.xlane.xlu0 %5346
        %v5348 = vsel %vm4756, %v4237, -inf
        %5349 = vmax.xlane.f32.xlu0 %v5348
        %v5350 = vpop.xlane.xlu0 %5349
        %v5351 = vsel %vm4756, %v4240, -inf
        %5352 = vmax.xlane.f32.xlu0 %v5351
        %v5353 = vpop.xlane.xlu0 %5352
        %v5354 = vsel %vm4756, %v4243, -inf
        %5355 = vmax.xlane.f32.xlu0 %v5354
        %v5356 = vpop.xlane.xlu0 %5355
        %v5357 = vsel %vm4756, %v4295, -inf
        %5358 = vmax.xlane.f32.xlu0 %v5357
        %v5359 = vpop.xlane.xlu0 %5358
        %v5360 = vsel %vm4756, %v4298, -inf
        %5361 = vmax.xlane.f32.xlu0 %v5360
        %v5362 = vpop.xlane.xlu0 %5361
        %v5363 = vsel %vm4756, %v4301, -inf
        %5364 = vmax.xlane.f32.xlu0 %v5363
        %v5365 = vpop.xlane.xlu0 %5364
        %v5366 = vsel %vm4756, %v4304, -inf
        %5367 = vmax.xlane.f32.xlu0 %v5366
        %v5368 = vpop.xlane.xlu0 %5367
        %v5369 = vsel %vm4756, %v4307, -inf
        %5370 = vmax.xlane.f32.xlu0 %v5369
        %v5371 = vpop.xlane.xlu0 %5370
        %v5372 = vsel %vm4756, %v4310, -inf
        %5373 = vmax.xlane.f32.xlu0 %v5372
        %v5374 = vpop.xlane.xlu0 %5373
        %v5375 = vsel %vm4756, %v4313, -inf
        %5376 = vmax.xlane.f32.xlu0 %v5375
        %v5377 = vpop.xlane.xlu0 %5376
        %v5378 = vsel %vm4756, %v4316, -inf
        %5379 = vmax.xlane.f32.xlu0 %v5378
        %v5380 = vpop.xlane.xlu0 %5379
        %v5381 = vsel %vm4756, %v4368, -inf
        %5382 = vmax.xlane.f32.xlu0 %v5381
        %v5383 = vpop.xlane.xlu0 %5382
        %v5384 = vsel %vm4756, %v4371, -inf
        %5385 = vmax.xlane.f32.xlu0 %v5384
        %v5386 = vpop.xlane.xlu0 %5385
        %v5387 = vsel %vm4756, %v4374, -inf
        %5388 = vmax.xlane.f32.xlu0 %v5387
        %v5389 = vpop.xlane.xlu0 %5388
        %v5390 = vsel %vm4756, %v4377, -inf
        %5391 = vmax.xlane.f32.xlu0 %v5390
        %v5392 = vpop.xlane.xlu0 %5391
        %v5393 = vsel %vm4756, %v4380, -inf
        %5394 = vmax.xlane.f32.xlu0 %v5393
        %v5395 = vpop.xlane.xlu0 %5394
        %v5396 = vsel %vm4756, %v4383, -inf
        %5397 = vmax.xlane.f32.xlu0 %v5396
        %v5398 = vpop.xlane.xlu0 %5397
        %v5399 = vsel %vm4756, %v4386, -inf
        %5400 = vmax.xlane.f32.xlu0 %v5399
        %v5401 = vpop.xlane.xlu0 %5400
        %v5402 = vsel %vm4756, %v4389, -inf
        %5403 = vmax.xlane.f32.xlu0 %v5402
        %v5404 = vpop.xlane.xlu0 %5403
        %v5405 = vsel %vm4756, %v4441, -inf
        %5406 = vmax.xlane.f32.xlu0 %v5405
        %v5407 = vpop.xlane.xlu0 %5406
        %v5408 = vsel %vm4756, %v4444, -inf
        %5409 = vmax.xlane.f32.xlu0 %v5408
        %v5410 = vpop.xlane.xlu0 %5409
        %v5411 = vsel %vm4756, %v4447, -inf
        %5412 = vmax.xlane.f32.xlu0 %v5411
        %v5413 = vpop.xlane.xlu0 %5412
        %v5414 = vsel %vm4756, %v4450, -inf
        %5415 = vmax.xlane.f32.xlu0 %v5414
        %v5416 = vpop.xlane.xlu0 %5415
        %v5417 = vsel %vm4756, %v4453, -inf
        %5418 = vmax.xlane.f32.xlu0 %v5417
        %v5419 = vpop.xlane.xlu0 %5418
        %v5420 = vsel %vm4756, %v4456, -inf
        %5421 = vmax.xlane.f32.xlu0 %v5420
        %v5422 = vpop.xlane.xlu0 %5421
        %v5423 = vsel %vm4756, %v4459, -inf
        %5424 = vmax.xlane.f32.xlu0 %v5423
        %v5425 = vpop.xlane.xlu0 %5424
        %v5426 = vsel %vm4756, %v4462, -inf
        %5427 = vmax.xlane.f32.xlu0 %v5426
        %v5428 = vpop.xlane.xlu0 %5427
        %v5429 = vsel %vm4756, %v4514, -inf
        %5430 = vmax.xlane.f32.xlu0 %v5429
        %v5431 = vpop.xlane.xlu0 %5430
        %v5432 = vsel %vm4756, %v4517, -inf
        %5433 = vmax.xlane.f32.xlu0 %v5432
        %v5434 = vpop.xlane.xlu0 %5433
        %v5435 = vsel %vm4756, %v4520, -inf
        %5436 = vmax.xlane.f32.xlu0 %v5435
        %v5437 = vpop.xlane.xlu0 %5436
        %v5438 = vsel %vm4756, %v4523, -inf
        %5439 = vmax.xlane.f32.xlu0 %v5438
        %v5440 = vpop.xlane.xlu0 %5439
        %v5441 = vsel %vm4756, %v4526, -inf
        %5442 = vmax.xlane.f32.xlu0 %v5441
        %v5443 = vpop.xlane.xlu0 %5442
        %v5444 = vsel %vm4756, %v4529, -inf
        %5445 = vmax.xlane.f32.xlu0 %v5444
        %v5446 = vpop.xlane.xlu0 %5445
        %v5447 = vsel %vm4756, %v4532, -inf
        %5448 = vmax.xlane.f32.xlu0 %v5447
        %v5449 = vpop.xlane.xlu0 %5448
        %v5450 = vsel %vm4756, %v4535, -inf
        %5451 = vmax.xlane.f32.xlu0 %v5450
        %v5452 = vpop.xlane.xlu0 %5451
        %v5453 = vsel %vm4756, %v4587, -inf
        %5454 = vmax.xlane.f32.xlu0 %v5453
        %v5455 = vpop.xlane.xlu0 %5454
        %v5456 = vsel %vm4756, %v4590, -inf
        %5457 = vmax.xlane.f32.xlu0 %v5456
        %v5458 = vpop.xlane.xlu0 %5457
        %v5459 = vsel %vm4756, %v4593, -inf
        %5460 = vmax.xlane.f32.xlu0 %v5459
        %v5461 = vpop.xlane.xlu0 %5460
        %v5462 = vsel %vm4756, %v4596, -inf
        %5463 = vmax.xlane.f32.xlu0 %v5462
        %v5464 = vpop.xlane.xlu0 %5463
        %v5465 = vsel %vm4756, %v4599, -inf
        %5466 = vmax.xlane.f32.xlu0 %v5465
        %v5467 = vpop.xlane.xlu0 %5466
        %v5468 = vsel %vm4756, %v4602, -inf
        %5469 = vmax.xlane.f32.xlu0 %v5468
        %v5470 = vpop.xlane.xlu0 %5469
        %v5471 = vsel %vm4756, %v4605, -inf
        %5472 = vmax.xlane.f32.xlu0 %v5471
        %v5473 = vpop.xlane.xlu0 %5472
        %v5474 = vsel %vm4756, %v4608, -inf
        %5475 = vmax.xlane.f32.xlu0 %v5474
        %v5476 = vpop.xlane.xlu0 %5475
        %v5477 = vsel %vm4756, %v4660, -inf
        %5478 = vmax.xlane.f32.xlu0 %v5477
        %v5479 = vpop.xlane.xlu0 %5478
        %v5480 = vsel %vm4756, %v4663, -inf
        %5481 = vmax.xlane.f32.xlu0 %v5480
        %v5482 = vpop.xlane.xlu0 %5481
        %v5483 = vsel %vm4756, %v4666, -inf
        %5484 = vmax.xlane.f32.xlu0 %v5483
        %v5485 = vpop.xlane.xlu0 %5484
        %v5486 = vsel %vm4756, %v4669, -inf
        %5487 = vmax.xlane.f32.xlu0 %v5486
        %v5488 = vpop.xlane.xlu0 %5487
        %v5489 = vsel %vm4756, %v4672, -inf
        %5490 = vmax.xlane.f32.xlu0 %v5489
        %v5491 = vpop.xlane.xlu0 %5490
        %v5492 = vsel %vm4756, %v4675, -inf
        %5493 = vmax.xlane.f32.xlu0 %v5492
        %v5494 = vpop.xlane.xlu0 %5493
        %v5495 = vsel %vm4756, %v4678, -inf
        %5496 = vmax.xlane.f32.xlu0 %v5495
        %v5497 = vpop.xlane.xlu0 %5496
        %v5498 = vsel %vm4756, %v4681, -inf
        %5499 = vmax.xlane.f32.xlu0 %v5498
        %v5500 = vpop.xlane.xlu0 %5499
        %v5501 = vsel %vm4756, %v4733, -inf
        %5502 = vmax.xlane.f32.xlu0 %v5501
        %v5503 = vpop.xlane.xlu0 %5502
        %v5504 = vsel %vm4756, %v4736, -inf
        %5505 = vmax.xlane.f32.xlu0 %v5504
        %v5506 = vpop.xlane.xlu0 %5505
        %v5507 = vsel %vm4756, %v4739, -inf
        %5508 = vmax.xlane.f32.xlu0 %v5507
        %v5509 = vpop.xlane.xlu0 %5508
        %v5510 = vsel %vm4756, %v4742, -inf
        %5511 = vmax.xlane.f32.xlu0 %v5510
        %v5512 = vpop.xlane.xlu0 %5511
        %v5513 = vsel %vm4756, %v4745, -inf
        %5514 = vmax.xlane.f32.xlu0 %v5513
        %v5515 = vpop.xlane.xlu0 %5514
        %v5516 = vsel %vm4756, %v4748, -inf
        %5517 = vmax.xlane.f32.xlu0 %v5516
        %v5518 = vpop.xlane.xlu0 %5517
        %v5519 = vsel %vm4756, %v4751, -inf
        %5520 = vmax.xlane.f32.xlu0 %v5519
        %v5521 = vpop.xlane.xlu0 %5520
        %v5522 = vsel %vm4756, %v4754, -inf
        %5523 = vmax.xlane.f32.xlu0 %v5522
        %v5524 = vpop.xlane.xlu0 %5523
        %v5525 = vsub.f32 %v2470, %v4759
        %v5526 = vsub.f32 %v2473, %v4762
        %v5527 = vsub.f32 %v2476, %v4765
        %v5528 = vsub.f32 %v2479, %v4768
        %v5529 = vsub.f32 %v2482, %v4771
        %v5530 = vsub.f32 %v2485, %v4774
        %v5531 = vsub.f32 %v2488, %v4777
        %v5532 = vsub.f32 %v2491, %v4780
        %v5533 = vsub.f32 %v2543, %v4783
        %v5534 = vsub.f32 %v2546, %v4786
        %v5535 = vsub.f32 %v2549, %v4789
        %v5536 = vsub.f32 %v2552, %v4792
        %v5537 = vsub.f32 %v2555, %v4795
        %v5538 = vsub.f32 %v2558, %v4798
        %v5539 = vsub.f32 %v2561, %v4801
        %v5540 = vsub.f32 %v2564, %v4804
        %v5541 = vsub.f32 %v2616, %v4807
        %v5542 = vsub.f32 %v2619, %v4810
        %v5543 = vsub.f32 %v2622, %v4813
        %v5544 = vsub.f32 %v2625, %v4816
        %v5545 = vsub.f32 %v2628, %v4819
        %v5546 = vsub.f32 %v2631, %v4822
        %v5547 = vsub.f32 %v2634, %v4825
        %v5548 = vsub.f32 %v2637, %v4828
        %v5549 = vsub.f32 %v2689, %v4831
        %v5550 = vsub.f32 %v2692, %v4834
        %v5551 = vsub.f32 %v2695, %v4837
        %v5552 = vsub.f32 %v2698, %v4840
        %v5553 = vsub.f32 %v2701, %v4843
        %v5554 = vsub.f32 %v2704, %v4846
        %v5555 = vsub.f32 %v2707, %v4849
        %v5556 = vsub.f32 %v2710, %v4852
        %v5557 = vsub.f32 %v2762, %v4855
        %v5558 = vsub.f32 %v2765, %v4858
        %v5559 = vsub.f32 %v2768, %v4861
        %v5560 = vsub.f32 %v2771, %v4864
        %v5561 = vsub.f32 %v2774, %v4867
        %v5562 = vsub.f32 %v2777, %v4870
        %v5563 = vsub.f32 %v2780, %v4873
        %v5564 = vsub.f32 %v2783, %v4876
        %v5565 = vsub.f32 %v2835, %v4879
        %v5566 = vsub.f32 %v2838, %v4882
        %v5567 = vsub.f32 %v2841, %v4885
        %v5568 = vsub.f32 %v2844, %v4888
        %v5569 = vsub.f32 %v2847, %v4891
        %v5570 = vsub.f32 %v2850, %v4894
        %v5571 = vsub.f32 %v2853, %v4897
        %v5572 = vsub.f32 %v2856, %v4900
        %v5573 = vsub.f32 %v2908, %v4903
        %v5574 = vsub.f32 %v2911, %v4906
        %v5575 = vsub.f32 %v2914, %v4909
        %v5576 = vsub.f32 %v2917, %v4912
        %v5577 = vsub.f32 %v2920, %v4915
        %v5578 = vsub.f32 %v2923, %v4918
        %v5579 = vsub.f32 %v2926, %v4921
        %v5580 = vsub.f32 %v2929, %v4924
        %v5581 = vsub.f32 %v2981, %v4927
        %v5582 = vsub.f32 %v2984, %v4930
        %v5583 = vsub.f32 %v2987, %v4933
        %v5584 = vsub.f32 %v2990, %v4936
        %v5585 = vsub.f32 %v2993, %v4939
        %v5586 = vsub.f32 %v2996, %v4942
        %v5587 = vsub.f32 %v2999, %v4945
        %v5588 = vsub.f32 %v3002, %v4948
        %v5589 = vsub.f32 %v3054, %v4951
        %v5590 = vsub.f32 %v3057, %v4954
        %v5591 = vsub.f32 %v3060, %v4957
        %v5592 = vsub.f32 %v3063, %v4960
        %v5593 = vsub.f32 %v3066, %v4963
        %v5594 = vsub.f32 %v3069, %v4966
        %v5595 = vsub.f32 %v3072, %v4969
        %v5596 = vsub.f32 %v3075, %v4972
        %v5597 = vsub.f32 %v3127, %v4975
        %v5598 = vsub.f32 %v3130, %v4978
        %v5599 = vsub.f32 %v3133, %v4981
        %v5600 = vsub.f32 %v3136, %v4984
        %v5601 = vsub.f32 %v3139, %v4987
        %v5602 = vsub.f32 %v3142, %v4990
        %v5603 = vsub.f32 %v3145, %v4993
        %v5604 = vsub.f32 %v3148, %v4996
        %v5605 = vsub.f32 %v3200, %v4999
        %v5606 = vsub.f32 %v3203, %v5002
        %v5607 = vsub.f32 %v3206, %v5005
        %v5608 = vsub.f32 %v3209, %v5008
        %v5609 = vsub.f32 %v3212, %v5011
        %v5610 = vsub.f32 %v3215, %v5014
        %v5611 = vsub.f32 %v3218, %v5017
        %v5612 = vsub.f32 %v3221, %v5020
        %v5613 = vsub.f32 %v3273, %v5023
        %v5614 = vsub.f32 %v3276, %v5026
        %v5615 = vsub.f32 %v3279, %v5029
        %v5616 = vsub.f32 %v3282, %v5032
        %v5617 = vsub.f32 %v3285, %v5035
        %v5618 = vsub.f32 %v3288, %v5038
        %v5619 = vsub.f32 %v3291, %v5041
        %v5620 = vsub.f32 %v3294, %v5044
        %v5621 = vsub.f32 %v3346, %v5047
        %v5622 = vsub.f32 %v3349, %v5050
        %v5623 = vsub.f32 %v3352, %v5053
        %v5624 = vsub.f32 %v3355, %v5056
        %v5625 = vsub.f32 %v3358, %v5059
        %v5626 = vsub.f32 %v3361, %v5062
        %v5627 = vsub.f32 %v3364, %v5065
        %v5628 = vsub.f32 %v3367, %v5068
        %v5629 = vsub.f32 %v3419, %v5071
        %v5630 = vsub.f32 %v3422, %v5074
        %v5631 = vsub.f32 %v3425, %v5077
        %v5632 = vsub.f32 %v3428, %v5080
        %v5633 = vsub.f32 %v3431, %v5083
        %v5634 = vsub.f32 %v3434, %v5086
        %v5635 = vsub.f32 %v3437, %v5089
        %v5636 = vsub.f32 %v3440, %v5092
        %v5637 = vsub.f32 %v3492, %v5095
        %v5638 = vsub.f32 %v3495, %v5098
        %v5639 = vsub.f32 %v3498, %v5101
        %v5640 = vsub.f32 %v3501, %v5104
        %v5641 = vsub.f32 %v3504, %v5107
        %v5642 = vsub.f32 %v3507, %v5110
        %v5643 = vsub.f32 %v3510, %v5113
        %v5644 = vsub.f32 %v3513, %v5116
        %v5645 = vsub.f32 %v3565, %v5119
        %v5646 = vsub.f32 %v3568, %v5122
        %v5647 = vsub.f32 %v3571, %v5125
        %v5648 = vsub.f32 %v3574, %v5128
        %v5649 = vsub.f32 %v3577, %v5131
        %v5650 = vsub.f32 %v3580, %v5134
        %v5651 = vsub.f32 %v3583, %v5137
        %v5652 = vsub.f32 %v3586, %v5140
        %v5653 = vsub.f32 %v3638, %v5143
        %v5654 = vsub.f32 %v3641, %v5146
        %v5655 = vsub.f32 %v3644, %v5149
        %v5656 = vsub.f32 %v3647, %v5152
        %v5657 = vsub.f32 %v3650, %v5155
        %v5658 = vsub.f32 %v3653, %v5158
        %v5659 = vsub.f32 %v3656, %v5161
        %v5660 = vsub.f32 %v3659, %v5164
        %v5661 = vsub.f32 %v3711, %v5167
        %v5662 = vsub.f32 %v3714, %v5170
        %v5663 = vsub.f32 %v3717, %v5173
        %v5664 = vsub.f32 %v3720, %v5176
        %v5665 = vsub.f32 %v3723, %v5179
        %v5666 = vsub.f32 %v3726, %v5182
        %v5667 = vsub.f32 %v3729, %v5185
        %v5668 = vsub.f32 %v3732, %v5188
        %v5669 = vsub.f32 %v3784, %v5191
        %v5670 = vsub.f32 %v3787, %v5194
        %v5671 = vsub.f32 %v3790, %v5197
        %v5672 = vsub.f32 %v3793, %v5200
        %v5673 = vsub.f32 %v3796, %v5203
        %v5674 = vsub.f32 %v3799, %v5206
        %v5675 = vsub.f32 %v3802, %v5209
        %v5676 = vsub.f32 %v3805, %v5212
        %v5677 = vsub.f32 %v3857, %v5215
        %v5678 = vsub.f32 %v3860, %v5218
        %v5679 = vsub.f32 %v3863, %v5221
        %v5680 = vsub.f32 %v3866, %v5224
        %v5681 = vsub.f32 %v3869, %v5227
        %v5682 = vsub.f32 %v3872, %v5230
        %v5683 = vsub.f32 %v3875, %v5233
        %v5684 = vsub.f32 %v3878, %v5236
        %v5685 = vsub.f32 %v3930, %v5239
        %v5686 = vsub.f32 %v3933, %v5242
        %v5687 = vsub.f32 %v3936, %v5245
        %v5688 = vsub.f32 %v3939, %v5248
        %v5689 = vsub.f32 %v3942, %v5251
        %v5690 = vsub.f32 %v3945, %v5254
        %v5691 = vsub.f32 %v3948, %v5257
        %v5692 = vsub.f32 %v3951, %v5260
        %v5693 = vsub.f32 %v4003, %v5263
        %v5694 = vsub.f32 %v4006, %v5266
        %v5695 = vsub.f32 %v4009, %v5269
        %v5696 = vsub.f32 %v4012, %v5272
        %v5697 = vsub.f32 %v4015, %v5275
        %v5698 = vsub.f32 %v4018, %v5278
        %v5699 = vsub.f32 %v4021, %v5281
        %v5700 = vsub.f32 %v4024, %v5284
        %v5701 = vsub.f32 %v4076, %v5287
        %v5702 = vsub.f32 %v4079, %v5290
        %v5703 = vsub.f32 %v4082, %v5293
        %v5704 = vsub.f32 %v4085, %v5296
        %v5705 = vsub.f32 %v4088, %v5299
        %v5706 = vsub.f32 %v4091, %v5302
        %v5707 = vsub.f32 %v4094, %v5305
        %v5708 = vsub.f32 %v4097, %v5308
        %v5709 = vsub.f32 %v4149, %v5311
        %v5710 = vsub.f32 %v4152, %v5314
        %v5711 = vsub.f32 %v4155, %v5317
        %v5712 = vsub.f32 %v4158, %v5320
        %v5713 = vsub.f32 %v4161, %v5323
        %v5714 = vsub.f32 %v4164, %v5326
        %v5715 = vsub.f32 %v4167, %v5329
        %v5716 = vsub.f32 %v4170, %v5332
        %v5717 = vsub.f32 %v4222, %v5335
        %v5718 = vsub.f32 %v4225, %v5338
        %v5719 = vsub.f32 %v4228, %v5341
        %v5720 = vsub.f32 %v4231, %v5344
        %v5721 = vsub.f32 %v4234, %v5347
        %v5722 = vsub.f32 %v4237, %v5350
        %v5723 = vsub.f32 %v4240, %v5353
        %v5724 = vsub.f32 %v4243, %v5356
        %v5725 = vsub.f32 %v4295, %v5359
        %v5726 = vsub.f32 %v4298, %v5362
        %v5727 = vsub.f32 %v4301, %v5365
        %v5728 = vsub.f32 %v4304, %v5368
        %v5729 = vsub.f32 %v4307, %v5371
        %v5730 = vsub.f32 %v4310, %v5374
        %v5731 = vsub.f32 %v4313, %v5377
        %v5732 = vsub.f32 %v4316, %v5380
        %v5733 = vsub.f32 %v4368, %v5383
        %v5734 = vsub.f32 %v4371, %v5386
        %v5735 = vsub.f32 %v4374, %v5389
        %v5736 = vsub.f32 %v4377, %v5392
        %v5737 = vsub.f32 %v4380, %v5395
        %v5738 = vsub.f32 %v4383, %v5398
        %v5739 = vsub.f32 %v4386, %v5401
        %v5740 = vsub.f32 %v4389, %v5404
        %v5741 = vsub.f32 %v4441, %v5407
        %v5742 = vsub.f32 %v4444, %v5410
        %v5743 = vsub.f32 %v4447, %v5413
        %v5744 = vsub.f32 %v4450, %v5416
        %v5745 = vsub.f32 %v4453, %v5419
        %v5746 = vsub.f32 %v4456, %v5422
        %v5747 = vsub.f32 %v4459, %v5425
        %v5748 = vsub.f32 %v4462, %v5428
        %v5749 = vsub.f32 %v4514, %v5431
        %v5750 = vsub.f32 %v4517, %v5434
        %v5751 = vsub.f32 %v4520, %v5437
        %v5752 = vsub.f32 %v4523, %v5440
        %v5753 = vsub.f32 %v4526, %v5443
        %v5754 = vsub.f32 %v4529, %v5446
        %v5755 = vsub.f32 %v4532, %v5449
        %v5756 = vsub.f32 %v4535, %v5452
        %v5757 = vsub.f32 %v4587, %v5455
        %v5758 = vsub.f32 %v4590, %v5458
        %v5759 = vsub.f32 %v4593, %v5461
        %v5760 = vsub.f32 %v4596, %v5464
        %v5761 = vsub.f32 %v4599, %v5467
        %v5762 = vsub.f32 %v4602, %v5470
        %v5763 = vsub.f32 %v4605, %v5473
        %v5764 = vsub.f32 %v4608, %v5476
        %v5765 = vsub.f32 %v4660, %v5479
        %v5766 = vsub.f32 %v4663, %v5482
        %v5767 = vsub.f32 %v4666, %v5485
        %v5768 = vsub.f32 %v4669, %v5488
        %v5769 = vsub.f32 %v4672, %v5491
        %v5770 = vsub.f32 %v4675, %v5494
        %v5771 = vsub.f32 %v4678, %v5497
        %v5772 = vsub.f32 %v4681, %v5500
        %v5773 = vsub.f32 %v4733, %v5503
        %v5774 = vsub.f32 %v4736, %v5506
        %v5775 = vsub.f32 %v4739, %v5509
        %v5776 = vsub.f32 %v4742, %v5512
        %v5777 = vsub.f32 %v4745, %v5515
        %v5778 = vsub.f32 %v4748, %v5518
        %v5779 = vsub.f32 %v4751, %v5521
        %v5780 = vsub.f32 %v4754, %v5524
        %v5781 = vmul.f32 %v5525, 1.442695
        %v5782 = vpow.pop %v5781
        %v5783 = vmul.f32 %v5526, 1.442695
        %v5784 = vpow.pop %v5783
        %v5785 = vmul.f32 %v5527, 1.442695
        %v5786 = vpow.pop %v5785
        %v5787 = vmul.f32 %v5528, 1.442695
        %v5788 = vpow.pop %v5787
        %v5789 = vmul.f32 %v5529, 1.442695
        %v5790 = vpow.pop %v5789
        %v5791 = vmul.f32 %v5530, 1.442695
        %v5792 = vpow.pop %v5791
        %v5793 = vmul.f32 %v5531, 1.442695
        %v5794 = vpow.pop %v5793
        %v5795 = vmul.f32 %v5532, 1.442695
        %v5796 = vpow.pop %v5795
        %v5797 = vmul.f32 %v5533, 1.442695
        %v5798 = vpow.pop %v5797
        %v5799 = vmul.f32 %v5534, 1.442695
        %v5800 = vpow.pop %v5799
        %v5801 = vmul.f32 %v5535, 1.442695
        %v5802 = vpow.pop %v5801
        %v5803 = vmul.f32 %v5536, 1.442695
        %v5804 = vpow.pop %v5803
        %v5805 = vmul.f32 %v5537, 1.442695
        %v5806 = vpow.pop %v5805
        %v5807 = vmul.f32 %v5538, 1.442695
        %v5808 = vpow.pop %v5807
        %v5809 = vmul.f32 %v5539, 1.442695
        %v5810 = vpow.pop %v5809
        %v5811 = vmul.f32 %v5540, 1.442695
        %v5812 = vpow.pop %v5811
        %v5813 = vmul.f32 %v5541, 1.442695
        %v5814 = vpow.pop %v5813
        %v5815 = vmul.f32 %v5542, 1.442695
        %v5816 = vpow.pop %v5815
        %v5817 = vmul.f32 %v5543, 1.442695
        %v5818 = vpow.pop %v5817
        %v5819 = vmul.f32 %v5544, 1.442695
        %v5820 = vpow.pop %v5819
        %v5821 = vmul.f32 %v5545, 1.442695
        %v5822 = vpow.pop %v5821
        %v5823 = vmul.f32 %v5546, 1.442695
        %v5824 = vpow.pop %v5823
        %v5825 = vmul.f32 %v5547, 1.442695
        %v5826 = vpow.pop %v5825
        %v5827 = vmul.f32 %v5548, 1.442695
        %v5828 = vpow.pop %v5827
        %v5829 = vmul.f32 %v5549, 1.442695
        %v5830 = vpow.pop %v5829
        %v5831 = vmul.f32 %v5550, 1.442695
        %v5832 = vpow.pop %v5831
        %v5833 = vmul.f32 %v5551, 1.442695
        %v5834 = vpow.pop %v5833
        %v5835 = vmul.f32 %v5552, 1.442695
        %v5836 = vpow.pop %v5835
        %v5837 = vmul.f32 %v5553, 1.442695
        %v5838 = vpow.pop %v5837
        %v5839 = vmul.f32 %v5554, 1.442695
        %v5840 = vpow.pop %v5839
        %v5841 = vmul.f32 %v5555, 1.442695
        %v5842 = vpow.pop %v5841
        %v5843 = vmul.f32 %v5556, 1.442695
        %v5844 = vpow.pop %v5843
        %v5845 = vmul.f32 %v5557, 1.442695
        %v5846 = vpow.pop %v5845
        %v5847 = vmul.f32 %v5558, 1.442695
        %v5848 = vpow.pop %v5847
        %v5849 = vmul.f32 %v5559, 1.442695
        %v5850 = vpow.pop %v5849
        %v5851 = vmul.f32 %v5560, 1.442695
        %v5852 = vpow.pop %v5851
        %v5853 = vmul.f32 %v5561, 1.442695
        %v5854 = vpow.pop %v5853
        %v5855 = vmul.f32 %v5562, 1.442695
        %v5856 = vpow.pop %v5855
        %v5857 = vmul.f32 %v5563, 1.442695
        %v5858 = vpow.pop %v5857
        %v5859 = vmul.f32 %v5564, 1.442695
        %v5860 = vpow.pop %v5859
        %v5861 = vmul.f32 %v5565, 1.442695
        %v5862 = vpow.pop %v5861
        %v5863 = vmul.f32 %v5566, 1.442695
        %v5864 = vpow.pop %v5863
        %v5865 = vmul.f32 %v5567, 1.442695
        %v5866 = vpow.pop %v5865
        %v5867 = vmul.f32 %v5568, 1.442695
        %v5868 = vpow.pop %v5867
        %v5869 = vmul.f32 %v5569, 1.442695
        %v5870 = vpow.pop %v5869
        %v5871 = vmul.f32 %v5570, 1.442695
        %v5872 = vpow.pop %v5871
        %v5873 = vmul.f32 %v5571, 1.442695
        %v5874 = vpow.pop %v5873
        %v5875 = vmul.f32 %v5572, 1.442695
        %v5876 = vpow.pop %v5875
        %v5877 = vmul.f32 %v5573, 1.442695
        %v5878 = vpow.pop %v5877
        %v5879 = vmul.f32 %v5574, 1.442695
        %v5880 = vpow.pop %v5879
        %v5881 = vmul.f32 %v5575, 1.442695
        %v5882 = vpow.pop %v5881
        %v5883 = vmul.f32 %v5576, 1.442695
        %v5884 = vpow.pop %v5883
        %v5885 = vmul.f32 %v5577, 1.442695
        %v5886 = vpow.pop %v5885
        %v5887 = vmul.f32 %v5578, 1.442695
        %v5888 = vpow.pop %v5887
        %v5889 = vmul.f32 %v5579, 1.442695
        %v5890 = vpow.pop %v5889
        %v5891 = vmul.f32 %v5580, 1.442695
        %v5892 = vpow.pop %v5891
        %v5893 = vmul.f32 %v5581, 1.442695
        %v5894 = vpow.pop %v5893
        %v5895 = vmul.f32 %v5582, 1.442695
        %v5896 = vpow.pop %v5895
        %v5897 = vmul.f32 %v5583, 1.442695
        %v5898 = vpow.pop %v5897
        %v5899 = vmul.f32 %v5584, 1.442695
        %v5900 = vpow.pop %v5899
        %v5901 = vmul.f32 %v5585, 1.442695
        %v5902 = vpow.pop %v5901
        %v5903 = vmul.f32 %v5586, 1.442695
        %v5904 = vpow.pop %v5903
        %v5905 = vmul.f32 %v5587, 1.442695
        %v5906 = vpow.pop %v5905
        %v5907 = vmul.f32 %v5588, 1.442695
        %v5908 = vpow.pop %v5907
        %v5909 = vmul.f32 %v5589, 1.442695
        %v5910 = vpow.pop %v5909
        %v5911 = vmul.f32 %v5590, 1.442695
        %v5912 = vpow.pop %v5911
        %v5913 = vmul.f32 %v5591, 1.442695
        %v5914 = vpow.pop %v5913
        %v5915 = vmul.f32 %v5592, 1.442695
        %v5916 = vpow.pop %v5915
        %v5917 = vmul.f32 %v5593, 1.442695
        %v5918 = vpow.pop %v5917
        %v5919 = vmul.f32 %v5594, 1.442695
        %v5920 = vpow.pop %v5919
        %v5921 = vmul.f32 %v5595, 1.442695
        %v5922 = vpow.pop %v5921
        %v5923 = vmul.f32 %v5596, 1.442695
        %v5924 = vpow.pop %v5923
        %v5925 = vmul.f32 %v5597, 1.442695
        %v5926 = vpow.pop %v5925
        %v5927 = vmul.f32 %v5598, 1.442695
        %v5928 = vpow.pop %v5927
        %v5929 = vmul.f32 %v5599, 1.442695
        %v5930 = vpow.pop %v5929
        %v5931 = vmul.f32 %v5600, 1.442695
        %v5932 = vpow.pop %v5931
        %v5933 = vmul.f32 %v5601, 1.442695
        %v5934 = vpow.pop %v5933
        %v5935 = vmul.f32 %v5602, 1.442695
        %v5936 = vpow.pop %v5935
        %v5937 = vmul.f32 %v5603, 1.442695
        %v5938 = vpow.pop %v5937
        %v5939 = vmul.f32 %v5604, 1.442695
        %v5940 = vpow.pop %v5939
        %v5941 = vmul.f32 %v5605, 1.442695
        %v5942 = vpow.pop %v5941
        %v5943 = vmul.f32 %v5606, 1.442695
        %v5944 = vpow.pop %v5943
        %v5945 = vmul.f32 %v5607, 1.442695
        %v5946 = vpow.pop %v5945
        %v5947 = vmul.f32 %v5608, 1.442695
        %v5948 = vpow.pop %v5947
        %v5949 = vmul.f32 %v5609, 1.442695
        %v5950 = vpow.pop %v5949
        %v5951 = vmul.f32 %v5610, 1.442695
        %v5952 = vpow.pop %v5951
        %v5953 = vmul.f32 %v5611, 1.442695
        %v5954 = vpow.pop %v5953
        %v5955 = vmul.f32 %v5612, 1.442695
        %v5956 = vpow.pop %v5955
        %v5957 = vmul.f32 %v5613, 1.442695
        %v5958 = vpow.pop %v5957
        %v5959 = vmul.f32 %v5614, 1.442695
        %v5960 = vpow.pop %v5959
        %v5961 = vmul.f32 %v5615, 1.442695
        %v5962 = vpow.pop %v5961
        %v5963 = vmul.f32 %v5616, 1.442695
        %v5964 = vpow.pop %v5963
        %v5965 = vmul.f32 %v5617, 1.442695
        %v5966 = vpow.pop %v5965
        %v5967 = vmul.f32 %v5618, 1.442695
        %v5968 = vpow.pop %v5967
        %v5969 = vmul.f32 %v5619, 1.442695
        %v5970 = vpow.pop %v5969
        %v5971 = vmul.f32 %v5620, 1.442695
        %v5972 = vpow.pop %v5971
        %v5973 = vmul.f32 %v5621, 1.442695
        %v5974 = vpow.pop %v5973
        %v5975 = vmul.f32 %v5622, 1.442695
        %v5976 = vpow.pop %v5975
        %v5977 = vmul.f32 %v5623, 1.442695
        %v5978 = vpow.pop %v5977
        %v5979 = vmul.f32 %v5624, 1.442695
        %v5980 = vpow.pop %v5979
        %v5981 = vmul.f32 %v5625, 1.442695
        %v5982 = vpow.pop %v5981
        %v5983 = vmul.f32 %v5626, 1.442695
        %v5984 = vpow.pop %v5983
        %v5985 = vmul.f32 %v5627, 1.442695
        %v5986 = vpow.pop %v5985
        %v5987 = vmul.f32 %v5628, 1.442695
        %v5988 = vpow.pop %v5987
        %v5989 = vmul.f32 %v5629, 1.442695
        %v5990 = vpow.pop %v5989
        %v5991 = vmul.f32 %v5630, 1.442695
        %v5992 = vpow.pop %v5991
        %v5993 = vmul.f32 %v5631, 1.442695
        %v5994 = vpow.pop %v5993
        %v5995 = vmul.f32 %v5632, 1.442695
        %v5996 = vpow.pop %v5995
        %v5997 = vmul.f32 %v5633, 1.442695
        %v5998 = vpow.pop %v5997
        %v5999 = vmul.f32 %v5634, 1.442695
        %v6000 = vpow.pop %v5999
        %v6001 = vmul.f32 %v5635, 1.442695
        %v6002 = vpow.pop %v6001
        %v6003 = vmul.f32 %v5636, 1.442695
        %v6004 = vpow.pop %v6003
        %v6005 = vmul.f32 %v5637, 1.442695
        %v6006 = vpow.pop %v6005
        %v6007 = vmul.f32 %v5638, 1.442695
        %v6008 = vpow.pop %v6007
        %v6009 = vmul.f32 %v5639, 1.442695
        %v6010 = vpow.pop %v6009
        %v6011 = vmul.f32 %v5640, 1.442695
        %v6012 = vpow.pop %v6011
        %v6013 = vmul.f32 %v5641, 1.442695
        %v6014 = vpow.pop %v6013
        %v6015 = vmul.f32 %v5642, 1.442695
        %v6016 = vpow.pop %v6015
        %v6017 = vmul.f32 %v5643, 1.442695
        %v6018 = vpow.pop %v6017
        %v6019 = vmul.f32 %v5644, 1.442695
        %v6020 = vpow.pop %v6019
        %v6021 = vmul.f32 %v5645, 1.442695
        %v6022 = vpow.pop %v6021
        %v6023 = vmul.f32 %v5646, 1.442695
        %v6024 = vpow.pop %v6023
        %v6025 = vmul.f32 %v5647, 1.442695
        %v6026 = vpow.pop %v6025
        %v6027 = vmul.f32 %v5648, 1.442695
        %v6028 = vpow.pop %v6027
        %v6029 = vmul.f32 %v5649, 1.442695
        %v6030 = vpow.pop %v6029
        %v6031 = vmul.f32 %v5650, 1.442695
        %v6032 = vpow.pop %v6031
        %v6033 = vmul.f32 %v5651, 1.442695
        %v6034 = vpow.pop %v6033
        %v6035 = vmul.f32 %v5652, 1.442695
        %v6036 = vpow.pop %v6035
        %v6037 = vmul.f32 %v5653, 1.442695
        %v6038 = vpow.pop %v6037
        %v6039 = vmul.f32 %v5654, 1.442695
        %v6040 = vpow.pop %v6039
        %v6041 = vmul.f32 %v5655, 1.442695
        %v6042 = vpow.pop %v6041
        %v6043 = vmul.f32 %v5656, 1.442695
        %v6044 = vpow.pop %v6043
        %v6045 = vmul.f32 %v5657, 1.442695
        %v6046 = vpow.pop %v6045
        %v6047 = vmul.f32 %v5658, 1.442695
        %v6048 = vpow.pop %v6047
        %v6049 = vmul.f32 %v5659, 1.442695
        %v6050 = vpow.pop %v6049
        %v6051 = vmul.f32 %v5660, 1.442695
        %v6052 = vpow.pop %v6051
        %v6053 = vmul.f32 %v5661, 1.442695
        %v6054 = vpow.pop %v6053
        %v6055 = vmul.f32 %v5662, 1.442695
        %v6056 = vpow.pop %v6055
        %v6057 = vmul.f32 %v5663, 1.442695
        %v6058 = vpow.pop %v6057
        %v6059 = vmul.f32 %v5664, 1.442695
        %v6060 = vpow.pop %v6059
        %v6061 = vmul.f32 %v5665, 1.442695
        %v6062 = vpow.pop %v6061
        %v6063 = vmul.f32 %v5666, 1.442695
        %v6064 = vpow.pop %v6063
        %v6065 = vmul.f32 %v5667, 1.442695
        %v6066 = vpow.pop %v6065
        %v6067 = vmul.f32 %v5668, 1.442695
        %v6068 = vpow.pop %v6067
        %v6069 = vmul.f32 %v5669, 1.442695
        %v6070 = vpow.pop %v6069
        %v6071 = vmul.f32 %v5670, 1.442695
        %v6072 = vpow.pop %v6071
        %v6073 = vmul.f32 %v5671, 1.442695
        %v6074 = vpow.pop %v6073
        %v6075 = vmul.f32 %v5672, 1.442695
        %v6076 = vpow.pop %v6075
        %v6077 = vmul.f32 %v5673, 1.442695
        %v6078 = vpow.pop %v6077
        %v6079 = vmul.f32 %v5674, 1.442695
        %v6080 = vpow.pop %v6079
        %v6081 = vmul.f32 %v5675, 1.442695
        %v6082 = vpow.pop %v6081
        %v6083 = vmul.f32 %v5676, 1.442695
        %v6084 = vpow.pop %v6083
        %v6085 = vmul.f32 %v5677, 1.442695
        %v6086 = vpow.pop %v6085
        %v6087 = vmul.f32 %v5678, 1.442695
        %v6088 = vpow.pop %v6087
        %v6089 = vmul.f32 %v5679, 1.442695
        %v6090 = vpow.pop %v6089
        %v6091 = vmul.f32 %v5680, 1.442695
        %v6092 = vpow.pop %v6091
        %v6093 = vmul.f32 %v5681, 1.442695
        %v6094 = vpow.pop %v6093
        %v6095 = vmul.f32 %v5682, 1.442695
        %v6096 = vpow.pop %v6095
        %v6097 = vmul.f32 %v5683, 1.442695
        %v6098 = vpow.pop %v6097
        %v6099 = vmul.f32 %v5684, 1.442695
        %v6100 = vpow.pop %v6099
        %v6101 = vmul.f32 %v5685, 1.442695
        %v6102 = vpow.pop %v6101
        %v6103 = vmul.f32 %v5686, 1.442695
        %v6104 = vpow.pop %v6103
        %v6105 = vmul.f32 %v5687, 1.442695
        %v6106 = vpow.pop %v6105
        %v6107 = vmul.f32 %v5688, 1.442695
        %v6108 = vpow.pop %v6107
        %v6109 = vmul.f32 %v5689, 1.442695
        %v6110 = vpow.pop %v6109
        %v6111 = vmul.f32 %v5690, 1.442695
        %v6112 = vpow.pop %v6111
        %v6113 = vmul.f32 %v5691, 1.442695
        %v6114 = vpow.pop %v6113
        %v6115 = vmul.f32 %v5692, 1.442695
        %v6116 = vpow.pop %v6115
        %v6117 = vmul.f32 %v5693, 1.442695
        %v6118 = vpow.pop %v6117
        %v6119 = vmul.f32 %v5694, 1.442695
        %v6120 = vpow.pop %v6119
        %v6121 = vmul.f32 %v5695, 1.442695
        %v6122 = vpow.pop %v6121
        %v6123 = vmul.f32 %v5696, 1.442695
        %v6124 = vpow.pop %v6123
        %v6125 = vmul.f32 %v5697, 1.442695
        %v6126 = vpow.pop %v6125
        %v6127 = vmul.f32 %v5698, 1.442695
        %v6128 = vpow.pop %v6127
        %v6129 = vmul.f32 %v5699, 1.442695
        %v6130 = vpow.pop %v6129
        %v6131 = vmul.f32 %v5700, 1.442695
        %v6132 = vpow.pop %v6131
        %v6133 = vmul.f32 %v5701, 1.442695
        %v6134 = vpow.pop %v6133
        %v6135 = vmul.f32 %v5702, 1.442695
        %v6136 = vpow.pop %v6135
        %v6137 = vmul.f32 %v5703, 1.442695
        %v6138 = vpow.pop %v6137
        %v6139 = vmul.f32 %v5704, 1.442695
        %v6140 = vpow.pop %v6139
        %v6141 = vmul.f32 %v5705, 1.442695
        %v6142 = vpow.pop %v6141
        %v6143 = vmul.f32 %v5706, 1.442695
        %v6144 = vpow.pop %v6143
        %v6145 = vmul.f32 %v5707, 1.442695
        %v6146 = vpow.pop %v6145
        %v6147 = vmul.f32 %v5708, 1.442695
        %v6148 = vpow.pop %v6147
        %v6149 = vmul.f32 %v5709, 1.442695
        %v6150 = vpow.pop %v6149
        %v6151 = vmul.f32 %v5710, 1.442695
        %v6152 = vpow.pop %v6151
        %v6153 = vmul.f32 %v5711, 1.442695
        %v6154 = vpow.pop %v6153
        %v6155 = vmul.f32 %v5712, 1.442695
        %v6156 = vpow.pop %v6155
        %v6157 = vmul.f32 %v5713, 1.442695
        %v6158 = vpow.pop %v6157
        %v6159 = vmul.f32 %v5714, 1.442695
        %v6160 = vpow.pop %v6159
        %v6161 = vmul.f32 %v5715, 1.442695
        %v6162 = vpow.pop %v6161
        %v6163 = vmul.f32 %v5716, 1.442695
        %v6164 = vpow.pop %v6163
        %v6165 = vmul.f32 %v5717, 1.442695
        %v6166 = vpow.pop %v6165
        %v6167 = vmul.f32 %v5718, 1.442695
        %v6168 = vpow.pop %v6167
        %v6169 = vmul.f32 %v5719, 1.442695
        %v6170 = vpow.pop %v6169
        %v6171 = vmul.f32 %v5720, 1.442695
        %v6172 = vpow.pop %v6171
        %v6173 = vmul.f32 %v5721, 1.442695
        %v6174 = vpow.pop %v6173
        %v6175 = vmul.f32 %v5722, 1.442695
        %v6176 = vpow.pop %v6175
        %v6177 = vmul.f32 %v5723, 1.442695
        %v6178 = vpow.pop %v6177
        %v6179 = vmul.f32 %v5724, 1.442695
        %v6180 = vpow.pop %v6179
        %v6181 = vmul.f32 %v5725, 1.442695
        %v6182 = vpow.pop %v6181
        %v6183 = vmul.f32 %v5726, 1.442695
        %v6184 = vpow.pop %v6183
        %v6185 = vmul.f32 %v5727, 1.442695
        %v6186 = vpow.pop %v6185
        %v6187 = vmul.f32 %v5728, 1.442695
        %v6188 = vpow.pop %v6187
        %v6189 = vmul.f32 %v5729, 1.442695
        %v6190 = vpow.pop %v6189
        %v6191 = vmul.f32 %v5730, 1.442695
        %v6192 = vpow.pop %v6191
        %v6193 = vmul.f32 %v5731, 1.442695
        %v6194 = vpow.pop %v6193
        %v6195 = vmul.f32 %v5732, 1.442695
        %v6196 = vpow.pop %v6195
        %v6197 = vmul.f32 %v5733, 1.442695
        %v6198 = vpow.pop %v6197
        %v6199 = vmul.f32 %v5734, 1.442695
        %v6200 = vpow.pop %v6199
        %v6201 = vmul.f32 %v5735, 1.442695
        %v6202 = vpow.pop %v6201
        %v6203 = vmul.f32 %v5736, 1.442695
        %v6204 = vpow.pop %v6203
        %v6205 = vmul.f32 %v5737, 1.442695
        %v6206 = vpow.pop %v6205
        %v6207 = vmul.f32 %v5738, 1.442695
        %v6208 = vpow.pop %v6207
        %v6209 = vmul.f32 %v5739, 1.442695
        %v6210 = vpow.pop %v6209
        %v6211 = vmul.f32 %v5740, 1.442695
        %v6212 = vpow.pop %v6211
        %v6213 = vmul.f32 %v5741, 1.442695
        %v6214 = vpow.pop %v6213
        %v6215 = vmul.f32 %v5742, 1.442695
        %v6216 = vpow.pop %v6215
        %v6217 = vmul.f32 %v5743, 1.442695
        %v6218 = vpow.pop %v6217
        %v6219 = vmul.f32 %v5744, 1.442695
        %v6220 = vpow.pop %v6219
        %v6221 = vmul.f32 %v5745, 1.442695
        %v6222 = vpow.pop %v6221
        %v6223 = vmul.f32 %v5746, 1.442695
        %v6224 = vpow.pop %v6223
        %v6225 = vmul.f32 %v5747, 1.442695
        %v6226 = vpow.pop %v6225
        %v6227 = vmul.f32 %v5748, 1.442695
        %v6228 = vpow.pop %v6227
        %v6229 = vmul.f32 %v5749, 1.442695
        %v6230 = vpow.pop %v6229
        %v6231 = vmul.f32 %v5750, 1.442695
        %v6232 = vpow.pop %v6231
        %v6233 = vmul.f32 %v5751, 1.442695
        %v6234 = vpow.pop %v6233
        %v6235 = vmul.f32 %v5752, 1.442695
        %v6236 = vpow.pop %v6235
        %v6237 = vmul.f32 %v5753, 1.442695
        %v6238 = vpow.pop %v6237
        %v6239 = vmul.f32 %v5754, 1.442695
        %v6240 = vpow.pop %v6239
        %v6241 = vmul.f32 %v5755, 1.442695
        %v6242 = vpow.pop %v6241
        %v6243 = vmul.f32 %v5756, 1.442695
        %v6244 = vpow.pop %v6243
        %v6245 = vmul.f32 %v5757, 1.442695
        %v6246 = vpow.pop %v6245
        %v6247 = vmul.f32 %v5758, 1.442695
        %v6248 = vpow.pop %v6247
        %v6249 = vmul.f32 %v5759, 1.442695
        %v6250 = vpow.pop %v6249
        %v6251 = vmul.f32 %v5760, 1.442695
        %v6252 = vpow.pop %v6251
        %v6253 = vmul.f32 %v5761, 1.442695
        %v6254 = vpow.pop %v6253
        %v6255 = vmul.f32 %v5762, 1.442695
        %v6256 = vpow.pop %v6255
        %v6257 = vmul.f32 %v5763, 1.442695
        %v6258 = vpow.pop %v6257
        %v6259 = vmul.f32 %v5764, 1.442695
        %v6260 = vpow.pop %v6259
        %v6261 = vmul.f32 %v5765, 1.442695
        %v6262 = vpow.pop %v6261
        %v6263 = vmul.f32 %v5766, 1.442695
        %v6264 = vpow.pop %v6263
        %v6265 = vmul.f32 %v5767, 1.442695
        %v6266 = vpow.pop %v6265
        %v6267 = vmul.f32 %v5768, 1.442695
        %v6268 = vpow.pop %v6267
        %v6269 = vmul.f32 %v5769, 1.442695
        %v6270 = vpow.pop %v6269
        %v6271 = vmul.f32 %v5770, 1.442695
        %v6272 = vpow.pop %v6271
        %v6273 = vmul.f32 %v5771, 1.442695
        %v6274 = vpow.pop %v6273
        %v6275 = vmul.f32 %v5772, 1.442695
        %v6276 = vpow.pop %v6275
        %v6277 = vmul.f32 %v5773, 1.442695
        %v6278 = vpow.pop %v6277
        %v6279 = vmul.f32 %v5774, 1.442695
        %v6280 = vpow.pop %v6279
        %v6281 = vmul.f32 %v5775, 1.442695
        %v6282 = vpow.pop %v6281
        %v6283 = vmul.f32 %v5776, 1.442695
        %v6284 = vpow.pop %v6283
        %v6285 = vmul.f32 %v5777, 1.442695
        %v6286 = vpow.pop %v6285
        %v6287 = vmul.f32 %v5778, 1.442695
        %v6288 = vpow.pop %v6287
        %v6289 = vmul.f32 %v5779, 1.442695
        %v6290 = vpow.pop %v6289
        %v6291 = vmul.f32 %v5780, 1.442695
        %v6292 = vpow.pop %v6291
        %v6293 = vsel %vm4756, %v5782, 0.0
        %6294 = vadd.xlane.f32.xlu0 %v6293
        %v6295 = vpop.xlane.xlu0 %6294
        %v6296 = vsel %vm4756, %v5784, 0.0
        %6297 = vadd.xlane.f32.xlu0 %v6296
        %v6298 = vpop.xlane.xlu0 %6297
        %v6299 = vsel %vm4756, %v5786, 0.0
        %6300 = vadd.xlane.f32.xlu0 %v6299
        %v6301 = vpop.xlane.xlu0 %6300
        %v6302 = vsel %vm4756, %v5788, 0.0
        %6303 = vadd.xlane.f32.xlu0 %v6302
        %v6304 = vpop.xlane.xlu0 %6303
        %v6305 = vsel %vm4756, %v5790, 0.0
        %6306 = vadd.xlane.f32.xlu0 %v6305
        %v6307 = vpop.xlane.xlu0 %6306
        %v6308 = vsel %vm4756, %v5792, 0.0
        %6309 = vadd.xlane.f32.xlu0 %v6308
        %v6310 = vpop.xlane.xlu0 %6309
        %v6311 = vsel %vm4756, %v5794, 0.0
        %6312 = vadd.xlane.f32.xlu0 %v6311
        %v6313 = vpop.xlane.xlu0 %6312
        %v6314 = vsel %vm4756, %v5796, 0.0
        %6315 = vadd.xlane.f32.xlu0 %v6314
        %v6316 = vpop.xlane.xlu0 %6315
        %v6317 = vsel %vm4756, %v5798, 0.0
        %6318 = vadd.xlane.f32.xlu0 %v6317
        %v6319 = vpop.xlane.xlu0 %6318
        %v6320 = vsel %vm4756, %v5800, 0.0
        %6321 = vadd.xlane.f32.xlu0 %v6320
        %v6322 = vpop.xlane.xlu0 %6321
        %v6323 = vsel %vm4756, %v5802, 0.0
        %6324 = vadd.xlane.f32.xlu0 %v6323
        %v6325 = vpop.xlane.xlu0 %6324
        %v6326 = vsel %vm4756, %v5804, 0.0
        %6327 = vadd.xlane.f32.xlu0 %v6326
        %v6328 = vpop.xlane.xlu0 %6327
        %v6329 = vsel %vm4756, %v5806, 0.0
        %6330 = vadd.xlane.f32.xlu0 %v6329
        %v6331 = vpop.xlane.xlu0 %6330
        %v6332 = vsel %vm4756, %v5808, 0.0
        %6333 = vadd.xlane.f32.xlu0 %v6332
        %v6334 = vpop.xlane.xlu0 %6333
        %v6335 = vsel %vm4756, %v5810, 0.0
        %6336 = vadd.xlane.f32.xlu0 %v6335
        %v6337 = vpop.xlane.xlu0 %6336
        %v6338 = vsel %vm4756, %v5812, 0.0
        %6339 = vadd.xlane.f32.xlu0 %v6338
        %v6340 = vpop.xlane.xlu0 %6339
        %v6341 = vsel %vm4756, %v5814, 0.0
        %6342 = vadd.xlane.f32.xlu0 %v6341
        %v6343 = vpop.xlane.xlu0 %6342
        %v6344 = vsel %vm4756, %v5816, 0.0
        %6345 = vadd.xlane.f32.xlu0 %v6344
        %v6346 = vpop.xlane.xlu0 %6345
        %v6347 = vsel %vm4756, %v5818, 0.0
        %6348 = vadd.xlane.f32.xlu0 %v6347
        %v6349 = vpop.xlane.xlu0 %6348
        %v6350 = vsel %vm4756, %v5820, 0.0
        %6351 = vadd.xlane.f32.xlu0 %v6350
        %v6352 = vpop.xlane.xlu0 %6351
        %v6353 = vsel %vm4756, %v5822, 0.0
        %6354 = vadd.xlane.f32.xlu0 %v6353
        %v6355 = vpop.xlane.xlu0 %6354
        %v6356 = vsel %vm4756, %v5824, 0.0
        %6357 = vadd.xlane.f32.xlu0 %v6356
        %v6358 = vpop.xlane.xlu0 %6357
        %v6359 = vsel %vm4756, %v5826, 0.0
        %6360 = vadd.xlane.f32.xlu0 %v6359
        %v6361 = vpop.xlane.xlu0 %6360
        %v6362 = vsel %vm4756, %v5828, 0.0
        %6363 = vadd.xlane.f32.xlu0 %v6362
        %v6364 = vpop.xlane.xlu0 %6363
        %v6365 = vsel %vm4756, %v5830, 0.0
        %6366 = vadd.xlane.f32.xlu0 %v6365
        %v6367 = vpop.xlane.xlu0 %6366
        %v6368 = vsel %vm4756, %v5832, 0.0
        %6369 = vadd.xlane.f32.xlu0 %v6368
        %v6370 = vpop.xlane.xlu0 %6369
        %v6371 = vsel %vm4756, %v5834, 0.0
        %6372 = vadd.xlane.f32.xlu0 %v6371
        %v6373 = vpop.xlane.xlu0 %6372
        %v6374 = vsel %vm4756, %v5836, 0.0
        %6375 = vadd.xlane.f32.xlu0 %v6374
        %v6376 = vpop.xlane.xlu0 %6375
        %v6377 = vsel %vm4756, %v5838, 0.0
        %6378 = vadd.xlane.f32.xlu0 %v6377
        %v6379 = vpop.xlane.xlu0 %6378
        %v6380 = vsel %vm4756, %v5840, 0.0
        %6381 = vadd.xlane.f32.xlu0 %v6380
        %v6382 = vpop.xlane.xlu0 %6381
        %v6383 = vsel %vm4756, %v5842, 0.0
        %6384 = vadd.xlane.f32.xlu0 %v6383
        %v6385 = vpop.xlane.xlu0 %6384
        %v6386 = vsel %vm4756, %v5844, 0.0
        %6387 = vadd.xlane.f32.xlu0 %v6386
        %v6388 = vpop.xlane.xlu0 %6387
        %v6389 = vsel %vm4756, %v5846, 0.0
        %6390 = vadd.xlane.f32.xlu0 %v6389
        %v6391 = vpop.xlane.xlu0 %6390
        %v6392 = vsel %vm4756, %v5848, 0.0
        %6393 = vadd.xlane.f32.xlu0 %v6392
        %v6394 = vpop.xlane.xlu0 %6393
        %v6395 = vsel %vm4756, %v5850, 0.0
        %6396 = vadd.xlane.f32.xlu0 %v6395
        %v6397 = vpop.xlane.xlu0 %6396
        %v6398 = vsel %vm4756, %v5852, 0.0
        %6399 = vadd.xlane.f32.xlu0 %v6398
        %v6400 = vpop.xlane.xlu0 %6399
        %v6401 = vsel %vm4756, %v5854, 0.0
        %6402 = vadd.xlane.f32.xlu0 %v6401
        %v6403 = vpop.xlane.xlu0 %6402
        %v6404 = vsel %vm4756, %v5856, 0.0
        %6405 = vadd.xlane.f32.xlu0 %v6404
        %v6406 = vpop.xlane.xlu0 %6405
        %v6407 = vsel %vm4756, %v5858, 0.0
        %6408 = vadd.xlane.f32.xlu0 %v6407
        %v6409 = vpop.xlane.xlu0 %6408
        %v6410 = vsel %vm4756, %v5860, 0.0
        %6411 = vadd.xlane.f32.xlu0 %v6410
        %v6412 = vpop.xlane.xlu0 %6411
        %v6413 = vsel %vm4756, %v5862, 0.0
        %6414 = vadd.xlane.f32.xlu0 %v6413
        %v6415 = vpop.xlane.xlu0 %6414
        %v6416 = vsel %vm4756, %v5864, 0.0
        %6417 = vadd.xlane.f32.xlu0 %v6416
        %v6418 = vpop.xlane.xlu0 %6417
        %v6419 = vsel %vm4756, %v5866, 0.0
        %6420 = vadd.xlane.f32.xlu0 %v6419
        %v6421 = vpop.xlane.xlu0 %6420
        %v6422 = vsel %vm4756, %v5868, 0.0
        %6423 = vadd.xlane.f32.xlu0 %v6422
        %v6424 = vpop.xlane.xlu0 %6423
        %v6425 = vsel %vm4756, %v5870, 0.0
        %6426 = vadd.xlane.f32.xlu0 %v6425
        %v6427 = vpop.xlane.xlu0 %6426
        %v6428 = vsel %vm4756, %v5872, 0.0
        %6429 = vadd.xlane.f32.xlu0 %v6428
        %v6430 = vpop.xlane.xlu0 %6429
        %v6431 = vsel %vm4756, %v5874, 0.0
        %6432 = vadd.xlane.f32.xlu0 %v6431
        %v6433 = vpop.xlane.xlu0 %6432
        %v6434 = vsel %vm4756, %v5876, 0.0
        %6435 = vadd.xlane.f32.xlu0 %v6434
        %v6436 = vpop.xlane.xlu0 %6435
        %v6437 = vsel %vm4756, %v5878, 0.0
        %6438 = vadd.xlane.f32.xlu0 %v6437
        %v6439 = vpop.xlane.xlu0 %6438
        %v6440 = vsel %vm4756, %v5880, 0.0
        %6441 = vadd.xlane.f32.xlu0 %v6440
        %v6442 = vpop.xlane.xlu0 %6441
        %v6443 = vsel %vm4756, %v5882, 0.0
        %6444 = vadd.xlane.f32.xlu0 %v6443
        %v6445 = vpop.xlane.xlu0 %6444
        %v6446 = vsel %vm4756, %v5884, 0.0
        %6447 = vadd.xlane.f32.xlu0 %v6446
        %v6448 = vpop.xlane.xlu0 %6447
        %v6449 = vsel %vm4756, %v5886, 0.0
        %6450 = vadd.xlane.f32.xlu0 %v6449
        %v6451 = vpop.xlane.xlu0 %6450
        %v6452 = vsel %vm4756, %v5888, 0.0
        %6453 = vadd.xlane.f32.xlu0 %v6452
        %v6454 = vpop.xlane.xlu0 %6453
        %v6455 = vsel %vm4756, %v5890, 0.0
        %6456 = vadd.xlane.f32.xlu0 %v6455
        %v6457 = vpop.xlane.xlu0 %6456
        %v6458 = vsel %vm4756, %v5892, 0.0
        %6459 = vadd.xlane.f32.xlu0 %v6458
        %v6460 = vpop.xlane.xlu0 %6459
        %v6461 = vsel %vm4756, %v5894, 0.0
        %6462 = vadd.xlane.f32.xlu0 %v6461
        %v6463 = vpop.xlane.xlu0 %6462
        %v6464 = vsel %vm4756, %v5896, 0.0
        %6465 = vadd.xlane.f32.xlu0 %v6464
        %v6466 = vpop.xlane.xlu0 %6465
        %v6467 = vsel %vm4756, %v5898, 0.0
        %6468 = vadd.xlane.f32.xlu0 %v6467
        %v6469 = vpop.xlane.xlu0 %6468
        %v6470 = vsel %vm4756, %v5900, 0.0
        %6471 = vadd.xlane.f32.xlu0 %v6470
        %v6472 = vpop.xlane.xlu0 %6471
        %v6473 = vsel %vm4756, %v5902, 0.0
        %6474 = vadd.xlane.f32.xlu0 %v6473
        %v6475 = vpop.xlane.xlu0 %6474
        %v6476 = vsel %vm4756, %v5904, 0.0
        %6477 = vadd.xlane.f32.xlu0 %v6476
        %v6478 = vpop.xlane.xlu0 %6477
        %v6479 = vsel %vm4756, %v5906, 0.0
        %6480 = vadd.xlane.f32.xlu0 %v6479
        %v6481 = vpop.xlane.xlu0 %6480
        %v6482 = vsel %vm4756, %v5908, 0.0
        %6483 = vadd.xlane.f32.xlu0 %v6482
        %v6484 = vpop.xlane.xlu0 %6483
        %v6485 = vsel %vm4756, %v5910, 0.0
        %6486 = vadd.xlane.f32.xlu0 %v6485
        %v6487 = vpop.xlane.xlu0 %6486
        %v6488 = vsel %vm4756, %v5912, 0.0
        %6489 = vadd.xlane.f32.xlu0 %v6488
        %v6490 = vpop.xlane.xlu0 %6489
        %v6491 = vsel %vm4756, %v5914, 0.0
        %6492 = vadd.xlane.f32.xlu0 %v6491
        %v6493 = vpop.xlane.xlu0 %6492
        %v6494 = vsel %vm4756, %v5916, 0.0
        %6495 = vadd.xlane.f32.xlu0 %v6494
        %v6496 = vpop.xlane.xlu0 %6495
        %v6497 = vsel %vm4756, %v5918, 0.0
        %6498 = vadd.xlane.f32.xlu0 %v6497
        %v6499 = vpop.xlane.xlu0 %6498
        %v6500 = vsel %vm4756, %v5920, 0.0
        %6501 = vadd.xlane.f32.xlu0 %v6500
        %v6502 = vpop.xlane.xlu0 %6501
        %v6503 = vsel %vm4756, %v5922, 0.0
        %6504 = vadd.xlane.f32.xlu0 %v6503
        %v6505 = vpop.xlane.xlu0 %6504
        %v6506 = vsel %vm4756, %v5924, 0.0
        %6507 = vadd.xlane.f32.xlu0 %v6506
        %v6508 = vpop.xlane.xlu0 %6507
        %v6509 = vsel %vm4756, %v5926, 0.0
        %6510 = vadd.xlane.f32.xlu0 %v6509
        %v6511 = vpop.xlane.xlu0 %6510
        %v6512 = vsel %vm4756, %v5928, 0.0
        %6513 = vadd.xlane.f32.xlu0 %v6512
        %v6514 = vpop.xlane.xlu0 %6513
        %v6515 = vsel %vm4756, %v5930, 0.0
        %6516 = vadd.xlane.f32.xlu0 %v6515
        %v6517 = vpop.xlane.xlu0 %6516
        %v6518 = vsel %vm4756, %v5932, 0.0
        %6519 = vadd.xlane.f32.xlu0 %v6518
        %v6520 = vpop.xlane.xlu0 %6519
        %v6521 = vsel %vm4756, %v5934, 0.0
        %6522 = vadd.xlane.f32.xlu0 %v6521
        %v6523 = vpop.xlane.xlu0 %6522
        %v6524 = vsel %vm4756, %v5936, 0.0
        %6525 = vadd.xlane.f32.xlu0 %v6524
        %v6526 = vpop.xlane.xlu0 %6525
        %v6527 = vsel %vm4756, %v5938, 0.0
        %6528 = vadd.xlane.f32.xlu0 %v6527
        %v6529 = vpop.xlane.xlu0 %6528
        %v6530 = vsel %vm4756, %v5940, 0.0
        %6531 = vadd.xlane.f32.xlu0 %v6530
        %v6532 = vpop.xlane.xlu0 %6531
        %v6533 = vsel %vm4756, %v5942, 0.0
        %6534 = vadd.xlane.f32.xlu0 %v6533
        %v6535 = vpop.xlane.xlu0 %6534
        %v6536 = vsel %vm4756, %v5944, 0.0
        %6537 = vadd.xlane.f32.xlu0 %v6536
        %v6538 = vpop.xlane.xlu0 %6537
        %v6539 = vsel %vm4756, %v5946, 0.0
        %6540 = vadd.xlane.f32.xlu0 %v6539
        %v6541 = vpop.xlane.xlu0 %6540
        %v6542 = vsel %vm4756, %v5948, 0.0
        %6543 = vadd.xlane.f32.xlu0 %v6542
        %v6544 = vpop.xlane.xlu0 %6543
        %v6545 = vsel %vm4756, %v5950, 0.0
        %6546 = vadd.xlane.f32.xlu0 %v6545
        %v6547 = vpop.xlane.xlu0 %6546
        %v6548 = vsel %vm4756, %v5952, 0.0
        %6549 = vadd.xlane.f32.xlu0 %v6548
        %v6550 = vpop.xlane.xlu0 %6549
        %v6551 = vsel %vm4756, %v5954, 0.0
        %6552 = vadd.xlane.f32.xlu0 %v6551
        %v6553 = vpop.xlane.xlu0 %6552
        %v6554 = vsel %vm4756, %v5956, 0.0
        %6555 = vadd.xlane.f32.xlu0 %v6554
        %v6556 = vpop.xlane.xlu0 %6555
        %v6557 = vsel %vm4756, %v5958, 0.0
        %6558 = vadd.xlane.f32.xlu0 %v6557
        %v6559 = vpop.xlane.xlu0 %6558
        %v6560 = vsel %vm4756, %v5960, 0.0
        %6561 = vadd.xlane.f32.xlu0 %v6560
        %v6562 = vpop.xlane.xlu0 %6561
        %v6563 = vsel %vm4756, %v5962, 0.0
        %6564 = vadd.xlane.f32.xlu0 %v6563
        %v6565 = vpop.xlane.xlu0 %6564
        %v6566 = vsel %vm4756, %v5964, 0.0
        %6567 = vadd.xlane.f32.xlu0 %v6566
        %v6568 = vpop.xlane.xlu0 %6567
        %v6569 = vsel %vm4756, %v5966, 0.0
        %6570 = vadd.xlane.f32.xlu0 %v6569
        %v6571 = vpop.xlane.xlu0 %6570
        %v6572 = vsel %vm4756, %v5968, 0.0
        %6573 = vadd.xlane.f32.xlu0 %v6572
        %v6574 = vpop.xlane.xlu0 %6573
        %v6575 = vsel %vm4756, %v5970, 0.0
        %6576 = vadd.xlane.f32.xlu0 %v6575
        %v6577 = vpop.xlane.xlu0 %6576
        %v6578 = vsel %vm4756, %v5972, 0.0
        %6579 = vadd.xlane.f32.xlu0 %v6578
        %v6580 = vpop.xlane.xlu0 %6579
        %v6581 = vsel %vm4756, %v5974, 0.0
        %6582 = vadd.xlane.f32.xlu0 %v6581
        %v6583 = vpop.xlane.xlu0 %6582
        %v6584 = vsel %vm4756, %v5976, 0.0
        %6585 = vadd.xlane.f32.xlu0 %v6584
        %v6586 = vpop.xlane.xlu0 %6585
        %v6587 = vsel %vm4756, %v5978, 0.0
        %6588 = vadd.xlane.f32.xlu0 %v6587
        %v6589 = vpop.xlane.xlu0 %6588
        %v6590 = vsel %vm4756, %v5980, 0.0
        %6591 = vadd.xlane.f32.xlu0 %v6590
        %v6592 = vpop.xlane.xlu0 %6591
        %v6593 = vsel %vm4756, %v5982, 0.0
        %6594 = vadd.xlane.f32.xlu0 %v6593
        %v6595 = vpop.xlane.xlu0 %6594
        %v6596 = vsel %vm4756, %v5984, 0.0
        %6597 = vadd.xlane.f32.xlu0 %v6596
        %v6598 = vpop.xlane.xlu0 %6597
        %v6599 = vsel %vm4756, %v5986, 0.0
        %6600 = vadd.xlane.f32.xlu0 %v6599
        %v6601 = vpop.xlane.xlu0 %6600
        %v6602 = vsel %vm4756, %v5988, 0.0
        %6603 = vadd.xlane.f32.xlu0 %v6602
        %v6604 = vpop.xlane.xlu0 %6603
        %v6605 = vsel %vm4756, %v5990, 0.0
        %6606 = vadd.xlane.f32.xlu0 %v6605
        %v6607 = vpop.xlane.xlu0 %6606
        %v6608 = vsel %vm4756, %v5992, 0.0
        %6609 = vadd.xlane.f32.xlu0 %v6608
        %v6610 = vpop.xlane.xlu0 %6609
        %v6611 = vsel %vm4756, %v5994, 0.0
        %6612 = vadd.xlane.f32.xlu0 %v6611
        %v6613 = vpop.xlane.xlu0 %6612
        %v6614 = vsel %vm4756, %v5996, 0.0
        %6615 = vadd.xlane.f32.xlu0 %v6614
        %v6616 = vpop.xlane.xlu0 %6615
        %v6617 = vsel %vm4756, %v5998, 0.0
        %6618 = vadd.xlane.f32.xlu0 %v6617
        %v6619 = vpop.xlane.xlu0 %6618
        %v6620 = vsel %vm4756, %v6000, 0.0
        %6621 = vadd.xlane.f32.xlu0 %v6620
        %v6622 = vpop.xlane.xlu0 %6621
        %v6623 = vsel %vm4756, %v6002, 0.0
        %6624 = vadd.xlane.f32.xlu0 %v6623
        %v6625 = vpop.xlane.xlu0 %6624
        %v6626 = vsel %vm4756, %v6004, 0.0
        %6627 = vadd.xlane.f32.xlu0 %v6626
        %v6628 = vpop.xlane.xlu0 %6627
        %v6629 = vsel %vm4756, %v6006, 0.0
        %6630 = vadd.xlane.f32.xlu0 %v6629
        %v6631 = vpop.xlane.xlu0 %6630
        %v6632 = vsel %vm4756, %v6008, 0.0
        %6633 = vadd.xlane.f32.xlu0 %v6632
        %v6634 = vpop.xlane.xlu0 %6633
        %v6635 = vsel %vm4756, %v6010, 0.0
        %6636 = vadd.xlane.f32.xlu0 %v6635
        %v6637 = vpop.xlane.xlu0 %6636
        %v6638 = vsel %vm4756, %v6012, 0.0
        %6639 = vadd.xlane.f32.xlu0 %v6638
        %v6640 = vpop.xlane.xlu0 %6639
        %v6641 = vsel %vm4756, %v6014, 0.0
        %6642 = vadd.xlane.f32.xlu0 %v6641
        %v6643 = vpop.xlane.xlu0 %6642
        %v6644 = vsel %vm4756, %v6016, 0.0
        %6645 = vadd.xlane.f32.xlu0 %v6644
        %v6646 = vpop.xlane.xlu0 %6645
        %v6647 = vsel %vm4756, %v6018, 0.0
        %6648 = vadd.xlane.f32.xlu0 %v6647
        %v6649 = vpop.xlane.xlu0 %6648
        %v6650 = vsel %vm4756, %v6020, 0.0
        %6651 = vadd.xlane.f32.xlu0 %v6650
        %v6652 = vpop.xlane.xlu0 %6651
        %v6653 = vsel %vm4756, %v6022, 0.0
        %6654 = vadd.xlane.f32.xlu0 %v6653
        %v6655 = vpop.xlane.xlu0 %6654
        %v6656 = vsel %vm4756, %v6024, 0.0
        %6657 = vadd.xlane.f32.xlu0 %v6656
        %v6658 = vpop.xlane.xlu0 %6657
        %v6659 = vsel %vm4756, %v6026, 0.0
        %6660 = vadd.xlane.f32.xlu0 %v6659
        %v6661 = vpop.xlane.xlu0 %6660
        %v6662 = vsel %vm4756, %v6028, 0.0
        %6663 = vadd.xlane.f32.xlu0 %v6662
        %v6664 = vpop.xlane.xlu0 %6663
        %v6665 = vsel %vm4756, %v6030, 0.0
        %6666 = vadd.xlane.f32.xlu0 %v6665
        %v6667 = vpop.xlane.xlu0 %6666
        %v6668 = vsel %vm4756, %v6032, 0.0
        %6669 = vadd.xlane.f32.xlu0 %v6668
        %v6670 = vpop.xlane.xlu0 %6669
        %v6671 = vsel %vm4756, %v6034, 0.0
        %6672 = vadd.xlane.f32.xlu0 %v6671
        %v6673 = vpop.xlane.xlu0 %6672
        %v6674 = vsel %vm4756, %v6036, 0.0
        %6675 = vadd.xlane.f32.xlu0 %v6674
        %v6676 = vpop.xlane.xlu0 %6675
        %v6677 = vsel %vm4756, %v6038, 0.0
        %6678 = vadd.xlane.f32.xlu0 %v6677
        %v6679 = vpop.xlane.xlu0 %6678
        %v6680 = vsel %vm4756, %v6040, 0.0
        %6681 = vadd.xlane.f32.xlu0 %v6680
        %v6682 = vpop.xlane.xlu0 %6681
        %v6683 = vsel %vm4756, %v6042, 0.0
        %6684 = vadd.xlane.f32.xlu0 %v6683
        %v6685 = vpop.xlane.xlu0 %6684
        %v6686 = vsel %vm4756, %v6044, 0.0
        %6687 = vadd.xlane.f32.xlu0 %v6686
        %v6688 = vpop.xlane.xlu0 %6687
        %v6689 = vsel %vm4756, %v6046, 0.0
        %6690 = vadd.xlane.f32.xlu0 %v6689
        %v6691 = vpop.xlane.xlu0 %6690
        %v6692 = vsel %vm4756, %v6048, 0.0
        %6693 = vadd.xlane.f32.xlu0 %v6692
        %v6694 = vpop.xlane.xlu0 %6693
        %v6695 = vsel %vm4756, %v6050, 0.0
        %6696 = vadd.xlane.f32.xlu0 %v6695
        %v6697 = vpop.xlane.xlu0 %6696
        %v6698 = vsel %vm4756, %v6052, 0.0
        %6699 = vadd.xlane.f32.xlu0 %v6698
        %v6700 = vpop.xlane.xlu0 %6699
        %v6701 = vsel %vm4756, %v6054, 0.0
        %6702 = vadd.xlane.f32.xlu0 %v6701
        %v6703 = vpop.xlane.xlu0 %6702
        %v6704 = vsel %vm4756, %v6056, 0.0
        %6705 = vadd.xlane.f32.xlu0 %v6704
        %v6706 = vpop.xlane.xlu0 %6705
        %v6707 = vsel %vm4756, %v6058, 0.0
        %6708 = vadd.xlane.f32.xlu0 %v6707
        %v6709 = vpop.xlane.xlu0 %6708
        %v6710 = vsel %vm4756, %v6060, 0.0
        %6711 = vadd.xlane.f32.xlu0 %v6710
        %v6712 = vpop.xlane.xlu0 %6711
        %v6713 = vsel %vm4756, %v6062, 0.0
        %6714 = vadd.xlane.f32.xlu0 %v6713
        %v6715 = vpop.xlane.xlu0 %6714
        %v6716 = vsel %vm4756, %v6064, 0.0
        %6717 = vadd.xlane.f32.xlu0 %v6716
        %v6718 = vpop.xlane.xlu0 %6717
        %v6719 = vsel %vm4756, %v6066, 0.0
        %6720 = vadd.xlane.f32.xlu0 %v6719
        %v6721 = vpop.xlane.xlu0 %6720
        %v6722 = vsel %vm4756, %v6068, 0.0
        %6723 = vadd.xlane.f32.xlu0 %v6722
        %v6724 = vpop.xlane.xlu0 %6723
        %v6725 = vsel %vm4756, %v6070, 0.0
        %6726 = vadd.xlane.f32.xlu0 %v6725
        %v6727 = vpop.xlane.xlu0 %6726
        %v6728 = vsel %vm4756, %v6072, 0.0
        %6729 = vadd.xlane.f32.xlu0 %v6728
        %v6730 = vpop.xlane.xlu0 %6729
        %v6731 = vsel %vm4756, %v6074, 0.0
        %6732 = vadd.xlane.f32.xlu0 %v6731
        %v6733 = vpop.xlane.xlu0 %6732
        %v6734 = vsel %vm4756, %v6076, 0.0
        %6735 = vadd.xlane.f32.xlu0 %v6734
        %v6736 = vpop.xlane.xlu0 %6735
        %v6737 = vsel %vm4756, %v6078, 0.0
        %6738 = vadd.xlane.f32.xlu0 %v6737
        %v6739 = vpop.xlane.xlu0 %6738
        %v6740 = vsel %vm4756, %v6080, 0.0
        %6741 = vadd.xlane.f32.xlu0 %v6740
        %v6742 = vpop.xlane.xlu0 %6741
        %v6743 = vsel %vm4756, %v6082, 0.0
        %6744 = vadd.xlane.f32.xlu0 %v6743
        %v6745 = vpop.xlane.xlu0 %6744
        %v6746 = vsel %vm4756, %v6084, 0.0
        %6747 = vadd.xlane.f32.xlu0 %v6746
        %v6748 = vpop.xlane.xlu0 %6747
        %v6749 = vsel %vm4756, %v6086, 0.0
        %6750 = vadd.xlane.f32.xlu0 %v6749
        %v6751 = vpop.xlane.xlu0 %6750
        %v6752 = vsel %vm4756, %v6088, 0.0
        %6753 = vadd.xlane.f32.xlu0 %v6752
        %v6754 = vpop.xlane.xlu0 %6753
        %v6755 = vsel %vm4756, %v6090, 0.0
        %6756 = vadd.xlane.f32.xlu0 %v6755
        %v6757 = vpop.xlane.xlu0 %6756
        %v6758 = vsel %vm4756, %v6092, 0.0
        %6759 = vadd.xlane.f32.xlu0 %v6758
        %v6760 = vpop.xlane.xlu0 %6759
        %v6761 = vsel %vm4756, %v6094, 0.0
        %6762 = vadd.xlane.f32.xlu0 %v6761
        %v6763 = vpop.xlane.xlu0 %6762
        %v6764 = vsel %vm4756, %v6096, 0.0
        %6765 = vadd.xlane.f32.xlu0 %v6764
        %v6766 = vpop.xlane.xlu0 %6765
        %v6767 = vsel %vm4756, %v6098, 0.0
        %6768 = vadd.xlane.f32.xlu0 %v6767
        %v6769 = vpop.xlane.xlu0 %6768
        %v6770 = vsel %vm4756, %v6100, 0.0
        %6771 = vadd.xlane.f32.xlu0 %v6770
        %v6772 = vpop.xlane.xlu0 %6771
        %v6773 = vsel %vm4756, %v6102, 0.0
        %6774 = vadd.xlane.f32.xlu0 %v6773
        %v6775 = vpop.xlane.xlu0 %6774
        %v6776 = vsel %vm4756, %v6104, 0.0
        %6777 = vadd.xlane.f32.xlu0 %v6776
        %v6778 = vpop.xlane.xlu0 %6777
        %v6779 = vsel %vm4756, %v6106, 0.0
        %6780 = vadd.xlane.f32.xlu0 %v6779
        %v6781 = vpop.xlane.xlu0 %6780
        %v6782 = vsel %vm4756, %v6108, 0.0
        %6783 = vadd.xlane.f32.xlu0 %v6782
        %v6784 = vpop.xlane.xlu0 %6783
        %v6785 = vsel %vm4756, %v6110, 0.0
        %6786 = vadd.xlane.f32.xlu0 %v6785
        %v6787 = vpop.xlane.xlu0 %6786
        %v6788 = vsel %vm4756, %v6112, 0.0
        %6789 = vadd.xlane.f32.xlu0 %v6788
        %v6790 = vpop.xlane.xlu0 %6789
        %v6791 = vsel %vm4756, %v6114, 0.0
        %6792 = vadd.xlane.f32.xlu0 %v6791
        %v6793 = vpop.xlane.xlu0 %6792
        %v6794 = vsel %vm4756, %v6116, 0.0
        %6795 = vadd.xlane.f32.xlu0 %v6794
        %v6796 = vpop.xlane.xlu0 %6795
        %v6797 = vsel %vm4756, %v6118, 0.0
        %6798 = vadd.xlane.f32.xlu0 %v6797
        %v6799 = vpop.xlane.xlu0 %6798
        %v6800 = vsel %vm4756, %v6120, 0.0
        %6801 = vadd.xlane.f32.xlu0 %v6800
        %v6802 = vpop.xlane.xlu0 %6801
        %v6803 = vsel %vm4756, %v6122, 0.0
        %6804 = vadd.xlane.f32.xlu0 %v6803
        %v6805 = vpop.xlane.xlu0 %6804
        %v6806 = vsel %vm4756, %v6124, 0.0
        %6807 = vadd.xlane.f32.xlu0 %v6806
        %v6808 = vpop.xlane.xlu0 %6807
        %v6809 = vsel %vm4756, %v6126, 0.0
        %6810 = vadd.xlane.f32.xlu0 %v6809
        %v6811 = vpop.xlane.xlu0 %6810
        %v6812 = vsel %vm4756, %v6128, 0.0
        %6813 = vadd.xlane.f32.xlu0 %v6812
        %v6814 = vpop.xlane.xlu0 %6813
        %v6815 = vsel %vm4756, %v6130, 0.0
        %6816 = vadd.xlane.f32.xlu0 %v6815
        %v6817 = vpop.xlane.xlu0 %6816
        %v6818 = vsel %vm4756, %v6132, 0.0
        %6819 = vadd.xlane.f32.xlu0 %v6818
        %v6820 = vpop.xlane.xlu0 %6819
        %v6821 = vsel %vm4756, %v6134, 0.0
        %6822 = vadd.xlane.f32.xlu0 %v6821
        %v6823 = vpop.xlane.xlu0 %6822
        %v6824 = vsel %vm4756, %v6136, 0.0
        %6825 = vadd.xlane.f32.xlu0 %v6824
        %v6826 = vpop.xlane.xlu0 %6825
        %v6827 = vsel %vm4756, %v6138, 0.0
        %6828 = vadd.xlane.f32.xlu0 %v6827
        %v6829 = vpop.xlane.xlu0 %6828
        %v6830 = vsel %vm4756, %v6140, 0.0
        %6831 = vadd.xlane.f32.xlu0 %v6830
        %v6832 = vpop.xlane.xlu0 %6831
        %v6833 = vsel %vm4756, %v6142, 0.0
        %6834 = vadd.xlane.f32.xlu0 %v6833
        %v6835 = vpop.xlane.xlu0 %6834
        %v6836 = vsel %vm4756, %v6144, 0.0
        %6837 = vadd.xlane.f32.xlu0 %v6836
        %v6838 = vpop.xlane.xlu0 %6837
        %v6839 = vsel %vm4756, %v6146, 0.0
        %6840 = vadd.xlane.f32.xlu0 %v6839
        %v6841 = vpop.xlane.xlu0 %6840
        %v6842 = vsel %vm4756, %v6148, 0.0
        %6843 = vadd.xlane.f32.xlu0 %v6842
        %v6844 = vpop.xlane.xlu0 %6843
        %v6845 = vsel %vm4756, %v6150, 0.0
        %6846 = vadd.xlane.f32.xlu0 %v6845
        %v6847 = vpop.xlane.xlu0 %6846
        %v6848 = vsel %vm4756, %v6152, 0.0
        %6849 = vadd.xlane.f32.xlu0 %v6848
        %v6850 = vpop.xlane.xlu0 %6849
        %v6851 = vsel %vm4756, %v6154, 0.0
        %6852 = vadd.xlane.f32.xlu0 %v6851
        %v6853 = vpop.xlane.xlu0 %6852
        %v6854 = vsel %vm4756, %v6156, 0.0
        %6855 = vadd.xlane.f32.xlu0 %v6854
        %v6856 = vpop.xlane.xlu0 %6855
        %v6857 = vsel %vm4756, %v6158, 0.0
        %6858 = vadd.xlane.f32.xlu0 %v6857
        %v6859 = vpop.xlane.xlu0 %6858
        %v6860 = vsel %vm4756, %v6160, 0.0
        %6861 = vadd.xlane.f32.xlu0 %v6860
        %v6862 = vpop.xlane.xlu0 %6861
        %v6863 = vsel %vm4756, %v6162, 0.0
        %6864 = vadd.xlane.f32.xlu0 %v6863
        %v6865 = vpop.xlane.xlu0 %6864
        %v6866 = vsel %vm4756, %v6164, 0.0
        %6867 = vadd.xlane.f32.xlu0 %v6866
        %v6868 = vpop.xlane.xlu0 %6867
        %v6869 = vsel %vm4756, %v6166, 0.0
        %6870 = vadd.xlane.f32.xlu0 %v6869
        %v6871 = vpop.xlane.xlu0 %6870
        %v6872 = vsel %vm4756, %v6168, 0.0
        %6873 = vadd.xlane.f32.xlu0 %v6872
        %v6874 = vpop.xlane.xlu0 %6873
        %v6875 = vsel %vm4756, %v6170, 0.0
        %6876 = vadd.xlane.f32.xlu0 %v6875
        %v6877 = vpop.xlane.xlu0 %6876
        %v6878 = vsel %vm4756, %v6172, 0.0
        %6879 = vadd.xlane.f32.xlu0 %v6878
        %v6880 = vpop.xlane.xlu0 %6879
        %v6881 = vsel %vm4756, %v6174, 0.0
        %6882 = vadd.xlane.f32.xlu0 %v6881
        %v6883 = vpop.xlane.xlu0 %6882
        %v6884 = vsel %vm4756, %v6176, 0.0
        %6885 = vadd.xlane.f32.xlu0 %v6884
        %v6886 = vpop.xlane.xlu0 %6885
        %v6887 = vsel %vm4756, %v6178, 0.0
        %6888 = vadd.xlane.f32.xlu0 %v6887
        %v6889 = vpop.xlane.xlu0 %6888
        %v6890 = vsel %vm4756, %v6180, 0.0
        %6891 = vadd.xlane.f32.xlu0 %v6890
        %v6892 = vpop.xlane.xlu0 %6891
        %v6893 = vsel %vm4756, %v6182, 0.0
        %6894 = vadd.xlane.f32.xlu0 %v6893
        %v6895 = vpop.xlane.xlu0 %6894
        %v6896 = vsel %vm4756, %v6184, 0.0
        %6897 = vadd.xlane.f32.xlu0 %v6896
        %v6898 = vpop.xlane.xlu0 %6897
        %v6899 = vsel %vm4756, %v6186, 0.0
        %6900 = vadd.xlane.f32.xlu0 %v6899
        %v6901 = vpop.xlane.xlu0 %6900
        %v6902 = vsel %vm4756, %v6188, 0.0
        %6903 = vadd.xlane.f32.xlu0 %v6902
        %v6904 = vpop.xlane.xlu0 %6903
        %v6905 = vsel %vm4756, %v6190, 0.0
        %6906 = vadd.xlane.f32.xlu0 %v6905
        %v6907 = vpop.xlane.xlu0 %6906
        %v6908 = vsel %vm4756, %v6192, 0.0
        %6909 = vadd.xlane.f32.xlu0 %v6908
        %v6910 = vpop.xlane.xlu0 %6909
        %v6911 = vsel %vm4756, %v6194, 0.0
        %6912 = vadd.xlane.f32.xlu0 %v6911
        %v6913 = vpop.xlane.xlu0 %6912
        %v6914 = vsel %vm4756, %v6196, 0.0
        %6915 = vadd.xlane.f32.xlu0 %v6914
        %v6916 = vpop.xlane.xlu0 %6915
        %v6917 = vsel %vm4756, %v6198, 0.0
        %6918 = vadd.xlane.f32.xlu0 %v6917
        %v6919 = vpop.xlane.xlu0 %6918
        %v6920 = vsel %vm4756, %v6200, 0.0
        %6921 = vadd.xlane.f32.xlu0 %v6920
        %v6922 = vpop.xlane.xlu0 %6921
        %v6923 = vsel %vm4756, %v6202, 0.0
        %6924 = vadd.xlane.f32.xlu0 %v6923
        %v6925 = vpop.xlane.xlu0 %6924
        %v6926 = vsel %vm4756, %v6204, 0.0
        %6927 = vadd.xlane.f32.xlu0 %v6926
        %v6928 = vpop.xlane.xlu0 %6927
        %v6929 = vsel %vm4756, %v6206, 0.0
        %6930 = vadd.xlane.f32.xlu0 %v6929
        %v6931 = vpop.xlane.xlu0 %6930
        %v6932 = vsel %vm4756, %v6208, 0.0
        %6933 = vadd.xlane.f32.xlu0 %v6932
        %v6934 = vpop.xlane.xlu0 %6933
        %v6935 = vsel %vm4756, %v6210, 0.0
        %6936 = vadd.xlane.f32.xlu0 %v6935
        %v6937 = vpop.xlane.xlu0 %6936
        %v6938 = vsel %vm4756, %v6212, 0.0
        %6939 = vadd.xlane.f32.xlu0 %v6938
        %v6940 = vpop.xlane.xlu0 %6939
        %v6941 = vsel %vm4756, %v6214, 0.0
        %6942 = vadd.xlane.f32.xlu0 %v6941
        %v6943 = vpop.xlane.xlu0 %6942
        %v6944 = vsel %vm4756, %v6216, 0.0
        %6945 = vadd.xlane.f32.xlu0 %v6944
        %v6946 = vpop.xlane.xlu0 %6945
        %v6947 = vsel %vm4756, %v6218, 0.0
        %6948 = vadd.xlane.f32.xlu0 %v6947
        %v6949 = vpop.xlane.xlu0 %6948
        %v6950 = vsel %vm4756, %v6220, 0.0
        %6951 = vadd.xlane.f32.xlu0 %v6950
        %v6952 = vpop.xlane.xlu0 %6951
        %v6953 = vsel %vm4756, %v6222, 0.0
        %6954 = vadd.xlane.f32.xlu0 %v6953
        %v6955 = vpop.xlane.xlu0 %6954
        %v6956 = vsel %vm4756, %v6224, 0.0
        %6957 = vadd.xlane.f32.xlu0 %v6956
        %v6958 = vpop.xlane.xlu0 %6957
        %v6959 = vsel %vm4756, %v6226, 0.0
        %6960 = vadd.xlane.f32.xlu0 %v6959
        %v6961 = vpop.xlane.xlu0 %6960
        %v6962 = vsel %vm4756, %v6228, 0.0
        %6963 = vadd.xlane.f32.xlu0 %v6962
        %v6964 = vpop.xlane.xlu0 %6963
        %v6965 = vsel %vm4756, %v6230, 0.0
        %6966 = vadd.xlane.f32.xlu0 %v6965
        %v6967 = vpop.xlane.xlu0 %6966
        %v6968 = vsel %vm4756, %v6232, 0.0
        %6969 = vadd.xlane.f32.xlu0 %v6968
        %v6970 = vpop.xlane.xlu0 %6969
        %v6971 = vsel %vm4756, %v6234, 0.0
        %6972 = vadd.xlane.f32.xlu0 %v6971
        %v6973 = vpop.xlane.xlu0 %6972
        %v6974 = vsel %vm4756, %v6236, 0.0
        %6975 = vadd.xlane.f32.xlu0 %v6974
        %v6976 = vpop.xlane.xlu0 %6975
        %v6977 = vsel %vm4756, %v6238, 0.0
        %6978 = vadd.xlane.f32.xlu0 %v6977
        %v6979 = vpop.xlane.xlu0 %6978
        %v6980 = vsel %vm4756, %v6240, 0.0
        %6981 = vadd.xlane.f32.xlu0 %v6980
        %v6982 = vpop.xlane.xlu0 %6981
        %v6983 = vsel %vm4756, %v6242, 0.0
        %6984 = vadd.xlane.f32.xlu0 %v6983
        %v6985 = vpop.xlane.xlu0 %6984
        %v6986 = vsel %vm4756, %v6244, 0.0
        %6987 = vadd.xlane.f32.xlu0 %v6986
        %v6988 = vpop.xlane.xlu0 %6987
        %v6989 = vsel %vm4756, %v6246, 0.0
        %6990 = vadd.xlane.f32.xlu0 %v6989
        %v6991 = vpop.xlane.xlu0 %6990
        %v6992 = vsel %vm4756, %v6248, 0.0
        %6993 = vadd.xlane.f32.xlu0 %v6992
        %v6994 = vpop.xlane.xlu0 %6993
        %v6995 = vsel %vm4756, %v6250, 0.0
        %6996 = vadd.xlane.f32.xlu0 %v6995
        %v6997 = vpop.xlane.xlu0 %6996
        %v6998 = vsel %vm4756, %v6252, 0.0
        %6999 = vadd.xlane.f32.xlu0 %v6998
        %v7000 = vpop.xlane.xlu0 %6999
        %v7001 = vsel %vm4756, %v6254, 0.0
        %7002 = vadd.xlane.f32.xlu0 %v7001
        %v7003 = vpop.xlane.xlu0 %7002
        %v7004 = vsel %vm4756, %v6256, 0.0
        %7005 = vadd.xlane.f32.xlu0 %v7004
        %v7006 = vpop.xlane.xlu0 %7005
        %v7007 = vsel %vm4756, %v6258, 0.0
        %7008 = vadd.xlane.f32.xlu0 %v7007
        %v7009 = vpop.xlane.xlu0 %7008
        %v7010 = vsel %vm4756, %v6260, 0.0
        %7011 = vadd.xlane.f32.xlu0 %v7010
        %v7012 = vpop.xlane.xlu0 %7011
        %v7013 = vsel %vm4756, %v6262, 0.0
        %7014 = vadd.xlane.f32.xlu0 %v7013
        %v7015 = vpop.xlane.xlu0 %7014
        %v7016 = vsel %vm4756, %v6264, 0.0
        %7017 = vadd.xlane.f32.xlu0 %v7016
        %v7018 = vpop.xlane.xlu0 %7017
        %v7019 = vsel %vm4756, %v6266, 0.0
        %7020 = vadd.xlane.f32.xlu0 %v7019
        %v7021 = vpop.xlane.xlu0 %7020
        %v7022 = vsel %vm4756, %v6268, 0.0
        %7023 = vadd.xlane.f32.xlu0 %v7022
        %v7024 = vpop.xlane.xlu0 %7023
        %v7025 = vsel %vm4756, %v6270, 0.0
        %7026 = vadd.xlane.f32.xlu0 %v7025
        %v7027 = vpop.xlane.xlu0 %7026
        %v7028 = vsel %vm4756, %v6272, 0.0
        %7029 = vadd.xlane.f32.xlu0 %v7028
        %v7030 = vpop.xlane.xlu0 %7029
        %v7031 = vsel %vm4756, %v6274, 0.0
        %7032 = vadd.xlane.f32.xlu0 %v7031
        %v7033 = vpop.xlane.xlu0 %7032
        %v7034 = vsel %vm4756, %v6276, 0.0
        %7035 = vadd.xlane.f32.xlu0 %v7034
        %v7036 = vpop.xlane.xlu0 %7035
        %v7037 = vsel %vm4756, %v6278, 0.0
        %7038 = vadd.xlane.f32.xlu0 %v7037
        %v7039 = vpop.xlane.xlu0 %7038
        %v7040 = vsel %vm4756, %v6280, 0.0
        %7041 = vadd.xlane.f32.xlu0 %v7040
        %v7042 = vpop.xlane.xlu0 %7041
        %v7043 = vsel %vm4756, %v6282, 0.0
        %7044 = vadd.xlane.f32.xlu0 %v7043
        %v7045 = vpop.xlane.xlu0 %7044
        %v7046 = vsel %vm4756, %v6284, 0.0
        %7047 = vadd.xlane.f32.xlu0 %v7046
        %v7048 = vpop.xlane.xlu0 %7047
        %v7049 = vsel %vm4756, %v6286, 0.0
        %7050 = vadd.xlane.f32.xlu0 %v7049
        %v7051 = vpop.xlane.xlu0 %7050
        %v7052 = vsel %vm4756, %v6288, 0.0
        %7053 = vadd.xlane.f32.xlu0 %v7052
        %v7054 = vpop.xlane.xlu0 %7053
        %v7055 = vsel %vm4756, %v6290, 0.0
        %7056 = vadd.xlane.f32.xlu0 %v7055
        %v7057 = vpop.xlane.xlu0 %7056
        %v7058 = vsel %vm4756, %v6292, 0.0
        %7059 = vadd.xlane.f32.xlu0 %v7058
        %v7060 = vpop.xlane.xlu0 %7059
        %v7061 = vrcp.pop %v6295
        %v7062 = vrcp.pop %v6298
        %v7063 = vrcp.pop %v6301
        %v7064 = vrcp.pop %v6304
        %v7065 = vrcp.pop %v6307
        %v7066 = vrcp.pop %v6310
        %v7067 = vrcp.pop %v6313
        %v7068 = vrcp.pop %v6316
        %v7069 = vrcp.pop %v6319
        %v7070 = vrcp.pop %v6322
        %v7071 = vrcp.pop %v6325
        %v7072 = vrcp.pop %v6328
        %v7073 = vrcp.pop %v6331
        %v7074 = vrcp.pop %v6334
        %v7075 = vrcp.pop %v6337
        %v7076 = vrcp.pop %v6340
        %v7077 = vrcp.pop %v6343
        %v7078 = vrcp.pop %v6346
        %v7079 = vrcp.pop %v6349
        %v7080 = vrcp.pop %v6352
        %v7081 = vrcp.pop %v6355
        %v7082 = vrcp.pop %v6358
        %v7083 = vrcp.pop %v6361
        %v7084 = vrcp.pop %v6364
        %v7085 = vrcp.pop %v6367
        %v7086 = vrcp.pop %v6370
        %v7087 = vrcp.pop %v6373
        %v7088 = vrcp.pop %v6376
        %v7089 = vrcp.pop %v6379
        %v7090 = vrcp.pop %v6382
        %v7091 = vrcp.pop %v6385
        %v7092 = vrcp.pop %v6388
        %v7093 = vrcp.pop %v6391
        %v7094 = vrcp.pop %v6394
        %v7095 = vrcp.pop %v6397
        %v7096 = vrcp.pop %v6400
        %v7097 = vrcp.pop %v6403
        %v7098 = vrcp.pop %v6406
        %v7099 = vrcp.pop %v6409
        %v7100 = vrcp.pop %v6412
        %v7101 = vrcp.pop %v6415
        %v7102 = vrcp.pop %v6418
        %v7103 = vrcp.pop %v6421
        %v7104 = vrcp.pop %v6424
        %v7105 = vrcp.pop %v6427
        %v7106 = vrcp.pop %v6430
        %v7107 = vrcp.pop %v6433
        %v7108 = vrcp.pop %v6436
        %v7109 = vrcp.pop %v6439
        %v7110 = vrcp.pop %v6442
        %v7111 = vrcp.pop %v6445
        %v7112 = vrcp.pop %v6448
        %v7113 = vrcp.pop %v6451
        %v7114 = vrcp.pop %v6454
        %v7115 = vrcp.pop %v6457
        %v7116 = vrcp.pop %v6460
        %v7117 = vrcp.pop %v6463
        %v7118 = vrcp.pop %v6466
        %v7119 = vrcp.pop %v6469
        %v7120 = vrcp.pop %v6472
        %v7121 = vrcp.pop %v6475
        %v7122 = vrcp.pop %v6478
        %v7123 = vrcp.pop %v6481
        %v7124 = vrcp.pop %v6484
        %v7125 = vrcp.pop %v6487
        %v7126 = vrcp.pop %v6490
        %v7127 = vrcp.pop %v6493
        %v7128 = vrcp.pop %v6496
        %v7129 = vrcp.pop %v6499
        %v7130 = vrcp.pop %v6502
        %v7131 = vrcp.pop %v6505
        %v7132 = vrcp.pop %v6508
        %v7133 = vrcp.pop %v6511
        %v7134 = vrcp.pop %v6514
        %v7135 = vrcp.pop %v6517
        %v7136 = vrcp.pop %v6520
        %v7137 = vrcp.pop %v6523
        %v7138 = vrcp.pop %v6526
        %v7139 = vrcp.pop %v6529
        %v7140 = vrcp.pop %v6532
        %v7141 = vrcp.pop %v6535
        %v7142 = vrcp.pop %v6538
        %v7143 = vrcp.pop %v6541
        %v7144 = vrcp.pop %v6544
        %v7145 = vrcp.pop %v6547
        %v7146 = vrcp.pop %v6550
        %v7147 = vrcp.pop %v6553
        %v7148 = vrcp.pop %v6556
        %v7149 = vrcp.pop %v6559
        %v7150 = vrcp.pop %v6562
        %v7151 = vrcp.pop %v6565
        %v7152 = vrcp.pop %v6568
        %v7153 = vrcp.pop %v6571
        %v7154 = vrcp.pop %v6574
        %v7155 = vrcp.pop %v6577
        %v7156 = vrcp.pop %v6580
        %v7157 = vrcp.pop %v6583
        %v7158 = vrcp.pop %v6586
        %v7159 = vrcp.pop %v6589
        %v7160 = vrcp.pop %v6592
        %v7161 = vrcp.pop %v6595
        %v7162 = vrcp.pop %v6598
        %v7163 = vrcp.pop %v6601
        %v7164 = vrcp.pop %v6604
        %v7165 = vrcp.pop %v6607
        %v7166 = vrcp.pop %v6610
        %v7167 = vrcp.pop %v6613
        %v7168 = vrcp.pop %v6616
        %v7169 = vrcp.pop %v6619
        %v7170 = vrcp.pop %v6622
        %v7171 = vrcp.pop %v6625
        %v7172 = vrcp.pop %v6628
        %v7173 = vrcp.pop %v6631
        %v7174 = vrcp.pop %v6634
        %v7175 = vrcp.pop %v6637
        %v7176 = vrcp.pop %v6640
        %v7177 = vrcp.pop %v6643
        %v7178 = vrcp.pop %v6646
        %v7179 = vrcp.pop %v6649
        %v7180 = vrcp.pop %v6652
        %v7181 = vrcp.pop %v6655
        %v7182 = vrcp.pop %v6658
        %v7183 = vrcp.pop %v6661
        %v7184 = vrcp.pop %v6664
        %v7185 = vrcp.pop %v6667
        %v7186 = vrcp.pop %v6670
        %v7187 = vrcp.pop %v6673
        %v7188 = vrcp.pop %v6676
        %v7189 = vrcp.pop %v6679
        %v7190 = vrcp.pop %v6682
        %v7191 = vrcp.pop %v6685
        %v7192 = vrcp.pop %v6688
        %v7193 = vrcp.pop %v6691
        %v7194 = vrcp.pop %v6694
        %v7195 = vrcp.pop %v6697
        %v7196 = vrcp.pop %v6700
        %v7197 = vrcp.pop %v6703
        %v7198 = vrcp.pop %v6706
        %v7199 = vrcp.pop %v6709
        %v7200 = vrcp.pop %v6712
        %v7201 = vrcp.pop %v6715
        %v7202 = vrcp.pop %v6718
        %v7203 = vrcp.pop %v6721
        %v7204 = vrcp.pop %v6724
        %v7205 = vrcp.pop %v6727
        %v7206 = vrcp.pop %v6730
        %v7207 = vrcp.pop %v6733
        %v7208 = vrcp.pop %v6736
        %v7209 = vrcp.pop %v6739
        %v7210 = vrcp.pop %v6742
        %v7211 = vrcp.pop %v6745
        %v7212 = vrcp.pop %v6748
        %v7213 = vrcp.pop %v6751
        %v7214 = vrcp.pop %v6754
        %v7215 = vrcp.pop %v6757
        %v7216 = vrcp.pop %v6760
        %v7217 = vrcp.pop %v6763
        %v7218 = vrcp.pop %v6766
        %v7219 = vrcp.pop %v6769
        %v7220 = vrcp.pop %v6772
        %v7221 = vrcp.pop %v6775
        %v7222 = vrcp.pop %v6778
        %v7223 = vrcp.pop %v6781
        %v7224 = vrcp.pop %v6784
        %v7225 = vrcp.pop %v6787
        %v7226 = vrcp.pop %v6790
        %v7227 = vrcp.pop %v6793
        %v7228 = vrcp.pop %v6796
        %v7229 = vrcp.pop %v6799
        %v7230 = vrcp.pop %v6802
        %v7231 = vrcp.pop %v6805
        %v7232 = vrcp.pop %v6808
        %v7233 = vrcp.pop %v6811
        %v7234 = vrcp.pop %v6814
        %v7235 = vrcp.pop %v6817
        %v7236 = vrcp.pop %v6820
        %v7237 = vrcp.pop %v6823
        %v7238 = vrcp.pop %v6826
        %v7239 = vrcp.pop %v6829
        %v7240 = vrcp.pop %v6832
        %v7241 = vrcp.pop %v6835
        %v7242 = vrcp.pop %v6838
        %v7243 = vrcp.pop %v6841
        %v7244 = vrcp.pop %v6844
        %v7245 = vrcp.pop %v6847
        %v7246 = vrcp.pop %v6850
        %v7247 = vrcp.pop %v6853
        %v7248 = vrcp.pop %v6856
        %v7249 = vrcp.pop %v6859
        %v7250 = vrcp.pop %v6862
        %v7251 = vrcp.pop %v6865
        %v7252 = vrcp.pop %v6868
        %v7253 = vrcp.pop %v6871
        %v7254 = vrcp.pop %v6874
        %v7255 = vrcp.pop %v6877
        %v7256 = vrcp.pop %v6880
        %v7257 = vrcp.pop %v6883
        %v7258 = vrcp.pop %v6886
        %v7259 = vrcp.pop %v6889
        %v7260 = vrcp.pop %v6892
        %v7261 = vrcp.pop %v6895
        %v7262 = vrcp.pop %v6898
        %v7263 = vrcp.pop %v6901
        %v7264 = vrcp.pop %v6904
        %v7265 = vrcp.pop %v6907
        %v7266 = vrcp.pop %v6910
        %v7267 = vrcp.pop %v6913
        %v7268 = vrcp.pop %v6916
        %v7269 = vrcp.pop %v6919
        %v7270 = vrcp.pop %v6922
        %v7271 = vrcp.pop %v6925
        %v7272 = vrcp.pop %v6928
        %v7273 = vrcp.pop %v6931
        %v7274 = vrcp.pop %v6934
        %v7275 = vrcp.pop %v6937
        %v7276 = vrcp.pop %v6940
        %v7277 = vrcp.pop %v6943
        %v7278 = vrcp.pop %v6946
        %v7279 = vrcp.pop %v6949
        %v7280 = vrcp.pop %v6952
        %v7281 = vrcp.pop %v6955
        %v7282 = vrcp.pop %v6958
        %v7283 = vrcp.pop %v6961
        %v7284 = vrcp.pop %v6964
        %v7285 = vrcp.pop %v6967
        %v7286 = vrcp.pop %v6970
        %v7287 = vrcp.pop %v6973
        %v7288 = vrcp.pop %v6976
        %v7289 = vrcp.pop %v6979
        %v7290 = vrcp.pop %v6982
        %v7291 = vrcp.pop %v6985
        %v7292 = vrcp.pop %v6988
        %v7293 = vrcp.pop %v6991
        %v7294 = vrcp.pop %v6994
        %v7295 = vrcp.pop %v6997
        %v7296 = vrcp.pop %v7000
        %v7297 = vrcp.pop %v7003
        %v7298 = vrcp.pop %v7006
        %v7299 = vrcp.pop %v7009
        %v7300 = vrcp.pop %v7012
        %v7301 = vrcp.pop %v7015
        %v7302 = vrcp.pop %v7018
        %v7303 = vrcp.pop %v7021
        %v7304 = vrcp.pop %v7024
        %v7305 = vrcp.pop %v7027
        %v7306 = vrcp.pop %v7030
        %v7307 = vrcp.pop %v7033
        %v7308 = vrcp.pop %v7036
        %v7309 = vrcp.pop %v7039
        %v7310 = vrcp.pop %v7042
        %v7311 = vrcp.pop %v7045
        %v7312 = vrcp.pop %v7048
        %v7313 = vrcp.pop %v7051
        %v7314 = vrcp.pop %v7054
        %v7315 = vrcp.pop %v7057
        %v7316 = vrcp.pop %v7060
        %v7317 = vmul.f32 %v5782, %v7061
        %v7318 = vmul.f32 %v5784, %v7062
        %v7319 = vmul.f32 %v5786, %v7063
        %v7320 = vmul.f32 %v5788, %v7064
        %v7321 = vmul.f32 %v5790, %v7065
        %v7322 = vmul.f32 %v5792, %v7066
        %v7323 = vmul.f32 %v5794, %v7067
        %v7324 = vmul.f32 %v5796, %v7068
        %v7325 = vmul.f32 %v5798, %v7069
        %v7326 = vmul.f32 %v5800, %v7070
        %v7327 = vmul.f32 %v5802, %v7071
        %v7328 = vmul.f32 %v5804, %v7072
        %v7329 = vmul.f32 %v5806, %v7073
        %v7330 = vmul.f32 %v5808, %v7074
        %v7331 = vmul.f32 %v5810, %v7075
        %v7332 = vmul.f32 %v5812, %v7076
        %v7333 = vmul.f32 %v5814, %v7077
        %v7334 = vmul.f32 %v5816, %v7078
        %v7335 = vmul.f32 %v5818, %v7079
        %v7336 = vmul.f32 %v5820, %v7080
        %v7337 = vmul.f32 %v5822, %v7081
        %v7338 = vmul.f32 %v5824, %v7082
        %v7339 = vmul.f32 %v5826, %v7083
        %v7340 = vmul.f32 %v5828, %v7084
        %v7341 = vmul.f32 %v5830, %v7085
        %v7342 = vmul.f32 %v5832, %v7086
        %v7343 = vmul.f32 %v5834, %v7087
        %v7344 = vmul.f32 %v5836, %v7088
        %v7345 = vmul.f32 %v5838, %v7089
        %v7346 = vmul.f32 %v5840, %v7090
        %v7347 = vmul.f32 %v5842, %v7091
        %v7348 = vmul.f32 %v5844, %v7092
        %v7349 = vmul.f32 %v5846, %v7093
        %v7350 = vmul.f32 %v5848, %v7094
        %v7351 = vmul.f32 %v5850, %v7095
        %v7352 = vmul.f32 %v5852, %v7096
        %v7353 = vmul.f32 %v5854, %v7097
        %v7354 = vmul.f32 %v5856, %v7098
        %v7355 = vmul.f32 %v5858, %v7099
        %v7356 = vmul.f32 %v5860, %v7100
        %v7357 = vmul.f32 %v5862, %v7101
        %v7358 = vmul.f32 %v5864, %v7102
        %v7359 = vmul.f32 %v5866, %v7103
        %v7360 = vmul.f32 %v5868, %v7104
        %v7361 = vmul.f32 %v5870, %v7105
        %v7362 = vmul.f32 %v5872, %v7106
        %v7363 = vmul.f32 %v5874, %v7107
        %v7364 = vmul.f32 %v5876, %v7108
        %v7365 = vmul.f32 %v5878, %v7109
        %v7366 = vmul.f32 %v5880, %v7110
        %v7367 = vmul.f32 %v5882, %v7111
        %v7368 = vmul.f32 %v5884, %v7112
        %v7369 = vmul.f32 %v5886, %v7113
        %v7370 = vmul.f32 %v5888, %v7114
        %v7371 = vmul.f32 %v5890, %v7115
        %v7372 = vmul.f32 %v5892, %v7116
        %v7373 = vmul.f32 %v5894, %v7117
        %v7374 = vmul.f32 %v5896, %v7118
        %v7375 = vmul.f32 %v5898, %v7119
        %v7376 = vmul.f32 %v5900, %v7120
        %v7377 = vmul.f32 %v5902, %v7121
        %v7378 = vmul.f32 %v5904, %v7122
        %v7379 = vmul.f32 %v5906, %v7123
        %v7380 = vmul.f32 %v5908, %v7124
        %v7381 = vmul.f32 %v5910, %v7125
        %v7382 = vmul.f32 %v5912, %v7126
        %v7383 = vmul.f32 %v5914, %v7127
        %v7384 = vmul.f32 %v5916, %v7128
        %v7385 = vmul.f32 %v5918, %v7129
        %v7386 = vmul.f32 %v5920, %v7130
        %v7387 = vmul.f32 %v5922, %v7131
        %v7388 = vmul.f32 %v5924, %v7132
        %v7389 = vmul.f32 %v5926, %v7133
        %v7390 = vmul.f32 %v5928, %v7134
        %v7391 = vmul.f32 %v5930, %v7135
        %v7392 = vmul.f32 %v5932, %v7136
        %v7393 = vmul.f32 %v5934, %v7137
        %v7394 = vmul.f32 %v5936, %v7138
        %v7395 = vmul.f32 %v5938, %v7139
        %v7396 = vmul.f32 %v5940, %v7140
        %v7397 = vmul.f32 %v5942, %v7141
        %v7398 = vmul.f32 %v5944, %v7142
        %v7399 = vmul.f32 %v5946, %v7143
        %v7400 = vmul.f32 %v5948, %v7144
        %v7401 = vmul.f32 %v5950, %v7145
        %v7402 = vmul.f32 %v5952, %v7146
        %v7403 = vmul.f32 %v5954, %v7147
        %v7404 = vmul.f32 %v5956, %v7148
        %v7405 = vmul.f32 %v5958, %v7149
        %v7406 = vmul.f32 %v5960, %v7150
        %v7407 = vmul.f32 %v5962, %v7151
        %v7408 = vmul.f32 %v5964, %v7152
        %v7409 = vmul.f32 %v5966, %v7153
        %v7410 = vmul.f32 %v5968, %v7154
        %v7411 = vmul.f32 %v5970, %v7155
        %v7412 = vmul.f32 %v5972, %v7156
        %v7413 = vmul.f32 %v5974, %v7157
        %v7414 = vmul.f32 %v5976, %v7158
        %v7415 = vmul.f32 %v5978, %v7159
        %v7416 = vmul.f32 %v5980, %v7160
        %v7417 = vmul.f32 %v5982, %v7161
        %v7418 = vmul.f32 %v5984, %v7162
        %v7419 = vmul.f32 %v5986, %v7163
        %v7420 = vmul.f32 %v5988, %v7164
        %v7421 = vmul.f32 %v5990, %v7165
        %v7422 = vmul.f32 %v5992, %v7166
        %v7423 = vmul.f32 %v5994, %v7167
        %v7424 = vmul.f32 %v5996, %v7168
        %v7425 = vmul.f32 %v5998, %v7169
        %v7426 = vmul.f32 %v6000, %v7170
        %v7427 = vmul.f32 %v6002, %v7171
        %v7428 = vmul.f32 %v6004, %v7172
        %v7429 = vmul.f32 %v6006, %v7173
        %v7430 = vmul.f32 %v6008, %v7174
        %v7431 = vmul.f32 %v6010, %v7175
        %v7432 = vmul.f32 %v6012, %v7176
        %v7433 = vmul.f32 %v6014, %v7177
        %v7434 = vmul.f32 %v6016, %v7178
        %v7435 = vmul.f32 %v6018, %v7179
        %v7436 = vmul.f32 %v6020, %v7180
        %v7437 = vmul.f32 %v6022, %v7181
        %v7438 = vmul.f32 %v6024, %v7182
        %v7439 = vmul.f32 %v6026, %v7183
        %v7440 = vmul.f32 %v6028, %v7184
        %v7441 = vmul.f32 %v6030, %v7185
        %v7442 = vmul.f32 %v6032, %v7186
        %v7443 = vmul.f32 %v6034, %v7187
        %v7444 = vmul.f32 %v6036, %v7188
        %v7445 = vmul.f32 %v6038, %v7189
        %v7446 = vmul.f32 %v6040, %v7190
        %v7447 = vmul.f32 %v6042, %v7191
        %v7448 = vmul.f32 %v6044, %v7192
        %v7449 = vmul.f32 %v6046, %v7193
        %v7450 = vmul.f32 %v6048, %v7194
        %v7451 = vmul.f32 %v6050, %v7195
        %v7452 = vmul.f32 %v6052, %v7196
        %v7453 = vmul.f32 %v6054, %v7197
        %v7454 = vmul.f32 %v6056, %v7198
        %v7455 = vmul.f32 %v6058, %v7199
        %v7456 = vmul.f32 %v6060, %v7200
        %v7457 = vmul.f32 %v6062, %v7201
        %v7458 = vmul.f32 %v6064, %v7202
        %v7459 = vmul.f32 %v6066, %v7203
        %v7460 = vmul.f32 %v6068, %v7204
        %v7461 = vmul.f32 %v6070, %v7205
        %v7462 = vmul.f32 %v6072, %v7206
        %v7463 = vmul.f32 %v6074, %v7207
        %v7464 = vmul.f32 %v6076, %v7208
        %v7465 = vmul.f32 %v6078, %v7209
        %v7466 = vmul.f32 %v6080, %v7210
        %v7467 = vmul.f32 %v6082, %v7211
        %v7468 = vmul.f32 %v6084, %v7212
        %v7469 = vmul.f32 %v6086, %v7213
        %v7470 = vmul.f32 %v6088, %v7214
        %v7471 = vmul.f32 %v6090, %v7215
        %v7472 = vmul.f32 %v6092, %v7216
        %v7473 = vmul.f32 %v6094, %v7217
        %v7474 = vmul.f32 %v6096, %v7218
        %v7475 = vmul.f32 %v6098, %v7219
        %v7476 = vmul.f32 %v6100, %v7220
        %v7477 = vmul.f32 %v6102, %v7221
        %v7478 = vmul.f32 %v6104, %v7222
        %v7479 = vmul.f32 %v6106, %v7223
        %v7480 = vmul.f32 %v6108, %v7224
        %v7481 = vmul.f32 %v6110, %v7225
        %v7482 = vmul.f32 %v6112, %v7226
        %v7483 = vmul.f32 %v6114, %v7227
        %v7484 = vmul.f32 %v6116, %v7228
        %v7485 = vmul.f32 %v6118, %v7229
        %v7486 = vmul.f32 %v6120, %v7230
        %v7487 = vmul.f32 %v6122, %v7231
        %v7488 = vmul.f32 %v6124, %v7232
        %v7489 = vmul.f32 %v6126, %v7233
        %v7490 = vmul.f32 %v6128, %v7234
        %v7491 = vmul.f32 %v6130, %v7235
        %v7492 = vmul.f32 %v6132, %v7236
        %v7493 = vmul.f32 %v6134, %v7237
        %v7494 = vmul.f32 %v6136, %v7238
        %v7495 = vmul.f32 %v6138, %v7239
        %v7496 = vmul.f32 %v6140, %v7240
        %v7497 = vmul.f32 %v6142, %v7241
        %v7498 = vmul.f32 %v6144, %v7242
        %v7499 = vmul.f32 %v6146, %v7243
        %v7500 = vmul.f32 %v6148, %v7244
        %v7501 = vmul.f32 %v6150, %v7245
        %v7502 = vmul.f32 %v6152, %v7246
        %v7503 = vmul.f32 %v6154, %v7247
        %v7504 = vmul.f32 %v6156, %v7248
        %v7505 = vmul.f32 %v6158, %v7249
        %v7506 = vmul.f32 %v6160, %v7250
        %v7507 = vmul.f32 %v6162, %v7251
        %v7508 = vmul.f32 %v6164, %v7252
        %v7509 = vmul.f32 %v6166, %v7253
        %v7510 = vmul.f32 %v6168, %v7254
        %v7511 = vmul.f32 %v6170, %v7255
        %v7512 = vmul.f32 %v6172, %v7256
        %v7513 = vmul.f32 %v6174, %v7257
        %v7514 = vmul.f32 %v6176, %v7258
        %v7515 = vmul.f32 %v6178, %v7259
        %v7516 = vmul.f32 %v6180, %v7260
        %v7517 = vmul.f32 %v6182, %v7261
        %v7518 = vmul.f32 %v6184, %v7262
        %v7519 = vmul.f32 %v6186, %v7263
        %v7520 = vmul.f32 %v6188, %v7264
        %v7521 = vmul.f32 %v6190, %v7265
        %v7522 = vmul.f32 %v6192, %v7266
        %v7523 = vmul.f32 %v6194, %v7267
        %v7524 = vmul.f32 %v6196, %v7268
        %v7525 = vmul.f32 %v6198, %v7269
        %v7526 = vmul.f32 %v6200, %v7270
        %v7527 = vmul.f32 %v6202, %v7271
        %v7528 = vmul.f32 %v6204, %v7272
        %v7529 = vmul.f32 %v6206, %v7273
        %v7530 = vmul.f32 %v6208, %v7274
        %v7531 = vmul.f32 %v6210, %v7275
        %v7532 = vmul.f32 %v6212, %v7276
        %v7533 = vmul.f32 %v6214, %v7277
        %v7534 = vmul.f32 %v6216, %v7278
        %v7535 = vmul.f32 %v6218, %v7279
        %v7536 = vmul.f32 %v6220, %v7280
        %v7537 = vmul.f32 %v6222, %v7281
        %v7538 = vmul.f32 %v6224, %v7282
        %v7539 = vmul.f32 %v6226, %v7283
        %v7540 = vmul.f32 %v6228, %v7284
        %v7541 = vmul.f32 %v6230, %v7285
        %v7542 = vmul.f32 %v6232, %v7286
        %v7543 = vmul.f32 %v6234, %v7287
        %v7544 = vmul.f32 %v6236, %v7288
        %v7545 = vmul.f32 %v6238, %v7289
        %v7546 = vmul.f32 %v6240, %v7290
        %v7547 = vmul.f32 %v6242, %v7291
        %v7548 = vmul.f32 %v6244, %v7292
        %v7549 = vmul.f32 %v6246, %v7293
        %v7550 = vmul.f32 %v6248, %v7294
        %v7551 = vmul.f32 %v6250, %v7295
        %v7552 = vmul.f32 %v6252, %v7296
        %v7553 = vmul.f32 %v6254, %v7297
        %v7554 = vmul.f32 %v6256, %v7298
        %v7555 = vmul.f32 %v6258, %v7299
        %v7556 = vmul.f32 %v6260, %v7300
        %v7557 = vmul.f32 %v6262, %v7301
        %v7558 = vmul.f32 %v6264, %v7302
        %v7559 = vmul.f32 %v6266, %v7303
        %v7560 = vmul.f32 %v6268, %v7304
        %v7561 = vmul.f32 %v6270, %v7305
        %v7562 = vmul.f32 %v6272, %v7306
        %v7563 = vmul.f32 %v6274, %v7307
        %v7564 = vmul.f32 %v6276, %v7308
        %v7565 = vmul.f32 %v6278, %v7309
        %v7566 = vmul.f32 %v6280, %v7310
        %v7567 = vmul.f32 %v6282, %v7311
        %v7568 = vmul.f32 %v6284, %v7312
        %v7569 = vmul.f32 %v6286, %v7313
        %v7570 = vmul.f32 %v6288, %v7314
        %v7571 = vmul.f32 %v6290, %v7315
        %v7572 = vmul.f32 %v6292, %v7316
        %v7574 = vsel %vm4756, %v7317, 0
        %v7577 = vsel %vm4756, %v7318, 0
        %v7580 = vsel %vm4756, %v7319, 0
        %v7583 = vsel %vm4756, %v7320, 0
        %v7586 = vsel %vm4756, %v7321, 0
        %v7589 = vsel %vm4756, %v7322, 0
        %v7592 = vsel %vm4756, %v7323, 0
        %v7595 = vsel %vm4756, %v7324, 0
        %7597 = vmatpush.msra.mxu0 0.0
        %7598 = vmatpush.msra.mxu0 0.0
        %7599 = vmatpush.msra.mxu0 0.0
        %7600 = vmatpush.msra.mxu0 0.0
        %7601 = vmatpush.msra.mxu0 0.0
        %7602 = vmatpush.msra.mxu0 0.0
        %7603 = vmatpush.msra.mxu0 0.0
        %7604 = vmatpush.msra.mxu0 0.0
        %7605 = vmatpush.msra.mxu0 %v649
        %7606 = vmatpush.msra.mxu0 %v646
        %7607 = vmatpush.msra.mxu0 %v643
        %7608 = vmatpush.msra.mxu0 %v640
        %7609 = vmatpush.msra.mxu0 %v637
        %7610 = vmatpush.msra.mxu0 %v634
        %7611 = vmatpush.msra.mxu0 %v631
        %7612 = vmatpush.msra.mxu0 %v628
        %7613 = vmatmul.f32.gmra.mxu0 %v7574
        %v7614 = vpop.f32.mrf.mxu0
        %v7615 = vadd.f32 0.0, %v7614
        %7616 = vmatmul.f32.gmra.mxu0 %v7577
        %v7617 = vpop.f32.mrf.mxu0
        %v7618 = vadd.f32 0.0, %v7617
        %7619 = vmatmul.f32.gmra.mxu0 %v7580
        %v7620 = vpop.f32.mrf.mxu0
        %v7621 = vadd.f32 0.0, %v7620
        %7622 = vmatmul.f32.gmra.mxu0 %v7583
        %v7623 = vpop.f32.mrf.mxu0
        %v7624 = vadd.f32 0.0, %v7623
        %7625 = vmatmul.f32.gmra.mxu0 %v7586
        %v7626 = vpop.f32.mrf.mxu0
        %v7627 = vadd.f32 0.0, %v7626
        %7628 = vmatmul.f32.gmra.mxu0 %v7589
        %v7629 = vpop.f32.mrf.mxu0
        %v7630 = vadd.f32 0.0, %v7629
        %7631 = vmatmul.f32.gmra.mxu0 %v7592
        %v7632 = vpop.f32.mrf.mxu0
        %v7633 = vadd.f32 0.0, %v7632
        %7634 = vmatmul.f32.gmra.mxu0 %v7595
        %v7635 = vpop.f32.mrf.mxu0
        %v7636 = vadd.f32 0.0, %v7635
        %7637 = vdwg.mxu0
        %v7639 = vsel %vm4756, %v7325, 0
        %v7642 = vsel %vm4756, %v7326, 0
        %v7645 = vsel %vm4756, %v7327, 0
        %v7648 = vsel %vm4756, %v7328, 0
        %v7651 = vsel %vm4756, %v7329, 0
        %v7654 = vsel %vm4756, %v7330, 0
        %v7657 = vsel %vm4756, %v7331, 0
        %v7660 = vsel %vm4756, %v7332, 0
        %7662 = vmatpush.msra.mxu0 0.0
        %7663 = vmatpush.msra.mxu0 0.0
        %7664 = vmatpush.msra.mxu0 0.0
        %7665 = vmatpush.msra.mxu0 0.0
        %7666 = vmatpush.msra.mxu0 0.0
        %7667 = vmatpush.msra.mxu0 0.0
        %7668 = vmatpush.msra.mxu0 0.0
        %7669 = vmatpush.msra.mxu0 0.0
        %7670 = vmatpush.msra.mxu0 %v673
        %7671 = vmatpush.msra.mxu0 %v670
        %7672 = vmatpush.msra.mxu0 %v667
        %7673 = vmatpush.msra.mxu0 %v664
        %7674 = vmatpush.msra.mxu0 %v661
        %7675 = vmatpush.msra.mxu0 %v658
        %7676 = vmatpush.msra.mxu0 %v655
        %7677 = vmatpush.msra.mxu0 %v652
        %7678 = vmatmul.f32.gmra.mxu0 %v7639
        %v7679 = vpop.f32.mrf.mxu0
        %v7680 = vadd.f32 0.0, %v7679
        %7681 = vmatmul.f32.gmra.mxu0 %v7642
        %v7682 = vpop.f32.mrf.mxu0
        %v7683 = vadd.f32 0.0, %v7682
        %7684 = vmatmul.f32.gmra.mxu0 %v7645
        %v7685 = vpop.f32.mrf.mxu0
        %v7686 = vadd.f32 0.0, %v7685
        %7687 = vmatmul.f32.gmra.mxu0 %v7648
        %v7688 = vpop.f32.mrf.mxu0
        %v7689 = vadd.f32 0.0, %v7688
        %7690 = vmatmul.f32.gmra.mxu0 %v7651
        %v7691 = vpop.f32.mrf.mxu0
        %v7692 = vadd.f32 0.0, %v7691
        %7693 = vmatmul.f32.gmra.mxu0 %v7654
        %v7694 = vpop.f32.mrf.mxu0
        %v7695 = vadd.f32 0.0, %v7694
        %7696 = vmatmul.f32.gmra.mxu0 %v7657
        %v7697 = vpop.f32.mrf.mxu0
        %v7698 = vadd.f32 0.0, %v7697
        %7699 = vmatmul.f32.gmra.mxu0 %v7660
        %v7700 = vpop.f32.mrf.mxu0
        %v7701 = vadd.f32 0.0, %v7700
        %7702 = vdwg.mxu0
        %v7704 = vsel %vm4756, %v7333, 0
        %v7707 = vsel %vm4756, %v7334, 0
        %v7710 = vsel %vm4756, %v7335, 0
        %v7713 = vsel %vm4756, %v7336, 0
        %v7716 = vsel %vm4756, %v7337, 0
        %v7719 = vsel %vm4756, %v7338, 0
        %v7722 = vsel %vm4756, %v7339, 0
        %v7725 = vsel %vm4756, %v7340, 0
        %7727 = vmatpush.msra.mxu0 0.0
        %7728 = vmatpush.msra.mxu0 0.0
        %7729 = vmatpush.msra.mxu0 0.0
        %7730 = vmatpush.msra.mxu0 0.0
        %7731 = vmatpush.msra.mxu0 0.0
        %7732 = vmatpush.msra.mxu0 0.0
        %7733 = vmatpush.msra.mxu0 0.0
        %7734 = vmatpush.msra.mxu0 0.0
        %7735 = vmatpush.msra.mxu0 %v697
        %7736 = vmatpush.msra.mxu0 %v694
        %7737 = vmatpush.msra.mxu0 %v691
        %7738 = vmatpush.msra.mxu0 %v688
        %7739 = vmatpush.msra.mxu0 %v685
        %7740 = vmatpush.msra.mxu0 %v682
        %7741 = vmatpush.msra.mxu0 %v679
        %7742 = vmatpush.msra.mxu0 %v676
        %7743 = vmatmul.f32.gmra.mxu0 %v7704
        %v7744 = vpop.f32.mrf.mxu0
        %v7745 = vadd.f32 0.0, %v7744
        %7746 = vmatmul.f32.gmra.mxu0 %v7707
        %v7747 = vpop.f32.mrf.mxu0
        %v7748 = vadd.f32 0.0, %v7747
        %7749 = vmatmul.f32.gmra.mxu0 %v7710
        %v7750 = vpop.f32.mrf.mxu0
        %v7751 = vadd.f32 0.0, %v7750
        %7752 = vmatmul.f32.gmra.mxu0 %v7713
        %v7753 = vpop.f32.mrf.mxu0
        %v7754 = vadd.f32 0.0, %v7753
        %7755 = vmatmul.f32.gmra.mxu0 %v7716
        %v7756 = vpop.f32.mrf.mxu0
        %v7757 = vadd.f32 0.0, %v7756
        %7758 = vmatmul.f32.gmra.mxu0 %v7719
        %v7759 = vpop.f32.mrf.mxu0
        %v7760 = vadd.f32 0.0, %v7759
        %7761 = vmatmul.f32.gmra.mxu0 %v7722
        %v7762 = vpop.f32.mrf.mxu0
        %v7763 = vadd.f32 0.0, %v7762
        %7764 = vmatmul.f32.gmra.mxu0 %v7725
        %v7765 = vpop.f32.mrf.mxu0
        %v7766 = vadd.f32 0.0, %v7765
        %7767 = vdwg.mxu0
        %v7769 = vsel %vm4756, %v7341, 0
        %v7772 = vsel %vm4756, %v7342, 0
        %v7775 = vsel %vm4756, %v7343, 0
        %v7778 = vsel %vm4756, %v7344, 0
        %v7781 = vsel %vm4756, %v7345, 0
        %v7784 = vsel %vm4756, %v7346, 0
        %v7787 = vsel %vm4756, %v7347, 0
        %v7790 = vsel %vm4756, %v7348, 0
        %7792 = vmatpush.msra.mxu0 0.0
        %7793 = vmatpush.msra.mxu0 0.0
        %7794 = vmatpush.msra.mxu0 0.0
        %7795 = vmatpush.msra.mxu0 0.0
        %7796 = vmatpush.msra.mxu0 0.0
        %7797 = vmatpush.msra.mxu0 0.0
        %7798 = vmatpush.msra.mxu0 0.0
        %7799 = vmatpush.msra.mxu0 0.0
        %7800 = vmatpush.msra.mxu0 %v721
        %7801 = vmatpush.msra.mxu0 %v718
        %7802 = vmatpush.msra.mxu0 %v715
        %7803 = vmatpush.msra.mxu0 %v712
        %7804 = vmatpush.msra.mxu0 %v709
        %7805 = vmatpush.msra.mxu0 %v706
        %7806 = vmatpush.msra.mxu0 %v703
        %7807 = vmatpush.msra.mxu0 %v700
        %7808 = vmatmul.f32.gmra.mxu0 %v7769
        %v7809 = vpop.f32.mrf.mxu0
        %v7810 = vadd.f32 0.0, %v7809
        %7811 = vmatmul.f32.gmra.mxu0 %v7772
        %v7812 = vpop.f32.mrf.mxu0
        %v7813 = vadd.f32 0.0, %v7812
        %7814 = vmatmul.f32.gmra.mxu0 %v7775
        %v7815 = vpop.f32.mrf.mxu0
        %v7816 = vadd.f32 0.0, %v7815
        %7817 = vmatmul.f32.gmra.mxu0 %v7778
        %v7818 = vpop.f32.mrf.mxu0
        %v7819 = vadd.f32 0.0, %v7818
        %7820 = vmatmul.f32.gmra.mxu0 %v7781
        %v7821 = vpop.f32.mrf.mxu0
        %v7822 = vadd.f32 0.0, %v7821
        %7823 = vmatmul.f32.gmra.mxu0 %v7784
        %v7824 = vpop.f32.mrf.mxu0
        %v7825 = vadd.f32 0.0, %v7824
        %7826 = vmatmul.f32.gmra.mxu0 %v7787
        %v7827 = vpop.f32.mrf.mxu0
        %v7828 = vadd.f32 0.0, %v7827
        %7829 = vmatmul.f32.gmra.mxu0 %v7790
        %v7830 = vpop.f32.mrf.mxu0
        %v7831 = vadd.f32 0.0, %v7830
        %7832 = vdwg.mxu0
        %v7834 = vsel %vm4756, %v7349, 0
        %v7837 = vsel %vm4756, %v7350, 0
        %v7840 = vsel %vm4756, %v7351, 0
        %v7843 = vsel %vm4756, %v7352, 0
        %v7846 = vsel %vm4756, %v7353, 0
        %v7849 = vsel %vm4756, %v7354, 0
        %v7852 = vsel %vm4756, %v7355, 0
        %v7855 = vsel %vm4756, %v7356, 0
        %7857 = vmatpush.msra.mxu0 0.0
        %7858 = vmatpush.msra.mxu0 0.0
        %7859 = vmatpush.msra.mxu0 0.0
        %7860 = vmatpush.msra.mxu0 0.0
        %7861 = vmatpush.msra.mxu0 0.0
        %7862 = vmatpush.msra.mxu0 0.0
        %7863 = vmatpush.msra.mxu0 0.0
        %7864 = vmatpush.msra.mxu0 0.0
        %7865 = vmatpush.msra.mxu0 %v1762
        %7866 = vmatpush.msra.mxu0 %v1760
        %7867 = vmatpush.msra.mxu0 %v1758
        %7868 = vmatpush.msra.mxu0 %v1756
        %7869 = vmatpush.msra.mxu0 %v1754
        %7870 = vmatpush.msra.mxu0 %v1752
        %7871 = vmatpush.msra.mxu0 %v1750
        %7872 = vmatpush.msra.mxu0 %v1748
        %7873 = vmatmul.f32.gmra.mxu0 %v7834
        %v7874 = vpop.f32.mrf.mxu0
        %v7875 = vadd.f32 0.0, %v7874
        %7876 = vmatmul.f32.gmra.mxu0 %v7837
        %v7877 = vpop.f32.mrf.mxu0
        %v7878 = vadd.f32 0.0, %v7877
        %7879 = vmatmul.f32.gmra.mxu0 %v7840
        %v7880 = vpop.f32.mrf.mxu0
        %v7881 = vadd.f32 0.0, %v7880
        %7882 = vmatmul.f32.gmra.mxu0 %v7843
        %v7883 = vpop.f32.mrf.mxu0
        %v7884 = vadd.f32 0.0, %v7883
        %7885 = vmatmul.f32.gmra.mxu0 %v7846
        %v7886 = vpop.f32.mrf.mxu0
        %v7887 = vadd.f32 0.0, %v7886
        %7888 = vmatmul.f32.gmra.mxu0 %v7849
        %v7889 = vpop.f32.mrf.mxu0
        %v7890 = vadd.f32 0.0, %v7889
        %7891 = vmatmul.f32.gmra.mxu0 %v7852
        %v7892 = vpop.f32.mrf.mxu0
        %v7893 = vadd.f32 0.0, %v7892
        %7894 = vmatmul.f32.gmra.mxu0 %v7855
        %v7895 = vpop.f32.mrf.mxu0
        %v7896 = vadd.f32 0.0, %v7895
        %7897 = vdwg.mxu0
        %v7899 = vsel %vm4756, %v7357, 0
        %v7902 = vsel %vm4756, %v7358, 0
        %v7905 = vsel %vm4756, %v7359, 0
        %v7908 = vsel %vm4756, %v7360, 0
        %v7911 = vsel %vm4756, %v7361, 0
        %v7914 = vsel %vm4756, %v7362, 0
        %v7917 = vsel %vm4756, %v7363, 0
        %v7920 = vsel %vm4756, %v7364, 0
        %7922 = vmatpush.msra.mxu0 0.0
        %7923 = vmatpush.msra.mxu0 0.0
        %7924 = vmatpush.msra.mxu0 0.0
        %7925 = vmatpush.msra.mxu0 0.0
        %7926 = vmatpush.msra.mxu0 0.0
        %7927 = vmatpush.msra.mxu0 0.0
        %7928 = vmatpush.msra.mxu0 0.0
        %7929 = vmatpush.msra.mxu0 0.0
        %7930 = vmatpush.msra.mxu0 %v1778
        %7931 = vmatpush.msra.mxu0 %v1776
        %7932 = vmatpush.msra.mxu0 %v1774
        %7933 = vmatpush.msra.mxu0 %v1772
        %7934 = vmatpush.msra.mxu0 %v1770
        %7935 = vmatpush.msra.mxu0 %v1768
        %7936 = vmatpush.msra.mxu0 %v1766
        %7937 = vmatpush.msra.mxu0 %v1764
        %7938 = vmatmul.f32.gmra.mxu0 %v7899
        %v7939 = vpop.f32.mrf.mxu0
        %v7940 = vadd.f32 0.0, %v7939
        %7941 = vmatmul.f32.gmra.mxu0 %v7902
        %v7942 = vpop.f32.mrf.mxu0
        %v7943 = vadd.f32 0.0, %v7942
        %7944 = vmatmul.f32.gmra.mxu0 %v7905
        %v7945 = vpop.f32.mrf.mxu0
        %v7946 = vadd.f32 0.0, %v7945
        %7947 = vmatmul.f32.gmra.mxu0 %v7908
        %v7948 = vpop.f32.mrf.mxu0
        %v7949 = vadd.f32 0.0, %v7948
        %7950 = vmatmul.f32.gmra.mxu0 %v7911
        %v7951 = vpop.f32.mrf.mxu0
        %v7952 = vadd.f32 0.0, %v7951
        %7953 = vmatmul.f32.gmra.mxu0 %v7914
        %v7954 = vpop.f32.mrf.mxu0
        %v7955 = vadd.f32 0.0, %v7954
        %7956 = vmatmul.f32.gmra.mxu0 %v7917
        %v7957 = vpop.f32.mrf.mxu0
        %v7958 = vadd.f32 0.0, %v7957
        %7959 = vmatmul.f32.gmra.mxu0 %v7920
        %v7960 = vpop.f32.mrf.mxu0
        %v7961 = vadd.f32 0.0, %v7960
        %7962 = vdwg.mxu0
        %v7964 = vsel %vm4756, %v7365, 0
        %v7967 = vsel %vm4756, %v7366, 0
        %v7970 = vsel %vm4756, %v7367, 0
        %v7973 = vsel %vm4756, %v7368, 0
        %v7976 = vsel %vm4756, %v7369, 0
        %v7979 = vsel %vm4756, %v7370, 0
        %v7982 = vsel %vm4756, %v7371, 0
        %v7985 = vsel %vm4756, %v7372, 0
        %7987 = vmatpush.msra.mxu0 0.0
        %7988 = vmatpush.msra.mxu0 0.0
        %7989 = vmatpush.msra.mxu0 0.0
        %7990 = vmatpush.msra.mxu0 0.0
        %7991 = vmatpush.msra.mxu0 0.0
        %7992 = vmatpush.msra.mxu0 0.0
        %7993 = vmatpush.msra.mxu0 0.0
        %7994 = vmatpush.msra.mxu0 0.0
        %7995 = vmatpush.msra.mxu0 %v1794
        %7996 = vmatpush.msra.mxu0 %v1792
        %7997 = vmatpush.msra.mxu0 %v1790
        %7998 = vmatpush.msra.mxu0 %v1788
        %7999 = vmatpush.msra.mxu0 %v1786
        %8000 = vmatpush.msra.mxu0 %v1784
        %8001 = vmatpush.msra.mxu0 %v1782
        %8002 = vmatpush.msra.mxu0 %v1780
        %8003 = vmatmul.f32.gmra.mxu0 %v7964
        %v8004 = vpop.f32.mrf.mxu0
        %v8005 = vadd.f32 0.0, %v8004
        %8006 = vmatmul.f32.gmra.mxu0 %v7967
        %v8007 = vpop.f32.mrf.mxu0
        %v8008 = vadd.f32 0.0, %v8007
        %8009 = vmatmul.f32.gmra.mxu0 %v7970
        %v8010 = vpop.f32.mrf.mxu0
        %v8011 = vadd.f32 0.0, %v8010
        %8012 = vmatmul.f32.gmra.mxu0 %v7973
        %v8013 = vpop.f32.mrf.mxu0
        %v8014 = vadd.f32 0.0, %v8013
        %8015 = vmatmul.f32.gmra.mxu0 %v7976
        %v8016 = vpop.f32.mrf.mxu0
        %v8017 = vadd.f32 0.0, %v8016
        %8018 = vmatmul.f32.gmra.mxu0 %v7979
        %v8019 = vpop.f32.mrf.mxu0
        %v8020 = vadd.f32 0.0, %v8019
        %8021 = vmatmul.f32.gmra.mxu0 %v7982
        %v8022 = vpop.f32.mrf.mxu0
        %v8023 = vadd.f32 0.0, %v8022
        %8024 = vmatmul.f32.gmra.mxu0 %v7985
        %v8025 = vpop.f32.mrf.mxu0
        %v8026 = vadd.f32 0.0, %v8025
        %8027 = vdwg.mxu0
        %v8029 = vsel %vm4756, %v7373, 0
        %v8032 = vsel %vm4756, %v7374, 0
        %v8035 = vsel %vm4756, %v7375, 0
        %v8038 = vsel %vm4756, %v7376, 0
        %v8041 = vsel %vm4756, %v7377, 0
        %v8044 = vsel %vm4756, %v7378, 0
        %v8047 = vsel %vm4756, %v7379, 0
        %v8050 = vsel %vm4756, %v7380, 0
        %8052 = vmatpush.msra.mxu0 0.0
        %8053 = vmatpush.msra.mxu0 0.0
        %8054 = vmatpush.msra.mxu0 0.0
        %8055 = vmatpush.msra.mxu0 0.0
        %8056 = vmatpush.msra.mxu0 0.0
        %8057 = vmatpush.msra.mxu0 0.0
        %8058 = vmatpush.msra.mxu0 0.0
        %8059 = vmatpush.msra.mxu0 0.0
        %8060 = vmatpush.msra.mxu0 %v1810
        %8061 = vmatpush.msra.mxu0 %v1808
        %8062 = vmatpush.msra.mxu0 %v1806
        %8063 = vmatpush.msra.mxu0 %v1804
        %8064 = vmatpush.msra.mxu0 %v1802
        %8065 = vmatpush.msra.mxu0 %v1800
        %8066 = vmatpush.msra.mxu0 %v1798
        %8067 = vmatpush.msra.mxu0 %v1796
        %8068 = vmatmul.f32.gmra.mxu0 %v8029
        %v8069 = vpop.f32.mrf.mxu0
        %v8070 = vadd.f32 0.0, %v8069
        %8071 = vmatmul.f32.gmra.mxu0 %v8032
        %v8072 = vpop.f32.mrf.mxu0
        %v8073 = vadd.f32 0.0, %v8072
        %8074 = vmatmul.f32.gmra.mxu0 %v8035
        %v8075 = vpop.f32.mrf.mxu0
        %v8076 = vadd.f32 0.0, %v8075
        %8077 = vmatmul.f32.gmra.mxu0 %v8038
        %v8078 = vpop.f32.mrf.mxu0
        %v8079 = vadd.f32 0.0, %v8078
        %8080 = vmatmul.f32.gmra.mxu0 %v8041
        %v8081 = vpop.f32.mrf.mxu0
        %v8082 = vadd.f32 0.0, %v8081
        %8083 = vmatmul.f32.gmra.mxu0 %v8044
        %v8084 = vpop.f32.mrf.mxu0
        %v8085 = vadd.f32 0.0, %v8084
        %8086 = vmatmul.f32.gmra.mxu0 %v8047
        %v8087 = vpop.f32.mrf.mxu0
        %v8088 = vadd.f32 0.0, %v8087
        %8089 = vmatmul.f32.gmra.mxu0 %v8050
        %v8090 = vpop.f32.mrf.mxu0
        %v8091 = vadd.f32 0.0, %v8090
        %8092 = vdwg.mxu0
        %v8094 = vsel %vm4756, %v7381, 0
        %v8097 = vsel %vm4756, %v7382, 0
        %v8100 = vsel %vm4756, %v7383, 0
        %v8103 = vsel %vm4756, %v7384, 0
        %v8106 = vsel %vm4756, %v7385, 0
        %v8109 = vsel %vm4756, %v7386, 0
        %v8112 = vsel %vm4756, %v7387, 0
        %v8115 = vsel %vm4756, %v7388, 0
        %8117 = vmatpush.msra.mxu0 0.0
        %8118 = vmatpush.msra.mxu0 0.0
        %8119 = vmatpush.msra.mxu0 0.0
        %8120 = vmatpush.msra.mxu0 0.0
        %8121 = vmatpush.msra.mxu0 0.0
        %8122 = vmatpush.msra.mxu0 0.0
        %8123 = vmatpush.msra.mxu0 0.0
        %8124 = vmatpush.msra.mxu0 0.0
        %8125 = vmatpush.msra.mxu0 %v1858
        %8126 = vmatpush.msra.mxu0 %v1856
        %8127 = vmatpush.msra.mxu0 %v1854
        %8128 = vmatpush.msra.mxu0 %v1852
        %8129 = vmatpush.msra.mxu0 %v1850
        %8130 = vmatpush.msra.mxu0 %v1848
        %8131 = vmatpush.msra.mxu0 %v1846
        %8132 = vmatpush.msra.mxu0 %v1844
        %8133 = vmatmul.f32.gmra.mxu0 %v8094
        %v8134 = vpop.f32.mrf.mxu0
        %v8135 = vadd.f32 0.0, %v8134
        %8136 = vmatmul.f32.gmra.mxu0 %v8097
        %v8137 = vpop.f32.mrf.mxu0
        %v8138 = vadd.f32 0.0, %v8137
        %8139 = vmatmul.f32.gmra.mxu0 %v8100
        %v8140 = vpop.f32.mrf.mxu0
        %v8141 = vadd.f32 0.0, %v8140
        %8142 = vmatmul.f32.gmra.mxu0 %v8103
        %v8143 = vpop.f32.mrf.mxu0
        %v8144 = vadd.f32 0.0, %v8143
        %8145 = vmatmul.f32.gmra.mxu0 %v8106
        %v8146 = vpop.f32.mrf.mxu0
        %v8147 = vadd.f32 0.0, %v8146
        %8148 = vmatmul.f32.gmra.mxu0 %v8109
        %v8149 = vpop.f32.mrf.mxu0
        %v8150 = vadd.f32 0.0, %v8149
        %8151 = vmatmul.f32.gmra.mxu0 %v8112
        %v8152 = vpop.f32.mrf.mxu0
        %v8153 = vadd.f32 0.0, %v8152
        %8154 = vmatmul.f32.gmra.mxu0 %v8115
        %v8155 = vpop.f32.mrf.mxu0
        %v8156 = vadd.f32 0.0, %v8155
        %8157 = vdwg.mxu0
        %v8159 = vsel %vm4756, %v7389, 0
        %v8162 = vsel %vm4756, %v7390, 0
        %v8165 = vsel %vm4756, %v7391, 0
        %v8168 = vsel %vm4756, %v7392, 0
        %v8171 = vsel %vm4756, %v7393, 0
        %v8174 = vsel %vm4756, %v7394, 0
        %v8177 = vsel %vm4756, %v7395, 0
        %v8180 = vsel %vm4756, %v7396, 0
        %8182 = vmatpush.msra.mxu0 0.0
        %8183 = vmatpush.msra.mxu0 0.0
        %8184 = vmatpush.msra.mxu0 0.0
        %8185 = vmatpush.msra.mxu0 0.0
        %8186 = vmatpush.msra.mxu0 0.0
        %8187 = vmatpush.msra.mxu0 0.0
        %8188 = vmatpush.msra.mxu0 0.0
        %8189 = vmatpush.msra.mxu0 0.0
        %8190 = vmatpush.msra.mxu0 %v1874
        %8191 = vmatpush.msra.mxu0 %v1872
        %8192 = vmatpush.msra.mxu0 %v1870
        %8193 = vmatpush.msra.mxu0 %v1868
        %8194 = vmatpush.msra.mxu0 %v1866
        %8195 = vmatpush.msra.mxu0 %v1864
        %8196 = vmatpush.msra.mxu0 %v1862
        %8197 = vmatpush.msra.mxu0 %v1860
        %8198 = vmatmul.f32.gmra.mxu0 %v8159
        %v8199 = vpop.f32.mrf.mxu0
        %v8200 = vadd.f32 0.0, %v8199
        %8201 = vmatmul.f32.gmra.mxu0 %v8162
        %v8202 = vpop.f32.mrf.mxu0
        %v8203 = vadd.f32 0.0, %v8202
        %8204 = vmatmul.f32.gmra.mxu0 %v8165
        %v8205 = vpop.f32.mrf.mxu0
        %v8206 = vadd.f32 0.0, %v8205
        %8207 = vmatmul.f32.gmra.mxu0 %v8168
        %v8208 = vpop.f32.mrf.mxu0
        %v8209 = vadd.f32 0.0, %v8208
        %8210 = vmatmul.f32.gmra.mxu0 %v8171
        %v8211 = vpop.f32.mrf.mxu0
        %v8212 = vadd.f32 0.0, %v8211
        %8213 = vmatmul.f32.gmra.mxu0 %v8174
        %v8214 = vpop.f32.mrf.mxu0
        %v8215 = vadd.f32 0.0, %v8214
        %8216 = vmatmul.f32.gmra.mxu0 %v8177
        %v8217 = vpop.f32.mrf.mxu0
        %v8218 = vadd.f32 0.0, %v8217
        %8219 = vmatmul.f32.gmra.mxu0 %v8180
        %v8220 = vpop.f32.mrf.mxu0
        %v8221 = vadd.f32 0.0, %v8220
        %8222 = vdwg.mxu0
        %v8224 = vsel %vm4756, %v7397, 0
        %v8227 = vsel %vm4756, %v7398, 0
        %v8230 = vsel %vm4756, %v7399, 0
        %v8233 = vsel %vm4756, %v7400, 0
        %v8236 = vsel %vm4756, %v7401, 0
        %v8239 = vsel %vm4756, %v7402, 0
        %v8242 = vsel %vm4756, %v7403, 0
        %v8245 = vsel %vm4756, %v7404, 0
        %8247 = vmatpush.msra.mxu0 0.0
        %8248 = vmatpush.msra.mxu0 0.0
        %8249 = vmatpush.msra.mxu0 0.0
        %8250 = vmatpush.msra.mxu0 0.0
        %8251 = vmatpush.msra.mxu0 0.0
        %8252 = vmatpush.msra.mxu0 0.0
        %8253 = vmatpush.msra.mxu0 0.0
        %8254 = vmatpush.msra.mxu0 0.0
        %8255 = vmatpush.msra.mxu0 %v1890
        %8256 = vmatpush.msra.mxu0 %v1888
        %8257 = vmatpush.msra.mxu0 %v1886
        %8258 = vmatpush.msra.mxu0 %v1884
        %8259 = vmatpush.msra.mxu0 %v1882
        %8260 = vmatpush.msra.mxu0 %v1880
        %8261 = vmatpush.msra.mxu0 %v1878
        %8262 = vmatpush.msra.mxu0 %v1876
        %8263 = vmatmul.f32.gmra.mxu0 %v8224
        %v8264 = vpop.f32.mrf.mxu0
        %v8265 = vadd.f32 0.0, %v8264
        %8266 = vmatmul.f32.gmra.mxu0 %v8227
        %v8267 = vpop.f32.mrf.mxu0
        %v8268 = vadd.f32 0.0, %v8267
        %8269 = vmatmul.f32.gmra.mxu0 %v8230
        %v8270 = vpop.f32.mrf.mxu0
        %v8271 = vadd.f32 0.0, %v8270
        %8272 = vmatmul.f32.gmra.mxu0 %v8233
        %v8273 = vpop.f32.mrf.mxu0
        %v8274 = vadd.f32 0.0, %v8273
        %8275 = vmatmul.f32.gmra.mxu0 %v8236
        %v8276 = vpop.f32.mrf.mxu0
        %v8277 = vadd.f32 0.0, %v8276
        %8278 = vmatmul.f32.gmra.mxu0 %v8239
        %v8279 = vpop.f32.mrf.mxu0
        %v8280 = vadd.f32 0.0, %v8279
        %8281 = vmatmul.f32.gmra.mxu0 %v8242
        %v8282 = vpop.f32.mrf.mxu0
        %v8283 = vadd.f32 0.0, %v8282
        %8284 = vmatmul.f32.gmra.mxu0 %v8245
        %v8285 = vpop.f32.mrf.mxu0
        %v8286 = vadd.f32 0.0, %v8285
        %8287 = vdwg.mxu0
        %v8289 = vsel %vm4756, %v7405, 0
        %v8292 = vsel %vm4756, %v7406, 0
        %v8295 = vsel %vm4756, %v7407, 0
        %v8298 = vsel %vm4756, %v7408, 0
        %v8301 = vsel %vm4756, %v7409, 0
        %v8304 = vsel %vm4756, %v7410, 0
        %v8307 = vsel %vm4756, %v7411, 0
        %v8310 = vsel %vm4756, %v7412, 0
        %8312 = vmatpush.msra.mxu0 0.0
        %8313 = vmatpush.msra.mxu0 0.0
        %8314 = vmatpush.msra.mxu0 0.0
        %8315 = vmatpush.msra.mxu0 0.0
        %8316 = vmatpush.msra.mxu0 0.0
        %8317 = vmatpush.msra.mxu0 0.0
        %8318 = vmatpush.msra.mxu0 0.0
        %8319 = vmatpush.msra.mxu0 0.0
        %8320 = vmatpush.msra.mxu0 %v1906
        %8321 = vmatpush.msra.mxu0 %v1904
        %8322 = vmatpush.msra.mxu0 %v1902
        %8323 = vmatpush.msra.mxu0 %v1900
        %8324 = vmatpush.msra.mxu0 %v1898
        %8325 = vmatpush.msra.mxu0 %v1896
        %8326 = vmatpush.msra.mxu0 %v1894
        %8327 = vmatpush.msra.mxu0 %v1892
        %8328 = vmatmul.f32.gmra.mxu0 %v8289
        %v8329 = vpop.f32.mrf.mxu0
        %v8330 = vadd.f32 0.0, %v8329
        %8331 = vmatmul.f32.gmra.mxu0 %v8292
        %v8332 = vpop.f32.mrf.mxu0
        %v8333 = vadd.f32 0.0, %v8332
        %8334 = vmatmul.f32.gmra.mxu0 %v8295
        %v8335 = vpop.f32.mrf.mxu0
        %v8336 = vadd.f32 0.0, %v8335
        %8337 = vmatmul.f32.gmra.mxu0 %v8298
        %v8338 = vpop.f32.mrf.mxu0
        %v8339 = vadd.f32 0.0, %v8338
        %8340 = vmatmul.f32.gmra.mxu0 %v8301
        %v8341 = vpop.f32.mrf.mxu0
        %v8342 = vadd.f32 0.0, %v8341
        %8343 = vmatmul.f32.gmra.mxu0 %v8304
        %v8344 = vpop.f32.mrf.mxu0
        %v8345 = vadd.f32 0.0, %v8344
        %8346 = vmatmul.f32.gmra.mxu0 %v8307
        %v8347 = vpop.f32.mrf.mxu0
        %v8348 = vadd.f32 0.0, %v8347
        %8349 = vmatmul.f32.gmra.mxu0 %v8310
        %v8350 = vpop.f32.mrf.mxu0
        %v8351 = vadd.f32 0.0, %v8350
        %8352 = vdwg.mxu0
        %v8354 = vsel %vm4756, %v7413, 0
        %v8357 = vsel %vm4756, %v7414, 0
        %v8360 = vsel %vm4756, %v7415, 0
        %v8363 = vsel %vm4756, %v7416, 0
        %v8366 = vsel %vm4756, %v7417, 0
        %v8369 = vsel %vm4756, %v7418, 0
        %v8372 = vsel %vm4756, %v7419, 0
        %v8375 = vsel %vm4756, %v7420, 0
        %8377 = vmatpush.msra.mxu0 0.0
        %8378 = vmatpush.msra.mxu0 0.0
        %8379 = vmatpush.msra.mxu0 0.0
        %8380 = vmatpush.msra.mxu0 0.0
        %8381 = vmatpush.msra.mxu0 0.0
        %8382 = vmatpush.msra.mxu0 0.0
        %8383 = vmatpush.msra.mxu0 0.0
        %8384 = vmatpush.msra.mxu0 0.0
        %8385 = vmatpush.msra.mxu0 %v1954
        %8386 = vmatpush.msra.mxu0 %v1952
        %8387 = vmatpush.msra.mxu0 %v1950
        %8388 = vmatpush.msra.mxu0 %v1948
        %8389 = vmatpush.msra.mxu0 %v1946
        %8390 = vmatpush.msra.mxu0 %v1944
        %8391 = vmatpush.msra.mxu0 %v1942
        %8392 = vmatpush.msra.mxu0 %v1940
        %8393 = vmatmul.f32.gmra.mxu0 %v8354
        %v8394 = vpop.f32.mrf.mxu0
        %v8395 = vadd.f32 0.0, %v8394
        %8396 = vmatmul.f32.gmra.mxu0 %v8357
        %v8397 = vpop.f32.mrf.mxu0
        %v8398 = vadd.f32 0.0, %v8397
        %8399 = vmatmul.f32.gmra.mxu0 %v8360
        %v8400 = vpop.f32.mrf.mxu0
        %v8401 = vadd.f32 0.0, %v8400
        %8402 = vmatmul.f32.gmra.mxu0 %v8363
        %v8403 = vpop.f32.mrf.mxu0
        %v8404 = vadd.f32 0.0, %v8403
        %8405 = vmatmul.f32.gmra.mxu0 %v8366
        %v8406 = vpop.f32.mrf.mxu0
        %v8407 = vadd.f32 0.0, %v8406
        %8408 = vmatmul.f32.gmra.mxu0 %v8369
        %v8409 = vpop.f32.mrf.mxu0
        %v8410 = vadd.f32 0.0, %v8409
        %8411 = vmatmul.f32.gmra.mxu0 %v8372
        %v8412 = vpop.f32.mrf.mxu0
        %v8413 = vadd.f32 0.0, %v8412
        %8414 = vmatmul.f32.gmra.mxu0 %v8375
        %v8415 = vpop.f32.mrf.mxu0
        %v8416 = vadd.f32 0.0, %v8415
        %8417 = vdwg.mxu0
        %v8419 = vsel %vm4756, %v7421, 0
        %v8422 = vsel %vm4756, %v7422, 0
        %v8425 = vsel %vm4756, %v7423, 0
        %v8428 = vsel %vm4756, %v7424, 0
        %v8431 = vsel %vm4756, %v7425, 0
        %v8434 = vsel %vm4756, %v7426, 0
        %v8437 = vsel %vm4756, %v7427, 0
        %v8440 = vsel %vm4756, %v7428, 0
        %8442 = vmatpush.msra.mxu0 0.0
        %8443 = vmatpush.msra.mxu0 0.0
        %8444 = vmatpush.msra.mxu0 0.0
        %8445 = vmatpush.msra.mxu0 0.0
        %8446 = vmatpush.msra.mxu0 0.0
        %8447 = vmatpush.msra.mxu0 0.0
        %8448 = vmatpush.msra.mxu0 0.0
        %8449 = vmatpush.msra.mxu0 0.0
        %8450 = vmatpush.msra.mxu0 %v1970
        %8451 = vmatpush.msra.mxu0 %v1968
        %8452 = vmatpush.msra.mxu0 %v1966
        %8453 = vmatpush.msra.mxu0 %v1964
        %8454 = vmatpush.msra.mxu0 %v1962
        %8455 = vmatpush.msra.mxu0 %v1960
        %8456 = vmatpush.msra.mxu0 %v1958
        %8457 = vmatpush.msra.mxu0 %v1956
        %8458 = vmatmul.f32.gmra.mxu0 %v8419
        %v8459 = vpop.f32.mrf.mxu0
        %v8460 = vadd.f32 0.0, %v8459
        %8461 = vmatmul.f32.gmra.mxu0 %v8422
        %v8462 = vpop.f32.mrf.mxu0
        %v8463 = vadd.f32 0.0, %v8462
        %8464 = vmatmul.f32.gmra.mxu0 %v8425
        %v8465 = vpop.f32.mrf.mxu0
        %v8466 = vadd.f32 0.0, %v8465
        %8467 = vmatmul.f32.gmra.mxu0 %v8428
        %v8468 = vpop.f32.mrf.mxu0
        %v8469 = vadd.f32 0.0, %v8468
        %8470 = vmatmul.f32.gmra.mxu0 %v8431
        %v8471 = vpop.f32.mrf.mxu0
        %v8472 = vadd.f32 0.0, %v8471
        %8473 = vmatmul.f32.gmra.mxu0 %v8434
        %v8474 = vpop.f32.mrf.mxu0
        %v8475 = vadd.f32 0.0, %v8474
        %8476 = vmatmul.f32.gmra.mxu0 %v8437
        %v8477 = vpop.f32.mrf.mxu0
        %v8478 = vadd.f32 0.0, %v8477
        %8479 = vmatmul.f32.gmra.mxu0 %v8440
        %v8480 = vpop.f32.mrf.mxu0
        %v8481 = vadd.f32 0.0, %v8480
        %8482 = vdwg.mxu0
        %v8484 = vsel %vm4756, %v7429, 0
        %v8487 = vsel %vm4756, %v7430, 0
        %v8490 = vsel %vm4756, %v7431, 0
        %v8493 = vsel %vm4756, %v7432, 0
        %v8496 = vsel %vm4756, %v7433, 0
        %v8499 = vsel %vm4756, %v7434, 0
        %v8502 = vsel %vm4756, %v7435, 0
        %v8505 = vsel %vm4756, %v7436, 0
        %8507 = vmatpush.msra.mxu0 0.0
        %8508 = vmatpush.msra.mxu0 0.0
        %8509 = vmatpush.msra.mxu0 0.0
        %8510 = vmatpush.msra.mxu0 0.0
        %8511 = vmatpush.msra.mxu0 0.0
        %8512 = vmatpush.msra.mxu0 0.0
        %8513 = vmatpush.msra.mxu0 0.0
        %8514 = vmatpush.msra.mxu0 0.0
        %8515 = vmatpush.msra.mxu0 %v1986
        %8516 = vmatpush.msra.mxu0 %v1984
        %8517 = vmatpush.msra.mxu0 %v1982
        %8518 = vmatpush.msra.mxu0 %v1980
        %8519 = vmatpush.msra.mxu0 %v1978
        %8520 = vmatpush.msra.mxu0 %v1976
        %8521 = vmatpush.msra.mxu0 %v1974
        %8522 = vmatpush.msra.mxu0 %v1972
        %8523 = vmatmul.f32.gmra.mxu0 %v8484
        %v8524 = vpop.f32.mrf.mxu0
        %v8525 = vadd.f32 0.0, %v8524
        %8526 = vmatmul.f32.gmra.mxu0 %v8487
        %v8527 = vpop.f32.mrf.mxu0
        %v8528 = vadd.f32 0.0, %v8527
        %8529 = vmatmul.f32.gmra.mxu0 %v8490
        %v8530 = vpop.f32.mrf.mxu0
        %v8531 = vadd.f32 0.0, %v8530
        %8532 = vmatmul.f32.gmra.mxu0 %v8493
        %v8533 = vpop.f32.mrf.mxu0
        %v8534 = vadd.f32 0.0, %v8533
        %8535 = vmatmul.f32.gmra.mxu0 %v8496
        %v8536 = vpop.f32.mrf.mxu0
        %v8537 = vadd.f32 0.0, %v8536
        %8538 = vmatmul.f32.gmra.mxu0 %v8499
        %v8539 = vpop.f32.mrf.mxu0
        %v8540 = vadd.f32 0.0, %v8539
        %8541 = vmatmul.f32.gmra.mxu0 %v8502
        %v8542 = vpop.f32.mrf.mxu0
        %v8543 = vadd.f32 0.0, %v8542
        %8544 = vmatmul.f32.gmra.mxu0 %v8505
        %v8545 = vpop.f32.mrf.mxu0
        %v8546 = vadd.f32 0.0, %v8545
        %8547 = vdwg.mxu0
        %v8549 = vsel %vm4756, %v7437, 0
        %v8552 = vsel %vm4756, %v7438, 0
        %v8555 = vsel %vm4756, %v7439, 0
        %v8558 = vsel %vm4756, %v7440, 0
        %v8561 = vsel %vm4756, %v7441, 0
        %v8564 = vsel %vm4756, %v7442, 0
        %v8567 = vsel %vm4756, %v7443, 0
        %v8570 = vsel %vm4756, %v7444, 0
        %8572 = vmatpush.msra.mxu0 0.0
        %8573 = vmatpush.msra.mxu0 0.0
        %8574 = vmatpush.msra.mxu0 0.0
        %8575 = vmatpush.msra.mxu0 0.0
        %8576 = vmatpush.msra.mxu0 0.0
        %8577 = vmatpush.msra.mxu0 0.0
        %8578 = vmatpush.msra.mxu0 0.0
        %8579 = vmatpush.msra.mxu0 0.0
        %8580 = vmatpush.msra.mxu0 %v2002
        %8581 = vmatpush.msra.mxu0 %v2000
        %8582 = vmatpush.msra.mxu0 %v1998
        %8583 = vmatpush.msra.mxu0 %v1996
        %8584 = vmatpush.msra.mxu0 %v1994
        %8585 = vmatpush.msra.mxu0 %v1992
        %8586 = vmatpush.msra.mxu0 %v1990
        %8587 = vmatpush.msra.mxu0 %v1988
        %8588 = vmatmul.f32.gmra.mxu0 %v8549
        %v8589 = vpop.f32.mrf.mxu0
        %v8590 = vadd.f32 0.0, %v8589
        %8591 = vmatmul.f32.gmra.mxu0 %v8552
        %v8592 = vpop.f32.mrf.mxu0
        %v8593 = vadd.f32 0.0, %v8592
        %8594 = vmatmul.f32.gmra.mxu0 %v8555
        %v8595 = vpop.f32.mrf.mxu0
        %v8596 = vadd.f32 0.0, %v8595
        %8597 = vmatmul.f32.gmra.mxu0 %v8558
        %v8598 = vpop.f32.mrf.mxu0
        %v8599 = vadd.f32 0.0, %v8598
        %8600 = vmatmul.f32.gmra.mxu0 %v8561
        %v8601 = vpop.f32.mrf.mxu0
        %v8602 = vadd.f32 0.0, %v8601
        %8603 = vmatmul.f32.gmra.mxu0 %v8564
        %v8604 = vpop.f32.mrf.mxu0
        %v8605 = vadd.f32 0.0, %v8604
        %8606 = vmatmul.f32.gmra.mxu0 %v8567
        %v8607 = vpop.f32.mrf.mxu0
        %v8608 = vadd.f32 0.0, %v8607
        %8609 = vmatmul.f32.gmra.mxu0 %v8570
        %v8610 = vpop.f32.mrf.mxu0
        %v8611 = vadd.f32 0.0, %v8610
        %8612 = vdwg.mxu0
        %v8614 = vsel %vm4756, %v7445, 0
        %v8617 = vsel %vm4756, %v7446, 0
        %v8620 = vsel %vm4756, %v7447, 0
        %v8623 = vsel %vm4756, %v7448, 0
        %v8626 = vsel %vm4756, %v7449, 0
        %v8629 = vsel %vm4756, %v7450, 0
        %v8632 = vsel %vm4756, %v7451, 0
        %v8635 = vsel %vm4756, %v7452, 0
        %8637 = vmatpush.msra.mxu0 0.0
        %8638 = vmatpush.msra.mxu0 0.0
        %8639 = vmatpush.msra.mxu0 0.0
        %8640 = vmatpush.msra.mxu0 0.0
        %8641 = vmatpush.msra.mxu0 0.0
        %8642 = vmatpush.msra.mxu0 0.0
        %8643 = vmatpush.msra.mxu0 0.0
        %8644 = vmatpush.msra.mxu0 0.0
        %8645 = vmatpush.msra.mxu0 %v2050
        %8646 = vmatpush.msra.mxu0 %v2048
        %8647 = vmatpush.msra.mxu0 %v2046
        %8648 = vmatpush.msra.mxu0 %v2044
        %8649 = vmatpush.msra.mxu0 %v2042
        %8650 = vmatpush.msra.mxu0 %v2040
        %8651 = vmatpush.msra.mxu0 %v2038
        %8652 = vmatpush.msra.mxu0 %v2036
        %8653 = vmatmul.f32.gmra.mxu0 %v8614
        %v8654 = vpop.f32.mrf.mxu0
        %v8655 = vadd.f32 0.0, %v8654
        %8656 = vmatmul.f32.gmra.mxu0 %v8617
        %v8657 = vpop.f32.mrf.mxu0
        %v8658 = vadd.f32 0.0, %v8657
        %8659 = vmatmul.f32.gmra.mxu0 %v8620
        %v8660 = vpop.f32.mrf.mxu0
        %v8661 = vadd.f32 0.0, %v8660
        %8662 = vmatmul.f32.gmra.mxu0 %v8623
        %v8663 = vpop.f32.mrf.mxu0
        %v8664 = vadd.f32 0.0, %v8663
        %8665 = vmatmul.f32.gmra.mxu0 %v8626
        %v8666 = vpop.f32.mrf.mxu0
        %v8667 = vadd.f32 0.0, %v8666
        %8668 = vmatmul.f32.gmra.mxu0 %v8629
        %v8669 = vpop.f32.mrf.mxu0
        %v8670 = vadd.f32 0.0, %v8669
        %8671 = vmatmul.f32.gmra.mxu0 %v8632
        %v8672 = vpop.f32.mrf.mxu0
        %v8673 = vadd.f32 0.0, %v8672
        %8674 = vmatmul.f32.gmra.mxu0 %v8635
        %v8675 = vpop.f32.mrf.mxu0
        %v8676 = vadd.f32 0.0, %v8675
        %8677 = vdwg.mxu0
        %v8679 = vsel %vm4756, %v7453, 0
        %v8682 = vsel %vm4756, %v7454, 0
        %v8685 = vsel %vm4756, %v7455, 0
        %v8688 = vsel %vm4756, %v7456, 0
        %v8691 = vsel %vm4756, %v7457, 0
        %v8694 = vsel %vm4756, %v7458, 0
        %v8697 = vsel %vm4756, %v7459, 0
        %v8700 = vsel %vm4756, %v7460, 0
        %8702 = vmatpush.msra.mxu0 0.0
        %8703 = vmatpush.msra.mxu0 0.0
        %8704 = vmatpush.msra.mxu0 0.0
        %8705 = vmatpush.msra.mxu0 0.0
        %8706 = vmatpush.msra.mxu0 0.0
        %8707 = vmatpush.msra.mxu0 0.0
        %8708 = vmatpush.msra.mxu0 0.0
        %8709 = vmatpush.msra.mxu0 0.0
        %8710 = vmatpush.msra.mxu0 %v2066
        %8711 = vmatpush.msra.mxu0 %v2064
        %8712 = vmatpush.msra.mxu0 %v2062
        %8713 = vmatpush.msra.mxu0 %v2060
        %8714 = vmatpush.msra.mxu0 %v2058
        %8715 = vmatpush.msra.mxu0 %v2056
        %8716 = vmatpush.msra.mxu0 %v2054
        %8717 = vmatpush.msra.mxu0 %v2052
        %8718 = vmatmul.f32.gmra.mxu0 %v8679
        %v8719 = vpop.f32.mrf.mxu0
        %v8720 = vadd.f32 0.0, %v8719
        %8721 = vmatmul.f32.gmra.mxu0 %v8682
        %v8722 = vpop.f32.mrf.mxu0
        %v8723 = vadd.f32 0.0, %v8722
        %8724 = vmatmul.f32.gmra.mxu0 %v8685
        %v8725 = vpop.f32.mrf.mxu0
        %v8726 = vadd.f32 0.0, %v8725
        %8727 = vmatmul.f32.gmra.mxu0 %v8688
        %v8728 = vpop.f32.mrf.mxu0
        %v8729 = vadd.f32 0.0, %v8728
        %8730 = vmatmul.f32.gmra.mxu0 %v8691
        %v8731 = vpop.f32.mrf.mxu0
        %v8732 = vadd.f32 0.0, %v8731
        %8733 = vmatmul.f32.gmra.mxu0 %v8694
        %v8734 = vpop.f32.mrf.mxu0
        %v8735 = vadd.f32 0.0, %v8734
        %8736 = vmatmul.f32.gmra.mxu0 %v8697
        %v8737 = vpop.f32.mrf.mxu0
        %v8738 = vadd.f32 0.0, %v8737
        %8739 = vmatmul.f32.gmra.mxu0 %v8700
        %v8740 = vpop.f32.mrf.mxu0
        %v8741 = vadd.f32 0.0, %v8740
        %8742 = vdwg.mxu0
        %v8744 = vsel %vm4756, %v7461, 0
        %v8747 = vsel %vm4756, %v7462, 0
        %v8750 = vsel %vm4756, %v7463, 0
        %v8753 = vsel %vm4756, %v7464, 0
        %v8756 = vsel %vm4756, %v7465, 0
        %v8759 = vsel %vm4756, %v7466, 0
        %v8762 = vsel %vm4756, %v7467, 0
        %v8765 = vsel %vm4756, %v7468, 0
        %8767 = vmatpush.msra.mxu0 0.0
        %8768 = vmatpush.msra.mxu0 0.0
        %8769 = vmatpush.msra.mxu0 0.0
        %8770 = vmatpush.msra.mxu0 0.0
        %8771 = vmatpush.msra.mxu0 0.0
        %8772 = vmatpush.msra.mxu0 0.0
        %8773 = vmatpush.msra.mxu0 0.0
        %8774 = vmatpush.msra.mxu0 0.0
        %8775 = vmatpush.msra.mxu0 %v2082
        %8776 = vmatpush.msra.mxu0 %v2080
        %8777 = vmatpush.msra.mxu0 %v2078
        %8778 = vmatpush.msra.mxu0 %v2076
        %8779 = vmatpush.msra.mxu0 %v2074
        %8780 = vmatpush.msra.mxu0 %v2072
        %8781 = vmatpush.msra.mxu0 %v2070
        %8782 = vmatpush.msra.mxu0 %v2068
        %8783 = vmatmul.f32.gmra.mxu0 %v8744
        %v8784 = vpop.f32.mrf.mxu0
        %v8785 = vadd.f32 0.0, %v8784
        %8786 = vmatmul.f32.gmra.mxu0 %v8747
        %v8787 = vpop.f32.mrf.mxu0
        %v8788 = vadd.f32 0.0, %v8787
        %8789 = vmatmul.f32.gmra.mxu0 %v8750
        %v8790 = vpop.f32.mrf.mxu0
        %v8791 = vadd.f32 0.0, %v8790
        %8792 = vmatmul.f32.gmra.mxu0 %v8753
        %v8793 = vpop.f32.mrf.mxu0
        %v8794 = vadd.f32 0.0, %v8793
        %8795 = vmatmul.f32.gmra.mxu0 %v8756
        %v8796 = vpop.f32.mrf.mxu0
        %v8797 = vadd.f32 0.0, %v8796
        %8798 = vmatmul.f32.gmra.mxu0 %v8759
        %v8799 = vpop.f32.mrf.mxu0
        %v8800 = vadd.f32 0.0, %v8799
        %8801 = vmatmul.f32.gmra.mxu0 %v8762
        %v8802 = vpop.f32.mrf.mxu0
        %v8803 = vadd.f32 0.0, %v8802
        %8804 = vmatmul.f32.gmra.mxu0 %v8765
        %v8805 = vpop.f32.mrf.mxu0
        %v8806 = vadd.f32 0.0, %v8805
        %8807 = vdwg.mxu0
        %v8809 = vsel %vm4756, %v7469, 0
        %v8812 = vsel %vm4756, %v7470, 0
        %v8815 = vsel %vm4756, %v7471, 0
        %v8818 = vsel %vm4756, %v7472, 0
        %v8821 = vsel %vm4756, %v7473, 0
        %v8824 = vsel %vm4756, %v7474, 0
        %v8827 = vsel %vm4756, %v7475, 0
        %v8830 = vsel %vm4756, %v7476, 0
        %8832 = vmatpush.msra.mxu0 0.0
        %8833 = vmatpush.msra.mxu0 0.0
        %8834 = vmatpush.msra.mxu0 0.0
        %8835 = vmatpush.msra.mxu0 0.0
        %8836 = vmatpush.msra.mxu0 0.0
        %8837 = vmatpush.msra.mxu0 0.0
        %8838 = vmatpush.msra.mxu0 0.0
        %8839 = vmatpush.msra.mxu0 0.0
        %8840 = vmatpush.msra.mxu0 %v2098
        %8841 = vmatpush.msra.mxu0 %v2096
        %8842 = vmatpush.msra.mxu0 %v2094
        %8843 = vmatpush.msra.mxu0 %v2092
        %8844 = vmatpush.msra.mxu0 %v2090
        %8845 = vmatpush.msra.mxu0 %v2088
        %8846 = vmatpush.msra.mxu0 %v2086
        %8847 = vmatpush.msra.mxu0 %v2084
        %8848 = vmatmul.f32.gmra.mxu0 %v8809
        %v8849 = vpop.f32.mrf.mxu0
        %v8850 = vadd.f32 0.0, %v8849
        %8851 = vmatmul.f32.gmra.mxu0 %v8812
        %v8852 = vpop.f32.mrf.mxu0
        %v8853 = vadd.f32 0.0, %v8852
        %8854 = vmatmul.f32.gmra.mxu0 %v8815
        %v8855 = vpop.f32.mrf.mxu0
        %v8856 = vadd.f32 0.0, %v8855
        %8857 = vmatmul.f32.gmra.mxu0 %v8818
        %v8858 = vpop.f32.mrf.mxu0
        %v8859 = vadd.f32 0.0, %v8858
        %8860 = vmatmul.f32.gmra.mxu0 %v8821
        %v8861 = vpop.f32.mrf.mxu0
        %v8862 = vadd.f32 0.0, %v8861
        %8863 = vmatmul.f32.gmra.mxu0 %v8824
        %v8864 = vpop.f32.mrf.mxu0
        %v8865 = vadd.f32 0.0, %v8864
        %8866 = vmatmul.f32.gmra.mxu0 %v8827
        %v8867 = vpop.f32.mrf.mxu0
        %v8868 = vadd.f32 0.0, %v8867
        %8869 = vmatmul.f32.gmra.mxu0 %v8830
        %v8870 = vpop.f32.mrf.mxu0
        %v8871 = vadd.f32 0.0, %v8870
        %8872 = vdwg.mxu0
        %v8874 = vsel %vm4756, %v7477, 0
        %v8877 = vsel %vm4756, %v7478, 0
        %v8880 = vsel %vm4756, %v7479, 0
        %v8883 = vsel %vm4756, %v7480, 0
        %v8886 = vsel %vm4756, %v7481, 0
        %v8889 = vsel %vm4756, %v7482, 0
        %v8892 = vsel %vm4756, %v7483, 0
        %v8895 = vsel %vm4756, %v7484, 0
        %8897 = vmatpush.msra.mxu0 0.0
        %8898 = vmatpush.msra.mxu0 0.0
        %8899 = vmatpush.msra.mxu0 0.0
        %8900 = vmatpush.msra.mxu0 0.0
        %8901 = vmatpush.msra.mxu0 0.0
        %8902 = vmatpush.msra.mxu0 0.0
        %8903 = vmatpush.msra.mxu0 0.0
        %8904 = vmatpush.msra.mxu0 0.0
        %8905 = vmatpush.msra.mxu0 %v2146
        %8906 = vmatpush.msra.mxu0 %v2144
        %8907 = vmatpush.msra.mxu0 %v2142
        %8908 = vmatpush.msra.mxu0 %v2140
        %8909 = vmatpush.msra.mxu0 %v2138
        %8910 = vmatpush.msra.mxu0 %v2136
        %8911 = vmatpush.msra.mxu0 %v2134
        %8912 = vmatpush.msra.mxu0 %v2132
        %8913 = vmatmul.f32.gmra.mxu0 %v8874
        %v8914 = vpop.f32.mrf.mxu0
        %v8915 = vadd.f32 0.0, %v8914
        %8916 = vmatmul.f32.gmra.mxu0 %v8877
        %v8917 = vpop.f32.mrf.mxu0
        %v8918 = vadd.f32 0.0, %v8917
        %8919 = vmatmul.f32.gmra.mxu0 %v8880
        %v8920 = vpop.f32.mrf.mxu0
        %v8921 = vadd.f32 0.0, %v8920
        %8922 = vmatmul.f32.gmra.mxu0 %v8883
        %v8923 = vpop.f32.mrf.mxu0
        %v8924 = vadd.f32 0.0, %v8923
        %8925 = vmatmul.f32.gmra.mxu0 %v8886
        %v8926 = vpop.f32.mrf.mxu0
        %v8927 = vadd.f32 0.0, %v8926
        %8928 = vmatmul.f32.gmra.mxu0 %v8889
        %v8929 = vpop.f32.mrf.mxu0
        %v8930 = vadd.f32 0.0, %v8929
        %8931 = vmatmul.f32.gmra.mxu0 %v8892
        %v8932 = vpop.f32.mrf.mxu0
        %v8933 = vadd.f32 0.0, %v8932
        %8934 = vmatmul.f32.gmra.mxu0 %v8895
        %v8935 = vpop.f32.mrf.mxu0
        %v8936 = vadd.f32 0.0, %v8935
        %8937 = vdwg.mxu0
        %v8939 = vsel %vm4756, %v7485, 0
        %v8942 = vsel %vm4756, %v7486, 0
        %v8945 = vsel %vm4756, %v7487, 0
        %v8948 = vsel %vm4756, %v7488, 0
        %v8951 = vsel %vm4756, %v7489, 0
        %v8954 = vsel %vm4756, %v7490, 0
        %v8957 = vsel %vm4756, %v7491, 0
        %v8960 = vsel %vm4756, %v7492, 0
        %8962 = vmatpush.msra.mxu0 0.0
        %8963 = vmatpush.msra.mxu0 0.0
        %8964 = vmatpush.msra.mxu0 0.0
        %8965 = vmatpush.msra.mxu0 0.0
        %8966 = vmatpush.msra.mxu0 0.0
        %8967 = vmatpush.msra.mxu0 0.0
        %8968 = vmatpush.msra.mxu0 0.0
        %8969 = vmatpush.msra.mxu0 0.0
        %8970 = vmatpush.msra.mxu0 %v2162
        %8971 = vmatpush.msra.mxu0 %v2160
        %8972 = vmatpush.msra.mxu0 %v2158
        %8973 = vmatpush.msra.mxu0 %v2156
        %8974 = vmatpush.msra.mxu0 %v2154
        %8975 = vmatpush.msra.mxu0 %v2152
        %8976 = vmatpush.msra.mxu0 %v2150
        %8977 = vmatpush.msra.mxu0 %v2148
        %8978 = vmatmul.f32.gmra.mxu0 %v8939
        %v8979 = vpop.f32.mrf.mxu0
        %v8980 = vadd.f32 0.0, %v8979
        %8981 = vmatmul.f32.gmra.mxu0 %v8942
        %v8982 = vpop.f32.mrf.mxu0
        %v8983 = vadd.f32 0.0, %v8982
        %8984 = vmatmul.f32.gmra.mxu0 %v8945
        %v8985 = vpop.f32.mrf.mxu0
        %v8986 = vadd.f32 0.0, %v8985
        %8987 = vmatmul.f32.gmra.mxu0 %v8948
        %v8988 = vpop.f32.mrf.mxu0
        %v8989 = vadd.f32 0.0, %v8988
        %8990 = vmatmul.f32.gmra.mxu0 %v8951
        %v8991 = vpop.f32.mrf.mxu0
        %v8992 = vadd.f32 0.0, %v8991
        %8993 = vmatmul.f32.gmra.mxu0 %v8954
        %v8994 = vpop.f32.mrf.mxu0
        %v8995 = vadd.f32 0.0, %v8994
        %8996 = vmatmul.f32.gmra.mxu0 %v8957
        %v8997 = vpop.f32.mrf.mxu0
        %v8998 = vadd.f32 0.0, %v8997
        %8999 = vmatmul.f32.gmra.mxu0 %v8960
        %v9000 = vpop.f32.mrf.mxu0
        %v9001 = vadd.f32 0.0, %v9000
        %9002 = vdwg.mxu0
        %v9004 = vsel %vm4756, %v7493, 0
        %v9007 = vsel %vm4756, %v7494, 0
        %v9010 = vsel %vm4756, %v7495, 0
        %v9013 = vsel %vm4756, %v7496, 0
        %v9016 = vsel %vm4756, %v7497, 0
        %v9019 = vsel %vm4756, %v7498, 0
        %v9022 = vsel %vm4756, %v7499, 0
        %v9025 = vsel %vm4756, %v7500, 0
        %9027 = vmatpush.msra.mxu0 0.0
        %9028 = vmatpush.msra.mxu0 0.0
        %9029 = vmatpush.msra.mxu0 0.0
        %9030 = vmatpush.msra.mxu0 0.0
        %9031 = vmatpush.msra.mxu0 0.0
        %9032 = vmatpush.msra.mxu0 0.0
        %9033 = vmatpush.msra.mxu0 0.0
        %9034 = vmatpush.msra.mxu0 0.0
        %9035 = vmatpush.msra.mxu0 %v2178
        %9036 = vmatpush.msra.mxu0 %v2176
        %9037 = vmatpush.msra.mxu0 %v2174
        %9038 = vmatpush.msra.mxu0 %v2172
        %9039 = vmatpush.msra.mxu0 %v2170
        %9040 = vmatpush.msra.mxu0 %v2168
        %9041 = vmatpush.msra.mxu0 %v2166
        %9042 = vmatpush.msra.mxu0 %v2164
        %9043 = vmatmul.f32.gmra.mxu0 %v9004
        %v9044 = vpop.f32.mrf.mxu0
        %v9045 = vadd.f32 0.0, %v9044
        %9046 = vmatmul.f32.gmra.mxu0 %v9007
        %v9047 = vpop.f32.mrf.mxu0
        %v9048 = vadd.f32 0.0, %v9047
        %9049 = vmatmul.f32.gmra.mxu0 %v9010
        %v9050 = vpop.f32.mrf.mxu0
        %v9051 = vadd.f32 0.0, %v9050
        %9052 = vmatmul.f32.gmra.mxu0 %v9013
        %v9053 = vpop.f32.mrf.mxu0
        %v9054 = vadd.f32 0.0, %v9053
        %9055 = vmatmul.f32.gmra.mxu0 %v9016
        %v9056 = vpop.f32.mrf.mxu0
        %v9057 = vadd.f32 0.0, %v9056
        %9058 = vmatmul.f32.gmra.mxu0 %v9019
        %v9059 = vpop.f32.mrf.mxu0
        %v9060 = vadd.f32 0.0, %v9059
        %9061 = vmatmul.f32.gmra.mxu0 %v9022
        %v9062 = vpop.f32.mrf.mxu0
        %v9063 = vadd.f32 0.0, %v9062
        %9064 = vmatmul.f32.gmra.mxu0 %v9025
        %v9065 = vpop.f32.mrf.mxu0
        %v9066 = vadd.f32 0.0, %v9065
        %9067 = vdwg.mxu0
        %v9069 = vsel %vm4756, %v7501, 0
        %v9072 = vsel %vm4756, %v7502, 0
        %v9075 = vsel %vm4756, %v7503, 0
        %v9078 = vsel %vm4756, %v7504, 0
        %v9081 = vsel %vm4756, %v7505, 0
        %v9084 = vsel %vm4756, %v7506, 0
        %v9087 = vsel %vm4756, %v7507, 0
        %v9090 = vsel %vm4756, %v7508, 0
        %9092 = vmatpush.msra.mxu0 0.0
        %9093 = vmatpush.msra.mxu0 0.0
        %9094 = vmatpush.msra.mxu0 0.0
        %9095 = vmatpush.msra.mxu0 0.0
        %9096 = vmatpush.msra.mxu0 0.0
        %9097 = vmatpush.msra.mxu0 0.0
        %9098 = vmatpush.msra.mxu0 0.0
        %9099 = vmatpush.msra.mxu0 0.0
        %9100 = vmatpush.msra.mxu0 %v2194
        %9101 = vmatpush.msra.mxu0 %v2192
        %9102 = vmatpush.msra.mxu0 %v2190
        %9103 = vmatpush.msra.mxu0 %v2188
        %9104 = vmatpush.msra.mxu0 %v2186
        %9105 = vmatpush.msra.mxu0 %v2184
        %9106 = vmatpush.msra.mxu0 %v2182
        %9107 = vmatpush.msra.mxu0 %v2180
        %9108 = vmatmul.f32.gmra.mxu0 %v9069
        %v9109 = vpop.f32.mrf.mxu0
        %v9110 = vadd.f32 0.0, %v9109
        %9111 = vmatmul.f32.gmra.mxu0 %v9072
        %v9112 = vpop.f32.mrf.mxu0
        %v9113 = vadd.f32 0.0, %v9112
        %9114 = vmatmul.f32.gmra.mxu0 %v9075
        %v9115 = vpop.f32.mrf.mxu0
        %v9116 = vadd.f32 0.0, %v9115
        %9117 = vmatmul.f32.gmra.mxu0 %v9078
        %v9118 = vpop.f32.mrf.mxu0
        %v9119 = vadd.f32 0.0, %v9118
        %9120 = vmatmul.f32.gmra.mxu0 %v9081
        %v9121 = vpop.f32.mrf.mxu0
        %v9122 = vadd.f32 0.0, %v9121
        %9123 = vmatmul.f32.gmra.mxu0 %v9084
        %v9124 = vpop.f32.mrf.mxu0
        %v9125 = vadd.f32 0.0, %v9124
        %9126 = vmatmul.f32.gmra.mxu0 %v9087
        %v9127 = vpop.f32.mrf.mxu0
        %v9128 = vadd.f32 0.0, %v9127
        %9129 = vmatmul.f32.gmra.mxu0 %v9090
        %v9130 = vpop.f32.mrf.mxu0
        %v9131 = vadd.f32 0.0, %v9130
        %9132 = vdwg.mxu0
        %v9134 = vsel %vm4756, %v7509, 0
        %v9137 = vsel %vm4756, %v7510, 0
        %v9140 = vsel %vm4756, %v7511, 0
        %v9143 = vsel %vm4756, %v7512, 0
        %v9146 = vsel %vm4756, %v7513, 0
        %v9149 = vsel %vm4756, %v7514, 0
        %v9152 = vsel %vm4756, %v7515, 0
        %v9155 = vsel %vm4756, %v7516, 0
        %9157 = vmatpush.msra.mxu0 0.0
        %9158 = vmatpush.msra.mxu0 0.0
        %9159 = vmatpush.msra.mxu0 0.0
        %9160 = vmatpush.msra.mxu0 0.0
        %9161 = vmatpush.msra.mxu0 0.0
        %9162 = vmatpush.msra.mxu0 0.0
        %9163 = vmatpush.msra.mxu0 0.0
        %9164 = vmatpush.msra.mxu0 0.0
        %9165 = vmatpush.msra.mxu0 %v2242
        %9166 = vmatpush.msra.mxu0 %v2240
        %9167 = vmatpush.msra.mxu0 %v2238
        %9168 = vmatpush.msra.mxu0 %v2236
        %9169 = vmatpush.msra.mxu0 %v2234
        %9170 = vmatpush.msra.mxu0 %v2232
        %9171 = vmatpush.msra.mxu0 %v2230
        %9172 = vmatpush.msra.mxu0 %v2228
        %9173 = vmatmul.f32.gmra.mxu0 %v9134
        %v9174 = vpop.f32.mrf.mxu0
        %v9175 = vadd.f32 0.0, %v9174
        %9176 = vmatmul.f32.gmra.mxu0 %v9137
        %v9177 = vpop.f32.mrf.mxu0
        %v9178 = vadd.f32 0.0, %v9177
        %9179 = vmatmul.f32.gmra.mxu0 %v9140
        %v9180 = vpop.f32.mrf.mxu0
        %v9181 = vadd.f32 0.0, %v9180
        %9182 = vmatmul.f32.gmra.mxu0 %v9143
        %v9183 = vpop.f32.mrf.mxu0
        %v9184 = vadd.f32 0.0, %v9183
        %9185 = vmatmul.f32.gmra.mxu0 %v9146
        %v9186 = vpop.f32.mrf.mxu0
        %v9187 = vadd.f32 0.0, %v9186
        %9188 = vmatmul.f32.gmra.mxu0 %v9149
        %v9189 = vpop.f32.mrf.mxu0
        %v9190 = vadd.f32 0.0, %v9189
        %9191 = vmatmul.f32.gmra.mxu0 %v9152
        %v9192 = vpop.f32.mrf.mxu0
        %v9193 = vadd.f32 0.0, %v9192
        %9194 = vmatmul.f32.gmra.mxu0 %v9155
        %v9195 = vpop.f32.mrf.mxu0
        %v9196 = vadd.f32 0.0, %v9195
        %9197 = vdwg.mxu0
        %v9199 = vsel %vm4756, %v7517, 0
        %v9202 = vsel %vm4756, %v7518, 0
        %v9205 = vsel %vm4756, %v7519, 0
        %v9208 = vsel %vm4756, %v7520, 0
        %v9211 = vsel %vm4756, %v7521, 0
        %v9214 = vsel %vm4756, %v7522, 0
        %v9217 = vsel %vm4756, %v7523, 0
        %v9220 = vsel %vm4756, %v7524, 0
        %9222 = vmatpush.msra.mxu0 0.0
        %9223 = vmatpush.msra.mxu0 0.0
        %9224 = vmatpush.msra.mxu0 0.0
        %9225 = vmatpush.msra.mxu0 0.0
        %9226 = vmatpush.msra.mxu0 0.0
        %9227 = vmatpush.msra.mxu0 0.0
        %9228 = vmatpush.msra.mxu0 0.0
        %9229 = vmatpush.msra.mxu0 0.0
        %9230 = vmatpush.msra.mxu0 %v2258
        %9231 = vmatpush.msra.mxu0 %v2256
        %9232 = vmatpush.msra.mxu0 %v2254
        %9233 = vmatpush.msra.mxu0 %v2252
        %9234 = vmatpush.msra.mxu0 %v2250
        %9235 = vmatpush.msra.mxu0 %v2248
        %9236 = vmatpush.msra.mxu0 %v2246
        %9237 = vmatpush.msra.mxu0 %v2244
        %9238 = vmatmul.f32.gmra.mxu0 %v9199
        %v9239 = vpop.f32.mrf.mxu0
        %v9240 = vadd.f32 0.0, %v9239
        %9241 = vmatmul.f32.gmra.mxu0 %v9202
        %v9242 = vpop.f32.mrf.mxu0
        %v9243 = vadd.f32 0.0, %v9242
        %9244 = vmatmul.f32.gmra.mxu0 %v9205
        %v9245 = vpop.f32.mrf.mxu0
        %v9246 = vadd.f32 0.0, %v9245
        %9247 = vmatmul.f32.gmra.mxu0 %v9208
        %v9248 = vpop.f32.mrf.mxu0
        %v9249 = vadd.f32 0.0, %v9248
        %9250 = vmatmul.f32.gmra.mxu0 %v9211
        %v9251 = vpop.f32.mrf.mxu0
        %v9252 = vadd.f32 0.0, %v9251
        %9253 = vmatmul.f32.gmra.mxu0 %v9214
        %v9254 = vpop.f32.mrf.mxu0
        %v9255 = vadd.f32 0.0, %v9254
        %9256 = vmatmul.f32.gmra.mxu0 %v9217
        %v9257 = vpop.f32.mrf.mxu0
        %v9258 = vadd.f32 0.0, %v9257
        %9259 = vmatmul.f32.gmra.mxu0 %v9220
        %v9260 = vpop.f32.mrf.mxu0
        %v9261 = vadd.f32 0.0, %v9260
        %9262 = vdwg.mxu0
        %v9264 = vsel %vm4756, %v7525, 0
        %v9267 = vsel %vm4756, %v7526, 0
        %v9270 = vsel %vm4756, %v7527, 0
        %v9273 = vsel %vm4756, %v7528, 0
        %v9276 = vsel %vm4756, %v7529, 0
        %v9279 = vsel %vm4756, %v7530, 0
        %v9282 = vsel %vm4756, %v7531, 0
        %v9285 = vsel %vm4756, %v7532, 0
        %9287 = vmatpush.msra.mxu0 0.0
        %9288 = vmatpush.msra.mxu0 0.0
        %9289 = vmatpush.msra.mxu0 0.0
        %9290 = vmatpush.msra.mxu0 0.0
        %9291 = vmatpush.msra.mxu0 0.0
        %9292 = vmatpush.msra.mxu0 0.0
        %9293 = vmatpush.msra.mxu0 0.0
        %9294 = vmatpush.msra.mxu0 0.0
        %9295 = vmatpush.msra.mxu0 %v2274
        %9296 = vmatpush.msra.mxu0 %v2272
        %9297 = vmatpush.msra.mxu0 %v2270
        %9298 = vmatpush.msra.mxu0 %v2268
        %9299 = vmatpush.msra.mxu0 %v2266
        %9300 = vmatpush.msra.mxu0 %v2264
        %9301 = vmatpush.msra.mxu0 %v2262
        %9302 = vmatpush.msra.mxu0 %v2260
        %9303 = vmatmul.f32.gmra.mxu0 %v9264
        %v9304 = vpop.f32.mrf.mxu0
        %v9305 = vadd.f32 0.0, %v9304
        %9306 = vmatmul.f32.gmra.mxu0 %v9267
        %v9307 = vpop.f32.mrf.mxu0
        %v9308 = vadd.f32 0.0, %v9307
        %9309 = vmatmul.f32.gmra.mxu0 %v9270
        %v9310 = vpop.f32.mrf.mxu0
        %v9311 = vadd.f32 0.0, %v9310
        %9312 = vmatmul.f32.gmra.mxu0 %v9273
        %v9313 = vpop.f32.mrf.mxu0
        %v9314 = vadd.f32 0.0, %v9313
        %9315 = vmatmul.f32.gmra.mxu0 %v9276
        %v9316 = vpop.f32.mrf.mxu0
        %v9317 = vadd.f32 0.0, %v9316
        %9318 = vmatmul.f32.gmra.mxu0 %v9279
        %v9319 = vpop.f32.mrf.mxu0
        %v9320 = vadd.f32 0.0, %v9319
        %9321 = vmatmul.f32.gmra.mxu0 %v9282
        %v9322 = vpop.f32.mrf.mxu0
        %v9323 = vadd.f32 0.0, %v9322
        %9324 = vmatmul.f32.gmra.mxu0 %v9285
        %v9325 = vpop.f32.mrf.mxu0
        %v9326 = vadd.f32 0.0, %v9325
        %9327 = vdwg.mxu0
        %v9329 = vsel %vm4756, %v7533, 0
        %v9332 = vsel %vm4756, %v7534, 0
        %v9335 = vsel %vm4756, %v7535, 0
        %v9338 = vsel %vm4756, %v7536, 0
        %v9341 = vsel %vm4756, %v7537, 0
        %v9344 = vsel %vm4756, %v7538, 0
        %v9347 = vsel %vm4756, %v7539, 0
        %v9350 = vsel %vm4756, %v7540, 0
        %9352 = vmatpush.msra.mxu0 0.0
        %9353 = vmatpush.msra.mxu0 0.0
        %9354 = vmatpush.msra.mxu0 0.0
        %9355 = vmatpush.msra.mxu0 0.0
        %9356 = vmatpush.msra.mxu0 0.0
        %9357 = vmatpush.msra.mxu0 0.0
        %9358 = vmatpush.msra.mxu0 0.0
        %9359 = vmatpush.msra.mxu0 0.0
        %9360 = vmatpush.msra.mxu0 %v2290
        %9361 = vmatpush.msra.mxu0 %v2288
        %9362 = vmatpush.msra.mxu0 %v2286
        %9363 = vmatpush.msra.mxu0 %v2284
        %9364 = vmatpush.msra.mxu0 %v2282
        %9365 = vmatpush.msra.mxu0 %v2280
        %9366 = vmatpush.msra.mxu0 %v2278
        %9367 = vmatpush.msra.mxu0 %v2276
        %9368 = vmatmul.f32.gmra.mxu0 %v9329
        %v9369 = vpop.f32.mrf.mxu0
        %v9370 = vadd.f32 0.0, %v9369
        %9371 = vmatmul.f32.gmra.mxu0 %v9332
        %v9372 = vpop.f32.mrf.mxu0
        %v9373 = vadd.f32 0.0, %v9372
        %9374 = vmatmul.f32.gmra.mxu0 %v9335
        %v9375 = vpop.f32.mrf.mxu0
        %v9376 = vadd.f32 0.0, %v9375
        %9377 = vmatmul.f32.gmra.mxu0 %v9338
        %v9378 = vpop.f32.mrf.mxu0
        %v9379 = vadd.f32 0.0, %v9378
        %9380 = vmatmul.f32.gmra.mxu0 %v9341
        %v9381 = vpop.f32.mrf.mxu0
        %v9382 = vadd.f32 0.0, %v9381
        %9383 = vmatmul.f32.gmra.mxu0 %v9344
        %v9384 = vpop.f32.mrf.mxu0
        %v9385 = vadd.f32 0.0, %v9384
        %9386 = vmatmul.f32.gmra.mxu0 %v9347
        %v9387 = vpop.f32.mrf.mxu0
        %v9388 = vadd.f32 0.0, %v9387
        %9389 = vmatmul.f32.gmra.mxu0 %v9350
        %v9390 = vpop.f32.mrf.mxu0
        %v9391 = vadd.f32 0.0, %v9390
        %9392 = vdwg.mxu0
        %v9394 = vsel %vm4756, %v7541, 0
        %v9397 = vsel %vm4756, %v7542, 0
        %v9400 = vsel %vm4756, %v7543, 0
        %v9403 = vsel %vm4756, %v7544, 0
        %v9406 = vsel %vm4756, %v7545, 0
        %v9409 = vsel %vm4756, %v7546, 0
        %v9412 = vsel %vm4756, %v7547, 0
        %v9415 = vsel %vm4756, %v7548, 0
        %9417 = vmatpush.msra.mxu0 0.0
        %9418 = vmatpush.msra.mxu0 0.0
        %9419 = vmatpush.msra.mxu0 0.0
        %9420 = vmatpush.msra.mxu0 0.0
        %9421 = vmatpush.msra.mxu0 0.0
        %9422 = vmatpush.msra.mxu0 0.0
        %9423 = vmatpush.msra.mxu0 0.0
        %9424 = vmatpush.msra.mxu0 0.0
        %9425 = vmatpush.msra.mxu0 %v2338
        %9426 = vmatpush.msra.mxu0 %v2336
        %9427 = vmatpush.msra.mxu0 %v2334
        %9428 = vmatpush.msra.mxu0 %v2332
        %9429 = vmatpush.msra.mxu0 %v2330
        %9430 = vmatpush.msra.mxu0 %v2328
        %9431 = vmatpush.msra.mxu0 %v2326
        %9432 = vmatpush.msra.mxu0 %v2324
        %9433 = vmatmul.f32.gmra.mxu0 %v9394
        %v9434 = vpop.f32.mrf.mxu0
        %v9435 = vadd.f32 0.0, %v9434
        %9436 = vmatmul.f32.gmra.mxu0 %v9397
        %v9437 = vpop.f32.mrf.mxu0
        %v9438 = vadd.f32 0.0, %v9437
        %9439 = vmatmul.f32.gmra.mxu0 %v9400
        %v9440 = vpop.f32.mrf.mxu0
        %v9441 = vadd.f32 0.0, %v9440
        %9442 = vmatmul.f32.gmra.mxu0 %v9403
        %v9443 = vpop.f32.mrf.mxu0
        %v9444 = vadd.f32 0.0, %v9443
        %9445 = vmatmul.f32.gmra.mxu0 %v9406
        %v9446 = vpop.f32.mrf.mxu0
        %v9447 = vadd.f32 0.0, %v9446
        %9448 = vmatmul.f32.gmra.mxu0 %v9409
        %v9449 = vpop.f32.mrf.mxu0
        %v9450 = vadd.f32 0.0, %v9449
        %9451 = vmatmul.f32.gmra.mxu0 %v9412
        %v9452 = vpop.f32.mrf.mxu0
        %v9453 = vadd.f32 0.0, %v9452
        %9454 = vmatmul.f32.gmra.mxu0 %v9415
        %v9455 = vpop.f32.mrf.mxu0
        %v9456 = vadd.f32 0.0, %v9455
        %9457 = vdwg.mxu0
        %v9459 = vsel %vm4756, %v7549, 0
        %v9462 = vsel %vm4756, %v7550, 0
        %v9465 = vsel %vm4756, %v7551, 0
        %v9468 = vsel %vm4756, %v7552, 0
        %v9471 = vsel %vm4756, %v7553, 0
        %v9474 = vsel %vm4756, %v7554, 0
        %v9477 = vsel %vm4756, %v7555, 0
        %v9480 = vsel %vm4756, %v7556, 0
        %9482 = vmatpush.msra.mxu0 0.0
        %9483 = vmatpush.msra.mxu0 0.0
        %9484 = vmatpush.msra.mxu0 0.0
        %9485 = vmatpush.msra.mxu0 0.0
        %9486 = vmatpush.msra.mxu0 0.0
        %9487 = vmatpush.msra.mxu0 0.0
        %9488 = vmatpush.msra.mxu0 0.0
        %9489 = vmatpush.msra.mxu0 0.0
        %9490 = vmatpush.msra.mxu0 %v2354
        %9491 = vmatpush.msra.mxu0 %v2352
        %9492 = vmatpush.msra.mxu0 %v2350
        %9493 = vmatpush.msra.mxu0 %v2348
        %9494 = vmatpush.msra.mxu0 %v2346
        %9495 = vmatpush.msra.mxu0 %v2344
        %9496 = vmatpush.msra.mxu0 %v2342
        %9497 = vmatpush.msra.mxu0 %v2340
        %9498 = vmatmul.f32.gmra.mxu0 %v9459
        %v9499 = vpop.f32.mrf.mxu0
        %v9500 = vadd.f32 0.0, %v9499
        %9501 = vmatmul.f32.gmra.mxu0 %v9462
        %v9502 = vpop.f32.mrf.mxu0
        %v9503 = vadd.f32 0.0, %v9502
        %9504 = vmatmul.f32.gmra.mxu0 %v9465
        %v9505 = vpop.f32.mrf.mxu0
        %v9506 = vadd.f32 0.0, %v9505
        %9507 = vmatmul.f32.gmra.mxu0 %v9468
        %v9508 = vpop.f32.mrf.mxu0
        %v9509 = vadd.f32 0.0, %v9508
        %9510 = vmatmul.f32.gmra.mxu0 %v9471
        %v9511 = vpop.f32.mrf.mxu0
        %v9512 = vadd.f32 0.0, %v9511
        %9513 = vmatmul.f32.gmra.mxu0 %v9474
        %v9514 = vpop.f32.mrf.mxu0
        %v9515 = vadd.f32 0.0, %v9514
        %9516 = vmatmul.f32.gmra.mxu0 %v9477
        %v9517 = vpop.f32.mrf.mxu0
        %v9518 = vadd.f32 0.0, %v9517
        %9519 = vmatmul.f32.gmra.mxu0 %v9480
        %v9520 = vpop.f32.mrf.mxu0
        %v9521 = vadd.f32 0.0, %v9520
        %9522 = vdwg.mxu0
        %v9524 = vsel %vm4756, %v7557, 0
        %v9527 = vsel %vm4756, %v7558, 0
        %v9530 = vsel %vm4756, %v7559, 0
        %v9533 = vsel %vm4756, %v7560, 0
        %v9536 = vsel %vm4756, %v7561, 0
        %v9539 = vsel %vm4756, %v7562, 0
        %v9542 = vsel %vm4756, %v7563, 0
        %v9545 = vsel %vm4756, %v7564, 0
        %9547 = vmatpush.msra.mxu0 0.0
        %9548 = vmatpush.msra.mxu0 0.0
        %9549 = vmatpush.msra.mxu0 0.0
        %9550 = vmatpush.msra.mxu0 0.0
        %9551 = vmatpush.msra.mxu0 0.0
        %9552 = vmatpush.msra.mxu0 0.0
        %9553 = vmatpush.msra.mxu0 0.0
        %9554 = vmatpush.msra.mxu0 0.0
        %9555 = vmatpush.msra.mxu0 %v2370
        %9556 = vmatpush.msra.mxu0 %v2368
        %9557 = vmatpush.msra.mxu0 %v2366
        %9558 = vmatpush.msra.mxu0 %v2364
        %9559 = vmatpush.msra.mxu0 %v2362
        %9560 = vmatpush.msra.mxu0 %v2360
        %9561 = vmatpush.msra.mxu0 %v2358
        %9562 = vmatpush.msra.mxu0 %v2356
        %9563 = vmatmul.f32.gmra.mxu0 %v9524
        %v9564 = vpop.f32.mrf.mxu0
        %v9565 = vadd.f32 0.0, %v9564
        %9566 = vmatmul.f32.gmra.mxu0 %v9527
        %v9567 = vpop.f32.mrf.mxu0
        %v9568 = vadd.f32 0.0, %v9567
        %9569 = vmatmul.f32.gmra.mxu0 %v9530
        %v9570 = vpop.f32.mrf.mxu0
        %v9571 = vadd.f32 0.0, %v9570
        %9572 = vmatmul.f32.gmra.mxu0 %v9533
        %v9573 = vpop.f32.mrf.mxu0
        %v9574 = vadd.f32 0.0, %v9573
        %9575 = vmatmul.f32.gmra.mxu0 %v9536
        %v9576 = vpop.f32.mrf.mxu0
        %v9577 = vadd.f32 0.0, %v9576
        %9578 = vmatmul.f32.gmra.mxu0 %v9539
        %v9579 = vpop.f32.mrf.mxu0
        %v9580 = vadd.f32 0.0, %v9579
        %9581 = vmatmul.f32.gmra.mxu0 %v9542
        %v9582 = vpop.f32.mrf.mxu0
        %v9583 = vadd.f32 0.0, %v9582
        %9584 = vmatmul.f32.gmra.mxu0 %v9545
        %v9585 = vpop.f32.mrf.mxu0
        %v9586 = vadd.f32 0.0, %v9585
        %9587 = vdwg.mxu0
        %v9589 = vsel %vm4756, %v7565, 0
        %v9592 = vsel %vm4756, %v7566, 0
        %v9595 = vsel %vm4756, %v7567, 0
        %v9598 = vsel %vm4756, %v7568, 0
        %v9601 = vsel %vm4756, %v7569, 0
        %v9604 = vsel %vm4756, %v7570, 0
        %v9607 = vsel %vm4756, %v7571, 0
        %v9610 = vsel %vm4756, %v7572, 0
        %9612 = vmatpush.msra.mxu0 0.0
        %9613 = vmatpush.msra.mxu0 0.0
        %9614 = vmatpush.msra.mxu0 0.0
        %9615 = vmatpush.msra.mxu0 0.0
        %9616 = vmatpush.msra.mxu0 0.0
        %9617 = vmatpush.msra.mxu0 0.0
        %9618 = vmatpush.msra.mxu0 0.0
        %9619 = vmatpush.msra.mxu0 0.0
        %9620 = vmatpush.msra.mxu0 %v2386
        %9621 = vmatpush.msra.mxu0 %v2384
        %9622 = vmatpush.msra.mxu0 %v2382
        %9623 = vmatpush.msra.mxu0 %v2380
        %9624 = vmatpush.msra.mxu0 %v2378
        %9625 = vmatpush.msra.mxu0 %v2376
        %9626 = vmatpush.msra.mxu0 %v2374
        %9627 = vmatpush.msra.mxu0 %v2372
        %9628 = vmatmul.f32.gmra.mxu0 %v9589
        %v9629 = vpop.f32.mrf.mxu0
        %v9630 = vadd.f32 0.0, %v9629
        %9631 = vmatmul.f32.gmra.mxu0 %v9592
        %v9632 = vpop.f32.mrf.mxu0
        %v9633 = vadd.f32 0.0, %v9632
        %9634 = vmatmul.f32.gmra.mxu0 %v9595
        %v9635 = vpop.f32.mrf.mxu0
        %v9636 = vadd.f32 0.0, %v9635
        %9637 = vmatmul.f32.gmra.mxu0 %v9598
        %v9638 = vpop.f32.mrf.mxu0
        %v9639 = vadd.f32 0.0, %v9638
        %9640 = vmatmul.f32.gmra.mxu0 %v9601
        %v9641 = vpop.f32.mrf.mxu0
        %v9642 = vadd.f32 0.0, %v9641
        %9643 = vmatmul.f32.gmra.mxu0 %v9604
        %v9644 = vpop.f32.mrf.mxu0
        %v9645 = vadd.f32 0.0, %v9644
        %9646 = vmatmul.f32.gmra.mxu0 %v9607
        %v9647 = vpop.f32.mrf.mxu0
        %v9648 = vadd.f32 0.0, %v9647
        %9649 = vmatmul.f32.gmra.mxu0 %v9610
        %v9650 = vpop.f32.mrf.mxu0
        %v9651 = vadd.f32 0.0, %v9650
        %9652 = vdwg.mxu0
        %9685 = vrot.lane.b32.xlu0 %v7875, 16
        %v9686 = vpop.permute.xlu0 %9685
        %9687 = vrot.lane.b32.xlu0 %v7878, 16
        %v9688 = vpop.permute.xlu0 %9687
        %9689 = vrot.lane.b32.xlu0 %v7881, 16
        %v9690 = vpop.permute.xlu0 %9689
        %9691 = vrot.lane.b32.xlu0 %v7884, 16
        %v9692 = vpop.permute.xlu0 %9691
        %9693 = vrot.lane.b32.xlu0 %v7887, 16
        %v9694 = vpop.permute.xlu0 %9693
        %9695 = vrot.lane.b32.xlu0 %v7890, 16
        %v9696 = vpop.permute.xlu0 %9695
        %9697 = vrot.lane.b32.xlu0 %v7893, 16
        %v9698 = vpop.permute.xlu0 %9697
        %9699 = vrot.lane.b32.xlu0 %v7896, 16
        %v9700 = vpop.permute.xlu0 %9699
        %9701 = vrot.lane.b32.xlu0 %v7940, 16
        %v9702 = vpop.permute.xlu0 %9701
        %9703 = vrot.lane.b32.xlu0 %v7943, 16
        %v9704 = vpop.permute.xlu0 %9703
        %9705 = vrot.lane.b32.xlu0 %v7946, 16
        %v9706 = vpop.permute.xlu0 %9705
        %9707 = vrot.lane.b32.xlu0 %v7949, 16
        %v9708 = vpop.permute.xlu0 %9707
        %9709 = vrot.lane.b32.xlu0 %v7952, 16
        %v9710 = vpop.permute.xlu0 %9709
        %9711 = vrot.lane.b32.xlu0 %v7955, 16
        %v9712 = vpop.permute.xlu0 %9711
        %9713 = vrot.lane.b32.xlu0 %v7958, 16
        %v9714 = vpop.permute.xlu0 %9713
        %9715 = vrot.lane.b32.xlu0 %v7961, 16
        %v9716 = vpop.permute.xlu0 %9715
        %9717 = vrot.lane.b32.xlu0 %v8005, 16
        %v9718 = vpop.permute.xlu0 %9717
        %9719 = vrot.lane.b32.xlu0 %v8008, 16
        %v9720 = vpop.permute.xlu0 %9719
        %9721 = vrot.lane.b32.xlu0 %v8011, 16
        %v9722 = vpop.permute.xlu0 %9721
        %9723 = vrot.lane.b32.xlu0 %v8014, 16
        %v9724 = vpop.permute.xlu0 %9723
        %9725 = vrot.lane.b32.xlu0 %v8017, 16
        %v9726 = vpop.permute.xlu0 %9725
        %9727 = vrot.lane.b32.xlu0 %v8020, 16
        %v9728 = vpop.permute.xlu0 %9727
        %9729 = vrot.lane.b32.xlu0 %v8023, 16
        %v9730 = vpop.permute.xlu0 %9729
        %9731 = vrot.lane.b32.xlu0 %v8026, 16
        %v9732 = vpop.permute.xlu0 %9731
        %9733 = vrot.lane.b32.xlu0 %v8070, 16
        %v9734 = vpop.permute.xlu0 %9733
        %9735 = vrot.lane.b32.xlu0 %v8073, 16
        %v9736 = vpop.permute.xlu0 %9735
        %9737 = vrot.lane.b32.xlu0 %v8076, 16
        %v9738 = vpop.permute.xlu0 %9737
        %9739 = vrot.lane.b32.xlu0 %v8079, 16
        %v9740 = vpop.permute.xlu0 %9739
        %9741 = vrot.lane.b32.xlu0 %v8082, 16
        %v9742 = vpop.permute.xlu0 %9741
        %9743 = vrot.lane.b32.xlu0 %v8085, 16
        %v9744 = vpop.permute.xlu0 %9743
        %9745 = vrot.lane.b32.xlu0 %v8088, 16
        %v9746 = vpop.permute.xlu0 %9745
        %9747 = vrot.lane.b32.xlu0 %v8091, 16
        %v9748 = vpop.permute.xlu0 %9747
        %9813 = vrot.lane.b32.xlu0 %v8135, 32
        %v9814 = vpop.permute.xlu0 %9813
        %9815 = vrot.lane.b32.xlu0 %v8138, 32
        %v9816 = vpop.permute.xlu0 %9815
        %9817 = vrot.lane.b32.xlu0 %v8141, 32
        %v9818 = vpop.permute.xlu0 %9817
        %9819 = vrot.lane.b32.xlu0 %v8144, 32
        %v9820 = vpop.permute.xlu0 %9819
        %9821 = vrot.lane.b32.xlu0 %v8147, 32
        %v9822 = vpop.permute.xlu0 %9821
        %9823 = vrot.lane.b32.xlu0 %v8150, 32
        %v9824 = vpop.permute.xlu0 %9823
        %9825 = vrot.lane.b32.xlu0 %v8153, 32
        %v9826 = vpop.permute.xlu0 %9825
        %9827 = vrot.lane.b32.xlu0 %v8156, 32
        %v9828 = vpop.permute.xlu0 %9827
        %9829 = vrot.lane.b32.xlu0 %v8200, 32
        %v9830 = vpop.permute.xlu0 %9829
        %9831 = vrot.lane.b32.xlu0 %v8203, 32
        %v9832 = vpop.permute.xlu0 %9831
        %9833 = vrot.lane.b32.xlu0 %v8206, 32
        %v9834 = vpop.permute.xlu0 %9833
        %9835 = vrot.lane.b32.xlu0 %v8209, 32
        %v9836 = vpop.permute.xlu0 %9835
        %9837 = vrot.lane.b32.xlu0 %v8212, 32
        %v9838 = vpop.permute.xlu0 %9837
        %9839 = vrot.lane.b32.xlu0 %v8215, 32
        %v9840 = vpop.permute.xlu0 %9839
        %9841 = vrot.lane.b32.xlu0 %v8218, 32
        %v9842 = vpop.permute.xlu0 %9841
        %9843 = vrot.lane.b32.xlu0 %v8221, 32
        %v9844 = vpop.permute.xlu0 %9843
        %9845 = vrot.lane.b32.xlu0 %v8265, 32
        %v9846 = vpop.permute.xlu0 %9845
        %9847 = vrot.lane.b32.xlu0 %v8268, 32
        %v9848 = vpop.permute.xlu0 %9847
        %9849 = vrot.lane.b32.xlu0 %v8271, 32
        %v9850 = vpop.permute.xlu0 %9849
        %9851 = vrot.lane.b32.xlu0 %v8274, 32
        %v9852 = vpop.permute.xlu0 %9851
        %9853 = vrot.lane.b32.xlu0 %v8277, 32
        %v9854 = vpop.permute.xlu0 %9853
        %9855 = vrot.lane.b32.xlu0 %v8280, 32
        %v9856 = vpop.permute.xlu0 %9855
        %9857 = vrot.lane.b32.xlu0 %v8283, 32
        %v9858 = vpop.permute.xlu0 %9857
        %9859 = vrot.lane.b32.xlu0 %v8286, 32
        %v9860 = vpop.permute.xlu0 %9859
        %9861 = vrot.lane.b32.xlu0 %v8330, 32
        %v9862 = vpop.permute.xlu0 %9861
        %9863 = vrot.lane.b32.xlu0 %v8333, 32
        %v9864 = vpop.permute.xlu0 %9863
        %9865 = vrot.lane.b32.xlu0 %v8336, 32
        %v9866 = vpop.permute.xlu0 %9865
        %9867 = vrot.lane.b32.xlu0 %v8339, 32
        %v9868 = vpop.permute.xlu0 %9867
        %9869 = vrot.lane.b32.xlu0 %v8342, 32
        %v9870 = vpop.permute.xlu0 %9869
        %9871 = vrot.lane.b32.xlu0 %v8345, 32
        %v9872 = vpop.permute.xlu0 %9871
        %9873 = vrot.lane.b32.xlu0 %v8348, 32
        %v9874 = vpop.permute.xlu0 %9873
        %9875 = vrot.lane.b32.xlu0 %v8351, 32
        %v9876 = vpop.permute.xlu0 %9875
        %9941 = vrot.lane.b32.xlu0 %v8395, 48
        %v9942 = vpop.permute.xlu0 %9941
        %9943 = vrot.lane.b32.xlu0 %v8398, 48
        %v9944 = vpop.permute.xlu0 %9943
        %9945 = vrot.lane.b32.xlu0 %v8401, 48
        %v9946 = vpop.permute.xlu0 %9945
        %9947 = vrot.lane.b32.xlu0 %v8404, 48
        %v9948 = vpop.permute.xlu0 %9947
        %9949 = vrot.lane.b32.xlu0 %v8407, 48
        %v9950 = vpop.permute.xlu0 %9949
        %9951 = vrot.lane.b32.xlu0 %v8410, 48
        %v9952 = vpop.permute.xlu0 %9951
        %9953 = vrot.lane.b32.xlu0 %v8413, 48
        %v9954 = vpop.permute.xlu0 %9953
        %9955 = vrot.lane.b32.xlu0 %v8416, 48
        %v9956 = vpop.permute.xlu0 %9955
        %9957 = vrot.lane.b32.xlu0 %v8460, 48
        %v9958 = vpop.permute.xlu0 %9957
        %9959 = vrot.lane.b32.xlu0 %v8463, 48
        %v9960 = vpop.permute.xlu0 %9959
        %9961 = vrot.lane.b32.xlu0 %v8466, 48
        %v9962 = vpop.permute.xlu0 %9961
        %9963 = vrot.lane.b32.xlu0 %v8469, 48
        %v9964 = vpop.permute.xlu0 %9963
        %9965 = vrot.lane.b32.xlu0 %v8472, 48
        %v9966 = vpop.permute.xlu0 %9965
        %9967 = vrot.lane.b32.xlu0 %v8475, 48
        %v9968 = vpop.permute.xlu0 %9967
        %9969 = vrot.lane.b32.xlu0 %v8478, 48
        %v9970 = vpop.permute.xlu0 %9969
        %9971 = vrot.lane.b32.xlu0 %v8481, 48
        %v9972 = vpop.permute.xlu0 %9971
        %9973 = vrot.lane.b32.xlu0 %v8525, 48
        %v9974 = vpop.permute.xlu0 %9973
        %9975 = vrot.lane.b32.xlu0 %v8528, 48
        %v9976 = vpop.permute.xlu0 %9975
        %9977 = vrot.lane.b32.xlu0 %v8531, 48
        %v9978 = vpop.permute.xlu0 %9977
        %9979 = vrot.lane.b32.xlu0 %v8534, 48
        %v9980 = vpop.permute.xlu0 %9979
        %9981 = vrot.lane.b32.xlu0 %v8537, 48
        %v9982 = vpop.permute.xlu0 %9981
        %9983 = vrot.lane.b32.xlu0 %v8540, 48
        %v9984 = vpop.permute.xlu0 %9983
        %9985 = vrot.lane.b32.xlu0 %v8543, 48
        %v9986 = vpop.permute.xlu0 %9985
        %9987 = vrot.lane.b32.xlu0 %v8546, 48
        %v9988 = vpop.permute.xlu0 %9987
        %9989 = vrot.lane.b32.xlu0 %v8590, 48
        %v9990 = vpop.permute.xlu0 %9989
        %9991 = vrot.lane.b32.xlu0 %v8593, 48
        %v9992 = vpop.permute.xlu0 %9991
        %9993 = vrot.lane.b32.xlu0 %v8596, 48
        %v9994 = vpop.permute.xlu0 %9993
        %9995 = vrot.lane.b32.xlu0 %v8599, 48
        %v9996 = vpop.permute.xlu0 %9995
        %9997 = vrot.lane.b32.xlu0 %v8602, 48
        %v9998 = vpop.permute.xlu0 %9997
        %9999 = vrot.lane.b32.xlu0 %v8605, 48
        %v10000 = vpop.permute.xlu0 %9999
        %10001 = vrot.lane.b32.xlu0 %v8608, 48
        %v10002 = vpop.permute.xlu0 %10001
        %10003 = vrot.lane.b32.xlu0 %v8611, 48
        %v10004 = vpop.permute.xlu0 %10003
        %10069 = vrot.lane.b32.xlu0 %v8655, 64
        %v10070 = vpop.permute.xlu0 %10069
        %10071 = vrot.lane.b32.xlu0 %v8658, 64
        %v10072 = vpop.permute.xlu0 %10071
        %10073 = vrot.lane.b32.xlu0 %v8661, 64
        %v10074 = vpop.permute.xlu0 %10073
        %10075 = vrot.lane.b32.xlu0 %v8664, 64
        %v10076 = vpop.permute.xlu0 %10075
        %10077 = vrot.lane.b32.xlu0 %v8667, 64
        %v10078 = vpop.permute.xlu0 %10077
        %10079 = vrot.lane.b32.xlu0 %v8670, 64
        %v10080 = vpop.permute.xlu0 %10079
        %10081 = vrot.lane.b32.xlu0 %v8673, 64
        %v10082 = vpop.permute.xlu0 %10081
        %10083 = vrot.lane.b32.xlu0 %v8676, 64
        %v10084 = vpop.permute.xlu0 %10083
        %10085 = vrot.lane.b32.xlu0 %v8720, 64
        %v10086 = vpop.permute.xlu0 %10085
        %10087 = vrot.lane.b32.xlu0 %v8723, 64
        %v10088 = vpop.permute.xlu0 %10087
        %10089 = vrot.lane.b32.xlu0 %v8726, 64
        %v10090 = vpop.permute.xlu0 %10089
        %10091 = vrot.lane.b32.xlu0 %v8729, 64
        %v10092 = vpop.permute.xlu0 %10091
        %10093 = vrot.lane.b32.xlu0 %v8732, 64
        %v10094 = vpop.permute.xlu0 %10093
        %10095 = vrot.lane.b32.xlu0 %v8735, 64
        %v10096 = vpop.permute.xlu0 %10095
        %10097 = vrot.lane.b32.xlu0 %v8738, 64
        %v10098 = vpop.permute.xlu0 %10097
        %10099 = vrot.lane.b32.xlu0 %v8741, 64
        %v10100 = vpop.permute.xlu0 %10099
        %10101 = vrot.lane.b32.xlu0 %v8785, 64
        %v10102 = vpop.permute.xlu0 %10101
        %10103 = vrot.lane.b32.xlu0 %v8788, 64
        %v10104 = vpop.permute.xlu0 %10103
        %10105 = vrot.lane.b32.xlu0 %v8791, 64
        %v10106 = vpop.permute.xlu0 %10105
        %10107 = vrot.lane.b32.xlu0 %v8794, 64
        %v10108 = vpop.permute.xlu0 %10107
        %10109 = vrot.lane.b32.xlu0 %v8797, 64
        %v10110 = vpop.permute.xlu0 %10109
        %10111 = vrot.lane.b32.xlu0 %v8800, 64
        %v10112 = vpop.permute.xlu0 %10111
        %10113 = vrot.lane.b32.xlu0 %v8803, 64
        %v10114 = vpop.permute.xlu0 %10113
        %10115 = vrot.lane.b32.xlu0 %v8806, 64
        %v10116 = vpop.permute.xlu0 %10115
        %10117 = vrot.lane.b32.xlu0 %v8850, 64
        %v10118 = vpop.permute.xlu0 %10117
        %10119 = vrot.lane.b32.xlu0 %v8853, 64
        %v10120 = vpop.permute.xlu0 %10119
        %10121 = vrot.lane.b32.xlu0 %v8856, 64
        %v10122 = vpop.permute.xlu0 %10121
        %10123 = vrot.lane.b32.xlu0 %v8859, 64
        %v10124 = vpop.permute.xlu0 %10123
        %10125 = vrot.lane.b32.xlu0 %v8862, 64
        %v10126 = vpop.permute.xlu0 %10125
        %10127 = vrot.lane.b32.xlu0 %v8865, 64
        %v10128 = vpop.permute.xlu0 %10127
        %10129 = vrot.lane.b32.xlu0 %v8868, 64
        %v10130 = vpop.permute.xlu0 %10129
        %10131 = vrot.lane.b32.xlu0 %v8871, 64
        %v10132 = vpop.permute.xlu0 %10131
        %10197 = vrot.lane.b32.xlu0 %v8915, 80
        %v10198 = vpop.permute.xlu0 %10197
        %10199 = vrot.lane.b32.xlu0 %v8918, 80
        %v10200 = vpop.permute.xlu0 %10199
        %10201 = vrot.lane.b32.xlu0 %v8921, 80
        %v10202 = vpop.permute.xlu0 %10201
        %10203 = vrot.lane.b32.xlu0 %v8924, 80
        %v10204 = vpop.permute.xlu0 %10203
        %10205 = vrot.lane.b32.xlu0 %v8927, 80
        %v10206 = vpop.permute.xlu0 %10205
        %10207 = vrot.lane.b32.xlu0 %v8930, 80
        %v10208 = vpop.permute.xlu0 %10207
        %10209 = vrot.lane.b32.xlu0 %v8933, 80
        %v10210 = vpop.permute.xlu0 %10209
        %10211 = vrot.lane.b32.xlu0 %v8936, 80
        %v10212 = vpop.permute.xlu0 %10211
        %10213 = vrot.lane.b32.xlu0 %v8980, 80
        %v10214 = vpop.permute.xlu0 %10213
        %10215 = vrot.lane.b32.xlu0 %v8983, 80
        %v10216 = vpop.permute.xlu0 %10215
        %10217 = vrot.lane.b32.xlu0 %v8986, 80
        %v10218 = vpop.permute.xlu0 %10217
        %10219 = vrot.lane.b32.xlu0 %v8989, 80
        %v10220 = vpop.permute.xlu0 %10219
        %10221 = vrot.lane.b32.xlu0 %v8992, 80
        %v10222 = vpop.permute.xlu0 %10221
        %10223 = vrot.lane.b32.xlu0 %v8995, 80
        %v10224 = vpop.permute.xlu0 %10223
        %10225 = vrot.lane.b32.xlu0 %v8998, 80
        %v10226 = vpop.permute.xlu0 %10225
        %10227 = vrot.lane.b32.xlu0 %v9001, 80
        %v10228 = vpop.permute.xlu0 %10227
        %10229 = vrot.lane.b32.xlu0 %v9045, 80
        %v10230 = vpop.permute.xlu0 %10229
        %10231 = vrot.lane.b32.xlu0 %v9048, 80
        %v10232 = vpop.permute.xlu0 %10231
        %10233 = vrot.lane.b32.xlu0 %v9051, 80
        %v10234 = vpop.permute.xlu0 %10233
        %10235 = vrot.lane.b32.xlu0 %v9054, 80
        %v10236 = vpop.permute.xlu0 %10235
        %10237 = vrot.lane.b32.xlu0 %v9057, 80
        %v10238 = vpop.permute.xlu0 %10237
        %10239 = vrot.lane.b32.xlu0 %v9060, 80
        %v10240 = vpop.permute.xlu0 %10239
        %10241 = vrot.lane.b32.xlu0 %v9063, 80
        %v10242 = vpop.permute.xlu0 %10241
        %10243 = vrot.lane.b32.xlu0 %v9066, 80
        %v10244 = vpop.permute.xlu0 %10243
        %10245 = vrot.lane.b32.xlu0 %v9110, 80
        %v10246 = vpop.permute.xlu0 %10245
        %10247 = vrot.lane.b32.xlu0 %v9113, 80
        %v10248 = vpop.permute.xlu0 %10247
        %10249 = vrot.lane.b32.xlu0 %v9116, 80
        %v10250 = vpop.permute.xlu0 %10249
        %10251 = vrot.lane.b32.xlu0 %v9119, 80
        %v10252 = vpop.permute.xlu0 %10251
        %10253 = vrot.lane.b32.xlu0 %v9122, 80
        %v10254 = vpop.permute.xlu0 %10253
        %10255 = vrot.lane.b32.xlu0 %v9125, 80
        %v10256 = vpop.permute.xlu0 %10255
        %10257 = vrot.lane.b32.xlu0 %v9128, 80
        %v10258 = vpop.permute.xlu0 %10257
        %10259 = vrot.lane.b32.xlu0 %v9131, 80
        %v10260 = vpop.permute.xlu0 %10259
        %10325 = vrot.lane.b32.xlu0 %v9175, 96
        %v10326 = vpop.permute.xlu0 %10325
        %10327 = vrot.lane.b32.xlu0 %v9178, 96
        %v10328 = vpop.permute.xlu0 %10327
        %10329 = vrot.lane.b32.xlu0 %v9181, 96
        %v10330 = vpop.permute.xlu0 %10329
        %10331 = vrot.lane.b32.xlu0 %v9184, 96
        %v10332 = vpop.permute.xlu0 %10331
        %10333 = vrot.lane.b32.xlu0 %v9187, 96
        %v10334 = vpop.permute.xlu0 %10333
        %10335 = vrot.lane.b32.xlu0 %v9190, 96
        %v10336 = vpop.permute.xlu0 %10335
        %10337 = vrot.lane.b32.xlu0 %v9193, 96
        %v10338 = vpop.permute.xlu0 %10337
        %10339 = vrot.lane.b32.xlu0 %v9196, 96
        %v10340 = vpop.permute.xlu0 %10339
        %10341 = vrot.lane.b32.xlu0 %v9240, 96
        %v10342 = vpop.permute.xlu0 %10341
        %10343 = vrot.lane.b32.xlu0 %v9243, 96
        %v10344 = vpop.permute.xlu0 %10343
        %10345 = vrot.lane.b32.xlu0 %v9246, 96
        %v10346 = vpop.permute.xlu0 %10345
        %10347 = vrot.lane.b32.xlu0 %v9249, 96
        %v10348 = vpop.permute.xlu0 %10347
        %10349 = vrot.lane.b32.xlu0 %v9252, 96
        %v10350 = vpop.permute.xlu0 %10349
        %10351 = vrot.lane.b32.xlu0 %v9255, 96
        %v10352 = vpop.permute.xlu0 %10351
        %10353 = vrot.lane.b32.xlu0 %v9258, 96
        %v10354 = vpop.permute.xlu0 %10353
        %10355 = vrot.lane.b32.xlu0 %v9261, 96
        %v10356 = vpop.permute.xlu0 %10355
        %10357 = vrot.lane.b32.xlu0 %v9305, 96
        %v10358 = vpop.permute.xlu0 %10357
        %10359 = vrot.lane.b32.xlu0 %v9308, 96
        %v10360 = vpop.permute.xlu0 %10359
        %10361 = vrot.lane.b32.xlu0 %v9311, 96
        %v10362 = vpop.permute.xlu0 %10361
        %10363 = vrot.lane.b32.xlu0 %v9314, 96
        %v10364 = vpop.permute.xlu0 %10363
        %10365 = vrot.lane.b32.xlu0 %v9317, 96
        %v10366 = vpop.permute.xlu0 %10365
        %10367 = vrot.lane.b32.xlu0 %v9320, 96
        %v10368 = vpop.permute.xlu0 %10367
        %10369 = vrot.lane.b32.xlu0 %v9323, 96
        %v10370 = vpop.permute.xlu0 %10369
        %10371 = vrot.lane.b32.xlu0 %v9326, 96
        %v10372 = vpop.permute.xlu0 %10371
        %10373 = vrot.lane.b32.xlu0 %v9370, 96
        %v10374 = vpop.permute.xlu0 %10373
        %10375 = vrot.lane.b32.xlu0 %v9373, 96
        %v10376 = vpop.permute.xlu0 %10375
        %10377 = vrot.lane.b32.xlu0 %v9376, 96
        %v10378 = vpop.permute.xlu0 %10377
        %10379 = vrot.lane.b32.xlu0 %v9379, 96
        %v10380 = vpop.permute.xlu0 %10379
        %10381 = vrot.lane.b32.xlu0 %v9382, 96
        %v10382 = vpop.permute.xlu0 %10381
        %10383 = vrot.lane.b32.xlu0 %v9385, 96
        %v10384 = vpop.permute.xlu0 %10383
        %10385 = vrot.lane.b32.xlu0 %v9388, 96
        %v10386 = vpop.permute.xlu0 %10385
        %10387 = vrot.lane.b32.xlu0 %v9391, 96
        %v10388 = vpop.permute.xlu0 %10387
        %10453 = vrot.lane.b32.xlu0 %v9435, 112
        %v10454 = vpop.permute.xlu0 %10453
        %10455 = vrot.lane.b32.xlu0 %v9438, 112
        %v10456 = vpop.permute.xlu0 %10455
        %10457 = vrot.lane.b32.xlu0 %v9441, 112
        %v10458 = vpop.permute.xlu0 %10457
        %10459 = vrot.lane.b32.xlu0 %v9444, 112
        %v10460 = vpop.permute.xlu0 %10459
        %10461 = vrot.lane.b32.xlu0 %v9447, 112
        %v10462 = vpop.permute.xlu0 %10461
        %10463 = vrot.lane.b32.xlu0 %v9450, 112
        %v10464 = vpop.permute.xlu0 %10463
        %10465 = vrot.lane.b32.xlu0 %v9453, 112
        %v10466 = vpop.permute.xlu0 %10465
        %10467 = vrot.lane.b32.xlu0 %v9456, 112
        %v10468 = vpop.permute.xlu0 %10467
        %10469 = vrot.lane.b32.xlu0 %v9500, 112
        %v10470 = vpop.permute.xlu0 %10469
        %10471 = vrot.lane.b32.xlu0 %v9503, 112
        %v10472 = vpop.permute.xlu0 %10471
        %10473 = vrot.lane.b32.xlu0 %v9506, 112
        %v10474 = vpop.permute.xlu0 %10473
        %10475 = vrot.lane.b32.xlu0 %v9509, 112
        %v10476 = vpop.permute.xlu0 %10475
        %10477 = vrot.lane.b32.xlu0 %v9512, 112
        %v10478 = vpop.permute.xlu0 %10477
        %10479 = vrot.lane.b32.xlu0 %v9515, 112
        %v10480 = vpop.permute.xlu0 %10479
        %10481 = vrot.lane.b32.xlu0 %v9518, 112
        %v10482 = vpop.permute.xlu0 %10481
        %10483 = vrot.lane.b32.xlu0 %v9521, 112
        %v10484 = vpop.permute.xlu0 %10483
        %10485 = vrot.lane.b32.xlu0 %v9565, 112
        %v10486 = vpop.permute.xlu0 %10485
        %10487 = vrot.lane.b32.xlu0 %v9568, 112
        %v10488 = vpop.permute.xlu0 %10487
        %10489 = vrot.lane.b32.xlu0 %v9571, 112
        %v10490 = vpop.permute.xlu0 %10489
        %10491 = vrot.lane.b32.xlu0 %v9574, 112
        %v10492 = vpop.permute.xlu0 %10491
        %10493 = vrot.lane.b32.xlu0 %v9577, 112
        %v10494 = vpop.permute.xlu0 %10493
        %10495 = vrot.lane.b32.xlu0 %v9580, 112
        %v10496 = vpop.permute.xlu0 %10495
        %10497 = vrot.lane.b32.xlu0 %v9583, 112
        %v10498 = vpop.permute.xlu0 %10497
        %10499 = vrot.lane.b32.xlu0 %v9586, 112
        %v10500 = vpop.permute.xlu0 %10499
        %10501 = vrot.lane.b32.xlu0 %v9630, 112
        %v10502 = vpop.permute.xlu0 %10501
        %10503 = vrot.lane.b32.xlu0 %v9633, 112
        %v10504 = vpop.permute.xlu0 %10503
        %10505 = vrot.lane.b32.xlu0 %v9636, 112
        %v10506 = vpop.permute.xlu0 %10505
        %10507 = vrot.lane.b32.xlu0 %v9639, 112
        %v10508 = vpop.permute.xlu0 %10507
        %10509 = vrot.lane.b32.xlu0 %v9642, 112
        %v10510 = vpop.permute.xlu0 %10509
        %10511 = vrot.lane.b32.xlu0 %v9645, 112
        %v10512 = vpop.permute.xlu0 %10511
        %10513 = vrot.lane.b32.xlu0 %v9648, 112
        %v10514 = vpop.permute.xlu0 %10513
        %10515 = vrot.lane.b32.xlu0 %v9651, 112
        %v10516 = vpop.permute.xlu0 %10515
        %v10549 = vsel %vm2419, %v7615, %v9686
        %v10550 = vsel %vm2419, %v7618, %v9688
        %v10551 = vsel %vm2419, %v7621, %v9690
        %v10552 = vsel %vm2419, %v7624, %v9692
        %v10553 = vsel %vm2419, %v7627, %v9694
        %v10554 = vsel %vm2419, %v7630, %v9696
        %v10555 = vsel %vm2419, %v7633, %v9698
        %v10556 = vsel %vm2419, %v7636, %v9700
        %v10557 = vsel %vm2419, %v7680, %v9702
        %v10558 = vsel %vm2419, %v7683, %v9704
        %v10559 = vsel %vm2419, %v7686, %v9706
        %v10560 = vsel %vm2419, %v7689, %v9708
        %v10561 = vsel %vm2419, %v7692, %v9710
        %v10562 = vsel %vm2419, %v7695, %v9712
        %v10563 = vsel %vm2419, %v7698, %v9714
        %v10564 = vsel %vm2419, %v7701, %v9716
        %v10565 = vsel %vm2419, %v7745, %v9718
        %v10566 = vsel %vm2419, %v7748, %v9720
        %v10567 = vsel %vm2419, %v7751, %v9722
        %v10568 = vsel %vm2419, %v7754, %v9724
        %v10569 = vsel %vm2419, %v7757, %v9726
        %v10570 = vsel %vm2419, %v7760, %v9728
        %v10571 = vsel %vm2419, %v7763, %v9730
        %v10572 = vsel %vm2419, %v7766, %v9732
        %v10573 = vsel %vm2419, %v7810, %v9734
        %v10574 = vsel %vm2419, %v7813, %v9736
        %v10575 = vsel %vm2419, %v7816, %v9738
        %v10576 = vsel %vm2419, %v7819, %v9740
        %v10577 = vsel %vm2419, %v7822, %v9742
        %v10578 = vsel %vm2419, %v7825, %v9744
        %v10579 = vsel %vm2419, %v7828, %v9746
        %v10580 = vsel %vm2419, %v7831, %v9748
        %vm10581 = vcmask 261120
        %v10582 = vsel %vm10581, %v10549, %v9814
        %v10583 = vsel %vm10581, %v10550, %v9816
        %v10584 = vsel %vm10581, %v10551, %v9818
        %v10585 = vsel %vm10581, %v10552, %v9820
        %v10586 = vsel %vm10581, %v10553, %v9822
        %v10587 = vsel %vm10581, %v10554, %v9824
        %v10588 = vsel %vm10581, %v10555, %v9826
        %v10589 = vsel %vm10581, %v10556, %v9828
        %v10590 = vsel %vm10581, %v10557, %v9830
        %v10591 = vsel %vm10581, %v10558, %v9832
        %v10592 = vsel %vm10581, %v10559, %v9834
        %v10593 = vsel %vm10581, %v10560, %v9836
        %v10594 = vsel %vm10581, %v10561, %v9838
        %v10595 = vsel %vm10581, %v10562, %v9840
        %v10596 = vsel %vm10581, %v10563, %v9842
        %v10597 = vsel %vm10581, %v10564, %v9844
        %v10598 = vsel %vm10581, %v10565, %v9846
        %v10599 = vsel %vm10581, %v10566, %v9848
        %v10600 = vsel %vm10581, %v10567, %v9850
        %v10601 = vsel %vm10581, %v10568, %v9852
        %v10602 = vsel %vm10581, %v10569, %v9854
        %v10603 = vsel %vm10581, %v10570, %v9856
        %v10604 = vsel %vm10581, %v10571, %v9858
        %v10605 = vsel %vm10581, %v10572, %v9860
        %v10606 = vsel %vm10581, %v10573, %v9862
        %v10607 = vsel %vm10581, %v10574, %v9864
        %v10608 = vsel %vm10581, %v10575, %v9866
        %v10609 = vsel %vm10581, %v10576, %v9868
        %v10610 = vsel %vm10581, %v10577, %v9870
        %v10611 = vsel %vm10581, %v10578, %v9872
        %v10612 = vsel %vm10581, %v10579, %v9874
        %v10613 = vsel %vm10581, %v10580, %v9876
        %vm10614 = vcmask 392192
        %v10615 = vsel %vm10614, %v10582, %v9942
        %v10616 = vsel %vm10614, %v10583, %v9944
        %v10617 = vsel %vm10614, %v10584, %v9946
        %v10618 = vsel %vm10614, %v10585, %v9948
        %v10619 = vsel %vm10614, %v10586, %v9950
        %v10620 = vsel %vm10614, %v10587, %v9952
        %v10621 = vsel %vm10614, %v10588, %v9954
        %v10622 = vsel %vm10614, %v10589, %v9956
        %v10623 = vsel %vm10614, %v10590, %v9958
        %v10624 = vsel %vm10614, %v10591, %v9960
        %v10625 = vsel %vm10614, %v10592, %v9962
        %v10626 = vsel %vm10614, %v10593, %v9964
        %v10627 = vsel %vm10614, %v10594, %v9966
        %v10628 = vsel %vm10614, %v10595, %v9968
        %v10629 = vsel %vm10614, %v10596, %v9970
        %v10630 = vsel %vm10614, %v10597, %v9972
        %v10631 = vsel %vm10614, %v10598, %v9974
        %v10632 = vsel %vm10614, %v10599, %v9976
        %v10633 = vsel %vm10614, %v10600, %v9978
        %v10634 = vsel %vm10614, %v10601, %v9980
        %v10635 = vsel %vm10614, %v10602, %v9982
        %v10636 = vsel %vm10614, %v10603, %v9984
        %v10637 = vsel %vm10614, %v10604, %v9986
        %v10638 = vsel %vm10614, %v10605, %v9988
        %v10639 = vsel %vm10614, %v10606, %v9990
        %v10640 = vsel %vm10614, %v10607, %v9992
        %v10641 = vsel %vm10614, %v10608, %v9994
        %v10642 = vsel %vm10614, %v10609, %v9996
        %v10643 = vsel %vm10614, %v10610, %v9998
        %v10644 = vsel %vm10614, %v10611, %v10000
        %v10645 = vsel %vm10614, %v10612, %v10002
        %v10646 = vsel %vm10614, %v10613, %v10004
        %v10647 = vsel %vm4756, %v10615, %v10070
        %v10648 = vsel %vm4756, %v10616, %v10072
        %v10649 = vsel %vm4756, %v10617, %v10074
        %v10650 = vsel %vm4756, %v10618, %v10076
        %v10651 = vsel %vm4756, %v10619, %v10078
        %v10652 = vsel %vm4756, %v10620, %v10080
        %v10653 = vsel %vm4756, %v10621, %v10082
        %v10654 = vsel %vm4756, %v10622, %v10084
        %v10655 = vsel %vm4756, %v10623, %v10086
        %v10656 = vsel %vm4756, %v10624, %v10088
        %v10657 = vsel %vm4756, %v10625, %v10090
        %v10658 = vsel %vm4756, %v10626, %v10092
        %v10659 = vsel %vm4756, %v10627, %v10094
        %v10660 = vsel %vm4756, %v10628, %v10096
        %v10661 = vsel %vm4756, %v10629, %v10098
        %v10662 = vsel %vm4756, %v10630, %v10100
        %v10663 = vsel %vm4756, %v10631, %v10102
        %v10664 = vsel %vm4756, %v10632, %v10104
        %v10665 = vsel %vm4756, %v10633, %v10106
        %v10666 = vsel %vm4756, %v10634, %v10108
        %v10667 = vsel %vm4756, %v10635, %v10110
        %v10668 = vsel %vm4756, %v10636, %v10112
        %v10669 = vsel %vm4756, %v10637, %v10114
        %v10670 = vsel %vm4756, %v10638, %v10116
        %v10671 = vsel %vm4756, %v10639, %v10118
        %v10672 = vsel %vm4756, %v10640, %v10120
        %v10673 = vsel %vm4756, %v10641, %v10122
        %v10674 = vsel %vm4756, %v10642, %v10124
        %v10675 = vsel %vm4756, %v10643, %v10126
        %v10676 = vsel %vm4756, %v10644, %v10128
        %v10677 = vsel %vm4756, %v10645, %v10130
        %v10678 = vsel %vm4756, %v10646, %v10132
        %vm10679 = vcmask 654336
        %v10680 = vsel %vm10679, %v10647, %v10198
        %v10681 = vsel %vm10679, %v10648, %v10200
        %v10682 = vsel %vm10679, %v10649, %v10202
        %v10683 = vsel %vm10679, %v10650, %v10204
        %v10684 = vsel %vm10679, %v10651, %v10206
        %v10685 = vsel %vm10679, %v10652, %v10208
        %v10686 = vsel %vm10679, %v10653, %v10210
        %v10687 = vsel %vm10679, %v10654, %v10212
        %v10688 = vsel %vm10679, %v10655, %v10214
        %v10689 = vsel %vm10679, %v10656, %v10216
        %v10690 = vsel %vm10679, %v10657, %v10218
        %v10691 = vsel %vm10679, %v10658, %v10220
        %v10692 = vsel %vm10679, %v10659, %v10222
        %v10693 = vsel %vm10679, %v10660, %v10224
        %v10694 = vsel %vm10679, %v10661, %v10226
        %v10695 = vsel %vm10679, %v10662, %v10228
        %v10696 = vsel %vm10679, %v10663, %v10230
        %v10697 = vsel %vm10679, %v10664, %v10232
        %v10698 = vsel %vm10679, %v10665, %v10234
        %v10699 = vsel %vm10679, %v10666, %v10236
        %v10700 = vsel %vm10679, %v10667, %v10238
        %v10701 = vsel %vm10679, %v10668, %v10240
        %v10702 = vsel %vm10679, %v10669, %v10242
        %v10703 = vsel %vm10679, %v10670, %v10244
        %v10704 = vsel %vm10679, %v10671, %v10246
        %v10705 = vsel %vm10679, %v10672, %v10248
        %v10706 = vsel %vm10679, %v10673, %v10250
        %v10707 = vsel %vm10679, %v10674, %v10252
        %v10708 = vsel %vm10679, %v10675, %v10254
        %v10709 = vsel %vm10679, %v10676, %v10256
        %v10710 = vsel %vm10679, %v10677, %v10258
        %v10711 = vsel %vm10679, %v10678, %v10260
        %vm10712 = vcmask 785408
        %v10713 = vsel %vm10712, %v10680, %v10326
        %v10714 = vsel %vm10712, %v10681, %v10328
        %v10715 = vsel %vm10712, %v10682, %v10330
        %v10716 = vsel %vm10712, %v10683, %v10332
        %v10717 = vsel %vm10712, %v10684, %v10334
        %v10718 = vsel %vm10712, %v10685, %v10336
        %v10719 = vsel %vm10712, %v10686, %v10338
        %v10720 = vsel %vm10712, %v10687, %v10340
        %v10721 = vsel %vm10712, %v10688, %v10342
        %v10722 = vsel %vm10712, %v10689, %v10344
        %v10723 = vsel %vm10712, %v10690, %v10346
        %v10724 = vsel %vm10712, %v10691, %v10348
        %v10725 = vsel %vm10712, %v10692, %v10350
        %v10726 = vsel %vm10712, %v10693, %v10352
        %v10727 = vsel %vm10712, %v10694, %v10354
        %v10728 = vsel %vm10712, %v10695, %v10356
        %v10729 = vsel %vm10712, %v10696, %v10358
        %v10730 = vsel %vm10712, %v10697, %v10360
        %v10731 = vsel %vm10712, %v10698, %v10362
        %v10732 = vsel %vm10712, %v10699, %v10364
        %v10733 = vsel %vm10712, %v10700, %v10366
        %v10734 = vsel %vm10712, %v10701, %v10368
        %v10735 = vsel %vm10712, %v10702, %v10370
        %v10736 = vsel %vm10712, %v10703, %v10372
        %v10737 = vsel %vm10712, %v10704, %v10374
        %v10738 = vsel %vm10712, %v10705, %v10376
        %v10739 = vsel %vm10712, %v10706, %v10378
        %v10740 = vsel %vm10712, %v10707, %v10380
        %v10741 = vsel %vm10712, %v10708, %v10382
        %v10742 = vsel %vm10712, %v10709, %v10384
        %v10743 = vsel %vm10712, %v10710, %v10386
        %v10744 = vsel %vm10712, %v10711, %v10388
        %vm10745 = vcmask 916480
        %v10746 = vsel %vm10745, %v10713, %v10454
        %v10747 = vsel %vm10745, %v10714, %v10456
        %v10748 = vsel %vm10745, %v10715, %v10458
        %v10749 = vsel %vm10745, %v10716, %v10460
        %v10750 = vsel %vm10745, %v10717, %v10462
        %v10751 = vsel %vm10745, %v10718, %v10464
        %v10752 = vsel %vm10745, %v10719, %v10466
        %v10753 = vsel %vm10745, %v10720, %v10468
        %v10754 = vsel %vm10745, %v10721, %v10470
        %v10755 = vsel %vm10745, %v10722, %v10472
        %v10756 = vsel %vm10745, %v10723, %v10474
        %v10757 = vsel %vm10745, %v10724, %v10476
        %v10758 = vsel %vm10745, %v10725, %v10478
        %v10759 = vsel %vm10745, %v10726, %v10480
        %v10760 = vsel %vm10745, %v10727, %v10482
        %v10761 = vsel %vm10745, %v10728, %v10484
        %v10762 = vsel %vm10745, %v10729, %v10486
        %v10763 = vsel %vm10745, %v10730, %v10488
        %v10764 = vsel %vm10745, %v10731, %v10490
        %v10765 = vsel %vm10745, %v10732, %v10492
        %v10766 = vsel %vm10745, %v10733, %v10494
        %v10767 = vsel %vm10745, %v10734, %v10496
        %v10768 = vsel %vm10745, %v10735, %v10498
        %v10769 = vsel %vm10745, %v10736, %v10500
        %v10770 = vsel %vm10745, %v10737, %v10502
        %v10771 = vsel %vm10745, %v10738, %v10504
        %v10772 = vsel %vm10745, %v10739, %v10506
        %v10773 = vsel %vm10745, %v10740, %v10508
        %v10774 = vsel %vm10745, %v10741, %v10510
        %v10775 = vsel %vm10745, %v10742, %v10512
        %v10776 = vsel %vm10745, %v10743, %v10514
        %v10777 = vsel %vm10745, %v10744, %v10516
        %v10778 = vld [vmem:[#allocation8] sm:$0xff]
        %v10779 = vld [vmem:[#allocation8 + $0x8] sm:$0xff]
        %v10780 = vld [vmem:[#allocation8 + $0x10] sm:$0xff]
        %v10781 = vld [vmem:[#allocation8 + $0x18] sm:$0xff]
        %v10782 = vld [vmem:[#allocation8 + $0x20] sm:$0xff]
        %v10783 = vld [vmem:[#allocation8 + $0x28] sm:$0xff]
        %v10784 = vld [vmem:[#allocation8 + $0x30] sm:$0xff]
        %v10785 = vld [vmem:[#allocation8 + $0x38] sm:$0xff]
        %v10786 = vld [vmem:[#allocation8 + $0x40] sm:$0xff]
        %v10787 = vld [vmem:[#allocation8 + $0x48] sm:$0xff]
        %v10788 = vld [vmem:[#allocation8 + $0x50] sm:$0xff]
        %v10789 = vld [vmem:[#allocation8 + $0x58] sm:$0xff]
        %v10790 = vld [vmem:[#allocation8 + $0x60] sm:$0xff]
        %v10791 = vld [vmem:[#allocation8 + $0x68] sm:$0xff]
        %v10792 = vld [vmem:[#allocation8 + $0x70] sm:$0xff]
        %v10793 = vld [vmem:[#allocation8 + $0x78] sm:$0xff]
        %v10794 = vld [vmem:[%s4] sm:$0x1]
        %v10796 = vperm.slane %v10794, 0
        %10798 = vmatpush.msra.mxu0 %v10793
        %10799 = vmatpush.msra.mxu0 %v10792
        %10800 = vmatpush.msra.mxu0 %v10791
        %10801 = vmatpush.msra.mxu0 %v10790
        %10802 = vmatpush.msra.mxu0 %v10789
        %10803 = vmatpush.msra.mxu0 %v10788
        %10804 = vmatpush.msra.mxu0 %v10787
        %10805 = vmatpush.msra.mxu0 %v10786
        %10806 = vmatpush.msra.mxu0 %v10785
        %10807 = vmatpush.msra.mxu0 %v10784
        %10808 = vmatpush.msra.mxu0 %v10783
        %10809 = vmatpush.msra.mxu0 %v10782
        %10810 = vmatpush.msra.mxu0 %v10781
        %10811 = vmatpush.msra.mxu0 %v10780
        %10812 = vmatpush.msra.mxu0 %v10779
        %10813 = vmatpush.msra.mxu0 %v10778
        %10814 = vmatmul.f32.gmra.mxu0 %v10746
        %v10815 = vpop.f32.mrf.mxu0
        %v10816 = vadd.f32 %v10796, %v10815
        %10817 = vmatmul.f32.gmra.mxu0 %v10747
        %v10818 = vpop.f32.mrf.mxu0
        %v10819 = vadd.f32 %v10796, %v10818
        %10820 = vmatmul.f32.gmra.mxu0 %v10748
        %v10821 = vpop.f32.mrf.mxu0
        %v10822 = vadd.f32 %v10796, %v10821
        %10823 = vmatmul.f32.gmra.mxu0 %v10749
        %v10824 = vpop.f32.mrf.mxu0
        %v10825 = vadd.f32 %v10796, %v10824
        %10826 = vmatmul.f32.gmra.mxu0 %v10750
        %v10827 = vpop.f32.mrf.mxu0
        %v10828 = vadd.f32 %v10796, %v10827
        %10829 = vmatmul.f32.gmra.mxu0 %v10751
        %v10830 = vpop.f32.mrf.mxu0
        %v10831 = vadd.f32 %v10796, %v10830
        %10832 = vmatmul.f32.gmra.mxu0 %v10752
        %v10833 = vpop.f32.mrf.mxu0
        %v10834 = vadd.f32 %v10796, %v10833
        %10835 = vmatmul.f32.gmra.mxu0 %v10753
        %v10836 = vpop.f32.mrf.mxu0
        %v10837 = vadd.f32 %v10796, %v10836
        %10838 = vmatmul.f32.gmra.mxu0 %v10754
        %v10839 = vpop.f32.mrf.mxu0
        %v10840 = vadd.f32 %v10796, %v10839
        %10841 = vmatmul.f32.gmra.mxu0 %v10755
        %v10842 = vpop.f32.mrf.mxu0
        %v10843 = vadd.f32 %v10796, %v10842
        %10844 = vmatmul.f32.gmra.mxu0 %v10756
        %v10845 = vpop.f32.mrf.mxu0
        %v10846 = vadd.f32 %v10796, %v10845
        %10847 = vmatmul.f32.gmra.mxu0 %v10757
        %v10848 = vpop.f32.mrf.mxu0
        %v10849 = vadd.f32 %v10796, %v10848
        %10850 = vmatmul.f32.gmra.mxu0 %v10758
        %v10851 = vpop.f32.mrf.mxu0
        %v10852 = vadd.f32 %v10796, %v10851
        %10853 = vmatmul.f32.gmra.mxu0 %v10759
        %v10854 = vpop.f32.mrf.mxu0
        %v10855 = vadd.f32 %v10796, %v10854
        %10856 = vmatmul.f32.gmra.mxu0 %v10760
        %v10857 = vpop.f32.mrf.mxu0
        %v10858 = vadd.f32 %v10796, %v10857
        %10859 = vmatmul.f32.gmra.mxu0 %v10761
        %v10860 = vpop.f32.mrf.mxu0
        %v10861 = vadd.f32 %v10796, %v10860
        %10862 = vmatmul.f32.gmra.mxu0 %v10762
        %v10863 = vpop.f32.mrf.mxu0
        %v10864 = vadd.f32 %v10796, %v10863
        %10865 = vmatmul.f32.gmra.mxu0 %v10763
        %v10866 = vpop.f32.mrf.mxu0
        %v10867 = vadd.f32 %v10796, %v10866
        %10868 = vmatmul.f32.gmra.mxu0 %v10764
        %v10869 = vpop.f32.mrf.mxu0
        %v10870 = vadd.f32 %v10796, %v10869
        %10871 = vmatmul.f32.gmra.mxu0 %v10765
        %v10872 = vpop.f32.mrf.mxu0
        %v10873 = vadd.f32 %v10796, %v10872
        %10874 = vmatmul.f32.gmra.mxu0 %v10766
        %v10875 = vpop.f32.mrf.mxu0
        %v10876 = vadd.f32 %v10796, %v10875
        %10877 = vmatmul.f32.gmra.mxu0 %v10767
        %v10878 = vpop.f32.mrf.mxu0
        %v10879 = vadd.f32 %v10796, %v10878
        %10880 = vmatmul.f32.gmra.mxu0 %v10768
        %v10881 = vpop.f32.mrf.mxu0
        %v10882 = vadd.f32 %v10796, %v10881
        %10883 = vmatmul.f32.gmra.mxu0 %v10769
        %v10884 = vpop.f32.mrf.mxu0
        %v10885 = vadd.f32 %v10796, %v10884
        %10886 = vmatmul.f32.gmra.mxu0 %v10770
        %v10887 = vpop.f32.mrf.mxu0
        %v10888 = vadd.f32 %v10796, %v10887
        %10889 = vmatmul.f32.gmra.mxu0 %v10771
        %v10890 = vpop.f32.mrf.mxu0
        %v10891 = vadd.f32 %v10796, %v10890
        %10892 = vmatmul.f32.gmra.mxu0 %v10772
        %v10893 = vpop.f32.mrf.mxu0
        %v10894 = vadd.f32 %v10796, %v10893
        %10895 = vmatmul.f32.gmra.mxu0 %v10773
        %v10896 = vpop.f32.mrf.mxu0
        %v10897 = vadd.f32 %v10796, %v10896
        %10898 = vmatmul.f32.gmra.mxu0 %v10774
        %v10899 = vpop.f32.mrf.mxu0
        %v10900 = vadd.f32 %v10796, %v10899
        %10901 = vmatmul.f32.gmra.mxu0 %v10775
        %v10902 = vpop.f32.mrf.mxu0
        %v10903 = vadd.f32 %v10796, %v10902
        %10904 = vmatmul.f32.gmra.mxu0 %v10776
        %v10905 = vpop.f32.mrf.mxu0
        %v10906 = vadd.f32 %v10796, %v10905
        %10907 = vmatmul.f32.gmra.mxu0 %v10777
        %v10908 = vpop.f32.mrf.mxu0
        %v10909 = vadd.f32 %v10796, %v10908
        %10910 = vdwg.mxu0
        %v10911 = vadd.f32 %v10816, %v296
        %v10912 = vadd.f32 %v10819, %v297
        %v10913 = vadd.f32 %v10822, %v298
        %v10914 = vadd.f32 %v10825, %v299
        %v10915 = vadd.f32 %v10828, %v300
        %v10916 = vadd.f32 %v10831, %v301
        %v10917 = vadd.f32 %v10834, %v302
        %v10918 = vadd.f32 %v10837, %v303
        %v10919 = vadd.f32 %v10840, %v304
        %v10920 = vadd.f32 %v10843, %v305
        %v10921 = vadd.f32 %v10846, %v306
        %v10922 = vadd.f32 %v10849, %v307
        %v10923 = vadd.f32 %v10852, %v308
        %v10924 = vadd.f32 %v10855, %v309
        %v10925 = vadd.f32 %v10858, %v310
        %v10926 = vadd.f32 %v10861, %v311
        %v10927 = vadd.f32 %v10864, %v312
        %v10928 = vadd.f32 %v10867, %v313
        %v10929 = vadd.f32 %v10870, %v314
        %v10930 = vadd.f32 %v10873, %v315
        %v10931 = vadd.f32 %v10876, %v316
        %v10932 = vadd.f32 %v10879, %v317
        %v10933 = vadd.f32 %v10882, %v318
        %v10934 = vadd.f32 %v10885, %v319
        %v10935 = vadd.f32 %v10888, %v320
        %v10936 = vadd.f32 %v10891, %v321
        %v10937 = vadd.f32 %v10894, %v322
        %v10938 = vadd.f32 %v10897, %v323
        %v10939 = vadd.f32 %v10900, %v324
        %v10940 = vadd.f32 %v10903, %v325
        %v10941 = vadd.f32 %v10906, %v326
        %v10942 = vadd.f32 %v10909, %v327
        %10943 = vst [vmem:[%s293] sm:$0xff] %v10911
        %10944 = vst [vmem:[%s293 + $0x8] sm:$0xff] %v10912
        %10945 = vst [vmem:[%s293 + $0x10] sm:$0xff] %v10913
        %10946 = vst [vmem:[%s293 + $0x18] sm:$0xff] %v10914
        %10947 = vst [vmem:[%s293 + $0x20] sm:$0xff] %v10915
        %10948 = vst [vmem:[%s293 + $0x28] sm:$0xff] %v10916
        %10949 = vst [vmem:[%s293 + $0x30] sm:$0xff] %v10917
        %10950 = vst [vmem:[%s293 + $0x38] sm:$0xff] %v10918
        %10951 = vst [vmem:[%s293 + $0x40] sm:$0xff] %v10919
        %10952 = vst [vmem:[%s293 + $0x48] sm:$0xff] %v10920
        %10953 = vst [vmem:[%s293 + $0x50] sm:$0xff] %v10921
        %10954 = vst [vmem:[%s293 + $0x58] sm:$0xff] %v10922
        %10955 = vst [vmem:[%s293 + $0x60] sm:$0xff] %v10923
        %10956 = vst [vmem:[%s293 + $0x68] sm:$0xff] %v10924
        %10957 = vst [vmem:[%s293 + $0x70] sm:$0xff] %v10925
        %10958 = vst [vmem:[%s293 + $0x78] sm:$0xff] %v10926
        %10959 = vst [vmem:[%s293 + $0x80] sm:$0xff] %v10927
        %10960 = vst [vmem:[%s293 + $0x88] sm:$0xff] %v10928
        %10961 = vst [vmem:[%s293 + $0x90] sm:$0xff] %v10929
        %10962 = vst [vmem:[%s293 + $0x98] sm:$0xff] %v10930
        %10963 = vst [vmem:[%s293 + $0xa0] sm:$0xff] %v10931
        %10964 = vst [vmem:[%s293 + $0xa8] sm:$0xff] %v10932
        %10965 = vst [vmem:[%s293 + $0xb0] sm:$0xff] %v10933
        %10966 = vst [vmem:[%s293 + $0xb8] sm:$0xff] %v10934
        %10967 = vst [vmem:[%s293 + $0xc0] sm:$0xff] %v10935
        %10968 = vst [vmem:[%s293 + $0xc8] sm:$0xff] %v10936
        %10969 = vst [vmem:[%s293 + $0xd0] sm:$0xff] %v10937
        %10970 = vst [vmem:[%s293 + $0xd8] sm:$0xff] %v10938
        %10971 = vst [vmem:[%s293 + $0xe0] sm:$0xff] %v10939
        %10972 = vst [vmem:[%s293 + $0xe8] sm:$0xff] %v10940
        %10973 = vst [vmem:[%s293 + $0xf0] sm:$0xff] %v10941
        %10974 = vst [vmem:[%s293 + $0xf8] sm:$0xff] %v10942
        %s10975 = sand.u32 %s142, 1
        %s10976 = scalar_lea.sflag [#allocation4], %s10975
        %s10977 = sand.u32 %s142, 1
        %s10978 = smul.addr %s10977, 256
        %s10979 = scalar_lea.vmem [#allocation10], %s10978
        // Predicated region
        $region57: #{tpu_custom_call.1} parent=39 // pred_check
          %p10980 = pneg %p152
        $region58: #{tpu_custom_call.1} parent=39 // pred_check_branch
          %10982 = sbr.rel (%p10980) target = $region60
        $region59: #{tpu_custom_call.1} parent=39 // pred_region
          %s10983 = smul.u32 4, %s24
          %10985 = vsyncadd %s10976, 0
          %s10986 = smul.addr %s10983, 8
          %s10987 = smul.addr %s10986, 8
          %s10988 = scalar_lea.hbm %s5, %s10987
          %s10989 = sshll.u32 %s10979, 4
          %s10990 = int_to_ptr.vmem [resolvable:$true] %s10989
          %s10991 = sshll.u32 %s10988, 4
          %s10992 = int_to_ptr.hbm [resolvable:$true] %s10991
          %10997 = dma.vmem_to_hbm [thread:$0]  %s10990, 4096, %s10992, %s10976, 128, 128, 8
        $region60: #{tpu_custom_call.1} parent=39 // pred_fallthru
          _
      $region40: #{tpu_custom_call.1} parent=5 // pred_fallthru
        _
      %p10998 = scmp.le.s32.totalorder 2, %s19
      // Predicated region
      $region61: #{tpu_custom_call.1} parent=5 // pred_check
        %p10999 = pneg %p10998
      $region62: #{tpu_custom_call.1} parent=5 // pred_check_branch
        %11001 = sbr.rel (%p10999) target = $region64
      $region63: #{tpu_custom_call.1} parent=5 // pred_region
        %s11002 = ssub.s32 %s19, 2
        // Predicated region
        $region65: #{tpu_custom_call.1} parent=63 // pred_check
          %p11003 = pneg %p158
        $region66: #{tpu_custom_call.1} parent=63 // pred_check_branch
          %11005 = sbr.rel (%p11003) target = $region68
        $region67: #{tpu_custom_call.1} parent=63 // pred_region
          %s11006 = sand.u32 %s143, 1
          %s11007 = scalar_lea.sflag [#allocation4], %s11006
          %s11008 = sand.u32 %s143, 1
          %s11009 = smul.addr %s11008, 256
          %s11010 = scalar_lea.vmem [#allocation10], %s11009
          %11012 = dma.done %s11007, 4096
        $region68: #{tpu_custom_call.1} parent=63 // pred_fallthru
          _
      $region64: #{tpu_custom_call.1} parent=5 // pred_fallthru
        _
    $region6: #{tpu_custom_call.1} parent=1 // loop_footer
      %s23 = sadd.s32 1, %s19
    $region7: #{tpu_custom_call.1} parent=1 // loop_footer_branch
      %18 = sbr.rel target = $region3
    $region8: #{tpu_custom_call.1} parent=1 // loop_exit
      _
    %11013 = vsyncpa [#allocation3], 1
    %s11014 = scalar_lea.sflag [#allocation3], 1
    %11015 = vsyncpa %s11014, 1
    %11016 = vsyncpa [#allocation6], 1
    %11017 = vsyncpa [#allocation9], 1
    %11018 = vsyncpa [#allocation4], 1
    %s11019 = scalar_lea.sflag [#allocation4], 1
    %11020 = vsyncpa %s11019, 1

</llo_original>
